<compile_context>
chip_gen: v7x
topology: tpu7x:2x2x1
jax: 0.10.0
libtpu: 0.0.40
codegen_flags: <defaults>
</compile_context>

<pallas_src>
import jax
import jax.numpy as jnp
from jax.experimental import pallas as pl
from jax.experimental.pallas import tpu as pltpu

EPS = 1e-5


def _make_fused_block_kernel(H, W, Cin, Cout, row_chunk):
    """out = relu(bn2(conv2(relu(bn1(conv1(x))))) + x) for one NHWC image."""

    def conv3x3_chunk(src_ref, w_ref, cin, r0, rh):
        # 3x3 conv (stride 1, pad 1) over output rows [r0, r0+rh) as 9 shifted
        # bf16 MXU matmuls with a bounded f32 accumulator.
        acc = jnp.zeros((rh * W, Cout), jnp.float32)
        for ky in range(3):
            for kx in range(3):
                patch = src_ref[r0 + ky:r0 + ky + rh, kx:kx + W, :]
                acc = acc + jnp.dot(
                    patch.reshape(rh * W, cin).astype(jnp.bfloat16),
                    w_ref[ky * 3 + kx],
                    preferred_element_type=jnp.float32)
        return acc

    def kernel(x_ref, w1_ref, w2_ref, s1_ref, b1_ref, s2_ref, b2_ref,
               out_ref, xpad_ref, ypad_ref):
        # ---- in-kernel zero padding of the input tile (halo stays zero).
        xpad_ref[...] = jnp.zeros_like(xpad_ref)
        xpad_ref[1:H + 1, 1:W + 1, :] = x_ref[...]
        ypad_ref[...] = jnp.zeros_like(ypad_ref)

        # ---- conv1 + bn1 + relu -> padded VMEM intermediate (never hits HBM).
        for r0 in range(0, H, row_chunk):
            rh = min(row_chunk, H - r0)
            y = conv3x3_chunk(xpad_ref, w1_ref, Cin, r0, rh)
            y = jnp.maximum(y * s1_ref[...] + b1_ref[...], 0.0)
            ypad_ref[1 + r0:1 + r0 + rh, 1:W + 1, :] = y.reshape(rh, W, Cout)

        # ---- conv2 + bn2 + residual + relu -> output block.
        for r0 in range(0, H, row_chunk):
            rh = min(row_chunk, H - r0)
            o = conv3x3_chunk(ypad_ref, w2_ref, Cout, r0, rh)
            o = o * s2_ref[...] + b2_ref[...]
            o = o.reshape(rh, W, Cout) + x_ref[r0:r0 + rh, :, :]   # residual (Cin==Cout)
            out_ref[r0:r0 + rh, :, :] = jnp.maximum(o, 0.0).astype(out_ref.dtype)

    return kernel


def _fold_bn(conv_bias, bn, eps=EPS):
    scale = bn["gamma"] / jnp.sqrt(bn["var"] + eps)
    shift = bn["beta"] + scale * (conv_bias - bn["mean"])
    return scale, shift


def basic_block_forward(x_nchw, params, *, row_chunk=None):
    """BasicBlock forward (stride=1, downsample=None). NCHW in/out like PyTorch."""
    N, Cin, H, W = x_nchw.shape
    Cout = params["conv1_w"].shape[-1]
    assert Cin == Cout, "stride=1 / downsample=None requires in_planes == planes"

    x = jnp.transpose(x_nchw, (0, 2, 3, 1))  # -> NHWC (channels on the lane axis)

    s1, b1 = _fold_bn(params["conv1_b"], params["bn1"])
    s2, b2 = _fold_bn(params["conv2_b"], params["bn2"])

    w1 = params["conv1_w"].reshape(9, Cin, Cout).astype(jnp.bfloat16)
    w2 = params["conv2_w"].reshape(9, Cout, Cout).astype(jnp.bfloat16)
    s1 = s1.reshape(1, Cout).astype(jnp.float32)
    b1 = b1.reshape(1, Cout).astype(jnp.float32)
    s2 = s2.reshape(1, Cout).astype(jnp.float32)
    b2 = b2.reshape(1, Cout).astype(jnp.float32)

    if row_chunk is None:
        row_chunk = max(1, min(H, 128 // max(1, W)))  # ~128-pixel f32 accumulator

    kernel = _make_fused_block_kernel(H, W, Cin, Cout, row_chunk)

    itemsize = x.dtype.itemsize
    flops = 2 * N * H * W * 9 * (Cin * Cout + Cout * Cout)
    bytes_accessed = (x.size + N * H * W * Cout) * itemsize + (w1.size + w2.size) * 2

    out_nhwc = pl.pallas_call(
        kernel,
        out_shape=jax.ShapeDtypeStruct((N, H, W, Cout), x.dtype),
        grid=(N,),
        in_specs=[
            pl.BlockSpec((None, H, W, Cin), lambda n: (n, 0, 0, 0)),  # x (per image)
            pl.BlockSpec((9, Cin, Cout), lambda n: (0, 0, 0)),        # conv1 weights
            pl.BlockSpec((9, Cout, Cout), lambda n: (0, 0, 0)),       # conv2 weights
            pl.BlockSpec((1, Cout), lambda n: (0, 0)),                # bn1 scale
            pl.BlockSpec((1, Cout), lambda n: (0, 0)),                # bn1 shift
            pl.BlockSpec((1, Cout), lambda n: (0, 0)),                # bn2 scale
            pl.BlockSpec((1, Cout), lambda n: (0, 0)),                # bn2 shift
        ],
        out_specs=pl.BlockSpec((None, H, W, Cout), lambda n: (n, 0, 0, 0)),
        scratch_shapes=[
            pltpu.VMEM((H + 2, W + 2, Cin), jnp.float32),   # padded input tile
            pltpu.VMEM((H + 2, W + 2, Cout), jnp.float32),  # padded conv1 output
        ],
        compiler_params=pltpu.CompilerParams(
            dimension_semantics=("parallel",)),
        cost_estimate=pl.CostEstimate(
            flops=flops, transcendentals=0, bytes_accessed=bytes_accessed),
    )(x, w1, w2, s1, b1, s2, b2)

    return jnp.transpose(out_nhwc, (0, 3, 1, 2))  # -> NCHW


def reference_forward(x_nchw, params, eps=EPS):
    """Pure-JAX f32 reference (eval-mode BN) for numerical verification."""
    x = jnp.transpose(x_nchw, (0, 2, 3, 1))

    def conv(inp, w, b):
        y = jax.lax.conv_general_dilated(
            inp, w, window_strides=(1, 1), padding="SAME",
            dimension_numbers=("NHWC", "HWIO", "NHWC"))
        return y + b

    def bn(y, p):
        return p["gamma"] * (y - p["mean"]) / jnp.sqrt(p["var"] + eps) + p["beta"]

    out = jax.nn.relu(bn(conv(x, params["conv1_w"], params["conv1_b"]), params["bn1"]))
    out = bn(conv(out, params["conv2_w"], params["conv2_b"]), params["bn2"])
    out = jax.nn.relu(out + x)
    return jnp.transpose(out, (0, 3, 1, 2))


def make_params(key, in_planes, planes):
    ks = jax.random.split(key, 12)

    def bn_params(k):
        k0, k1, k2, k3 = jax.random.split(k, 4)
        return dict(
            gamma=1.0 + 0.1 * jax.random.normal(k0, (planes,), jnp.float32),
            beta=0.1 * jax.random.normal(k1, (planes,), jnp.float32),
            mean=0.1 * jax.random.normal(k2, (planes,), jnp.float32),
            var=jnp.abs(jax.random.normal(k3, (planes,), jnp.float32)) + 0.5,
        )

    return dict(
        conv1_w=0.1 * jax.random.normal(ks[0], (3, 3, in_planes, planes), jnp.float32),
        conv1_b=0.1 * jax.random.normal(ks[1], (planes,), jnp.float32),
        bn1=bn_params(ks[2]),
        conv2_w=0.1 * jax.random.normal(ks[3], (3, 3, planes, planes), jnp.float32),
        conv2_b=0.1 * jax.random.normal(ks[4], (planes,), jnp.float32),
        bn2=bn_params(ks[5]),
    )


if __name__ == "__main__":
    key = jax.random.PRNGKey(0)
    kx, kp = jax.random.split(key)

    N, C, H, W = 2, 4, 16, 16
    planes = C  # stride=1, downsample=None -> in_planes must equal planes

    x = jax.random.normal(kx, (N, C, H, W), jnp.float32)
    params = make_params(kp, C, planes)

    out = basic_block_forward(x, params)
    jax.block_until_ready(out)

    ref = reference_forward(x, params)
    assert out.shape == ref.shape == (N, planes, H, W)
    # bf16 MXU inputs with f32 accumulation -> loosened tolerance vs f32 reference.
    assert jnp.allclose(out, ref, atol=3e-2, rtol=3e-2), "mismatch vs reference"

    print("KERNEL_OK")
</pallas_src>

<mosaic_0001>
module attributes {stable_mosaic.version = 11 : i64} {
  func.func @kernel(%arg0: i32, %arg1: memref<1x16x16x4xf32, #tpu.memory_space<vmem>>, %arg2: memref<9x4x4xbf16, #tpu.memory_space<vmem>>, %arg3: memref<9x4x4xbf16, #tpu.memory_space<vmem>>, %arg4: memref<1x4xf32, #tpu.memory_space<vmem>>, %arg5: memref<1x4xf32, #tpu.memory_space<vmem>>, %arg6: memref<1x4xf32, #tpu.memory_space<vmem>>, %arg7: memref<1x4xf32, #tpu.memory_space<vmem>>, %arg8: memref<1x16x16x4xf32, #tpu.memory_space<vmem>>, %arg9: memref<18x18x4xf32, #tpu.memory_space<vmem>>, %arg10: memref<18x18x4xf32, #tpu.memory_space<vmem>>) attributes {dimension_semantics = [#tpu.dimension_semantics<parallel>], iteration_bounds = array<i64: 2>, scalar_prefetch = 0 : i64, scratch_operands = 2 : i64, tpu.core_type = #tpu.core_type<tc>, window_params = [{transform_indices = @transform_0, window_bounds = array<i64: 1, 16, 16, 4>}, {pipeline_mode = #tpu.pipeline_mode<synchronous>, transform_indices = @transform_1, window_bounds = array<i64: 9, 4, 4>}, {pipeline_mode = #tpu.pipeline_mode<synchronous>, transform_indices = @transform_2, window_bounds = array<i64: 9, 4, 4>}, {pipeline_mode = #tpu.pipeline_mode<synchronous>, transform_indices = @transform_3, window_bounds = array<i64: 1, 4>}, {pipeline_mode = #tpu.pipeline_mode<synchronous>, transform_indices = @transform_4, window_bounds = array<i64: 1, 4>}, {pipeline_mode = #tpu.pipeline_mode<synchronous>, transform_indices = @transform_5, window_bounds = array<i64: 1, 4>}, {pipeline_mode = #tpu.pipeline_mode<synchronous>, transform_indices = @transform_6, window_bounds = array<i64: 1, 4>}, {transform_indices = @transform_7, window_bounds = array<i64: 1, 16, 16, 4>}]} {
    %cst = arith.constant 0.000000e+00 : f32
    %0 = vector.broadcast %cst : f32 to vector<18x18x4xf32>
    %c0 = arith.constant 0 : index
    %c0_0 = arith.constant 0 : index
    %c0_1 = arith.constant 0 : index
    %1 = vector.load %arg9[%c0, %c0_0, %c0_1] : memref<18x18x4xf32, #tpu.memory_space<vmem>>, vector<18x18x4xf32>
    tpu.vector_store %arg9[%c0, %c0_0, %c0_1], %0 {strides = array<i32>} : memref<18x18x4xf32, #tpu.memory_space<vmem>>, vector<18x18x4xf32>,
    %c0_2 = arith.constant 0 : index
    %c0_3 = arith.constant 0 : index
    %c0_4 = arith.constant 0 : index
    %c0_5 = arith.constant 0 : index
    %2 = vector.load %arg1[%c0_2, %c0_3, %c0_4, %c0_5] : memref<1x16x16x4xf32, #tpu.memory_space<vmem>>, vector<1x16x16x4xf32>
    %3 = vector.shape_cast %2 : vector<1x16x16x4xf32> to vector<16x16x4xf32>
    %c1 = arith.constant 1 : index
    %c1_6 = arith.constant 1 : index
    %c0_7 = arith.constant 0 : index
    %4 = vector.load %arg9[%c1, %c1_6, %c0_7] : memref<18x18x4xf32, #tpu.memory_space<vmem>>, vector<16x16x4xf32>
    tpu.vector_store %arg9[%c1, %c1_6, %c0_7], %3 {strides = array<i32>} : memref<18x18x4xf32, #tpu.memory_space<vmem>>, vector<16x16x4xf32>,
    %cst_8 = arith.constant 0.000000e+00 : f32
    %5 = vector.broadcast %cst_8 : f32 to vector<18x18x4xf32>
    %c0_9 = arith.constant 0 : index
    %c0_10 = arith.constant 0 : index
    %c0_11 = arith.constant 0 : index
    %6 = vector.load %arg10[%c0_9, %c0_10, %c0_11] : memref<18x18x4xf32, #tpu.memory_space<vmem>>, vector<18x18x4xf32>
    tpu.vector_store %arg10[%c0_9, %c0_10, %c0_11], %5 {strides = array<i32>} : memref<18x18x4xf32, #tpu.memory_space<vmem>>, vector<18x18x4xf32>,
    %cst_12 = arith.constant 0.000000e+00 : f32
    %7 = vector.broadcast %cst_12 : f32 to vector<128x4xf32>
    %c0_13 = arith.constant 0 : index
    %c0_14 = arith.constant 0 : index
    %c0_15 = arith.constant 0 : index
    %8 = vector.load %arg9[%c0_13, %c0_14, %c0_15] : memref<18x18x4xf32, #tpu.memory_space<vmem>>, vector<8x16x4xf32>
    %9 = vector.shape_cast %8 : vector<8x16x4xf32> to vector<128x4xf32>
    %10 = arith.truncf %9 : vector<128x4xf32> to vector<128x4xbf16>
    %c0_16 = arith.constant 0 : index
    %c0_17 = arith.constant 0 : index
    %c0_18 = arith.constant 0 : index
    %11 = vector.load %arg2[%c0_16, %c0_17, %c0_18] : memref<9x4x4xbf16, #tpu.memory_space<vmem>>, vector<1x4x4xbf16>
    %12 = vector.shape_cast %11 : vector<1x4x4xbf16> to vector<4x4xbf16>
    %cst_19 = arith.constant dense<0.000000e+00> : vector<128x4xf32>
    %13 = tpu.matmul %10, %12, %cst_19 {dimension_numbers = #tpu.dot_dimension_numbers<[1], [0], [0], [1], [0, 0, 1, 1], [], []>} : vector<128x4xbf16>, vector<4x4xbf16>, vector<128x4xf32> -> vector<128x4xf32>
    %14 = arith.addf %7, %13 : vector<128x4xf32>
    %c0_20 = arith.constant 0 : index
    %c1_21 = arith.constant 1 : index
    %c0_22 = arith.constant 0 : index
    %15 = vector.load %arg9[%c0_20, %c1_21, %c0_22] : memref<18x18x4xf32, #tpu.memory_space<vmem>>, vector<8x16x4xf32>
    %16 = vector.shape_cast %15 : vector<8x16x4xf32> to vector<128x4xf32>
    %17 = arith.truncf %16 : vector<128x4xf32> to vector<128x4xbf16>
    %c1_23 = arith.constant 1 : index
    %c0_24 = arith.constant 0 : index
    %c0_25 = arith.constant 0 : index
    %18 = vector.load %arg2[%c1_23, %c0_24, %c0_25] : memref<9x4x4xbf16, #tpu.memory_space<vmem>>, vector<1x4x4xbf16>
    %19 = vector.shape_cast %18 : vector<1x4x4xbf16> to vector<4x4xbf16>
    %cst_26 = arith.constant dense<0.000000e+00> : vector<128x4xf32>
    %20 = tpu.matmul %17, %19, %cst_26 {dimension_numbers = #tpu.dot_dimension_numbers<[1], [0], [0], [1], [0, 0, 1, 1], [], []>} : vector<128x4xbf16>, vector<4x4xbf16>, vector<128x4xf32> -> vector<128x4xf32>
    %21 = arith.addf %14, %20 : vector<128x4xf32>
    %c0_27 = arith.constant 0 : index
    %c2 = arith.constant 2 : index
    %c0_28 = arith.constant 0 : index
    %22 = vector.load %arg9[%c0_27, %c2, %c0_28] : memref<18x18x4xf32, #tpu.memory_space<vmem>>, vector<8x16x4xf32>
    %23 = vector.shape_cast %22 : vector<8x16x4xf32> to vector<128x4xf32>
    %24 = arith.truncf %23 : vector<128x4xf32> to vector<128x4xbf16>
    %c2_29 = arith.constant 2 : index
    %c0_30 = arith.constant 0 : index
    %c0_31 = arith.constant 0 : index
    %25 = vector.load %arg2[%c2_29, %c0_30, %c0_31] : memref<9x4x4xbf16, #tpu.memory_space<vmem>>, vector<1x4x4xbf16>
    %26 = vector.shape_cast %25 : vector<1x4x4xbf16> to vector<4x4xbf16>
    %cst_32 = arith.constant dense<0.000000e+00> : vector<128x4xf32>
    %27 = tpu.matmul %24, %26, %cst_32 {dimension_numbers = #tpu.dot_dimension_numbers<[1], [0], [0], [1], [0, 0, 1, 1], [], []>} : vector<128x4xbf16>, vector<4x4xbf16>, vector<128x4xf32> -> vector<128x4xf32>
    %28 = arith.addf %21, %27 : vector<128x4xf32>
    %c1_33 = arith.constant 1 : index
    %c0_34 = arith.constant 0 : index
    %c0_35 = arith.constant 0 : index
    %29 = vector.load %arg9[%c1_33, %c0_34, %c0_35] : memref<18x18x4xf32, #tpu.memory_space<vmem>>, vector<8x16x4xf32>
    %30 = vector.shape_cast %29 : vector<8x16x4xf32> to vector<128x4xf32>
    %31 = arith.truncf %30 : vector<128x4xf32> to vector<128x4xbf16>
    %c3 = arith.constant 3 : index
    %c0_36 = arith.constant 0 : index
    %c0_37 = arith.constant 0 : index
    %32 = vector.load %arg2[%c3, %c0_36, %c0_37] : memref<9x4x4xbf16, #tpu.memory_space<vmem>>, vector<1x4x4xbf16>
    %33 = vector.shape_cast %32 : vector<1x4x4xbf16> to vector<4x4xbf16>
    %cst_38 = arith.constant dense<0.000000e+00> : vector<128x4xf32>
    %34 = tpu.matmul %31, %33, %cst_38 {dimension_numbers = #tpu.dot_dimension_numbers<[1], [0], [0], [1], [0, 0, 1, 1], [], []>} : vector<128x4xbf16>, vector<4x4xbf16>, vector<128x4xf32> -> vector<128x4xf32>
    %35 = arith.addf %28, %34 : vector<128x4xf32>
    %c1_39 = arith.constant 1 : index
    %c1_40 = arith.constant 1 : index
    %c0_41 = arith.constant 0 : index
    %36 = vector.load %arg9[%c1_39, %c1_40, %c0_41] : memref<18x18x4xf32, #tpu.memory_space<vmem>>, vector<8x16x4xf32>
    %37 = vector.shape_cast %36 : vector<8x16x4xf32> to vector<128x4xf32>
    %38 = arith.truncf %37 : vector<128x4xf32> to vector<128x4xbf16>
    %c4 = arith.constant 4 : index
    %c0_42 = arith.constant 0 : index
    %c0_43 = arith.constant 0 : index
    %39 = vector.load %arg2[%c4, %c0_42, %c0_43] : memref<9x4x4xbf16, #tpu.memory_space<vmem>>, vector<1x4x4xbf16>
    %40 = vector.shape_cast %39 : vector<1x4x4xbf16> to vector<4x4xbf16>
    %cst_44 = arith.constant dense<0.000000e+00> : vector<128x4xf32>
    %41 = tpu.matmul %38, %40, %cst_44 {dimension_numbers = #tpu.dot_dimension_numbers<[1], [0], [0], [1], [0, 0, 1, 1], [], []>} : vector<128x4xbf16>, vector<4x4xbf16>, vector<128x4xf32> -> vector<128x4xf32>
    %42 = arith.addf %35, %41 : vector<128x4xf32>
    %c1_45 = arith.constant 1 : index
    %c2_46 = arith.constant 2 : index
    %c0_47 = arith.constant 0 : index
    %43 = vector.load %arg9[%c1_45, %c2_46, %c0_47] : memref<18x18x4xf32, #tpu.memory_space<vmem>>, vector<8x16x4xf32>
    %44 = vector.shape_cast %43 : vector<8x16x4xf32> to vector<128x4xf32>
    %45 = arith.truncf %44 : vector<128x4xf32> to vector<128x4xbf16>
    %c5 = arith.constant 5 : index
    %c0_48 = arith.constant 0 : index
    %c0_49 = arith.constant 0 : index
    %46 = vector.load %arg2[%c5, %c0_48, %c0_49] : memref<9x4x4xbf16, #tpu.memory_space<vmem>>, vector<1x4x4xbf16>
    %47 = vector.shape_cast %46 : vector<1x4x4xbf16> to vector<4x4xbf16>
    %cst_50 = arith.constant dense<0.000000e+00> : vector<128x4xf32>
    %48 = tpu.matmul %45, %47, %cst_50 {dimension_numbers = #tpu.dot_dimension_numbers<[1], [0], [0], [1], [0, 0, 1, 1], [], []>} : vector<128x4xbf16>, vector<4x4xbf16>, vector<128x4xf32> -> vector<128x4xf32>
    %49 = arith.addf %42, %48 : vector<128x4xf32>
    %c2_51 = arith.constant 2 : index
    %c0_52 = arith.constant 0 : index
    %c0_53 = arith.constant 0 : index
    %50 = vector.load %arg9[%c2_51, %c0_52, %c0_53] : memref<18x18x4xf32, #tpu.memory_space<vmem>>, vector<8x16x4xf32>
    %51 = vector.shape_cast %50 : vector<8x16x4xf32> to vector<128x4xf32>
    %52 = arith.truncf %51 : vector<128x4xf32> to vector<128x4xbf16>
    %c6 = arith.constant 6 : index
    %c0_54 = arith.constant 0 : index
    %c0_55 = arith.constant 0 : index
    %53 = vector.load %arg2[%c6, %c0_54, %c0_55] : memref<9x4x4xbf16, #tpu.memory_space<vmem>>, vector<1x4x4xbf16>
    %54 = vector.shape_cast %53 : vector<1x4x4xbf16> to vector<4x4xbf16>
    %cst_56 = arith.constant dense<0.000000e+00> : vector<128x4xf32>
    %55 = tpu.matmul %52, %54, %cst_56 {dimension_numbers = #tpu.dot_dimension_numbers<[1], [0], [0], [1], [0, 0, 1, 1], [], []>} : vector<128x4xbf16>, vector<4x4xbf16>, vector<128x4xf32> -> vector<128x4xf32>
    %56 = arith.addf %49, %55 : vector<128x4xf32>
    %c2_57 = arith.constant 2 : index
    %c1_58 = arith.constant 1 : index
    %c0_59 = arith.constant 0 : index
    %57 = vector.load %arg9[%c2_57, %c1_58, %c0_59] : memref<18x18x4xf32, #tpu.memory_space<vmem>>, vector<8x16x4xf32>
    %58 = vector.shape_cast %57 : vector<8x16x4xf32> to vector<128x4xf32>
    %59 = arith.truncf %58 : vector<128x4xf32> to vector<128x4xbf16>
    %c7 = arith.constant 7 : index
    %c0_60 = arith.constant 0 : index
    %c0_61 = arith.constant 0 : index
    %60 = vector.load %arg2[%c7, %c0_60, %c0_61] : memref<9x4x4xbf16, #tpu.memory_space<vmem>>, vector<1x4x4xbf16>
    %61 = vector.shape_cast %60 : vector<1x4x4xbf16> to vector<4x4xbf16>
    %cst_62 = arith.constant dense<0.000000e+00> : vector<128x4xf32>
    %62 = tpu.matmul %59, %61, %cst_62 {dimension_numbers = #tpu.dot_dimension_numbers<[1], [0], [0], [1], [0, 0, 1, 1], [], []>} : vector<128x4xbf16>, vector<4x4xbf16>, vector<128x4xf32> -> vector<128x4xf32>
    %63 = arith.addf %56, %62 : vector<128x4xf32>
    %c2_63 = arith.constant 2 : index
    %c2_64 = arith.constant 2 : index
    %c0_65 = arith.constant 0 : index
    %64 = vector.load %arg9[%c2_63, %c2_64, %c0_65] : memref<18x18x4xf32, #tpu.memory_space<vmem>>, vector<8x16x4xf32>
    %65 = vector.shape_cast %64 : vector<8x16x4xf32> to vector<128x4xf32>
    %66 = arith.truncf %65 : vector<128x4xf32> to vector<128x4xbf16>
    %c8 = arith.constant 8 : index
    %c0_66 = arith.constant 0 : index
    %c0_67 = arith.constant 0 : index
    %67 = vector.load %arg2[%c8, %c0_66, %c0_67] : memref<9x4x4xbf16, #tpu.memory_space<vmem>>, vector<1x4x4xbf16>
    %68 = vector.shape_cast %67 : vector<1x4x4xbf16> to vector<4x4xbf16>
    %cst_68 = arith.constant dense<0.000000e+00> : vector<128x4xf32>
    %69 = tpu.matmul %66, %68, %cst_68 {dimension_numbers = #tpu.dot_dimension_numbers<[1], [0], [0], [1], [0, 0, 1, 1], [], []>} : vector<128x4xbf16>, vector<4x4xbf16>, vector<128x4xf32> -> vector<128x4xf32>
    %70 = arith.addf %63, %69 : vector<128x4xf32>
    %c0_69 = arith.constant 0 : index
    %c0_70 = arith.constant 0 : index
    %71 = vector.load %arg4[%c0_69, %c0_70] : memref<1x4xf32, #tpu.memory_space<vmem>>, vector<1x4xf32>
    %72 = vector.broadcast %71 : vector<1x4xf32> to vector<128x4xf32>
    %73 = arith.mulf %70, %72 : vector<128x4xf32>
    %c0_71 = arith.constant 0 : index
    %c0_72 = arith.constant 0 : index
    %74 = vector.load %arg5[%c0_71, %c0_72] : memref<1x4xf32, #tpu.memory_space<vmem>>, vector<1x4xf32>
    %75 = vector.broadcast %74 : vector<1x4xf32> to vector<128x4xf32>
    %76 = arith.addf %73, %75 : vector<128x4xf32>
    %cst_73 = arith.constant 0.000000e+00 : f32
    %77 = vector.broadcast %cst_73 : f32 to vector<128x4xf32>
    %78 = arith.maximumf %76, %77 : vector<128x4xf32>
    %79 = vector.shape_cast %78 : vector<128x4xf32> to vector<8x16x4xf32>
    %c1_74 = arith.constant 1 : index
    %c1_75 = arith.constant 1 : index
    %c0_76 = arith.constant 0 : index
    %80 = vector.load %arg10[%c1_74, %c1_75, %c0_76] : memref<18x18x4xf32, #tpu.memory_space<vmem>>, vector<8x16x4xf32>
    tpu.vector_store %arg10[%c1_74, %c1_75, %c0_76], %79 {strides = array<i32>} : memref<18x18x4xf32, #tpu.memory_space<vmem>>, vector<8x16x4xf32>,
    %cst_77 = arith.constant 0.000000e+00 : f32
    %81 = vector.broadcast %cst_77 : f32 to vector<128x4xf32>
    %c8_78 = arith.constant 8 : index
    %c0_79 = arith.constant 0 : index
    %c0_80 = arith.constant 0 : index
    %82 = vector.load %arg9[%c8_78, %c0_79, %c0_80] : memref<18x18x4xf32, #tpu.memory_space<vmem>>, vector<8x16x4xf32>
    %83 = vector.shape_cast %82 : vector<8x16x4xf32> to vector<128x4xf32>
    %84 = arith.truncf %83 : vector<128x4xf32> to vector<128x4xbf16>
    %c0_81 = arith.constant 0 : index
    %c0_82 = arith.constant 0 : index
    %c0_83 = arith.constant 0 : index
    %85 = vector.load %arg2[%c0_81, %c0_82, %c0_83] : memref<9x4x4xbf16, #tpu.memory_space<vmem>>, vector<1x4x4xbf16>
    %86 = vector.shape_cast %85 : vector<1x4x4xbf16> to vector<4x4xbf16>
    %cst_84 = arith.constant dense<0.000000e+00> : vector<128x4xf32>
    %87 = tpu.matmul %84, %86, %cst_84 {dimension_numbers = #tpu.dot_dimension_numbers<[1], [0], [0], [1], [0, 0, 1, 1], [], []>} : vector<128x4xbf16>, vector<4x4xbf16>, vector<128x4xf32> -> vector<128x4xf32>
    %88 = arith.addf %81, %87 : vector<128x4xf32>
    %c8_85 = arith.constant 8 : index
    %c1_86 = arith.constant 1 : index
    %c0_87 = arith.constant 0 : index
    %89 = vector.load %arg9[%c8_85, %c1_86, %c0_87] : memref<18x18x4xf32, #tpu.memory_space<vmem>>, vector<8x16x4xf32>
    %90 = vector.shape_cast %89 : vector<8x16x4xf32> to vector<128x4xf32>
    %91 = arith.truncf %90 : vector<128x4xf32> to vector<128x4xbf16>
    %c1_88 = arith.constant 1 : index
    %c0_89 = arith.constant 0 : index
    %c0_90 = arith.constant 0 : index
    %92 = vector.load %arg2[%c1_88, %c0_89, %c0_90] : memref<9x4x4xbf16, #tpu.memory_space<vmem>>, vector<1x4x4xbf16>
    %93 = vector.shape_cast %92 : vector<1x4x4xbf16> to vector<4x4xbf16>
    %cst_91 = arith.constant dense<0.000000e+00> : vector<128x4xf32>
    %94 = tpu.matmul %91, %93, %cst_91 {dimension_numbers = #tpu.dot_dimension_numbers<[1], [0], [0], [1], [0, 0, 1, 1], [], []>} : vector<128x4xbf16>, vector<4x4xbf16>, vector<128x4xf32> -> vector<128x4xf32>
    %95 = arith.addf %88, %94 : vector<128x4xf32>
    %c8_92 = arith.constant 8 : index
    %c2_93 = arith.constant 2 : index
    %c0_94 = arith.constant 0 : index
    %96 = vector.load %arg9[%c8_92, %c2_93, %c0_94] : memref<18x18x4xf32, #tpu.memory_space<vmem>>, vector<8x16x4xf32>
    %97 = vector.shape_cast %96 : vector<8x16x4xf32> to vector<128x4xf32>
    %98 = arith.truncf %97 : vector<128x4xf32> to vector<128x4xbf16>
    %c2_95 = arith.constant 2 : index
    %c0_96 = arith.constant 0 : index
    %c0_97 = arith.constant 0 : index
    %99 = vector.load %arg2[%c2_95, %c0_96, %c0_97] : memref<9x4x4xbf16, #tpu.memory_space<vmem>>, vector<1x4x4xbf16>
    %100 = vector.shape_cast %99 : vector<1x4x4xbf16> to vector<4x4xbf16>
    %cst_98 = arith.constant dense<0.000000e+00> : vector<128x4xf32>
    %101 = tpu.matmul %98, %100, %cst_98 {dimension_numbers = #tpu.dot_dimension_numbers<[1], [0], [0], [1], [0, 0, 1, 1], [], []>} : vector<128x4xbf16>, vector<4x4xbf16>, vector<128x4xf32> -> vector<128x4xf32>
    %102 = arith.addf %95, %101 : vector<128x4xf32>
    %c9 = arith.constant 9 : index
    %c0_99 = arith.constant 0 : index
    %c0_100 = arith.constant 0 : index
    %103 = vector.load %arg9[%c9, %c0_99, %c0_100] : memref<18x18x4xf32, #tpu.memory_space<vmem>>, vector<8x16x4xf32>
    %104 = vector.shape_cast %103 : vector<8x16x4xf32> to vector<128x4xf32>
    %105 = arith.truncf %104 : vector<128x4xf32> to vector<128x4xbf16>
    %c3_101 = arith.constant 3 : index
    %c0_102 = arith.constant 0 : index
    %c0_103 = arith.constant 0 : index
    %106 = vector.load %arg2[%c3_101, %c0_102, %c0_103] : memref<9x4x4xbf16, #tpu.memory_space<vmem>>, vector<1x4x4xbf16>
    %107 = vector.shape_cast %106 : vector<1x4x4xbf16> to vector<4x4xbf16>
    %cst_104 = arith.constant dense<0.000000e+00> : vector<128x4xf32>
    %108 = tpu.matmul %105, %107, %cst_104 {dimension_numbers = #tpu.dot_dimension_numbers<[1], [0], [0], [1], [0, 0, 1, 1], [], []>} : vector<128x4xbf16>, vector<4x4xbf16>, vector<128x4xf32> -> vector<128x4xf32>
    %109 = arith.addf %102, %108 : vector<128x4xf32>
    %c9_105 = arith.constant 9 : index
    %c1_106 = arith.constant 1 : index
    %c0_107 = arith.constant 0 : index
    %110 = vector.load %arg9[%c9_105, %c1_106, %c0_107] : memref<18x18x4xf32, #tpu.memory_space<vmem>>, vector<8x16x4xf32>
    %111 = vector.shape_cast %110 : vector<8x16x4xf32> to vector<128x4xf32>
    %112 = arith.truncf %111 : vector<128x4xf32> to vector<128x4xbf16>
    %c4_108 = arith.constant 4 : index
    %c0_109 = arith.constant 0 : index
    %c0_110 = arith.constant 0 : index
    %113 = vector.load %arg2[%c4_108, %c0_109, %c0_110] : memref<9x4x4xbf16, #tpu.memory_space<vmem>>, vector<1x4x4xbf16>
    %114 = vector.shape_cast %113 : vector<1x4x4xbf16> to vector<4x4xbf16>
    %cst_111 = arith.constant dense<0.000000e+00> : vector<128x4xf32>
    %115 = tpu.matmul %112, %114, %cst_111 {dimension_numbers = #tpu.dot_dimension_numbers<[1], [0], [0], [1], [0, 0, 1, 1], [], []>} : vector<128x4xbf16>, vector<4x4xbf16>, vector<128x4xf32> -> vector<128x4xf32>
    %116 = arith.addf %109, %115 : vector<128x4xf32>
    %c9_112 = arith.constant 9 : index
    %c2_113 = arith.constant 2 : index
    %c0_114 = arith.constant 0 : index
    %117 = vector.load %arg9[%c9_112, %c2_113, %c0_114] : memref<18x18x4xf32, #tpu.memory_space<vmem>>, vector<8x16x4xf32>
    %118 = vector.shape_cast %117 : vector<8x16x4xf32> to vector<128x4xf32>
    %119 = arith.truncf %118 : vector<128x4xf32> to vector<128x4xbf16>
    %c5_115 = arith.constant 5 : index
    %c0_116 = arith.constant 0 : index
    %c0_117 = arith.constant 0 : index
    %120 = vector.load %arg2[%c5_115, %c0_116, %c0_117] : memref<9x4x4xbf16, #tpu.memory_space<vmem>>, vector<1x4x4xbf16>
    %121 = vector.shape_cast %120 : vector<1x4x4xbf16> to vector<4x4xbf16>
    %cst_118 = arith.constant dense<0.000000e+00> : vector<128x4xf32>
    %122 = tpu.matmul %119, %121, %cst_118 {dimension_numbers = #tpu.dot_dimension_numbers<[1], [0], [0], [1], [0, 0, 1, 1], [], []>} : vector<128x4xbf16>, vector<4x4xbf16>, vector<128x4xf32> -> vector<128x4xf32>
    %123 = arith.addf %116, %122 : vector<128x4xf32>
    %c10 = arith.constant 10 : index
    %c0_119 = arith.constant 0 : index
    %c0_120 = arith.constant 0 : index
    %124 = vector.load %arg9[%c10, %c0_119, %c0_120] : memref<18x18x4xf32, #tpu.memory_space<vmem>>, vector<8x16x4xf32>
    %125 = vector.shape_cast %124 : vector<8x16x4xf32> to vector<128x4xf32>
    %126 = arith.truncf %125 : vector<128x4xf32> to vector<128x4xbf16>
    %c6_121 = arith.constant 6 : index
    %c0_122 = arith.constant 0 : index
    %c0_123 = arith.constant 0 : index
    %127 = vector.load %arg2[%c6_121, %c0_122, %c0_123] : memref<9x4x4xbf16, #tpu.memory_space<vmem>>, vector<1x4x4xbf16>
    %128 = vector.shape_cast %127 : vector<1x4x4xbf16> to vector<4x4xbf16>
    %cst_124 = arith.constant dense<0.000000e+00> : vector<128x4xf32>
    %129 = tpu.matmul %126, %128, %cst_124 {dimension_numbers = #tpu.dot_dimension_numbers<[1], [0], [0], [1], [0, 0, 1, 1], [], []>} : vector<128x4xbf16>, vector<4x4xbf16>, vector<128x4xf32> -> vector<128x4xf32>
    %130 = arith.addf %123, %129 : vector<128x4xf32>
    %c10_125 = arith.constant 10 : index
    %c1_126 = arith.constant 1 : index
    %c0_127 = arith.constant 0 : index
    %131 = vector.load %arg9[%c10_125, %c1_126, %c0_127] : memref<18x18x4xf32, #tpu.memory_space<vmem>>, vector<8x16x4xf32>
    %132 = vector.shape_cast %131 : vector<8x16x4xf32> to vector<128x4xf32>
    %133 = arith.truncf %132 : vector<128x4xf32> to vector<128x4xbf16>
    %c7_128 = arith.constant 7 : index
    %c0_129 = arith.constant 0 : index
    %c0_130 = arith.constant 0 : index
    %134 = vector.load %arg2[%c7_128, %c0_129, %c0_130] : memref<9x4x4xbf16, #tpu.memory_space<vmem>>, vector<1x4x4xbf16>
    %135 = vector.shape_cast %134 : vector<1x4x4xbf16> to vector<4x4xbf16>
    %cst_131 = arith.constant dense<0.000000e+00> : vector<128x4xf32>
    %136 = tpu.matmul %133, %135, %cst_131 {dimension_numbers = #tpu.dot_dimension_numbers<[1], [0], [0], [1], [0, 0, 1, 1], [], []>} : vector<128x4xbf16>, vector<4x4xbf16>, vector<128x4xf32> -> vector<128x4xf32>
    %137 = arith.addf %130, %136 : vector<128x4xf32>
    %c10_132 = arith.constant 10 : index
    %c2_133 = arith.constant 2 : index
    %c0_134 = arith.constant 0 : index
    %138 = vector.load %arg9[%c10_132, %c2_133, %c0_134] : memref<18x18x4xf32, #tpu.memory_space<vmem>>, vector<8x16x4xf32>
    %139 = vector.shape_cast %138 : vector<8x16x4xf32> to vector<128x4xf32>
    %140 = arith.truncf %139 : vector<128x4xf32> to vector<128x4xbf16>
    %c8_135 = arith.constant 8 : index
    %c0_136 = arith.constant 0 : index
    %c0_137 = arith.constant 0 : index
    %141 = vector.load %arg2[%c8_135, %c0_136, %c0_137] : memref<9x4x4xbf16, #tpu.memory_space<vmem>>, vector<1x4x4xbf16>
    %142 = vector.shape_cast %141 : vector<1x4x4xbf16> to vector<4x4xbf16>
    %cst_138 = arith.constant dense<0.000000e+00> : vector<128x4xf32>
    %143 = tpu.matmul %140, %142, %cst_138 {dimension_numbers = #tpu.dot_dimension_numbers<[1], [0], [0], [1], [0, 0, 1, 1], [], []>} : vector<128x4xbf16>, vector<4x4xbf16>, vector<128x4xf32> -> vector<128x4xf32>
    %144 = arith.addf %137, %143 : vector<128x4xf32>
    %c0_139 = arith.constant 0 : index
    %c0_140 = arith.constant 0 : index
    %145 = vector.load %arg4[%c0_139, %c0_140] : memref<1x4xf32, #tpu.memory_space<vmem>>, vector<1x4xf32>
    %146 = vector.broadcast %145 : vector<1x4xf32> to vector<128x4xf32>
    %147 = arith.mulf %144, %146 : vector<128x4xf32>
    %c0_141 = arith.constant 0 : index
    %c0_142 = arith.constant 0 : index
    %148 = vector.load %arg5[%c0_141, %c0_142] : memref<1x4xf32, #tpu.memory_space<vmem>>, vector<1x4xf32>
    %149 = vector.broadcast %148 : vector<1x4xf32> to vector<128x4xf32>
    %150 = arith.addf %147, %149 : vector<128x4xf32>
    %cst_143 = arith.constant 0.000000e+00 : f32
    %151 = vector.broadcast %cst_143 : f32 to vector<128x4xf32>
    %152 = arith.maximumf %150, %151 : vector<128x4xf32>
    %153 = vector.shape_cast %152 : vector<128x4xf32> to vector<8x16x4xf32>
    %c9_144 = arith.constant 9 : index
    %c1_145 = arith.constant 1 : index
    %c0_146 = arith.constant 0 : index
    %154 = vector.load %arg10[%c9_144, %c1_145, %c0_146] : memref<18x18x4xf32, #tpu.memory_space<vmem>>, vector<8x16x4xf32>
    tpu.vector_store %arg10[%c9_144, %c1_145, %c0_146], %153 {strides = array<i32>} : memref<18x18x4xf32, #tpu.memory_space<vmem>>, vector<8x16x4xf32>,
    %cst_147 = arith.constant 0.000000e+00 : f32
    %155 = vector.broadcast %cst_147 : f32 to vector<128x4xf32>
    %c0_148 = arith.constant 0 : index
    %c0_149 = arith.constant 0 : index
    %c0_150 = arith.constant 0 : index
    %156 = vector.load %arg10[%c0_148, %c0_149, %c0_150] : memref<18x18x4xf32, #tpu.memory_space<vmem>>, vector<8x16x4xf32>
    %157 = vector.shape_cast %156 : vector<8x16x4xf32> to vector<128x4xf32>
    %158 = arith.truncf %157 : vector<128x4xf32> to vector<128x4xbf16>
    %c0_151 = arith.constant 0 : index
    %c0_152 = arith.constant 0 : index
    %c0_153 = arith.constant 0 : index
    %159 = vector.load %arg3[%c0_151, %c0_152, %c0_153] : memref<9x4x4xbf16, #tpu.memory_space<vmem>>, vector<1x4x4xbf16>
    %160 = vector.shape_cast %159 : vector<1x4x4xbf16> to vector<4x4xbf16>
    %cst_154 = arith.constant dense<0.000000e+00> : vector<128x4xf32>
    %161 = tpu.matmul %158, %160, %cst_154 {dimension_numbers = #tpu.dot_dimension_numbers<[1], [0], [0], [1], [0, 0, 1, 1], [], []>} : vector<128x4xbf16>, vector<4x4xbf16>, vector<128x4xf32> -> vector<128x4xf32>
    %162 = arith.addf %155, %161 : vector<128x4xf32>
    %c0_155 = arith.constant 0 : index
    %c1_156 = arith.constant 1 : index
    %c0_157 = arith.constant 0 : index
    %163 = vector.load %arg10[%c0_155, %c1_156, %c0_157] : memref<18x18x4xf32, #tpu.memory_space<vmem>>, vector<8x16x4xf32>
    %164 = vector.shape_cast %163 : vector<8x16x4xf32> to vector<128x4xf32>
    %165 = arith.truncf %164 : vector<128x4xf32> to vector<128x4xbf16>
    %c1_158 = arith.constant 1 : index
    %c0_159 = arith.constant 0 : index
    %c0_160 = arith.constant 0 : index
    %166 = vector.load %arg3[%c1_158, %c0_159, %c0_160] : memref<9x4x4xbf16, #tpu.memory_space<vmem>>, vector<1x4x4xbf16>
    %167 = vector.shape_cast %166 : vector<1x4x4xbf16> to vector<4x4xbf16>
    %cst_161 = arith.constant dense<0.000000e+00> : vector<128x4xf32>
    %168 = tpu.matmul %165, %167, %cst_161 {dimension_numbers = #tpu.dot_dimension_numbers<[1], [0], [0], [1], [0, 0, 1, 1], [], []>} : vector<128x4xbf16>, vector<4x4xbf16>, vector<128x4xf32> -> vector<128x4xf32>
    %169 = arith.addf %162, %168 : vector<128x4xf32>
    %c0_162 = arith.constant 0 : index
    %c2_163 = arith.constant 2 : index
    %c0_164 = arith.constant 0 : index
    %170 = vector.load %arg10[%c0_162, %c2_163, %c0_164] : memref<18x18x4xf32, #tpu.memory_space<vmem>>, vector<8x16x4xf32>
    %171 = vector.shape_cast %170 : vector<8x16x4xf32> to vector<128x4xf32>
    %172 = arith.truncf %171 : vector<128x4xf32> to vector<128x4xbf16>
    %c2_165 = arith.constant 2 : index
    %c0_166 = arith.constant 0 : index
    %c0_167 = arith.constant 0 : index
    %173 = vector.load %arg3[%c2_165, %c0_166, %c0_167] : memref<9x4x4xbf16, #tpu.memory_space<vmem>>, vector<1x4x4xbf16>
    %174 = vector.shape_cast %173 : vector<1x4x4xbf16> to vector<4x4xbf16>
    %cst_168 = arith.constant dense<0.000000e+00> : vector<128x4xf32>
    %175 = tpu.matmul %172, %174, %cst_168 {dimension_numbers = #tpu.dot_dimension_numbers<[1], [0], [0], [1], [0, 0, 1, 1], [], []>} : vector<128x4xbf16>, vector<4x4xbf16>, vector<128x4xf32> -> vector<128x4xf32>
    %176 = arith.addf %169, %175 : vector<128x4xf32>
    %c1_169 = arith.constant 1 : index
    %c0_170 = arith.constant 0 : index
    %c0_171 = arith.constant 0 : index
    %177 = vector.load %arg10[%c1_169, %c0_170, %c0_171] : memref<18x18x4xf32, #tpu.memory_space<vmem>>, vector<8x16x4xf32>
    %178 = vector.shape_cast %177 : vector<8x16x4xf32> to vector<128x4xf32>
    %179 = arith.truncf %178 : vector<128x4xf32> to vector<128x4xbf16>
    %c3_172 = arith.constant 3 : index
    %c0_173 = arith.constant 0 : index
    %c0_174 = arith.constant 0 : index
    %180 = vector.load %arg3[%c3_172, %c0_173, %c0_174] : memref<9x4x4xbf16, #tpu.memory_space<vmem>>, vector<1x4x4xbf16>
    %181 = vector.shape_cast %180 : vector<1x4x4xbf16> to vector<4x4xbf16>
    %cst_175 = arith.constant dense<0.000000e+00> : vector<128x4xf32>
    %182 = tpu.matmul %179, %181, %cst_175 {dimension_numbers = #tpu.dot_dimension_numbers<[1], [0], [0], [1], [0, 0, 1, 1], [], []>} : vector<128x4xbf16>, vector<4x4xbf16>, vector<128x4xf32> -> vector<128x4xf32>
    %183 = arith.addf %176, %182 : vector<128x4xf32>
    %c1_176 = arith.constant 1 : index
    %c1_177 = arith.constant 1 : index
    %c0_178 = arith.constant 0 : index
    %184 = vector.load %arg10[%c1_176, %c1_177, %c0_178] : memref<18x18x4xf32, #tpu.memory_space<vmem>>, vector<8x16x4xf32>
    %185 = vector.shape_cast %184 : vector<8x16x4xf32> to vector<128x4xf32>
    %186 = arith.truncf %185 : vector<128x4xf32> to vector<128x4xbf16>
    %c4_179 = arith.constant 4 : index
    %c0_180 = arith.constant 0 : index
    %c0_181 = arith.constant 0 : index
    %187 = vector.load %arg3[%c4_179, %c0_180, %c0_181] : memref<9x4x4xbf16, #tpu.memory_space<vmem>>, vector<1x4x4xbf16>
    %188 = vector.shape_cast %187 : vector<1x4x4xbf16> to vector<4x4xbf16>
    %cst_182 = arith.constant dense<0.000000e+00> : vector<128x4xf32>
    %189 = tpu.matmul %186, %188, %cst_182 {dimension_numbers = #tpu.dot_dimension_numbers<[1], [0], [0], [1], [0, 0, 1, 1], [], []>} : vector<128x4xbf16>, vector<4x4xbf16>, vector<128x4xf32> -> vector<128x4xf32>
    %190 = arith.addf %183, %189 : vector<128x4xf32>
    %c1_183 = arith.constant 1 : index
    %c2_184 = arith.constant 2 : index
    %c0_185 = arith.constant 0 : index
    %191 = vector.load %arg10[%c1_183, %c2_184, %c0_185] : memref<18x18x4xf32, #tpu.memory_space<vmem>>, vector<8x16x4xf32>
    %192 = vector.shape_cast %191 : vector<8x16x4xf32> to vector<128x4xf32>
    %193 = arith.truncf %192 : vector<128x4xf32> to vector<128x4xbf16>
    %c5_186 = arith.constant 5 : index
    %c0_187 = arith.constant 0 : index
    %c0_188 = arith.constant 0 : index
    %194 = vector.load %arg3[%c5_186, %c0_187, %c0_188] : memref<9x4x4xbf16, #tpu.memory_space<vmem>>, vector<1x4x4xbf16>
    %195 = vector.shape_cast %194 : vector<1x4x4xbf16> to vector<4x4xbf16>
    %cst_189 = arith.constant dense<0.000000e+00> : vector<128x4xf32>
    %196 = tpu.matmul %193, %195, %cst_189 {dimension_numbers = #tpu.dot_dimension_numbers<[1], [0], [0], [1], [0, 0, 1, 1], [], []>} : vector<128x4xbf16>, vector<4x4xbf16>, vector<128x4xf32> -> vector<128x4xf32>
    %197 = arith.addf %190, %196 : vector<128x4xf32>
    %c2_190 = arith.constant 2 : index
    %c0_191 = arith.constant 0 : index
    %c0_192 = arith.constant 0 : index
    %198 = vector.load %arg10[%c2_190, %c0_191, %c0_192] : memref<18x18x4xf32, #tpu.memory_space<vmem>>, vector<8x16x4xf32>
    %199 = vector.shape_cast %198 : vector<8x16x4xf32> to vector<128x4xf32>
    %200 = arith.truncf %199 : vector<128x4xf32> to vector<128x4xbf16>
    %c6_193 = arith.constant 6 : index
    %c0_194 = arith.constant 0 : index
    %c0_195 = arith.constant 0 : index
    %201 = vector.load %arg3[%c6_193, %c0_194, %c0_195] : memref<9x4x4xbf16, #tpu.memory_space<vmem>>, vector<1x4x4xbf16>
    %202 = vector.shape_cast %201 : vector<1x4x4xbf16> to vector<4x4xbf16>
    %cst_196 = arith.constant dense<0.000000e+00> : vector<128x4xf32>
    %203 = tpu.matmul %200, %202, %cst_196 {dimension_numbers = #tpu.dot_dimension_numbers<[1], [0], [0], [1], [0, 0, 1, 1], [], []>} : vector<128x4xbf16>, vector<4x4xbf16>, vector<128x4xf32> -> vector<128x4xf32>
    %204 = arith.addf %197, %203 : vector<128x4xf32>
    %c2_197 = arith.constant 2 : index
    %c1_198 = arith.constant 1 : index
    %c0_199 = arith.constant 0 : index
    %205 = vector.load %arg10[%c2_197, %c1_198, %c0_199] : memref<18x18x4xf32, #tpu.memory_space<vmem>>, vector<8x16x4xf32>
    %206 = vector.shape_cast %205 : vector<8x16x4xf32> to vector<128x4xf32>
    %207 = arith.truncf %206 : vector<128x4xf32> to vector<128x4xbf16>
    %c7_200 = arith.constant 7 : index
    %c0_201 = arith.constant 0 : index
    %c0_202 = arith.constant 0 : index
    %208 = vector.load %arg3[%c7_200, %c0_201, %c0_202] : memref<9x4x4xbf16, #tpu.memory_space<vmem>>, vector<1x4x4xbf16>
    %209 = vector.shape_cast %208 : vector<1x4x4xbf16> to vector<4x4xbf16>
    %cst_203 = arith.constant dense<0.000000e+00> : vector<128x4xf32>
    %210 = tpu.matmul %207, %209, %cst_203 {dimension_numbers = #tpu.dot_dimension_numbers<[1], [0], [0], [1], [0, 0, 1, 1], [], []>} : vector<128x4xbf16>, vector<4x4xbf16>, vector<128x4xf32> -> vector<128x4xf32>
    %211 = arith.addf %204, %210 : vector<128x4xf32>
    %c2_204 = arith.constant 2 : index
    %c2_205 = arith.constant 2 : index
    %c0_206 = arith.constant 0 : index
    %212 = vector.load %arg10[%c2_204, %c2_205, %c0_206] : memref<18x18x4xf32, #tpu.memory_space<vmem>>, vector<8x16x4xf32>
    %213 = vector.shape_cast %212 : vector<8x16x4xf32> to vector<128x4xf32>
    %214 = arith.truncf %213 : vector<128x4xf32> to vector<128x4xbf16>
    %c8_207 = arith.constant 8 : index
    %c0_208 = arith.constant 0 : index
    %c0_209 = arith.constant 0 : index
    %215 = vector.load %arg3[%c8_207, %c0_208, %c0_209] : memref<9x4x4xbf16, #tpu.memory_space<vmem>>, vector<1x4x4xbf16>
    %216 = vector.shape_cast %215 : vector<1x4x4xbf16> to vector<4x4xbf16>
    %cst_210 = arith.constant dense<0.000000e+00> : vector<128x4xf32>
    %217 = tpu.matmul %214, %216, %cst_210 {dimension_numbers = #tpu.dot_dimension_numbers<[1], [0], [0], [1], [0, 0, 1, 1], [], []>} : vector<128x4xbf16>, vector<4x4xbf16>, vector<128x4xf32> -> vector<128x4xf32>
    %218 = arith.addf %211, %217 : vector<128x4xf32>
    %c0_211 = arith.constant 0 : index
    %c0_212 = arith.constant 0 : index
    %219 = vector.load %arg6[%c0_211, %c0_212] : memref<1x4xf32, #tpu.memory_space<vmem>>, vector<1x4xf32>
    %220 = vector.broadcast %219 : vector<1x4xf32> to vector<128x4xf32>
    %221 = arith.mulf %218, %220 : vector<128x4xf32>
    %c0_213 = arith.constant 0 : index
    %c0_214 = arith.constant 0 : index
    %222 = vector.load %arg7[%c0_213, %c0_214] : memref<1x4xf32, #tpu.memory_space<vmem>>, vector<1x4xf32>
    %223 = vector.broadcast %222 : vector<1x4xf32> to vector<128x4xf32>
    %224 = arith.addf %221, %223 : vector<128x4xf32>
    %225 = vector.shape_cast %224 : vector<128x4xf32> to vector<8x16x4xf32>
    %c0_215 = arith.constant 0 : index
    %c0_216 = arith.constant 0 : index
    %c0_217 = arith.constant 0 : index
    %c0_218 = arith.constant 0 : index
    %226 = vector.load %arg1[%c0_215, %c0_216, %c0_217, %c0_218] : memref<1x16x16x4xf32, #tpu.memory_space<vmem>>, vector<1x8x16x4xf32>
    %227 = vector.shape_cast %226 : vector<1x8x16x4xf32> to vector<8x16x4xf32>
    %228 = arith.addf %225, %227 : vector<8x16x4xf32>
    %cst_219 = arith.constant 0.000000e+00 : f32
    %229 = vector.broadcast %cst_219 : f32 to vector<8x16x4xf32>
    %230 = arith.maximumf %228, %229 : vector<8x16x4xf32>
    %c0_220 = arith.constant 0 : index
    %c0_221 = arith.constant 0 : index
    %c0_222 = arith.constant 0 : index
    %c0_223 = arith.constant 0 : index
    %231 = vector.load %arg8[%c0_220, %c0_221, %c0_222, %c0_223] : memref<1x16x16x4xf32, #tpu.memory_space<vmem>>, vector<1x8x16x4xf32>
    %232 = vector.shape_cast %231 : vector<1x8x16x4xf32> to vector<8x16x4xf32>
    %233 = vector.shape_cast %230 : vector<8x16x4xf32> to vector<1x8x16x4xf32>
    tpu.vector_store %arg8[%c0_220, %c0_221, %c0_222, %c0_223], %233 {strides = array<i32>} : memref<1x16x16x4xf32, #tpu.memory_space<vmem>>, vector<1x8x16x4xf32>,
    %cst_224 = arith.constant 0.000000e+00 : f32
    %234 = vector.broadcast %cst_224 : f32 to vector<128x4xf32>
    %c8_225 = arith.constant 8 : index
    %c0_226 = arith.constant 0 : index
    %c0_227 = arith.constant 0 : index
    %235 = vector.load %arg10[%c8_225, %c0_226, %c0_227] : memref<18x18x4xf32, #tpu.memory_space<vmem>>, vector<8x16x4xf32>
    %236 = vector.shape_cast %235 : vector<8x16x4xf32> to vector<128x4xf32>
    %237 = arith.truncf %236 : vector<128x4xf32> to vector<128x4xbf16>
    %c0_228 = arith.constant 0 : index
    %c0_229 = arith.constant 0 : index
    %c0_230 = arith.constant 0 : index
    %238 = vector.load %arg3[%c0_228, %c0_229, %c0_230] : memref<9x4x4xbf16, #tpu.memory_space<vmem>>, vector<1x4x4xbf16>
    %239 = vector.shape_cast %238 : vector<1x4x4xbf16> to vector<4x4xbf16>
    %cst_231 = arith.constant dense<0.000000e+00> : vector<128x4xf32>
    %240 = tpu.matmul %237, %239, %cst_231 {dimension_numbers = #tpu.dot_dimension_numbers<[1], [0], [0], [1], [0, 0, 1, 1], [], []>} : vector<128x4xbf16>, vector<4x4xbf16>, vector<128x4xf32> -> vector<128x4xf32>
    %241 = arith.addf %234, %240 : vector<128x4xf32>
    %c8_232 = arith.constant 8 : index
    %c1_233 = arith.constant 1 : index
    %c0_234 = arith.constant 0 : index
    %242 = vector.load %arg10[%c8_232, %c1_233, %c0_234] : memref<18x18x4xf32, #tpu.memory_space<vmem>>, vector<8x16x4xf32>
    %243 = vector.shape_cast %242 : vector<8x16x4xf32> to vector<128x4xf32>
    %244 = arith.truncf %243 : vector<128x4xf32> to vector<128x4xbf16>
    %c1_235 = arith.constant 1 : index
    %c0_236 = arith.constant 0 : index
    %c0_237 = arith.constant 0 : index
    %245 = vector.load %arg3[%c1_235, %c0_236, %c0_237] : memref<9x4x4xbf16, #tpu.memory_space<vmem>>, vector<1x4x4xbf16>
    %246 = vector.shape_cast %245 : vector<1x4x4xbf16> to vector<4x4xbf16>
    %cst_238 = arith.constant dense<0.000000e+00> : vector<128x4xf32>
    %247 = tpu.matmul %244, %246, %cst_238 {dimension_numbers = #tpu.dot_dimension_numbers<[1], [0], [0], [1], [0, 0, 1, 1], [], []>} : vector<128x4xbf16>, vector<4x4xbf16>, vector<128x4xf32> -> vector<128x4xf32>
    %248 = arith.addf %241, %247 : vector<128x4xf32>
    %c8_239 = arith.constant 8 : index
    %c2_240 = arith.constant 2 : index
    %c0_241 = arith.constant 0 : index
    %249 = vector.load %arg10[%c8_239, %c2_240, %c0_241] : memref<18x18x4xf32, #tpu.memory_space<vmem>>, vector<8x16x4xf32>
    %250 = vector.shape_cast %249 : vector<8x16x4xf32> to vector<128x4xf32>
    %251 = arith.truncf %250 : vector<128x4xf32> to vector<128x4xbf16>
    %c2_242 = arith.constant 2 : index
    %c0_243 = arith.constant 0 : index
    %c0_244 = arith.constant 0 : index
    %252 = vector.load %arg3[%c2_242, %c0_243, %c0_244] : memref<9x4x4xbf16, #tpu.memory_space<vmem>>, vector<1x4x4xbf16>
    %253 = vector.shape_cast %252 : vector<1x4x4xbf16> to vector<4x4xbf16>
    %cst_245 = arith.constant dense<0.000000e+00> : vector<128x4xf32>
    %254 = tpu.matmul %251, %253, %cst_245 {dimension_numbers = #tpu.dot_dimension_numbers<[1], [0], [0], [1], [0, 0, 1, 1], [], []>} : vector<128x4xbf16>, vector<4x4xbf16>, vector<128x4xf32> -> vector<128x4xf32>
    %255 = arith.addf %248, %254 : vector<128x4xf32>
    %c9_246 = arith.constant 9 : index
    %c0_247 = arith.constant 0 : index
    %c0_248 = arith.constant 0 : index
    %256 = vector.load %arg10[%c9_246, %c0_247, %c0_248] : memref<18x18x4xf32, #tpu.memory_space<vmem>>, vector<8x16x4xf32>
    %257 = vector.shape_cast %256 : vector<8x16x4xf32> to vector<128x4xf32>
    %258 = arith.truncf %257 : vector<128x4xf32> to vector<128x4xbf16>
    %c3_249 = arith.constant 3 : index
    %c0_250 = arith.constant 0 : index
    %c0_251 = arith.constant 0 : index
    %259 = vector.load %arg3[%c3_249, %c0_250, %c0_251] : memref<9x4x4xbf16, #tpu.memory_space<vmem>>, vector<1x4x4xbf16>
    %260 = vector.shape_cast %259 : vector<1x4x4xbf16> to vector<4x4xbf16>
    %cst_252 = arith.constant dense<0.000000e+00> : vector<128x4xf32>
    %261 = tpu.matmul %258, %260, %cst_252 {dimension_numbers = #tpu.dot_dimension_numbers<[1], [0], [0], [1], [0, 0, 1, 1], [], []>} : vector<128x4xbf16>, vector<4x4xbf16>, vector<128x4xf32> -> vector<128x4xf32>
    %262 = arith.addf %255, %261 : vector<128x4xf32>
    %c9_253 = arith.constant 9 : index
    %c1_254 = arith.constant 1 : index
    %c0_255 = arith.constant 0 : index
    %263 = vector.load %arg10[%c9_253, %c1_254, %c0_255] : memref<18x18x4xf32, #tpu.memory_space<vmem>>, vector<8x16x4xf32>
    %264 = vector.shape_cast %263 : vector<8x16x4xf32> to vector<128x4xf32>
    %265 = arith.truncf %264 : vector<128x4xf32> to vector<128x4xbf16>
    %c4_256 = arith.constant 4 : index
    %c0_257 = arith.constant 0 : index
    %c0_258 = arith.constant 0 : index
    %266 = vector.load %arg3[%c4_256, %c0_257, %c0_258] : memref<9x4x4xbf16, #tpu.memory_space<vmem>>, vector<1x4x4xbf16>
    %267 = vector.shape_cast %266 : vector<1x4x4xbf16> to vector<4x4xbf16>
    %cst_259 = arith.constant dense<0.000000e+00> : vector<128x4xf32>
    %268 = tpu.matmul %265, %267, %cst_259 {dimension_numbers = #tpu.dot_dimension_numbers<[1], [0], [0], [1], [0, 0, 1, 1], [], []>} : vector<128x4xbf16>, vector<4x4xbf16>, vector<128x4xf32> -> vector<128x4xf32>
    %269 = arith.addf %262, %268 : vector<128x4xf32>
    %c9_260 = arith.constant 9 : index
    %c2_261 = arith.constant 2 : index
    %c0_262 = arith.constant 0 : index
    %270 = vector.load %arg10[%c9_260, %c2_261, %c0_262] : memref<18x18x4xf32, #tpu.memory_space<vmem>>, vector<8x16x4xf32>
    %271 = vector.shape_cast %270 : vector<8x16x4xf32> to vector<128x4xf32>
    %272 = arith.truncf %271 : vector<128x4xf32> to vector<128x4xbf16>
    %c5_263 = arith.constant 5 : index
    %c0_264 = arith.constant 0 : index
    %c0_265 = arith.constant 0 : index
    %273 = vector.load %arg3[%c5_263, %c0_264, %c0_265] : memref<9x4x4xbf16, #tpu.memory_space<vmem>>, vector<1x4x4xbf16>
    %274 = vector.shape_cast %273 : vector<1x4x4xbf16> to vector<4x4xbf16>
    %cst_266 = arith.constant dense<0.000000e+00> : vector<128x4xf32>
    %275 = tpu.matmul %272, %274, %cst_266 {dimension_numbers = #tpu.dot_dimension_numbers<[1], [0], [0], [1], [0, 0, 1, 1], [], []>} : vector<128x4xbf16>, vector<4x4xbf16>, vector<128x4xf32> -> vector<128x4xf32>
    %276 = arith.addf %269, %275 : vector<128x4xf32>
    %c10_267 = arith.constant 10 : index
    %c0_268 = arith.constant 0 : index
    %c0_269 = arith.constant 0 : index
    %277 = vector.load %arg10[%c10_267, %c0_268, %c0_269] : memref<18x18x4xf32, #tpu.memory_space<vmem>>, vector<8x16x4xf32>
    %278 = vector.shape_cast %277 : vector<8x16x4xf32> to vector<128x4xf32>
    %279 = arith.truncf %278 : vector<128x4xf32> to vector<128x4xbf16>
    %c6_270 = arith.constant 6 : index
    %c0_271 = arith.constant 0 : index
    %c0_272 = arith.constant 0 : index
    %280 = vector.load %arg3[%c6_270, %c0_271, %c0_272] : memref<9x4x4xbf16, #tpu.memory_space<vmem>>, vector<1x4x4xbf16>
    %281 = vector.shape_cast %280 : vector<1x4x4xbf16> to vector<4x4xbf16>
    %cst_273 = arith.constant dense<0.000000e+00> : vector<128x4xf32>
    %282 = tpu.matmul %279, %281, %cst_273 {dimension_numbers = #tpu.dot_dimension_numbers<[1], [0], [0], [1], [0, 0, 1, 1], [], []>} : vector<128x4xbf16>, vector<4x4xbf16>, vector<128x4xf32> -> vector<128x4xf32>
    %283 = arith.addf %276, %282 : vector<128x4xf32>
    %c10_274 = arith.constant 10 : index
    %c1_275 = arith.constant 1 : index
    %c0_276 = arith.constant 0 : index
    %284 = vector.load %arg10[%c10_274, %c1_275, %c0_276] : memref<18x18x4xf32, #tpu.memory_space<vmem>>, vector<8x16x4xf32>
    %285 = vector.shape_cast %284 : vector<8x16x4xf32> to vector<128x4xf32>
    %286 = arith.truncf %285 : vector<128x4xf32> to vector<128x4xbf16>
    %c7_277 = arith.constant 7 : index
    %c0_278 = arith.constant 0 : index
    %c0_279 = arith.constant 0 : index
    %287 = vector.load %arg3[%c7_277, %c0_278, %c0_279] : memref<9x4x4xbf16, #tpu.memory_space<vmem>>, vector<1x4x4xbf16>
    %288 = vector.shape_cast %287 : vector<1x4x4xbf16> to vector<4x4xbf16>
    %cst_280 = arith.constant dense<0.000000e+00> : vector<128x4xf32>
    %289 = tpu.matmul %286, %288, %cst_280 {dimension_numbers = #tpu.dot_dimension_numbers<[1], [0], [0], [1], [0, 0, 1, 1], [], []>} : vector<128x4xbf16>, vector<4x4xbf16>, vector<128x4xf32> -> vector<128x4xf32>
    %290 = arith.addf %283, %289 : vector<128x4xf32>
    %c10_281 = arith.constant 10 : index
    %c2_282 = arith.constant 2 : index
    %c0_283 = arith.constant 0 : index
    %291 = vector.load %arg10[%c10_281, %c2_282, %c0_283] : memref<18x18x4xf32, #tpu.memory_space<vmem>>, vector<8x16x4xf32>
    %292 = vector.shape_cast %291 : vector<8x16x4xf32> to vector<128x4xf32>
    %293 = arith.truncf %292 : vector<128x4xf32> to vector<128x4xbf16>
    %c8_284 = arith.constant 8 : index
    %c0_285 = arith.constant 0 : index
    %c0_286 = arith.constant 0 : index
    %294 = vector.load %arg3[%c8_284, %c0_285, %c0_286] : memref<9x4x4xbf16, #tpu.memory_space<vmem>>, vector<1x4x4xbf16>
    %295 = vector.shape_cast %294 : vector<1x4x4xbf16> to vector<4x4xbf16>
    %cst_287 = arith.constant dense<0.000000e+00> : vector<128x4xf32>
    %296 = tpu.matmul %293, %295, %cst_287 {dimension_numbers = #tpu.dot_dimension_numbers<[1], [0], [0], [1], [0, 0, 1, 1], [], []>} : vector<128x4xbf16>, vector<4x4xbf16>, vector<128x4xf32> -> vector<128x4xf32>
    %297 = arith.addf %290, %296 : vector<128x4xf32>
    %c0_288 = arith.constant 0 : index
    %c0_289 = arith.constant 0 : index
    %298 = vector.load %arg6[%c0_288, %c0_289] : memref<1x4xf32, #tpu.memory_space<vmem>>, vector<1x4xf32>
    %299 = vector.broadcast %298 : vector<1x4xf32> to vector<128x4xf32>
    %300 = arith.mulf %297, %299 : vector<128x4xf32>
    %c0_290 = arith.constant 0 : index
    %c0_291 = arith.constant 0 : index
    %301 = vector.load %arg7[%c0_290, %c0_291] : memref<1x4xf32, #tpu.memory_space<vmem>>, vector<1x4xf32>
    %302 = vector.broadcast %301 : vector<1x4xf32> to vector<128x4xf32>
    %303 = arith.addf %300, %302 : vector<128x4xf32>
    %304 = vector.shape_cast %303 : vector<128x4xf32> to vector<8x16x4xf32>
    %c0_292 = arith.constant 0 : index
    %c8_293 = arith.constant 8 : index
    %c0_294 = arith.constant 0 : index
    %c0_295 = arith.constant 0 : index
    %305 = vector.load %arg1[%c0_292, %c8_293, %c0_294, %c0_295] : memref<1x16x16x4xf32, #tpu.memory_space<vmem>>, vector<1x8x16x4xf32>
    %306 = vector.shape_cast %305 : vector<1x8x16x4xf32> to vector<8x16x4xf32>
    %307 = arith.addf %304, %306 : vector<8x16x4xf32>
    %cst_296 = arith.constant 0.000000e+00 : f32
    %308 = vector.broadcast %cst_296 : f32 to vector<8x16x4xf32>
    %309 = arith.maximumf %307, %308 : vector<8x16x4xf32>
    %c0_297 = arith.constant 0 : index
    %c8_298 = arith.constant 8 : index
    %c0_299 = arith.constant 0 : index
    %c0_300 = arith.constant 0 : index
    %310 = vector.load %arg8[%c0_297, %c8_298, %c0_299, %c0_300] : memref<1x16x16x4xf32, #tpu.memory_space<vmem>>, vector<1x8x16x4xf32>
    %311 = vector.shape_cast %310 : vector<1x8x16x4xf32> to vector<8x16x4xf32>
    %312 = vector.shape_cast %309 : vector<8x16x4xf32> to vector<1x8x16x4xf32>
    tpu.vector_store %arg8[%c0_297, %c8_298, %c0_299, %c0_300], %312 {strides = array<i32>} : memref<1x16x16x4xf32, #tpu.memory_space<vmem>>, vector<1x8x16x4xf32>,
    return
  }
  func.func @transform_0(%arg0: i32) -> (i32, i32, i32, i32) {
    %c0_i32 = arith.constant 0 : i32
    %c0_i32_0 = arith.constant 0 : i32
    %c0_i32_1 = arith.constant 0 : i32
    %c0_i32_2 = arith.constant 0 : i32
    return %arg0, %c0_i32, %c0_i32_0, %c0_i32_1 : i32, i32, i32, i32
  }
  func.func @transform_1(%arg0: i32) -> (i32, i32, i32) {
    %c0_i32 = arith.constant 0 : i32
    %c0_i32_0 = arith.constant 0 : i32
    %c0_i32_1 = arith.constant 0 : i32
    %c0_i32_2 = arith.constant 0 : i32
    return %c0_i32, %c0_i32_0, %c0_i32_1 : i32, i32, i32
  }
  func.func @transform_2(%arg0: i32) -> (i32, i32, i32) {
    %c0_i32 = arith.constant 0 : i32
    %c0_i32_0 = arith.constant 0 : i32
    %c0_i32_1 = arith.constant 0 : i32
    %c0_i32_2 = arith.constant 0 : i32
    return %c0_i32, %c0_i32_0, %c0_i32_1 : i32, i32, i32
  }
  func.func @transform_3(%arg0: i32) -> (i32, i32) {
    %c0_i32 = arith.constant 0 : i32
    %c0_i32_0 = arith.constant 0 : i32
    %c0_i32_1 = arith.constant 0 : i32
    return %c0_i32, %c0_i32_0 : i32, i32
  }
  func.func @transform_4(%arg0: i32) -> (i32, i32) {
    %c0_i32 = arith.constant 0 : i32
    %c0_i32_0 = arith.constant 0 : i32
    %c0_i32_1 = arith.constant 0 : i32
    return %c0_i32, %c0_i32_0 : i32, i32
  }
  func.func @transform_5(%arg0: i32) -> (i32, i32) {
    %c0_i32 = arith.constant 0 : i32
    %c0_i32_0 = arith.constant 0 : i32
    %c0_i32_1 = arith.constant 0 : i32
    return %c0_i32, %c0_i32_0 : i32, i32
  }
  func.func @transform_6(%arg0: i32) -> (i32, i32) {
    %c0_i32 = arith.constant 0 : i32
    %c0_i32_0 = arith.constant 0 : i32
    %c0_i32_1 = arith.constant 0 : i32
    return %c0_i32, %c0_i32_0 : i32, i32
  }
  func.func @transform_7(%arg0: i32) -> (i32, i32, i32, i32) {
    %c0_i32 = arith.constant 0 : i32
    %c0_i32_0 = arith.constant 0 : i32
    %c0_i32_1 = arith.constant 0 : i32
    %c0_i32_2 = arith.constant 0 : i32
    return %arg0, %c0_i32, %c0_i32_0, %c0_i32_1 : i32, i32, i32, i32
  }
}

</mosaic_0001>

<llo_original>
// kernel: tpu_custom_call.1
$region0: #{tpu_custom_call.1}
  #allocation0 [shape = 'u32[]', space=smem, size = 0x4, offset = 0x4, fixed_abs, tag = 'smem constant byte address 0x4 - core index']
  #allocation1 [shape = 'u32[144,128]{1,0:T(1,128)}', space=vmem, size = 0x12000, scoped, tag = 'internal scratch']
  #allocation2 [shape = 'f32[18,18,4]{2,1,0:T(8,128)}', space=vmem, size = 0x36000, scoped, tag = 'scratch operand']
  #allocation3 [shape = 'f32[18,18,4]{2,1,0:T(8,128)}', space=vmem, size = 0x36000, scoped, tag = 'scratch operand']
  %s0 = inlined_call_operand.vmem [shape: f32[2,16,16,4], index: 0, kind: input, shape index: {}]
  %s1 = inlined_call_operand.vmem [shape: bf16[9,4,4], index: 1, kind: input, shape index: {}]
  %s2 = inlined_call_operand.vmem [shape: bf16[9,4,4], index: 2, kind: input, shape index: {}]
  %s3 = inlined_call_operand.vmem [shape: f32[1,4], index: 3, kind: input, shape index: {}]
  %s4 = inlined_call_operand.vmem [shape: f32[1,4], index: 4, kind: input, shape index: {}]
  %s5 = inlined_call_operand.vmem [shape: f32[1,4], index: 5, kind: input, shape index: {}]
  %s6 = inlined_call_operand.vmem [shape: f32[1,4], index: 6, kind: input, shape index: {}]
  %s7 = inlined_call_operand.vmem [shape: f32[2,16,16,4], index: 7, kind: output, shape index: {}]
  %s8 = sld [smem:[#allocation0]]
  $region61: #{tpu_custom_call.1} parent=0
    _
  %s10 = ssub.s32 1, %s8
  %s11 = scalar_select 0, %s10, %s8
  loop: start=0, step=1, limit=4
  $region2: #{tpu_custom_call.1} parent=0 // loop_pre_header
    _
  $region3: #{tpu_custom_call.1} parent=0 // loop_header
    %s13 = sphi 0, %s17
    %p14 = scmp.ge.s32.totalorder %s13, 4
    %s23 = sphi 0, %s25
    %s26 = sphi 0, %s23
    %s27 = sphi 0, %s26
    %s43 = sphi 0, %s27
    %s47 = sphi 0, %s47
    %s49 = sphi 0, %s47
    %s50 = sphi 0, %s49
    %s64 = sphi 0, %s50
    %s68 = sphi 0, %s68
    %s70 = sphi 0, %s68
    %s71 = sphi 0, %s70
    %s85 = sphi 0, %s71
    %s89 = sphi 0, %s89
    %s91 = sphi 0, %s89
    %s92 = sphi 0, %s91
    %s106 = sphi 0, %s92
    %s110 = sphi 0, %s110
    %s112 = sphi 0, %s110
    %s113 = sphi 0, %s112
    %s127 = sphi 0, %s113
    %s131 = sphi 0, %s131
    %s133 = sphi 0, %s131
    %s134 = sphi 0, %s133
    %s148 = sphi 0, %s134
    %s152 = sphi 0, %s152
    %s154 = sphi 0, %s152
    %s155 = sphi 0, %s154
    %s169 = sphi 0, %s155
    %s175 = sphi 0, %s177
    %s178 = sphi 0, %s175
    %s179 = sphi 0, %s178
    %s195 = sphi 0, %s179
  $region4: #{tpu_custom_call.1} parent=0 // loop_header_branch
    %16 = sbr.rel (%p14) target = $region8
  $region5: #{tpu_custom_call.1} parent=0 // loop_body
    %s18 = ssub.s32 %s13, 1
    %s19 = ssub.s32 %s13, 2
    %s20 = sadd.s32 %s13, 1
    %s21 = ssub.s32 %s13, %s20
    %p22 = scmp.eq.s32.totalorder %s21, 0
    %s24 = sadd.s32 %s23, 1
    %s25 = scalar_select %p22, %s23, %s24
    %p28 = pneg %p22
    %p29 = scmp.eq.s32.totalorder %s13, 1
    %p30 = por %p28, %p29
    %p31 = scmp.ne.s32.totalorder %s23, %s26
    %p32 = scmp.eq.s32.totalorder %s13, 0
    %p33 = por %p31, %p32
    %p34 = scmp.ne.s32.totalorder %s23, %s26
    %p35 = scmp.eq.s32.totalorder %s18, 1
    %p36 = por %p34, %p35
    %p37 = scmp.ne.s32.totalorder %s26, %s27
    %p38 = scmp.eq.s32.totalorder %s18, 0
    %p39 = por %p37, %p38
    %p40 = scmp.ne.s32.totalorder %s26, %s27
    %p41 = scmp.eq.s32.totalorder %s19, 1
    %p42 = por %p40, %p41
    %p44 = scmp.ne.s32.totalorder %s27, %s43
    %p45 = scmp.eq.s32.totalorder %s19, 0
    %p46 = por %p44, %p45
    %s48 = sadd.s32 %s47, 1
    %p51 = scmp.eq.s32.totalorder %s13, 1
    %p52 = scmp.ne.s32.totalorder %s47, %s49
    %p53 = scmp.eq.s32.totalorder %s13, 0
    %p54 = por %p52, %p53
    %p55 = scmp.ne.s32.totalorder %s47, %s49
    %p56 = scmp.eq.s32.totalorder %s18, 1
    %p57 = por %p55, %p56
    %p58 = scmp.ne.s32.totalorder %s49, %s50
    %p59 = scmp.eq.s32.totalorder %s18, 0
    %p60 = por %p58, %p59
    %p61 = scmp.ne.s32.totalorder %s49, %s50
    %p62 = scmp.eq.s32.totalorder %s19, 1
    %p63 = por %p61, %p62
    %p65 = scmp.ne.s32.totalorder %s50, %s64
    %p66 = scmp.eq.s32.totalorder %s19, 0
    %p67 = por %p65, %p66
    %s69 = sadd.s32 %s68, 1
    %p72 = scmp.eq.s32.totalorder %s13, 1
    %p73 = scmp.ne.s32.totalorder %s68, %s70
    %p74 = scmp.eq.s32.totalorder %s13, 0
    %p75 = por %p73, %p74
    %p76 = scmp.ne.s32.totalorder %s68, %s70
    %p77 = scmp.eq.s32.totalorder %s18, 1
    %p78 = por %p76, %p77
    %p79 = scmp.ne.s32.totalorder %s70, %s71
    %p80 = scmp.eq.s32.totalorder %s18, 0
    %p81 = por %p79, %p80
    %p82 = scmp.ne.s32.totalorder %s70, %s71
    %p83 = scmp.eq.s32.totalorder %s19, 1
    %p84 = por %p82, %p83
    %p86 = scmp.ne.s32.totalorder %s71, %s85
    %p87 = scmp.eq.s32.totalorder %s19, 0
    %p88 = por %p86, %p87
    %s90 = sadd.s32 %s89, 1
    %p93 = scmp.eq.s32.totalorder %s13, 1
    %p94 = scmp.ne.s32.totalorder %s89, %s91
    %p95 = scmp.eq.s32.totalorder %s13, 0
    %p96 = por %p94, %p95
    %p97 = scmp.ne.s32.totalorder %s89, %s91
    %p98 = scmp.eq.s32.totalorder %s18, 1
    %p99 = por %p97, %p98
    %p100 = scmp.ne.s32.totalorder %s91, %s92
    %p101 = scmp.eq.s32.totalorder %s18, 0
    %p102 = por %p100, %p101
    %p103 = scmp.ne.s32.totalorder %s91, %s92
    %p104 = scmp.eq.s32.totalorder %s19, 1
    %p105 = por %p103, %p104
    %p107 = scmp.ne.s32.totalorder %s92, %s106
    %p108 = scmp.eq.s32.totalorder %s19, 0
    %p109 = por %p107, %p108
    %s111 = sadd.s32 %s110, 1
    %p114 = scmp.eq.s32.totalorder %s13, 1
    %p115 = scmp.ne.s32.totalorder %s110, %s112
    %p116 = scmp.eq.s32.totalorder %s13, 0
    %p117 = por %p115, %p116
    %p118 = scmp.ne.s32.totalorder %s110, %s112
    %p119 = scmp.eq.s32.totalorder %s18, 1
    %p120 = por %p118, %p119
    %p121 = scmp.ne.s32.totalorder %s112, %s113
    %p122 = scmp.eq.s32.totalorder %s18, 0
    %p123 = por %p121, %p122
    %p124 = scmp.ne.s32.totalorder %s112, %s113
    %p125 = scmp.eq.s32.totalorder %s19, 1
    %p126 = por %p124, %p125
    %p128 = scmp.ne.s32.totalorder %s113, %s127
    %p129 = scmp.eq.s32.totalorder %s19, 0
    %p130 = por %p128, %p129
    %s132 = sadd.s32 %s131, 1
    %p135 = scmp.eq.s32.totalorder %s13, 1
    %p136 = scmp.ne.s32.totalorder %s131, %s133
    %p137 = scmp.eq.s32.totalorder %s13, 0
    %p138 = por %p136, %p137
    %p139 = scmp.ne.s32.totalorder %s131, %s133
    %p140 = scmp.eq.s32.totalorder %s18, 1
    %p141 = por %p139, %p140
    %p142 = scmp.ne.s32.totalorder %s133, %s134
    %p143 = scmp.eq.s32.totalorder %s18, 0
    %p144 = por %p142, %p143
    %p145 = scmp.ne.s32.totalorder %s133, %s134
    %p146 = scmp.eq.s32.totalorder %s19, 1
    %p147 = por %p145, %p146
    %p149 = scmp.ne.s32.totalorder %s134, %s148
    %p150 = scmp.eq.s32.totalorder %s19, 0
    %p151 = por %p149, %p150
    %s153 = sadd.s32 %s152, 1
    %p156 = scmp.eq.s32.totalorder %s13, 1
    %p157 = scmp.ne.s32.totalorder %s152, %s154
    %p158 = scmp.eq.s32.totalorder %s13, 0
    %p159 = por %p157, %p158
    %p160 = scmp.ne.s32.totalorder %s152, %s154
    %p161 = scmp.eq.s32.totalorder %s18, 1
    %p162 = por %p160, %p161
    %p163 = scmp.ne.s32.totalorder %s154, %s155
    %p164 = scmp.eq.s32.totalorder %s18, 0
    %p165 = por %p163, %p164
    %p166 = scmp.ne.s32.totalorder %s154, %s155
    %p167 = scmp.eq.s32.totalorder %s19, 1
    %p168 = por %p166, %p167
    %p170 = scmp.ne.s32.totalorder %s155, %s169
    %p171 = scmp.eq.s32.totalorder %s19, 0
    %p172 = por %p170, %p171
    %s173 = ssub.s32 %s13, %s20
    %p174 = scmp.eq.s32.totalorder %s173, 0
    %s176 = sadd.s32 %s175, 1
    %s177 = scalar_select %p174, %s175, %s176
    %p180 = pneg %p174
    %p181 = scmp.eq.s32.totalorder %s13, 1
    %p182 = por %p180, %p181
    %p183 = scmp.ne.s32.totalorder %s175, %s178
    %p184 = scmp.eq.s32.totalorder %s13, 0
    %p185 = por %p183, %p184
    %p186 = scmp.ne.s32.totalorder %s175, %s178
    %p187 = scmp.eq.s32.totalorder %s18, 1
    %p188 = por %p186, %p187
    %p189 = scmp.ne.s32.totalorder %s178, %s179
    %p190 = scmp.eq.s32.totalorder %s18, 0
    %p191 = por %p189, %p190
    %p192 = scmp.ne.s32.totalorder %s178, %s179
    %p193 = scmp.eq.s32.totalorder %s19, 1
    %p194 = por %p192, %p193
    %p196 = scmp.ne.s32.totalorder %s179, %s195
    %p197 = scmp.eq.s32.totalorder %s19, 0
    %p198 = por %p196, %p197
    %p199 = scmp.le.s32.totalorder 1, %s13
    %p200 = scmp.lt.s32.totalorder %s13, 3
    %p201 = pnand %p199, %p200
    %p202 = pneg %p201
    // Predicated region
    $region9: #{tpu_custom_call.1} parent=5 // pred_check
      _
    $region10: #{tpu_custom_call.1} parent=5 // pred_check_branch
      %204 = sbr.rel (%p201) target = $region12
    $region11: #{tpu_custom_call.1} parent=5 // pred_region
      %s205 = ssub.s32 %s13, 1
      // Predicated region
      $region13: #{tpu_custom_call.1} parent=11 // pred_check
        %p206 = pneg %p60
      $region14: #{tpu_custom_call.1} parent=11 // pred_check_branch
        %208 = sbr.rel (%p206) target = $region16
      $region15: #{tpu_custom_call.1} parent=11 // pred_region
        _
      $region16: #{tpu_custom_call.1} parent=11 // pred_fallthru
        _
      // Predicated region
      $region17: #{tpu_custom_call.1} parent=11 // pred_check
        %p209 = pneg %p81
      $region18: #{tpu_custom_call.1} parent=11 // pred_check_branch
        %211 = sbr.rel (%p209) target = $region20
      $region19: #{tpu_custom_call.1} parent=11 // pred_region
        _
      $region20: #{tpu_custom_call.1} parent=11 // pred_fallthru
        _
      // Predicated region
      $region21: #{tpu_custom_call.1} parent=11 // pred_check
        %p212 = pneg %p102
      $region22: #{tpu_custom_call.1} parent=11 // pred_check_branch
        %214 = sbr.rel (%p212) target = $region24
      $region23: #{tpu_custom_call.1} parent=11 // pred_region
        _
      $region24: #{tpu_custom_call.1} parent=11 // pred_fallthru
        _
      // Predicated region
      $region25: #{tpu_custom_call.1} parent=11 // pred_check
        %p215 = pneg %p123
      $region26: #{tpu_custom_call.1} parent=11 // pred_check_branch
        %217 = sbr.rel (%p215) target = $region28
      $region27: #{tpu_custom_call.1} parent=11 // pred_region
        _
      $region28: #{tpu_custom_call.1} parent=11 // pred_fallthru
        _
      // Predicated region
      $region29: #{tpu_custom_call.1} parent=11 // pred_check
        %p218 = pneg %p144
      $region30: #{tpu_custom_call.1} parent=11 // pred_check_branch
        %220 = sbr.rel (%p218) target = $region32
      $region31: #{tpu_custom_call.1} parent=11 // pred_region
        _
      $region32: #{tpu_custom_call.1} parent=11 // pred_fallthru
        _
      // Predicated region
      $region33: #{tpu_custom_call.1} parent=11 // pred_check
        %p221 = pneg %p165
      $region34: #{tpu_custom_call.1} parent=11 // pred_check_branch
        %223 = sbr.rel (%p221) target = $region36
      $region35: #{tpu_custom_call.1} parent=11 // pred_region
        _
      $region36: #{tpu_custom_call.1} parent=11 // pred_fallthru
        _
    $region12: #{tpu_custom_call.1} parent=5 // pred_fallthru
      _
    %p224 = scmp.lt.s32.totalorder %s13, 2
    // Predicated region
    $region37: #{tpu_custom_call.1} parent=5 // pred_check
      %p225 = pneg %p224
    $region38: #{tpu_custom_call.1} parent=5 // pred_check_branch
      %227 = sbr.rel (%p225) target = $region40
    $region39: #{tpu_custom_call.1} parent=5 // pred_region
      // Predicated region
      $region41: #{tpu_custom_call.1} parent=39 // pred_check
        %p228 = pneg %p33
      $region42: #{tpu_custom_call.1} parent=39 // pred_check_branch
        %230 = sbr.rel (%p228) target = $region44
      $region43: #{tpu_custom_call.1} parent=39 // pred_region
        %p231 = scmp.lt.s32.totalorder %s13, 1
        %s232 = scalar_select %p231, %s13, 1
        %s233 = smul.addr %s232, 32
        %s234 = smul.addr %s233, 8
        %s235 = scalar_lea.vmem %s0, %s234
      $region44: #{tpu_custom_call.1} parent=39 // pred_fallthru
        _
    $region40: #{tpu_custom_call.1} parent=5 // pred_fallthru
      _
    %p236 = scmp.le.s32.totalorder 1, %s13
    %p237 = scmp.lt.s32.totalorder %s13, 3
    %p238 = pnand %p236, %p237
    %p239 = pneg %p238
    // Predicated region
    $region45: #{tpu_custom_call.1} parent=5 // pred_check
      _
    $region46: #{tpu_custom_call.1} parent=5 // pred_check_branch
      %241 = sbr.rel (%p238) target = $region48
    $region47: #{tpu_custom_call.1} parent=5 // pred_region
      %s242 = ssub.s32 %s13, 1
      %p243 = scmp.lt.s32.totalorder %s18, 1
      %s244 = scalar_select %p243, %s18, 1
      %s245 = smul.addr %s244, 32
      %s246 = smul.addr %s245, 8
      %s247 = scalar_lea.vmem %s0, %s246
      %p248 = pneg %p39
      %p249 = pneg %p36
      %p250 = pneg %p60
      %p251 = pneg %p57
      %p252 = pneg %p81
      %p253 = pneg %p78
      %p254 = pneg %p102
      %p255 = pneg %p99
      %p256 = pneg %p123
      %p257 = pneg %p120
      %p258 = pneg %p144
      %p259 = pneg %p141
      %p260 = pneg %p165
      %p261 = pneg %p162
      %p262 = pneg %p191
      %p263 = pneg %p188
      %p264 = scmp.lt.s32.totalorder %s18, 1
      %s265 = scalar_select %p264, %s18, 1
      %s266 = smul.addr %s265, 32
      %s267 = smul.addr %s266, 8
      %s268 = scalar_lea.vmem %s7, %s267
      %p269 = scmp.lt.s32.totalorder %s18, 1
      %s270 = scalar_select %p269, %s18, 1
      %s271 = smul.addr %s270, 32
      %s272 = smul.addr %s271, 8
      %s273 = scalar_lea.vmem %s0, %s272
      %p274 = scmp.lt.s32.totalorder %s18, 1
      %s275 = scalar_select %p274, %s18, 1
      %s276 = smul.addr %s275, 32
      %s277 = smul.addr %s276, 8
      %s278 = scalar_lea.vmem %s7, %s277
      %vm280 = vcmask 31744
      %281 = vst.msk [vmem:[#allocation2] sm:$0xff] %vm280, 0.0
      %282 = vst.msk [vmem:[#allocation2 + $0x8] sm:$0xff] %vm280, 0.0
      %vm283 = vcmask 25600
      %284 = vst.msk [vmem:[#allocation2 + $0x10] sm:$0x3] %vm283, 0.0
      %285 = vst.msk [vmem:[#allocation2 + $0x18] sm:$0xff] %vm280, 0.0
      %286 = vst.msk [vmem:[#allocation2 + $0x20] sm:$0xff] %vm280, 0.0
      %287 = vst.msk [vmem:[#allocation2 + $0x28] sm:$0x3] %vm283, 0.0
      %288 = vst.msk [vmem:[#allocation2 + $0x30] sm:$0xff] %vm280, 0.0
      %289 = vst.msk [vmem:[#allocation2 + $0x38] sm:$0xff] %vm280, 0.0
      %290 = vst.msk [vmem:[#allocation2 + $0x40] sm:$0x3] %vm283, 0.0
      %291 = vst.msk [vmem:[#allocation2 + $0x48] sm:$0xff] %vm280, 0.0
      %292 = vst.msk [vmem:[#allocation2 + $0x50] sm:$0xff] %vm280, 0.0
      %293 = vst.msk [vmem:[#allocation2 + $0x58] sm:$0x3] %vm283, 0.0
      %294 = vst.msk [vmem:[#allocation2 + $0x60] sm:$0xff] %vm280, 0.0
      %295 = vst.msk [vmem:[#allocation2 + $0x68] sm:$0xff] %vm280, 0.0
      %296 = vst.msk [vmem:[#allocation2 + $0x70] sm:$0x3] %vm283, 0.0
      %297 = vst.msk [vmem:[#allocation2 + $0x78] sm:$0xff] %vm280, 0.0
      %298 = vst.msk [vmem:[#allocation2 + $0x80] sm:$0xff] %vm280, 0.0
      %299 = vst.msk [vmem:[#allocation2 + $0x88] sm:$0x3] %vm283, 0.0
      %300 = vst.msk [vmem:[#allocation2 + $0x90] sm:$0xff] %vm280, 0.0
      %301 = vst.msk [vmem:[#allocation2 + $0x98] sm:$0xff] %vm280, 0.0
      %302 = vst.msk [vmem:[#allocation2 + $0xa0] sm:$0x3] %vm283, 0.0
      %303 = vst.msk [vmem:[#allocation2 + $0xa8] sm:$0xff] %vm280, 0.0
      %304 = vst.msk [vmem:[#allocation2 + $0xb0] sm:$0xff] %vm280, 0.0
      %305 = vst.msk [vmem:[#allocation2 + $0xb8] sm:$0x3] %vm283, 0.0
      %306 = vst.msk [vmem:[#allocation2 + $0xc0] sm:$0xff] %vm280, 0.0
      %307 = vst.msk [vmem:[#allocation2 + $0xc8] sm:$0xff] %vm280, 0.0
      %308 = vst.msk [vmem:[#allocation2 + $0xd0] sm:$0x3] %vm283, 0.0
      %309 = vst.msk [vmem:[#allocation2 + $0xd8] sm:$0xff] %vm280, 0.0
      %310 = vst.msk [vmem:[#allocation2 + $0xe0] sm:$0xff] %vm280, 0.0
      %311 = vst.msk [vmem:[#allocation2 + $0xe8] sm:$0x3] %vm283, 0.0
      %312 = vst.msk [vmem:[#allocation2 + $0xf0] sm:$0xff] %vm280, 0.0
      %313 = vst.msk [vmem:[#allocation2 + $0xf8] sm:$0xff] %vm280, 0.0
      %314 = vst.msk [vmem:[#allocation2 + $0x100] sm:$0x3] %vm283, 0.0
      %315 = vst.msk [vmem:[#allocation2 + $0x108] sm:$0xff] %vm280, 0.0
      %316 = vst.msk [vmem:[#allocation2 + $0x110] sm:$0xff] %vm280, 0.0
      %317 = vst.msk [vmem:[#allocation2 + $0x118] sm:$0x3] %vm283, 0.0
      %318 = vst.msk [vmem:[#allocation2 + $0x120] sm:$0xff] %vm280, 0.0
      %319 = vst.msk [vmem:[#allocation2 + $0x128] sm:$0xff] %vm280, 0.0
      %320 = vst.msk [vmem:[#allocation2 + $0x130] sm:$0x3] %vm283, 0.0
      %321 = vst.msk [vmem:[#allocation2 + $0x138] sm:$0xff] %vm280, 0.0
      %322 = vst.msk [vmem:[#allocation2 + $0x140] sm:$0xff] %vm280, 0.0
      %323 = vst.msk [vmem:[#allocation2 + $0x148] sm:$0x3] %vm283, 0.0
      %324 = vst.msk [vmem:[#allocation2 + $0x150] sm:$0xff] %vm280, 0.0
      %325 = vst.msk [vmem:[#allocation2 + $0x158] sm:$0xff] %vm280, 0.0
      %326 = vst.msk [vmem:[#allocation2 + $0x160] sm:$0x3] %vm283, 0.0
      %327 = vst.msk [vmem:[#allocation2 + $0x168] sm:$0xff] %vm280, 0.0
      %328 = vst.msk [vmem:[#allocation2 + $0x170] sm:$0xff] %vm280, 0.0
      %329 = vst.msk [vmem:[#allocation2 + $0x178] sm:$0x3] %vm283, 0.0
      %330 = vst.msk [vmem:[#allocation2 + $0x180] sm:$0xff] %vm280, 0.0
      %331 = vst.msk [vmem:[#allocation2 + $0x188] sm:$0xff] %vm280, 0.0
      %332 = vst.msk [vmem:[#allocation2 + $0x190] sm:$0x3] %vm283, 0.0
      %333 = vst.msk [vmem:[#allocation2 + $0x198] sm:$0xff] %vm280, 0.0
      %334 = vst.msk [vmem:[#allocation2 + $0x1a0] sm:$0xff] %vm280, 0.0
      %335 = vst.msk [vmem:[#allocation2 + $0x1a8] sm:$0x3] %vm283, 0.0
      %v336 = vld [vmem:[%s273] sm:$0xff]
      %v337 = vld [vmem:[%s273 + $0x8] sm:$0xff]
      %v338 = vld [vmem:[%s273 + $0x10] sm:$0xff]
      %v339 = vld [vmem:[%s273 + $0x18] sm:$0xff]
      %v340 = vld [vmem:[%s273 + $0x20] sm:$0xff]
      %v341 = vld [vmem:[%s273 + $0x28] sm:$0xff]
      %v342 = vld [vmem:[%s273 + $0x30] sm:$0xff]
      %v343 = vld [vmem:[%s273 + $0x38] sm:$0xff]
      %v344 = vld [vmem:[%s273 + $0x40] sm:$0xff]
      %v345 = vld [vmem:[%s273 + $0x48] sm:$0xff]
      %v346 = vld [vmem:[%s273 + $0x50] sm:$0xff]
      %v347 = vld [vmem:[%s273 + $0x58] sm:$0xff]
      %v348 = vld [vmem:[%s273 + $0x60] sm:$0xff]
      %v349 = vld [vmem:[%s273 + $0x68] sm:$0xff]
      %v350 = vld [vmem:[%s273 + $0x70] sm:$0xff]
      %v351 = vld [vmem:[%s273 + $0x78] sm:$0xff]
      %v352 = vld [vmem:[%s273 + $0x80] sm:$0xff]
      %v353 = vld [vmem:[%s273 + $0x88] sm:$0xff]
      %v354 = vld [vmem:[%s273 + $0x90] sm:$0xff]
      %v355 = vld [vmem:[%s273 + $0x98] sm:$0xff]
      %v356 = vld [vmem:[%s273 + $0xa0] sm:$0xff]
      %v357 = vld [vmem:[%s273 + $0xa8] sm:$0xff]
      %v358 = vld [vmem:[%s273 + $0xb0] sm:$0xff]
      %v359 = vld [vmem:[%s273 + $0xb8] sm:$0xff]
      %v360 = vld [vmem:[%s273 + $0xc0] sm:$0xff]
      %v361 = vld [vmem:[%s273 + $0xc8] sm:$0xff]
      %v362 = vld [vmem:[%s273 + $0xd0] sm:$0xff]
      %v363 = vld [vmem:[%s273 + $0xd8] sm:$0xff]
      %v364 = vld [vmem:[%s273 + $0xe0] sm:$0xff]
      %v365 = vld [vmem:[%s273 + $0xe8] sm:$0xff]
      %v366 = vld [vmem:[%s273 + $0xf0] sm:$0xff]
      %v367 = vld [vmem:[%s273 + $0xf8] sm:$0xff]
      %s368 = scalar_lea.vmem [#allocation2], 24
      %369 = vst.msk [vmem:[%s368 + $0x1] sm:$0xff] %vm280, %v336
      %370 = vst.msk [vmem:[%s368 + $0x9] sm:$0xff] %vm280, %v337
      %371 = vst.msk [vmem:[%s368 + $0x19] sm:$0xff] %vm280, %v338
      %372 = vst.msk [vmem:[%s368 + $0x21] sm:$0xff] %vm280, %v339
      %373 = vst.msk [vmem:[%s368 + $0x31] sm:$0xff] %vm280, %v340
      %374 = vst.msk [vmem:[%s368 + $0x39] sm:$0xff] %vm280, %v341
      %375 = vst.msk [vmem:[%s368 + $0x49] sm:$0xff] %vm280, %v342
      %376 = vst.msk [vmem:[%s368 + $0x51] sm:$0xff] %vm280, %v343
      %377 = vst.msk [vmem:[%s368 + $0x61] sm:$0xff] %vm280, %v344
      %378 = vst.msk [vmem:[%s368 + $0x69] sm:$0xff] %vm280, %v345
      %379 = vst.msk [vmem:[%s368 + $0x79] sm:$0xff] %vm280, %v346
      %380 = vst.msk [vmem:[%s368 + $0x81] sm:$0xff] %vm280, %v347
      %381 = vst.msk [vmem:[%s368 + $0x91] sm:$0xff] %vm280, %v348
      %382 = vst.msk [vmem:[%s368 + $0x99] sm:$0xff] %vm280, %v349
      %383 = vst.msk [vmem:[%s368 + $0xa9] sm:$0xff] %vm280, %v350
      %384 = vst.msk [vmem:[%s368 + $0xb1] sm:$0xff] %vm280, %v351
      %385 = vst.msk [vmem:[%s368 + $0xc1] sm:$0xff] %vm280, %v352
      %386 = vst.msk [vmem:[%s368 + $0xc9] sm:$0xff] %vm280, %v353
      %387 = vst.msk [vmem:[%s368 + $0xd9] sm:$0xff] %vm280, %v354
      %388 = vst.msk [vmem:[%s368 + $0xe1] sm:$0xff] %vm280, %v355
      %389 = vst.msk [vmem:[%s368 + $0xf1] sm:$0xff] %vm280, %v356
      %390 = vst.msk [vmem:[%s368 + $0xf9] sm:$0xff] %vm280, %v357
      %391 = vst.msk [vmem:[%s368 + $0x109] sm:$0xff] %vm280, %v358
      %392 = vst.msk [vmem:[%s368 + $0x111] sm:$0xff] %vm280, %v359
      %393 = vst.msk [vmem:[%s368 + $0x121] sm:$0xff] %vm280, %v360
      %394 = vst.msk [vmem:[%s368 + $0x129] sm:$0xff] %vm280, %v361
      %395 = vst.msk [vmem:[%s368 + $0x139] sm:$0xff] %vm280, %v362
      %396 = vst.msk [vmem:[%s368 + $0x141] sm:$0xff] %vm280, %v363
      %397 = vst.msk [vmem:[%s368 + $0x151] sm:$0xff] %vm280, %v364
      %398 = vst.msk [vmem:[%s368 + $0x159] sm:$0xff] %vm280, %v365
      %399 = vst.msk [vmem:[%s368 + $0x169] sm:$0xff] %vm280, %v366
      %400 = vst.msk [vmem:[%s368 + $0x171] sm:$0xff] %vm280, %v367
      %401 = vst.msk [vmem:[#allocation3] sm:$0xff] %vm280, 0.0
      %402 = vst.msk [vmem:[#allocation3 + $0x8] sm:$0xff] %vm280, 0.0
      %403 = vst.msk [vmem:[#allocation3 + $0x10] sm:$0x3] %vm283, 0.0
      %404 = vst.msk [vmem:[#allocation3 + $0x18] sm:$0xff] %vm280, 0.0
      %405 = vst.msk [vmem:[#allocation3 + $0x20] sm:$0xff] %vm280, 0.0
      %406 = vst.msk [vmem:[#allocation3 + $0x28] sm:$0x3] %vm283, 0.0
      %407 = vst.msk [vmem:[#allocation3 + $0x30] sm:$0xff] %vm280, 0.0
      %408 = vst.msk [vmem:[#allocation3 + $0x38] sm:$0xff] %vm280, 0.0
      %409 = vst.msk [vmem:[#allocation3 + $0x40] sm:$0x3] %vm283, 0.0
      %410 = vst.msk [vmem:[#allocation3 + $0x48] sm:$0xff] %vm280, 0.0
      %411 = vst.msk [vmem:[#allocation3 + $0x50] sm:$0xff] %vm280, 0.0
      %412 = vst.msk [vmem:[#allocation3 + $0x58] sm:$0x3] %vm283, 0.0
      %413 = vst.msk [vmem:[#allocation3 + $0x60] sm:$0xff] %vm280, 0.0
      %414 = vst.msk [vmem:[#allocation3 + $0x68] sm:$0xff] %vm280, 0.0
      %415 = vst.msk [vmem:[#allocation3 + $0x70] sm:$0x3] %vm283, 0.0
      %416 = vst.msk [vmem:[#allocation3 + $0x78] sm:$0xff] %vm280, 0.0
      %417 = vst.msk [vmem:[#allocation3 + $0x80] sm:$0xff] %vm280, 0.0
      %418 = vst.msk [vmem:[#allocation3 + $0x88] sm:$0x3] %vm283, 0.0
      %419 = vst.msk [vmem:[#allocation3 + $0x90] sm:$0xff] %vm280, 0.0
      %420 = vst.msk [vmem:[#allocation3 + $0x98] sm:$0xff] %vm280, 0.0
      %421 = vst.msk [vmem:[#allocation3 + $0xa0] sm:$0x3] %vm283, 0.0
      %422 = vst.msk [vmem:[#allocation3 + $0xa8] sm:$0xff] %vm280, 0.0
      %423 = vst.msk [vmem:[#allocation3 + $0xb0] sm:$0xff] %vm280, 0.0
      %424 = vst.msk [vmem:[#allocation3 + $0xb8] sm:$0x3] %vm283, 0.0
      %425 = vst.msk [vmem:[#allocation3 + $0xc0] sm:$0xff] %vm280, 0.0
      %426 = vst.msk [vmem:[#allocation3 + $0xc8] sm:$0xff] %vm280, 0.0
      %427 = vst.msk [vmem:[#allocation3 + $0xd0] sm:$0x3] %vm283, 0.0
      %428 = vst.msk [vmem:[#allocation3 + $0xd8] sm:$0xff] %vm280, 0.0
      %429 = vst.msk [vmem:[#allocation3 + $0xe0] sm:$0xff] %vm280, 0.0
      %430 = vst.msk [vmem:[#allocation3 + $0xe8] sm:$0x3] %vm283, 0.0
      %431 = vst.msk [vmem:[#allocation3 + $0xf0] sm:$0xff] %vm280, 0.0
      %432 = vst.msk [vmem:[#allocation3 + $0xf8] sm:$0xff] %vm280, 0.0
      %433 = vst.msk [vmem:[#allocation3 + $0x100] sm:$0x3] %vm283, 0.0
      %434 = vst.msk [vmem:[#allocation3 + $0x108] sm:$0xff] %vm280, 0.0
      %435 = vst.msk [vmem:[#allocation3 + $0x110] sm:$0xff] %vm280, 0.0
      %436 = vst.msk [vmem:[#allocation3 + $0x118] sm:$0x3] %vm283, 0.0
      %437 = vst.msk [vmem:[#allocation3 + $0x120] sm:$0xff] %vm280, 0.0
      %438 = vst.msk [vmem:[#allocation3 + $0x128] sm:$0xff] %vm280, 0.0
      %439 = vst.msk [vmem:[#allocation3 + $0x130] sm:$0x3] %vm283, 0.0
      %440 = vst.msk [vmem:[#allocation3 + $0x138] sm:$0xff] %vm280, 0.0
      %441 = vst.msk [vmem:[#allocation3 + $0x140] sm:$0xff] %vm280, 0.0
      %442 = vst.msk [vmem:[#allocation3 + $0x148] sm:$0x3] %vm283, 0.0
      %443 = vst.msk [vmem:[#allocation3 + $0x150] sm:$0xff] %vm280, 0.0
      %444 = vst.msk [vmem:[#allocation3 + $0x158] sm:$0xff] %vm280, 0.0
      %445 = vst.msk [vmem:[#allocation3 + $0x160] sm:$0x3] %vm283, 0.0
      %446 = vst.msk [vmem:[#allocation3 + $0x168] sm:$0xff] %vm280, 0.0
      %447 = vst.msk [vmem:[#allocation3 + $0x170] sm:$0xff] %vm280, 0.0
      %448 = vst.msk [vmem:[#allocation3 + $0x178] sm:$0x3] %vm283, 0.0
      %449 = vst.msk [vmem:[#allocation3 + $0x180] sm:$0xff] %vm280, 0.0
      %450 = vst.msk [vmem:[#allocation3 + $0x188] sm:$0xff] %vm280, 0.0
      %451 = vst.msk [vmem:[#allocation3 + $0x190] sm:$0x3] %vm283, 0.0
      %452 = vst.msk [vmem:[#allocation3 + $0x198] sm:$0xff] %vm280, 0.0
      %453 = vst.msk [vmem:[#allocation3 + $0x1a0] sm:$0xff] %vm280, 0.0
      %454 = vst.msk [vmem:[#allocation3 + $0x1a8] sm:$0x3] %vm283, 0.0
      %v455 = vld [vmem:[#allocation2] sm:$0xff]
      %v456 = vld [vmem:[#allocation2 + $0x8] sm:$0xff]
      %v457 = vld [vmem:[#allocation2 + $0x18] sm:$0xff]
      %v458 = vld [vmem:[#allocation2 + $0x20] sm:$0xff]
      %v459 = vld [vmem:[#allocation2 + $0x30] sm:$0xff]
      %v460 = vld [vmem:[#allocation2 + $0x38] sm:$0xff]
      %v461 = vld [vmem:[#allocation2 + $0x48] sm:$0xff]
      %v462 = vld [vmem:[#allocation2 + $0x50] sm:$0xff]
      %v463 = vld [vmem:[#allocation2 + $0x60] sm:$0xff]
      %v464 = vld [vmem:[#allocation2 + $0x68] sm:$0xff]
      %v465 = vld [vmem:[#allocation2 + $0x78] sm:$0xff]
      %v466 = vld [vmem:[#allocation2 + $0x80] sm:$0xff]
      %v467 = vld [vmem:[#allocation2 + $0x90] sm:$0xff]
      %v468 = vld [vmem:[#allocation2 + $0x98] sm:$0xff]
      %v469 = vld [vmem:[#allocation2 + $0xa8] sm:$0xff]
      %v470 = vld [vmem:[#allocation2 + $0xb0] sm:$0xff]
      %v471 = vpack.c.bf16 %v456, %v455
      %v472 = vpack.c.bf16 %v458, %v457
      %v473 = vpack.c.bf16 %v460, %v459
      %v474 = vpack.c.bf16 %v462, %v461
      %v475 = vpack.c.bf16 %v464, %v463
      %v476 = vpack.c.bf16 %v466, %v465
      %v477 = vpack.c.bf16 %v468, %v467
      %v478 = vpack.c.bf16 %v470, %v469
      %v479 = vld [vmem:[%s1] sm:$0x3]
      %v480 = vld [vmem:[#allocation2 + $0x1] sm:$0xff]
      %v481 = vld [vmem:[#allocation2 + $0x9] sm:$0xff]
      %v482 = vld [vmem:[#allocation2 + $0x19] sm:$0xff]
      %v483 = vld [vmem:[#allocation2 + $0x21] sm:$0xff]
      %v484 = vld [vmem:[#allocation2 + $0x31] sm:$0xff]
      %v485 = vld [vmem:[#allocation2 + $0x39] sm:$0xff]
      %v486 = vld [vmem:[#allocation2 + $0x49] sm:$0xff]
      %v487 = vld [vmem:[#allocation2 + $0x51] sm:$0xff]
      %v488 = vld [vmem:[#allocation2 + $0x61] sm:$0xff]
      %v489 = vld [vmem:[#allocation2 + $0x69] sm:$0xff]
      %v490 = vld [vmem:[#allocation2 + $0x79] sm:$0xff]
      %v491 = vld [vmem:[#allocation2 + $0x81] sm:$0xff]
      %v492 = vld [vmem:[#allocation2 + $0x91] sm:$0xff]
      %v493 = vld [vmem:[#allocation2 + $0x99] sm:$0xff]
      %v494 = vld [vmem:[#allocation2 + $0xa9] sm:$0xff]
      %v495 = vld [vmem:[#allocation2 + $0xb1] sm:$0xff]
      %v496 = vpack.c.bf16 %v481, %v480
      %v497 = vpack.c.bf16 %v483, %v482
      %v498 = vpack.c.bf16 %v485, %v484
      %v499 = vpack.c.bf16 %v487, %v486
      %v500 = vpack.c.bf16 %v489, %v488
      %v501 = vpack.c.bf16 %v491, %v490
      %v502 = vpack.c.bf16 %v493, %v492
      %v503 = vpack.c.bf16 %v495, %v494
      %s504 = scalar_lea.vmem %s1, 2
      %v505 = vld [vmem:[%s504] sm:$0x3]
      %v507 = vsel %vm280, %v496, 0
      %v510 = vsel %vm280, %v497, 0
      %v513 = vsel %vm280, %v498, 0
      %v516 = vsel %vm280, %v499, 0
      %v519 = vsel %vm280, %v500, 0
      %v522 = vsel %vm280, %v501, 0
      %v525 = vsel %vm280, %v502, 0
      %v528 = vsel %vm280, %v503, 0
      %vm530 = vcmask 1041408
      %v532 = vsel %vm530, %v505, 0
      %534 = vmatprep.subr.bf16.mxu0 0
      %535 = vmatpush1.bf16.msra.mxu0 %v532
      %536 = vmatprep.subr.bf16.mxu0 0
      %537 = vmatpush1.bf16.msra.mxu0 0
      %538 = vmatprep.subr.bf16.mxu0 0
      %539 = vmatpush1.bf16.msra.mxu0 0
      %540 = vmatprep.subr.bf16.mxu0 0
      %541 = vmatpush1.bf16.msra.mxu0 0
      %542 = vmatprep.subr.bf16.mxu0 0
      %543 = vmatpush1.bf16.msra.mxu0 0
      %544 = vmatprep.subr.bf16.mxu0 0
      %545 = vmatpush1.bf16.msra.mxu0 0
      %546 = vmatprep.subr.bf16.mxu0 0
      %547 = vmatpush1.bf16.msra.mxu0 0
      %548 = vmatprep.subr.bf16.mxu0 0
      %549 = vmatpush1.bf16.msra.mxu0 0
      %550 = vmatprep.subr.bf16.mxu0 0
      %551 = vmatpush1.bf16.msra.mxu0 0
      %552 = vmatprep.subr.bf16.mxu0 0
      %553 = vmatpush1.bf16.msra.mxu0 0
      %554 = vmatprep.subr.bf16.mxu0 0
      %555 = vmatpush1.bf16.msra.mxu0 0
      %556 = vmatprep.subr.bf16.mxu0 0
      %557 = vmatpush1.bf16.msra.mxu0 0
      %558 = vmatprep.subr.bf16.mxu0 0
      %559 = vmatpush1.bf16.msra.mxu0 0
      %560 = vmatprep.subr.bf16.mxu0 0
      %561 = vmatpush1.bf16.msra.mxu0 0
      %562 = vmatprep.subr.bf16.mxu0 0
      %563 = vmatpush1.bf16.msra.mxu0 0
      %564 = vmatprep.subr.bf16.mxu0 0
      %565 = vmatpush1.bf16.msra.mxu0 0
      %566 = vmatprep.mubr.bf16.mxu0 0
      %567 = vmatmul.mubr.bf16.gmra.mrb[0].mxu0 %v507
      %v568 = vpop.f32.mrb[0].mxu0
      %v569 = vadd.f32 0.0, %v568
      %v570 = vpop.f32.mrb[0].mxu0
      %v571 = vpop.f32.mrb[0].mxu0
      %v572 = vadd.f32 0.0, %v571
      %v573 = vpop.f32.mrb[0].mxu0
      %574 = vmatprep.mubr.bf16.mxu0 0
      %575 = vmatmul.mubr.bf16.gmra.mrb[0].mxu0 %v510
      %v576 = vpop.f32.mrb[0].mxu0
      %v577 = vadd.f32 0.0, %v576
      %v578 = vpop.f32.mrb[0].mxu0
      %v579 = vpop.f32.mrb[0].mxu0
      %v580 = vadd.f32 0.0, %v579
      %v581 = vpop.f32.mrb[0].mxu0
      %582 = vmatprep.mubr.bf16.mxu0 0
      %583 = vmatmul.mubr.bf16.gmra.mrb[0].mxu0 %v513
      %v584 = vpop.f32.mrb[0].mxu0
      %v585 = vadd.f32 0.0, %v584
      %v586 = vpop.f32.mrb[0].mxu0
      %v587 = vpop.f32.mrb[0].mxu0
      %v588 = vadd.f32 0.0, %v587
      %v589 = vpop.f32.mrb[0].mxu0
      %590 = vmatprep.mubr.bf16.mxu0 0
      %591 = vmatmul.mubr.bf16.gmra.mrb[0].mxu0 %v516
      %v592 = vpop.f32.mrb[0].mxu0
      %v593 = vadd.f32 0.0, %v592
      %v594 = vpop.f32.mrb[0].mxu0
      %v595 = vpop.f32.mrb[0].mxu0
      %v596 = vadd.f32 0.0, %v595
      %v597 = vpop.f32.mrb[0].mxu0
      %598 = vmatprep.mubr.bf16.mxu0 0
      %599 = vmatmul.mubr.bf16.gmra.mrb[0].mxu0 %v519
      %v600 = vpop.f32.mrb[0].mxu0
      %v601 = vadd.f32 0.0, %v600
      %v602 = vpop.f32.mrb[0].mxu0
      %v603 = vpop.f32.mrb[0].mxu0
      %v604 = vadd.f32 0.0, %v603
      %v605 = vpop.f32.mrb[0].mxu0
      %606 = vmatprep.mubr.bf16.mxu0 0
      %607 = vmatmul.mubr.bf16.gmra.mrb[0].mxu0 %v522
      %v608 = vpop.f32.mrb[0].mxu0
      %v609 = vadd.f32 0.0, %v608
      %v610 = vpop.f32.mrb[0].mxu0
      %v611 = vpop.f32.mrb[0].mxu0
      %v612 = vadd.f32 0.0, %v611
      %v613 = vpop.f32.mrb[0].mxu0
      %614 = vmatprep.mubr.bf16.mxu0 0
      %615 = vmatmul.mubr.bf16.gmra.mrb[0].mxu0 %v525
      %v616 = vpop.f32.mrb[0].mxu0
      %v617 = vadd.f32 0.0, %v616
      %v618 = vpop.f32.mrb[0].mxu0
      %v619 = vpop.f32.mrb[0].mxu0
      %v620 = vadd.f32 0.0, %v619
      %v621 = vpop.f32.mrb[0].mxu0
      %622 = vmatprep.mubr.bf16.mxu0 0
      %623 = vmatmul.mubr.bf16.gmra.mrb[0].mxu0 %v528
      %v624 = vpop.f32.mrb[0].mxu0
      %v625 = vadd.f32 0.0, %v624
      %v626 = vpop.f32.mrb[0].mxu0
      %v627 = vpop.f32.mrb[0].mxu0
      %v628 = vadd.f32 0.0, %v627
      %v629 = vpop.f32.mrb[0].mxu0
      %630 = vdwg.mxu0
      %v632 = vsel %vm280, %v471, 0
      %v635 = vsel %vm280, %v472, 0
      %v638 = vsel %vm280, %v473, 0
      %v641 = vsel %vm280, %v474, 0
      %v644 = vsel %vm280, %v475, 0
      %v647 = vsel %vm280, %v476, 0
      %v650 = vsel %vm280, %v477, 0
      %v653 = vsel %vm280, %v478, 0
      %v656 = vsel %vm530, %v479, 0
      %658 = vmatprep.subr.bf16.mxu0 0
      %659 = vmatpush1.bf16.msra.mxu0 %v656
      %660 = vmatprep.subr.bf16.mxu0 0
      %661 = vmatpush1.bf16.msra.mxu0 0
      %662 = vmatprep.subr.bf16.mxu0 0
      %663 = vmatpush1.bf16.msra.mxu0 0
      %664 = vmatprep.subr.bf16.mxu0 0
      %665 = vmatpush1.bf16.msra.mxu0 0
      %666 = vmatprep.subr.bf16.mxu0 0
      %667 = vmatpush1.bf16.msra.mxu0 0
      %668 = vmatprep.subr.bf16.mxu0 0
      %669 = vmatpush1.bf16.msra.mxu0 0
      %670 = vmatprep.subr.bf16.mxu0 0
      %671 = vmatpush1.bf16.msra.mxu0 0
      %672 = vmatprep.subr.bf16.mxu0 0
      %673 = vmatpush1.bf16.msra.mxu0 0
      %674 = vmatprep.subr.bf16.mxu0 0
      %675 = vmatpush1.bf16.msra.mxu0 0
      %676 = vmatprep.subr.bf16.mxu0 0
      %677 = vmatpush1.bf16.msra.mxu0 0
      %678 = vmatprep.subr.bf16.mxu0 0
      %679 = vmatpush1.bf16.msra.mxu0 0
      %680 = vmatprep.subr.bf16.mxu0 0
      %681 = vmatpush1.bf16.msra.mxu0 0
      %682 = vmatprep.subr.bf16.mxu0 0
      %683 = vmatpush1.bf16.msra.mxu0 0
      %684 = vmatprep.subr.bf16.mxu0 0
      %685 = vmatpush1.bf16.msra.mxu0 0
      %686 = vmatprep.subr.bf16.mxu0 0
      %687 = vmatpush1.bf16.msra.mxu0 0
      %688 = vmatprep.subr.bf16.mxu0 0
      %689 = vmatpush1.bf16.msra.mxu0 0
      %690 = vmatprep.mubr.bf16.mxu0 0
      %691 = vmatmul.mubr.bf16.gmra.mrb[0].mxu0 %v632
      %v692 = vpop.f32.mrb[0].mxu0
      %v693 = vadd.f32 %v569, %v692
      %v694 = vpop.f32.mrb[0].mxu0
      %v695 = vpop.f32.mrb[0].mxu0
      %v696 = vadd.f32 %v572, %v695
      %v697 = vpop.f32.mrb[0].mxu0
      %698 = vmatprep.mubr.bf16.mxu0 0
      %699 = vmatmul.mubr.bf16.gmra.mrb[0].mxu0 %v635
      %v700 = vpop.f32.mrb[0].mxu0
      %v701 = vadd.f32 %v577, %v700
      %v702 = vpop.f32.mrb[0].mxu0
      %v703 = vpop.f32.mrb[0].mxu0
      %v704 = vadd.f32 %v580, %v703
      %v705 = vpop.f32.mrb[0].mxu0
      %706 = vmatprep.mubr.bf16.mxu0 0
      %707 = vmatmul.mubr.bf16.gmra.mrb[0].mxu0 %v638
      %v708 = vpop.f32.mrb[0].mxu0
      %v709 = vadd.f32 %v585, %v708
      %v710 = vpop.f32.mrb[0].mxu0
      %v711 = vpop.f32.mrb[0].mxu0
      %v712 = vadd.f32 %v588, %v711
      %v713 = vpop.f32.mrb[0].mxu0
      %714 = vmatprep.mubr.bf16.mxu0 0
      %715 = vmatmul.mubr.bf16.gmra.mrb[0].mxu0 %v641
      %v716 = vpop.f32.mrb[0].mxu0
      %v717 = vadd.f32 %v593, %v716
      %v718 = vpop.f32.mrb[0].mxu0
      %v719 = vpop.f32.mrb[0].mxu0
      %v720 = vadd.f32 %v596, %v719
      %v721 = vpop.f32.mrb[0].mxu0
      %722 = vmatprep.mubr.bf16.mxu0 0
      %723 = vmatmul.mubr.bf16.gmra.mrb[0].mxu0 %v644
      %v724 = vpop.f32.mrb[0].mxu0
      %v725 = vadd.f32 %v601, %v724
      %v726 = vpop.f32.mrb[0].mxu0
      %v727 = vpop.f32.mrb[0].mxu0
      %v728 = vadd.f32 %v604, %v727
      %v729 = vpop.f32.mrb[0].mxu0
      %730 = vmatprep.mubr.bf16.mxu0 0
      %731 = vmatmul.mubr.bf16.gmra.mrb[0].mxu0 %v647
      %v732 = vpop.f32.mrb[0].mxu0
      %v733 = vadd.f32 %v609, %v732
      %v734 = vpop.f32.mrb[0].mxu0
      %v735 = vpop.f32.mrb[0].mxu0
      %v736 = vadd.f32 %v612, %v735
      %v737 = vpop.f32.mrb[0].mxu0
      %738 = vmatprep.mubr.bf16.mxu0 0
      %739 = vmatmul.mubr.bf16.gmra.mrb[0].mxu0 %v650
      %v740 = vpop.f32.mrb[0].mxu0
      %v741 = vadd.f32 %v617, %v740
      %v742 = vpop.f32.mrb[0].mxu0
      %v743 = vpop.f32.mrb[0].mxu0
      %v744 = vadd.f32 %v620, %v743
      %v745 = vpop.f32.mrb[0].mxu0
      %746 = vmatprep.mubr.bf16.mxu0 0
      %747 = vmatmul.mubr.bf16.gmra.mrb[0].mxu0 %v653
      %v748 = vpop.f32.mrb[0].mxu0
      %v749 = vadd.f32 %v625, %v748
      %v750 = vpop.f32.mrb[0].mxu0
      %v751 = vpop.f32.mrb[0].mxu0
      %v752 = vadd.f32 %v628, %v751
      %v753 = vpop.f32.mrb[0].mxu0
      %754 = vdwg.mxu0
      %v755 = vld [vmem:[#allocation2 + $0x2] sm:$0xff]
      %v756 = vld [vmem:[#allocation2 + $0xa] sm:$0xff]
      %v757 = vld [vmem:[#allocation2 + $0x1a] sm:$0xff]
      %v758 = vld [vmem:[#allocation2 + $0x22] sm:$0xff]
      %v759 = vld [vmem:[#allocation2 + $0x32] sm:$0xff]
      %v760 = vld [vmem:[#allocation2 + $0x3a] sm:$0xff]
      %v761 = vld [vmem:[#allocation2 + $0x4a] sm:$0xff]
      %v762 = vld [vmem:[#allocation2 + $0x52] sm:$0xff]
      %v763 = vld [vmem:[#allocation2 + $0x62] sm:$0xff]
      %v764 = vld [vmem:[#allocation2 + $0x6a] sm:$0xff]
      %v765 = vld [vmem:[#allocation2 + $0x7a] sm:$0xff]
      %v766 = vld [vmem:[#allocation2 + $0x82] sm:$0xff]
      %v767 = vld [vmem:[#allocation2 + $0x92] sm:$0xff]
      %v768 = vld [vmem:[#allocation2 + $0x9a] sm:$0xff]
      %v769 = vld [vmem:[#allocation2 + $0xaa] sm:$0xff]
      %v770 = vld [vmem:[#allocation2 + $0xb2] sm:$0xff]
      %v771 = vpack.c.bf16 %v756, %v755
      %v772 = vpack.c.bf16 %v758, %v757
      %v773 = vpack.c.bf16 %v760, %v759
      %v774 = vpack.c.bf16 %v762, %v761
      %v775 = vpack.c.bf16 %v764, %v763
      %v776 = vpack.c.bf16 %v766, %v765
      %v777 = vpack.c.bf16 %v768, %v767
      %v778 = vpack.c.bf16 %v770, %v769
      %s779 = scalar_lea.vmem %s1, 4
      %v780 = vld [vmem:[%s779] sm:$0x3]
      %v782 = vsel %vm280, %v771, 0
      %v785 = vsel %vm280, %v772, 0
      %v788 = vsel %vm280, %v773, 0
      %v791 = vsel %vm280, %v774, 0
      %v794 = vsel %vm280, %v775, 0
      %v797 = vsel %vm280, %v776, 0
      %v800 = vsel %vm280, %v777, 0
      %v803 = vsel %vm280, %v778, 0
      %v806 = vsel %vm530, %v780, 0
      %808 = vmatprep.subr.bf16.mxu0 0
      %809 = vmatpush1.bf16.msra.mxu0 %v806
      %810 = vmatprep.subr.bf16.mxu0 0
      %811 = vmatpush1.bf16.msra.mxu0 0
      %812 = vmatprep.subr.bf16.mxu0 0
      %813 = vmatpush1.bf16.msra.mxu0 0
      %814 = vmatprep.subr.bf16.mxu0 0
      %815 = vmatpush1.bf16.msra.mxu0 0
      %816 = vmatprep.subr.bf16.mxu0 0
      %817 = vmatpush1.bf16.msra.mxu0 0
      %818 = vmatprep.subr.bf16.mxu0 0
      %819 = vmatpush1.bf16.msra.mxu0 0
      %820 = vmatprep.subr.bf16.mxu0 0
      %821 = vmatpush1.bf16.msra.mxu0 0
      %822 = vmatprep.subr.bf16.mxu0 0
      %823 = vmatpush1.bf16.msra.mxu0 0
      %824 = vmatprep.subr.bf16.mxu0 0
      %825 = vmatpush1.bf16.msra.mxu0 0
      %826 = vmatprep.subr.bf16.mxu0 0
      %827 = vmatpush1.bf16.msra.mxu0 0
      %828 = vmatprep.subr.bf16.mxu0 0
      %829 = vmatpush1.bf16.msra.mxu0 0
      %830 = vmatprep.subr.bf16.mxu0 0
      %831 = vmatpush1.bf16.msra.mxu0 0
      %832 = vmatprep.subr.bf16.mxu0 0
      %833 = vmatpush1.bf16.msra.mxu0 0
      %834 = vmatprep.subr.bf16.mxu0 0
      %835 = vmatpush1.bf16.msra.mxu0 0
      %836 = vmatprep.subr.bf16.mxu0 0
      %837 = vmatpush1.bf16.msra.mxu0 0
      %838 = vmatprep.subr.bf16.mxu0 0
      %839 = vmatpush1.bf16.msra.mxu0 0
      %840 = vmatprep.mubr.bf16.mxu0 0
      %841 = vmatmul.mubr.bf16.gmra.mrb[0].mxu0 %v782
      %v842 = vpop.f32.mrb[0].mxu0
      %v843 = vadd.f32 0.0, %v842
      %v844 = vpop.f32.mrb[0].mxu0
      %v845 = vpop.f32.mrb[0].mxu0
      %v846 = vadd.f32 0.0, %v845
      %v847 = vpop.f32.mrb[0].mxu0
      %848 = vmatprep.mubr.bf16.mxu0 0
      %849 = vmatmul.mubr.bf16.gmra.mrb[0].mxu0 %v785
      %v850 = vpop.f32.mrb[0].mxu0
      %v851 = vadd.f32 0.0, %v850
      %v852 = vpop.f32.mrb[0].mxu0
      %v853 = vpop.f32.mrb[0].mxu0
      %v854 = vadd.f32 0.0, %v853
      %v855 = vpop.f32.mrb[0].mxu0
      %856 = vmatprep.mubr.bf16.mxu0 0
      %857 = vmatmul.mubr.bf16.gmra.mrb[0].mxu0 %v788
      %v858 = vpop.f32.mrb[0].mxu0
      %v859 = vadd.f32 0.0, %v858
      %v860 = vpop.f32.mrb[0].mxu0
      %v861 = vpop.f32.mrb[0].mxu0
      %v862 = vadd.f32 0.0, %v861
      %v863 = vpop.f32.mrb[0].mxu0
      %864 = vmatprep.mubr.bf16.mxu0 0
      %865 = vmatmul.mubr.bf16.gmra.mrb[0].mxu0 %v791
      %v866 = vpop.f32.mrb[0].mxu0
      %v867 = vadd.f32 0.0, %v866
      %v868 = vpop.f32.mrb[0].mxu0
      %v869 = vpop.f32.mrb[0].mxu0
      %v870 = vadd.f32 0.0, %v869
      %v871 = vpop.f32.mrb[0].mxu0
      %872 = vmatprep.mubr.bf16.mxu0 0
      %873 = vmatmul.mubr.bf16.gmra.mrb[0].mxu0 %v794
      %v874 = vpop.f32.mrb[0].mxu0
      %v875 = vadd.f32 0.0, %v874
      %v876 = vpop.f32.mrb[0].mxu0
      %v877 = vpop.f32.mrb[0].mxu0
      %v878 = vadd.f32 0.0, %v877
      %v879 = vpop.f32.mrb[0].mxu0
      %880 = vmatprep.mubr.bf16.mxu0 0
      %881 = vmatmul.mubr.bf16.gmra.mrb[0].mxu0 %v797
      %v882 = vpop.f32.mrb[0].mxu0
      %v883 = vadd.f32 0.0, %v882
      %v884 = vpop.f32.mrb[0].mxu0
      %v885 = vpop.f32.mrb[0].mxu0
      %v886 = vadd.f32 0.0, %v885
      %v887 = vpop.f32.mrb[0].mxu0
      %888 = vmatprep.mubr.bf16.mxu0 0
      %889 = vmatmul.mubr.bf16.gmra.mrb[0].mxu0 %v800
      %v890 = vpop.f32.mrb[0].mxu0
      %v891 = vadd.f32 0.0, %v890
      %v892 = vpop.f32.mrb[0].mxu0
      %v893 = vpop.f32.mrb[0].mxu0
      %v894 = vadd.f32 0.0, %v893
      %v895 = vpop.f32.mrb[0].mxu0
      %896 = vmatprep.mubr.bf16.mxu0 0
      %897 = vmatmul.mubr.bf16.gmra.mrb[0].mxu0 %v803
      %v898 = vpop.f32.mrb[0].mxu0
      %v899 = vadd.f32 0.0, %v898
      %v900 = vpop.f32.mrb[0].mxu0
      %v901 = vpop.f32.mrb[0].mxu0
      %v902 = vadd.f32 0.0, %v901
      %v903 = vpop.f32.mrb[0].mxu0
      %904 = vdwg.mxu0
      %v905 = vadd.f32 %v693, %v843
      %v906 = vadd.f32 %v696, %v846
      %v907 = vadd.f32 %v701, %v851
      %v908 = vadd.f32 %v704, %v854
      %v909 = vadd.f32 %v709, %v859
      %v910 = vadd.f32 %v712, %v862
      %v911 = vadd.f32 %v717, %v867
      %v912 = vadd.f32 %v720, %v870
      %v913 = vadd.f32 %v725, %v875
      %v914 = vadd.f32 %v728, %v878
      %v915 = vadd.f32 %v733, %v883
      %v916 = vadd.f32 %v736, %v886
      %v917 = vadd.f32 %v741, %v891
      %v918 = vadd.f32 %v744, %v894
      %v919 = vadd.f32 %v749, %v899
      %v920 = vadd.f32 %v752, %v902
      %v921 = vld [vmem:[%s368] sm:$0xff]
      %v922 = vld [vmem:[%s368 + $0x8] sm:$0xff]
      %v923 = vld [vmem:[%s368 + $0x18] sm:$0xff]
      %v924 = vld [vmem:[%s368 + $0x20] sm:$0xff]
      %v925 = vld [vmem:[%s368 + $0x30] sm:$0xff]
      %v926 = vld [vmem:[%s368 + $0x38] sm:$0xff]
      %v927 = vld [vmem:[%s368 + $0x48] sm:$0xff]
      %v928 = vld [vmem:[%s368 + $0x50] sm:$0xff]
      %v929 = vld [vmem:[%s368 + $0x60] sm:$0xff]
      %v930 = vld [vmem:[%s368 + $0x68] sm:$0xff]
      %v931 = vld [vmem:[%s368 + $0x78] sm:$0xff]
      %v932 = vld [vmem:[%s368 + $0x80] sm:$0xff]
      %v933 = vld [vmem:[%s368 + $0x90] sm:$0xff]
      %v934 = vld [vmem:[%s368 + $0x98] sm:$0xff]
      %v935 = vld [vmem:[%s368 + $0xa8] sm:$0xff]
      %v936 = vld [vmem:[%s368 + $0xb0] sm:$0xff]
      %v937 = vpack.c.bf16 %v922, %v921
      %v938 = vpack.c.bf16 %v924, %v923
      %v939 = vpack.c.bf16 %v926, %v925
      %v940 = vpack.c.bf16 %v928, %v927
      %v941 = vpack.c.bf16 %v930, %v929
      %v942 = vpack.c.bf16 %v932, %v931
      %v943 = vpack.c.bf16 %v934, %v933
      %v944 = vpack.c.bf16 %v936, %v935
      %s945 = scalar_lea.vmem %s1, 6
      %v946 = vld [vmem:[%s945] sm:$0x3]
      %v948 = vsel %vm280, %v937, 0
      %v951 = vsel %vm280, %v938, 0
      %v954 = vsel %vm280, %v939, 0
      %v957 = vsel %vm280, %v940, 0
      %v960 = vsel %vm280, %v941, 0
      %v963 = vsel %vm280, %v942, 0
      %v966 = vsel %vm280, %v943, 0
      %v969 = vsel %vm280, %v944, 0
      %v972 = vsel %vm530, %v946, 0
      %974 = vmatprep.subr.bf16.mxu0 0
      %975 = vmatpush1.bf16.msra.mxu0 %v972
      %976 = vmatprep.subr.bf16.mxu0 0
      %977 = vmatpush1.bf16.msra.mxu0 0
      %978 = vmatprep.subr.bf16.mxu0 0
      %979 = vmatpush1.bf16.msra.mxu0 0
      %980 = vmatprep.subr.bf16.mxu0 0
      %981 = vmatpush1.bf16.msra.mxu0 0
      %982 = vmatprep.subr.bf16.mxu0 0
      %983 = vmatpush1.bf16.msra.mxu0 0
      %984 = vmatprep.subr.bf16.mxu0 0
      %985 = vmatpush1.bf16.msra.mxu0 0
      %986 = vmatprep.subr.bf16.mxu0 0
      %987 = vmatpush1.bf16.msra.mxu0 0
      %988 = vmatprep.subr.bf16.mxu0 0
      %989 = vmatpush1.bf16.msra.mxu0 0
      %990 = vmatprep.subr.bf16.mxu0 0
      %991 = vmatpush1.bf16.msra.mxu0 0
      %992 = vmatprep.subr.bf16.mxu0 0
      %993 = vmatpush1.bf16.msra.mxu0 0
      %994 = vmatprep.subr.bf16.mxu0 0
      %995 = vmatpush1.bf16.msra.mxu0 0
      %996 = vmatprep.subr.bf16.mxu0 0
      %997 = vmatpush1.bf16.msra.mxu0 0
      %998 = vmatprep.subr.bf16.mxu0 0
      %999 = vmatpush1.bf16.msra.mxu0 0
      %1000 = vmatprep.subr.bf16.mxu0 0
      %1001 = vmatpush1.bf16.msra.mxu0 0
      %1002 = vmatprep.subr.bf16.mxu0 0
      %1003 = vmatpush1.bf16.msra.mxu0 0
      %1004 = vmatprep.subr.bf16.mxu0 0
      %1005 = vmatpush1.bf16.msra.mxu0 0
      %1006 = vmatprep.mubr.bf16.mxu0 0
      %1007 = vmatmul.mubr.bf16.gmra.mrb[0].mxu0 %v948
      %v1008 = vpop.f32.mrb[0].mxu0
      %v1009 = vadd.f32 0.0, %v1008
      %v1010 = vpop.f32.mrb[0].mxu0
      %v1011 = vpop.f32.mrb[0].mxu0
      %v1012 = vadd.f32 0.0, %v1011
      %v1013 = vpop.f32.mrb[0].mxu0
      %1014 = vmatprep.mubr.bf16.mxu0 0
      %1015 = vmatmul.mubr.bf16.gmra.mrb[0].mxu0 %v951
      %v1016 = vpop.f32.mrb[0].mxu0
      %v1017 = vadd.f32 0.0, %v1016
      %v1018 = vpop.f32.mrb[0].mxu0
      %v1019 = vpop.f32.mrb[0].mxu0
      %v1020 = vadd.f32 0.0, %v1019
      %v1021 = vpop.f32.mrb[0].mxu0
      %1022 = vmatprep.mubr.bf16.mxu0 0
      %1023 = vmatmul.mubr.bf16.gmra.mrb[0].mxu0 %v954
      %v1024 = vpop.f32.mrb[0].mxu0
      %v1025 = vadd.f32 0.0, %v1024
      %v1026 = vpop.f32.mrb[0].mxu0
      %v1027 = vpop.f32.mrb[0].mxu0
      %v1028 = vadd.f32 0.0, %v1027
      %v1029 = vpop.f32.mrb[0].mxu0
      %1030 = vmatprep.mubr.bf16.mxu0 0
      %1031 = vmatmul.mubr.bf16.gmra.mrb[0].mxu0 %v957
      %v1032 = vpop.f32.mrb[0].mxu0
      %v1033 = vadd.f32 0.0, %v1032
      %v1034 = vpop.f32.mrb[0].mxu0
      %v1035 = vpop.f32.mrb[0].mxu0
      %v1036 = vadd.f32 0.0, %v1035
      %v1037 = vpop.f32.mrb[0].mxu0
      %1038 = vmatprep.mubr.bf16.mxu0 0
      %1039 = vmatmul.mubr.bf16.gmra.mrb[0].mxu0 %v960
      %v1040 = vpop.f32.mrb[0].mxu0
      %v1041 = vadd.f32 0.0, %v1040
      %v1042 = vpop.f32.mrb[0].mxu0
      %v1043 = vpop.f32.mrb[0].mxu0
      %v1044 = vadd.f32 0.0, %v1043
      %v1045 = vpop.f32.mrb[0].mxu0
      %1046 = vmatprep.mubr.bf16.mxu0 0
      %1047 = vmatmul.mubr.bf16.gmra.mrb[0].mxu0 %v963
      %v1048 = vpop.f32.mrb[0].mxu0
      %v1049 = vadd.f32 0.0, %v1048
      %v1050 = vpop.f32.mrb[0].mxu0
      %v1051 = vpop.f32.mrb[0].mxu0
      %v1052 = vadd.f32 0.0, %v1051
      %v1053 = vpop.f32.mrb[0].mxu0
      %1054 = vmatprep.mubr.bf16.mxu0 0
      %1055 = vmatmul.mubr.bf16.gmra.mrb[0].mxu0 %v966
      %v1056 = vpop.f32.mrb[0].mxu0
      %v1057 = vadd.f32 0.0, %v1056
      %v1058 = vpop.f32.mrb[0].mxu0
      %v1059 = vpop.f32.mrb[0].mxu0
      %v1060 = vadd.f32 0.0, %v1059
      %v1061 = vpop.f32.mrb[0].mxu0
      %1062 = vmatprep.mubr.bf16.mxu0 0
      %1063 = vmatmul.mubr.bf16.gmra.mrb[0].mxu0 %v969
      %v1064 = vpop.f32.mrb[0].mxu0
      %v1065 = vadd.f32 0.0, %v1064
      %v1066 = vpop.f32.mrb[0].mxu0
      %v1067 = vpop.f32.mrb[0].mxu0
      %v1068 = vadd.f32 0.0, %v1067
      %v1069 = vpop.f32.mrb[0].mxu0
      %1070 = vdwg.mxu0
      %v1071 = vadd.f32 %v905, %v1009
      %v1072 = vadd.f32 %v906, %v1012
      %v1073 = vadd.f32 %v907, %v1017
      %v1074 = vadd.f32 %v908, %v1020
      %v1075 = vadd.f32 %v909, %v1025
      %v1076 = vadd.f32 %v910, %v1028
      %v1077 = vadd.f32 %v911, %v1033
      %v1078 = vadd.f32 %v912, %v1036
      %v1079 = vadd.f32 %v913, %v1041
      %v1080 = vadd.f32 %v914, %v1044
      %v1081 = vadd.f32 %v915, %v1049
      %v1082 = vadd.f32 %v916, %v1052
      %v1083 = vadd.f32 %v917, %v1057
      %v1084 = vadd.f32 %v918, %v1060
      %v1085 = vadd.f32 %v919, %v1065
      %v1086 = vadd.f32 %v920, %v1068
      %v1087 = vld [vmem:[%s368 + $0x1] sm:$0xff]
      %v1088 = vld [vmem:[%s368 + $0x9] sm:$0xff]
      %v1089 = vld [vmem:[%s368 + $0x19] sm:$0xff]
      %v1090 = vld [vmem:[%s368 + $0x21] sm:$0xff]
      %v1091 = vld [vmem:[%s368 + $0x31] sm:$0xff]
      %v1092 = vld [vmem:[%s368 + $0x39] sm:$0xff]
      %v1093 = vld [vmem:[%s368 + $0x49] sm:$0xff]
      %v1094 = vld [vmem:[%s368 + $0x51] sm:$0xff]
      %v1095 = vld [vmem:[%s368 + $0x61] sm:$0xff]
      %v1096 = vld [vmem:[%s368 + $0x69] sm:$0xff]
      %v1097 = vld [vmem:[%s368 + $0x79] sm:$0xff]
      %v1098 = vld [vmem:[%s368 + $0x81] sm:$0xff]
      %v1099 = vld [vmem:[%s368 + $0x91] sm:$0xff]
      %v1100 = vld [vmem:[%s368 + $0x99] sm:$0xff]
      %v1101 = vld [vmem:[%s368 + $0xa9] sm:$0xff]
      %v1102 = vld [vmem:[%s368 + $0xb1] sm:$0xff]
      %v1103 = vpack.c.bf16 %v1088, %v1087
      %v1104 = vpack.c.bf16 %v1090, %v1089
      %v1105 = vpack.c.bf16 %v1092, %v1091
      %v1106 = vpack.c.bf16 %v1094, %v1093
      %v1107 = vpack.c.bf16 %v1096, %v1095
      %v1108 = vpack.c.bf16 %v1098, %v1097
      %v1109 = vpack.c.bf16 %v1100, %v1099
      %v1110 = vpack.c.bf16 %v1102, %v1101
      %s1111 = scalar_lea.vmem %s1, 8
      %v1112 = vld [vmem:[%s1111] sm:$0x3]
      %v1114 = vsel %vm280, %v1103, 0
      %v1117 = vsel %vm280, %v1104, 0
      %v1120 = vsel %vm280, %v1105, 0
      %v1123 = vsel %vm280, %v1106, 0
      %v1126 = vsel %vm280, %v1107, 0
      %v1129 = vsel %vm280, %v1108, 0
      %v1132 = vsel %vm280, %v1109, 0
      %v1135 = vsel %vm280, %v1110, 0
      %v1138 = vsel %vm530, %v1112, 0
      %1140 = vmatprep.subr.bf16.mxu0 0
      %1141 = vmatpush1.bf16.msra.mxu0 %v1138
      %1142 = vmatprep.subr.bf16.mxu0 0
      %1143 = vmatpush1.bf16.msra.mxu0 0
      %1144 = vmatprep.subr.bf16.mxu0 0
      %1145 = vmatpush1.bf16.msra.mxu0 0
      %1146 = vmatprep.subr.bf16.mxu0 0
      %1147 = vmatpush1.bf16.msra.mxu0 0
      %1148 = vmatprep.subr.bf16.mxu0 0
      %1149 = vmatpush1.bf16.msra.mxu0 0
      %1150 = vmatprep.subr.bf16.mxu0 0
      %1151 = vmatpush1.bf16.msra.mxu0 0
      %1152 = vmatprep.subr.bf16.mxu0 0
      %1153 = vmatpush1.bf16.msra.mxu0 0
      %1154 = vmatprep.subr.bf16.mxu0 0
      %1155 = vmatpush1.bf16.msra.mxu0 0
      %1156 = vmatprep.subr.bf16.mxu0 0
      %1157 = vmatpush1.bf16.msra.mxu0 0
      %1158 = vmatprep.subr.bf16.mxu0 0
      %1159 = vmatpush1.bf16.msra.mxu0 0
      %1160 = vmatprep.subr.bf16.mxu0 0
      %1161 = vmatpush1.bf16.msra.mxu0 0
      %1162 = vmatprep.subr.bf16.mxu0 0
      %1163 = vmatpush1.bf16.msra.mxu0 0
      %1164 = vmatprep.subr.bf16.mxu0 0
      %1165 = vmatpush1.bf16.msra.mxu0 0
      %1166 = vmatprep.subr.bf16.mxu0 0
      %1167 = vmatpush1.bf16.msra.mxu0 0
      %1168 = vmatprep.subr.bf16.mxu0 0
      %1169 = vmatpush1.bf16.msra.mxu0 0
      %1170 = vmatprep.subr.bf16.mxu0 0
      %1171 = vmatpush1.bf16.msra.mxu0 0
      %1172 = vmatprep.mubr.bf16.mxu0 0
      %1173 = vmatmul.mubr.bf16.gmra.mrb[0].mxu0 %v1114
      %v1174 = vpop.f32.mrb[0].mxu0
      %v1175 = vadd.f32 0.0, %v1174
      %v1176 = vpop.f32.mrb[0].mxu0
      %v1177 = vpop.f32.mrb[0].mxu0
      %v1178 = vadd.f32 0.0, %v1177
      %v1179 = vpop.f32.mrb[0].mxu0
      %1180 = vmatprep.mubr.bf16.mxu0 0
      %1181 = vmatmul.mubr.bf16.gmra.mrb[0].mxu0 %v1117
      %v1182 = vpop.f32.mrb[0].mxu0
      %v1183 = vadd.f32 0.0, %v1182
      %v1184 = vpop.f32.mrb[0].mxu0
      %v1185 = vpop.f32.mrb[0].mxu0
      %v1186 = vadd.f32 0.0, %v1185
      %v1187 = vpop.f32.mrb[0].mxu0
      %1188 = vmatprep.mubr.bf16.mxu0 0
      %1189 = vmatmul.mubr.bf16.gmra.mrb[0].mxu0 %v1120
      %v1190 = vpop.f32.mrb[0].mxu0
      %v1191 = vadd.f32 0.0, %v1190
      %v1192 = vpop.f32.mrb[0].mxu0
      %v1193 = vpop.f32.mrb[0].mxu0
      %v1194 = vadd.f32 0.0, %v1193
      %v1195 = vpop.f32.mrb[0].mxu0
      %1196 = vmatprep.mubr.bf16.mxu0 0
      %1197 = vmatmul.mubr.bf16.gmra.mrb[0].mxu0 %v1123
      %v1198 = vpop.f32.mrb[0].mxu0
      %v1199 = vadd.f32 0.0, %v1198
      %v1200 = vpop.f32.mrb[0].mxu0
      %v1201 = vpop.f32.mrb[0].mxu0
      %v1202 = vadd.f32 0.0, %v1201
      %v1203 = vpop.f32.mrb[0].mxu0
      %1204 = vmatprep.mubr.bf16.mxu0 0
      %1205 = vmatmul.mubr.bf16.gmra.mrb[0].mxu0 %v1126
      %v1206 = vpop.f32.mrb[0].mxu0
      %v1207 = vadd.f32 0.0, %v1206
      %v1208 = vpop.f32.mrb[0].mxu0
      %v1209 = vpop.f32.mrb[0].mxu0
      %v1210 = vadd.f32 0.0, %v1209
      %v1211 = vpop.f32.mrb[0].mxu0
      %1212 = vmatprep.mubr.bf16.mxu0 0
      %1213 = vmatmul.mubr.bf16.gmra.mrb[0].mxu0 %v1129
      %v1214 = vpop.f32.mrb[0].mxu0
      %v1215 = vadd.f32 0.0, %v1214
      %v1216 = vpop.f32.mrb[0].mxu0
      %v1217 = vpop.f32.mrb[0].mxu0
      %v1218 = vadd.f32 0.0, %v1217
      %v1219 = vpop.f32.mrb[0].mxu0
      %1220 = vmatprep.mubr.bf16.mxu0 0
      %1221 = vmatmul.mubr.bf16.gmra.mrb[0].mxu0 %v1132
      %v1222 = vpop.f32.mrb[0].mxu0
      %v1223 = vadd.f32 0.0, %v1222
      %v1224 = vpop.f32.mrb[0].mxu0
      %v1225 = vpop.f32.mrb[0].mxu0
      %v1226 = vadd.f32 0.0, %v1225
      %v1227 = vpop.f32.mrb[0].mxu0
      %1228 = vmatprep.mubr.bf16.mxu0 0
      %1229 = vmatmul.mubr.bf16.gmra.mrb[0].mxu0 %v1135
      %v1230 = vpop.f32.mrb[0].mxu0
      %v1231 = vadd.f32 0.0, %v1230
      %v1232 = vpop.f32.mrb[0].mxu0
      %v1233 = vpop.f32.mrb[0].mxu0
      %v1234 = vadd.f32 0.0, %v1233
      %v1235 = vpop.f32.mrb[0].mxu0
      %1236 = vdwg.mxu0
      %v1237 = vadd.f32 %v1071, %v1175
      %v1238 = vadd.f32 %v1072, %v1178
      %v1239 = vadd.f32 %v1073, %v1183
      %v1240 = vadd.f32 %v1074, %v1186
      %v1241 = vadd.f32 %v1075, %v1191
      %v1242 = vadd.f32 %v1076, %v1194
      %v1243 = vadd.f32 %v1077, %v1199
      %v1244 = vadd.f32 %v1078, %v1202
      %v1245 = vadd.f32 %v1079, %v1207
      %v1246 = vadd.f32 %v1080, %v1210
      %v1247 = vadd.f32 %v1081, %v1215
      %v1248 = vadd.f32 %v1082, %v1218
      %v1249 = vadd.f32 %v1083, %v1223
      %v1250 = vadd.f32 %v1084, %v1226
      %v1251 = vadd.f32 %v1085, %v1231
      %v1252 = vadd.f32 %v1086, %v1234
      %v1253 = vld [vmem:[%s368 + $0x2] sm:$0xff]
      %v1254 = vld [vmem:[%s368 + $0xa] sm:$0xff]
      %v1255 = vld [vmem:[%s368 + $0x1a] sm:$0xff]
      %v1256 = vld [vmem:[%s368 + $0x22] sm:$0xff]
      %v1257 = vld [vmem:[%s368 + $0x32] sm:$0xff]
      %v1258 = vld [vmem:[%s368 + $0x3a] sm:$0xff]
      %v1259 = vld [vmem:[%s368 + $0x4a] sm:$0xff]
      %v1260 = vld [vmem:[%s368 + $0x52] sm:$0xff]
      %v1261 = vld [vmem:[%s368 + $0x62] sm:$0xff]
      %v1262 = vld [vmem:[%s368 + $0x6a] sm:$0xff]
      %v1263 = vld [vmem:[%s368 + $0x7a] sm:$0xff]
      %v1264 = vld [vmem:[%s368 + $0x82] sm:$0xff]
      %v1265 = vld [vmem:[%s368 + $0x92] sm:$0xff]
      %v1266 = vld [vmem:[%s368 + $0x9a] sm:$0xff]
      %v1267 = vld [vmem:[%s368 + $0xaa] sm:$0xff]
      %v1268 = vld [vmem:[%s368 + $0xb2] sm:$0xff]
      %v1269 = vpack.c.bf16 %v1254, %v1253
      %v1270 = vpack.c.bf16 %v1256, %v1255
      %v1271 = vpack.c.bf16 %v1258, %v1257
      %v1272 = vpack.c.bf16 %v1260, %v1259
      %v1273 = vpack.c.bf16 %v1262, %v1261
      %v1274 = vpack.c.bf16 %v1264, %v1263
      %v1275 = vpack.c.bf16 %v1266, %v1265
      %v1276 = vpack.c.bf16 %v1268, %v1267
      %s1277 = scalar_lea.vmem %s1, 10
      %v1278 = vld [vmem:[%s1277] sm:$0x3]
      %v1280 = vsel %vm280, %v1269, 0
      %v1283 = vsel %vm280, %v1270, 0
      %v1286 = vsel %vm280, %v1271, 0
      %v1289 = vsel %vm280, %v1272, 0
      %v1292 = vsel %vm280, %v1273, 0
      %v1295 = vsel %vm280, %v1274, 0
      %v1298 = vsel %vm280, %v1275, 0
      %v1301 = vsel %vm280, %v1276, 0
      %v1304 = vsel %vm530, %v1278, 0
      %1306 = vmatprep.subr.bf16.mxu0 0
      %1307 = vmatpush1.bf16.msra.mxu0 %v1304
      %1308 = vmatprep.subr.bf16.mxu0 0
      %1309 = vmatpush1.bf16.msra.mxu0 0
      %1310 = vmatprep.subr.bf16.mxu0 0
      %1311 = vmatpush1.bf16.msra.mxu0 0
      %1312 = vmatprep.subr.bf16.mxu0 0
      %1313 = vmatpush1.bf16.msra.mxu0 0
      %1314 = vmatprep.subr.bf16.mxu0 0
      %1315 = vmatpush1.bf16.msra.mxu0 0
      %1316 = vmatprep.subr.bf16.mxu0 0
      %1317 = vmatpush1.bf16.msra.mxu0 0
      %1318 = vmatprep.subr.bf16.mxu0 0
      %1319 = vmatpush1.bf16.msra.mxu0 0
      %1320 = vmatprep.subr.bf16.mxu0 0
      %1321 = vmatpush1.bf16.msra.mxu0 0
      %1322 = vmatprep.subr.bf16.mxu0 0
      %1323 = vmatpush1.bf16.msra.mxu0 0
      %1324 = vmatprep.subr.bf16.mxu0 0
      %1325 = vmatpush1.bf16.msra.mxu0 0
      %1326 = vmatprep.subr.bf16.mxu0 0
      %1327 = vmatpush1.bf16.msra.mxu0 0
      %1328 = vmatprep.subr.bf16.mxu0 0
      %1329 = vmatpush1.bf16.msra.mxu0 0
      %1330 = vmatprep.subr.bf16.mxu0 0
      %1331 = vmatpush1.bf16.msra.mxu0 0
      %1332 = vmatprep.subr.bf16.mxu0 0
      %1333 = vmatpush1.bf16.msra.mxu0 0
      %1334 = vmatprep.subr.bf16.mxu0 0
      %1335 = vmatpush1.bf16.msra.mxu0 0
      %1336 = vmatprep.subr.bf16.mxu0 0
      %1337 = vmatpush1.bf16.msra.mxu0 0
      %1338 = vmatprep.mubr.bf16.mxu0 0
      %1339 = vmatmul.mubr.bf16.gmra.mrb[0].mxu0 %v1280
      %v1340 = vpop.f32.mrb[0].mxu0
      %v1341 = vadd.f32 0.0, %v1340
      %v1342 = vpop.f32.mrb[0].mxu0
      %v1343 = vpop.f32.mrb[0].mxu0
      %v1344 = vadd.f32 0.0, %v1343
      %v1345 = vpop.f32.mrb[0].mxu0
      %1346 = vmatprep.mubr.bf16.mxu0 0
      %1347 = vmatmul.mubr.bf16.gmra.mrb[0].mxu0 %v1283
      %v1348 = vpop.f32.mrb[0].mxu0
      %v1349 = vadd.f32 0.0, %v1348
      %v1350 = vpop.f32.mrb[0].mxu0
      %v1351 = vpop.f32.mrb[0].mxu0
      %v1352 = vadd.f32 0.0, %v1351
      %v1353 = vpop.f32.mrb[0].mxu0
      %1354 = vmatprep.mubr.bf16.mxu0 0
      %1355 = vmatmul.mubr.bf16.gmra.mrb[0].mxu0 %v1286
      %v1356 = vpop.f32.mrb[0].mxu0
      %v1357 = vadd.f32 0.0, %v1356
      %v1358 = vpop.f32.mrb[0].mxu0
      %v1359 = vpop.f32.mrb[0].mxu0
      %v1360 = vadd.f32 0.0, %v1359
      %v1361 = vpop.f32.mrb[0].mxu0
      %1362 = vmatprep.mubr.bf16.mxu0 0
      %1363 = vmatmul.mubr.bf16.gmra.mrb[0].mxu0 %v1289
      %v1364 = vpop.f32.mrb[0].mxu0
      %v1365 = vadd.f32 0.0, %v1364
      %v1366 = vpop.f32.mrb[0].mxu0
      %v1367 = vpop.f32.mrb[0].mxu0
      %v1368 = vadd.f32 0.0, %v1367
      %v1369 = vpop.f32.mrb[0].mxu0
      %1370 = vmatprep.mubr.bf16.mxu0 0
      %1371 = vmatmul.mubr.bf16.gmra.mrb[0].mxu0 %v1292
      %v1372 = vpop.f32.mrb[0].mxu0
      %v1373 = vadd.f32 0.0, %v1372
      %v1374 = vpop.f32.mrb[0].mxu0
      %v1375 = vpop.f32.mrb[0].mxu0
      %v1376 = vadd.f32 0.0, %v1375
      %v1377 = vpop.f32.mrb[0].mxu0
      %1378 = vmatprep.mubr.bf16.mxu0 0
      %1379 = vmatmul.mubr.bf16.gmra.mrb[0].mxu0 %v1295
      %v1380 = vpop.f32.mrb[0].mxu0
      %v1381 = vadd.f32 0.0, %v1380
      %v1382 = vpop.f32.mrb[0].mxu0
      %v1383 = vpop.f32.mrb[0].mxu0
      %v1384 = vadd.f32 0.0, %v1383
      %v1385 = vpop.f32.mrb[0].mxu0
      %1386 = vmatprep.mubr.bf16.mxu0 0
      %1387 = vmatmul.mubr.bf16.gmra.mrb[0].mxu0 %v1298
      %v1388 = vpop.f32.mrb[0].mxu0
      %v1389 = vadd.f32 0.0, %v1388
      %v1390 = vpop.f32.mrb[0].mxu0
      %v1391 = vpop.f32.mrb[0].mxu0
      %v1392 = vadd.f32 0.0, %v1391
      %v1393 = vpop.f32.mrb[0].mxu0
      %1394 = vmatprep.mubr.bf16.mxu0 0
      %1395 = vmatmul.mubr.bf16.gmra.mrb[0].mxu0 %v1301
      %v1396 = vpop.f32.mrb[0].mxu0
      %v1397 = vadd.f32 0.0, %v1396
      %v1398 = vpop.f32.mrb[0].mxu0
      %v1399 = vpop.f32.mrb[0].mxu0
      %v1400 = vadd.f32 0.0, %v1399
      %v1401 = vpop.f32.mrb[0].mxu0
      %1402 = vdwg.mxu0
      %v1403 = vadd.f32 %v1237, %v1341
      %v1404 = vadd.f32 %v1238, %v1344
      %v1405 = vadd.f32 %v1239, %v1349
      %v1406 = vadd.f32 %v1240, %v1352
      %v1407 = vadd.f32 %v1241, %v1357
      %v1408 = vadd.f32 %v1242, %v1360
      %v1409 = vadd.f32 %v1243, %v1365
      %v1410 = vadd.f32 %v1244, %v1368
      %v1411 = vadd.f32 %v1245, %v1373
      %v1412 = vadd.f32 %v1246, %v1376
      %v1413 = vadd.f32 %v1247, %v1381
      %v1414 = vadd.f32 %v1248, %v1384
      %v1415 = vadd.f32 %v1249, %v1389
      %v1416 = vadd.f32 %v1250, %v1392
      %v1417 = vadd.f32 %v1251, %v1397
      %v1418 = vadd.f32 %v1252, %v1400
      %s1419 = scalar_lea.vmem [#allocation2], 48
      %v1420 = vld [vmem:[%s1419] sm:$0xff]
      %v1421 = vld [vmem:[%s1419 + $0x8] sm:$0xff]
      %v1422 = vld [vmem:[%s1419 + $0x18] sm:$0xff]
      %v1423 = vld [vmem:[%s1419 + $0x20] sm:$0xff]
      %v1424 = vld [vmem:[%s1419 + $0x30] sm:$0xff]
      %v1425 = vld [vmem:[%s1419 + $0x38] sm:$0xff]
      %v1426 = vld [vmem:[%s1419 + $0x48] sm:$0xff]
      %v1427 = vld [vmem:[%s1419 + $0x50] sm:$0xff]
      %v1428 = vld [vmem:[%s1419 + $0x60] sm:$0xff]
      %v1429 = vld [vmem:[%s1419 + $0x68] sm:$0xff]
      %v1430 = vld [vmem:[%s1419 + $0x78] sm:$0xff]
      %v1431 = vld [vmem:[%s1419 + $0x80] sm:$0xff]
      %v1432 = vld [vmem:[%s1419 + $0x90] sm:$0xff]
      %v1433 = vld [vmem:[%s1419 + $0x98] sm:$0xff]
      %v1434 = vld [vmem:[%s1419 + $0xa8] sm:$0xff]
      %v1435 = vld [vmem:[%s1419 + $0xb0] sm:$0xff]
      %v1436 = vpack.c.bf16 %v1421, %v1420
      %v1437 = vpack.c.bf16 %v1423, %v1422
      %v1438 = vpack.c.bf16 %v1425, %v1424
      %v1439 = vpack.c.bf16 %v1427, %v1426
      %v1440 = vpack.c.bf16 %v1429, %v1428
      %v1441 = vpack.c.bf16 %v1431, %v1430
      %v1442 = vpack.c.bf16 %v1433, %v1432
      %v1443 = vpack.c.bf16 %v1435, %v1434
      %s1444 = scalar_lea.vmem %s1, 12
      %v1445 = vld [vmem:[%s1444] sm:$0x3]
      %v1447 = vsel %vm280, %v1436, 0
      %v1450 = vsel %vm280, %v1437, 0
      %v1453 = vsel %vm280, %v1438, 0
      %v1456 = vsel %vm280, %v1439, 0
      %v1459 = vsel %vm280, %v1440, 0
      %v1462 = vsel %vm280, %v1441, 0
      %v1465 = vsel %vm280, %v1442, 0
      %v1468 = vsel %vm280, %v1443, 0
      %v1471 = vsel %vm530, %v1445, 0
      %1473 = vmatprep.subr.bf16.mxu0 0
      %1474 = vmatpush1.bf16.msra.mxu0 %v1471
      %1475 = vmatprep.subr.bf16.mxu0 0
      %1476 = vmatpush1.bf16.msra.mxu0 0
      %1477 = vmatprep.subr.bf16.mxu0 0
      %1478 = vmatpush1.bf16.msra.mxu0 0
      %1479 = vmatprep.subr.bf16.mxu0 0
      %1480 = vmatpush1.bf16.msra.mxu0 0
      %1481 = vmatprep.subr.bf16.mxu0 0
      %1482 = vmatpush1.bf16.msra.mxu0 0
      %1483 = vmatprep.subr.bf16.mxu0 0
      %1484 = vmatpush1.bf16.msra.mxu0 0
      %1485 = vmatprep.subr.bf16.mxu0 0
      %1486 = vmatpush1.bf16.msra.mxu0 0
      %1487 = vmatprep.subr.bf16.mxu0 0
      %1488 = vmatpush1.bf16.msra.mxu0 0
      %1489 = vmatprep.subr.bf16.mxu0 0
      %1490 = vmatpush1.bf16.msra.mxu0 0
      %1491 = vmatprep.subr.bf16.mxu0 0
      %1492 = vmatpush1.bf16.msra.mxu0 0
      %1493 = vmatprep.subr.bf16.mxu0 0
      %1494 = vmatpush1.bf16.msra.mxu0 0
      %1495 = vmatprep.subr.bf16.mxu0 0
      %1496 = vmatpush1.bf16.msra.mxu0 0
      %1497 = vmatprep.subr.bf16.mxu0 0
      %1498 = vmatpush1.bf16.msra.mxu0 0
      %1499 = vmatprep.subr.bf16.mxu0 0
      %1500 = vmatpush1.bf16.msra.mxu0 0
      %1501 = vmatprep.subr.bf16.mxu0 0
      %1502 = vmatpush1.bf16.msra.mxu0 0
      %1503 = vmatprep.subr.bf16.mxu0 0
      %1504 = vmatpush1.bf16.msra.mxu0 0
      %1505 = vmatprep.mubr.bf16.mxu0 0
      %1506 = vmatmul.mubr.bf16.gmra.mrb[0].mxu0 %v1447
      %v1507 = vpop.f32.mrb[0].mxu0
      %v1508 = vadd.f32 0.0, %v1507
      %v1509 = vpop.f32.mrb[0].mxu0
      %v1510 = vpop.f32.mrb[0].mxu0
      %v1511 = vadd.f32 0.0, %v1510
      %v1512 = vpop.f32.mrb[0].mxu0
      %1513 = vmatprep.mubr.bf16.mxu0 0
      %1514 = vmatmul.mubr.bf16.gmra.mrb[0].mxu0 %v1450
      %v1515 = vpop.f32.mrb[0].mxu0
      %v1516 = vadd.f32 0.0, %v1515
      %v1517 = vpop.f32.mrb[0].mxu0
      %v1518 = vpop.f32.mrb[0].mxu0
      %v1519 = vadd.f32 0.0, %v1518
      %v1520 = vpop.f32.mrb[0].mxu0
      %1521 = vmatprep.mubr.bf16.mxu0 0
      %1522 = vmatmul.mubr.bf16.gmra.mrb[0].mxu0 %v1453
      %v1523 = vpop.f32.mrb[0].mxu0
      %v1524 = vadd.f32 0.0, %v1523
      %v1525 = vpop.f32.mrb[0].mxu0
      %v1526 = vpop.f32.mrb[0].mxu0
      %v1527 = vadd.f32 0.0, %v1526
      %v1528 = vpop.f32.mrb[0].mxu0
      %1529 = vmatprep.mubr.bf16.mxu0 0
      %1530 = vmatmul.mubr.bf16.gmra.mrb[0].mxu0 %v1456
      %v1531 = vpop.f32.mrb[0].mxu0
      %v1532 = vadd.f32 0.0, %v1531
      %v1533 = vpop.f32.mrb[0].mxu0
      %v1534 = vpop.f32.mrb[0].mxu0
      %v1535 = vadd.f32 0.0, %v1534
      %v1536 = vpop.f32.mrb[0].mxu0
      %1537 = vmatprep.mubr.bf16.mxu0 0
      %1538 = vmatmul.mubr.bf16.gmra.mrb[0].mxu0 %v1459
      %v1539 = vpop.f32.mrb[0].mxu0
      %v1540 = vadd.f32 0.0, %v1539
      %v1541 = vpop.f32.mrb[0].mxu0
      %v1542 = vpop.f32.mrb[0].mxu0
      %v1543 = vadd.f32 0.0, %v1542
      %v1544 = vpop.f32.mrb[0].mxu0
      %1545 = vmatprep.mubr.bf16.mxu0 0
      %1546 = vmatmul.mubr.bf16.gmra.mrb[0].mxu0 %v1462
      %v1547 = vpop.f32.mrb[0].mxu0
      %v1548 = vadd.f32 0.0, %v1547
      %v1549 = vpop.f32.mrb[0].mxu0
      %v1550 = vpop.f32.mrb[0].mxu0
      %v1551 = vadd.f32 0.0, %v1550
      %v1552 = vpop.f32.mrb[0].mxu0
      %1553 = vmatprep.mubr.bf16.mxu0 0
      %1554 = vmatmul.mubr.bf16.gmra.mrb[0].mxu0 %v1465
      %v1555 = vpop.f32.mrb[0].mxu0
      %v1556 = vadd.f32 0.0, %v1555
      %v1557 = vpop.f32.mrb[0].mxu0
      %v1558 = vpop.f32.mrb[0].mxu0
      %v1559 = vadd.f32 0.0, %v1558
      %v1560 = vpop.f32.mrb[0].mxu0
      %1561 = vmatprep.mubr.bf16.mxu0 0
      %1562 = vmatmul.mubr.bf16.gmra.mrb[0].mxu0 %v1468
      %v1563 = vpop.f32.mrb[0].mxu0
      %v1564 = vadd.f32 0.0, %v1563
      %v1565 = vpop.f32.mrb[0].mxu0
      %v1566 = vpop.f32.mrb[0].mxu0
      %v1567 = vadd.f32 0.0, %v1566
      %v1568 = vpop.f32.mrb[0].mxu0
      %1569 = vdwg.mxu0
      %v1570 = vadd.f32 %v1403, %v1508
      %v1571 = vadd.f32 %v1404, %v1511
      %v1572 = vadd.f32 %v1405, %v1516
      %v1573 = vadd.f32 %v1406, %v1519
      %v1574 = vadd.f32 %v1407, %v1524
      %v1575 = vadd.f32 %v1408, %v1527
      %v1576 = vadd.f32 %v1409, %v1532
      %v1577 = vadd.f32 %v1410, %v1535
      %v1578 = vadd.f32 %v1411, %v1540
      %v1579 = vadd.f32 %v1412, %v1543
      %v1580 = vadd.f32 %v1413, %v1548
      %v1581 = vadd.f32 %v1414, %v1551
      %v1582 = vadd.f32 %v1415, %v1556
      %v1583 = vadd.f32 %v1416, %v1559
      %v1584 = vadd.f32 %v1417, %v1564
      %v1585 = vadd.f32 %v1418, %v1567
      %v1586 = vld [vmem:[%s1419 + $0x1] sm:$0xff]
      %v1587 = vld [vmem:[%s1419 + $0x9] sm:$0xff]
      %v1588 = vld [vmem:[%s1419 + $0x19] sm:$0xff]
      %v1589 = vld [vmem:[%s1419 + $0x21] sm:$0xff]
      %v1590 = vld [vmem:[%s1419 + $0x31] sm:$0xff]
      %v1591 = vld [vmem:[%s1419 + $0x39] sm:$0xff]
      %v1592 = vld [vmem:[%s1419 + $0x49] sm:$0xff]
      %v1593 = vld [vmem:[%s1419 + $0x51] sm:$0xff]
      %v1594 = vld [vmem:[%s1419 + $0x61] sm:$0xff]
      %v1595 = vld [vmem:[%s1419 + $0x69] sm:$0xff]
      %v1596 = vld [vmem:[%s1419 + $0x79] sm:$0xff]
      %v1597 = vld [vmem:[%s1419 + $0x81] sm:$0xff]
      %v1598 = vld [vmem:[%s1419 + $0x91] sm:$0xff]
      %v1599 = vld [vmem:[%s1419 + $0x99] sm:$0xff]
      %v1600 = vld [vmem:[%s1419 + $0xa9] sm:$0xff]
      %v1601 = vld [vmem:[%s1419 + $0xb1] sm:$0xff]
      %v1602 = vpack.c.bf16 %v1587, %v1586
      %v1603 = vpack.c.bf16 %v1589, %v1588
      %v1604 = vpack.c.bf16 %v1591, %v1590
      %v1605 = vpack.c.bf16 %v1593, %v1592
      %v1606 = vpack.c.bf16 %v1595, %v1594
      %v1607 = vpack.c.bf16 %v1597, %v1596
      %v1608 = vpack.c.bf16 %v1599, %v1598
      %v1609 = vpack.c.bf16 %v1601, %v1600
      %s1610 = scalar_lea.vmem %s1, 14
      %v1611 = vld [vmem:[%s1610] sm:$0x3]
      %v1613 = vsel %vm280, %v1602, 0
      %v1616 = vsel %vm280, %v1603, 0
      %v1619 = vsel %vm280, %v1604, 0
      %v1622 = vsel %vm280, %v1605, 0
      %v1625 = vsel %vm280, %v1606, 0
      %v1628 = vsel %vm280, %v1607, 0
      %v1631 = vsel %vm280, %v1608, 0
      %v1634 = vsel %vm280, %v1609, 0
      %v1637 = vsel %vm530, %v1611, 0
      %1639 = vmatprep.subr.bf16.mxu0 0
      %1640 = vmatpush1.bf16.msra.mxu0 %v1637
      %1641 = vmatprep.subr.bf16.mxu0 0
      %1642 = vmatpush1.bf16.msra.mxu0 0
      %1643 = vmatprep.subr.bf16.mxu0 0
      %1644 = vmatpush1.bf16.msra.mxu0 0
      %1645 = vmatprep.subr.bf16.mxu0 0
      %1646 = vmatpush1.bf16.msra.mxu0 0
      %1647 = vmatprep.subr.bf16.mxu0 0
      %1648 = vmatpush1.bf16.msra.mxu0 0
      %1649 = vmatprep.subr.bf16.mxu0 0
      %1650 = vmatpush1.bf16.msra.mxu0 0
      %1651 = vmatprep.subr.bf16.mxu0 0
      %1652 = vmatpush1.bf16.msra.mxu0 0
      %1653 = vmatprep.subr.bf16.mxu0 0
      %1654 = vmatpush1.bf16.msra.mxu0 0
      %1655 = vmatprep.subr.bf16.mxu0 0
      %1656 = vmatpush1.bf16.msra.mxu0 0
      %1657 = vmatprep.subr.bf16.mxu0 0
      %1658 = vmatpush1.bf16.msra.mxu0 0
      %1659 = vmatprep.subr.bf16.mxu0 0
      %1660 = vmatpush1.bf16.msra.mxu0 0
      %1661 = vmatprep.subr.bf16.mxu0 0
      %1662 = vmatpush1.bf16.msra.mxu0 0
      %1663 = vmatprep.subr.bf16.mxu0 0
      %1664 = vmatpush1.bf16.msra.mxu0 0
      %1665 = vmatprep.subr.bf16.mxu0 0
      %1666 = vmatpush1.bf16.msra.mxu0 0
      %1667 = vmatprep.subr.bf16.mxu0 0
      %1668 = vmatpush1.bf16.msra.mxu0 0
      %1669 = vmatprep.subr.bf16.mxu0 0
      %1670 = vmatpush1.bf16.msra.mxu0 0
      %1671 = vmatprep.mubr.bf16.mxu0 0
      %1672 = vmatmul.mubr.bf16.gmra.mrb[0].mxu0 %v1613
      %v1673 = vpop.f32.mrb[0].mxu0
      %v1674 = vadd.f32 0.0, %v1673
      %v1675 = vpop.f32.mrb[0].mxu0
      %v1676 = vpop.f32.mrb[0].mxu0
      %v1677 = vadd.f32 0.0, %v1676
      %v1678 = vpop.f32.mrb[0].mxu0
      %1679 = vmatprep.mubr.bf16.mxu0 0
      %1680 = vmatmul.mubr.bf16.gmra.mrb[0].mxu0 %v1616
      %v1681 = vpop.f32.mrb[0].mxu0
      %v1682 = vadd.f32 0.0, %v1681
      %v1683 = vpop.f32.mrb[0].mxu0
      %v1684 = vpop.f32.mrb[0].mxu0
      %v1685 = vadd.f32 0.0, %v1684
      %v1686 = vpop.f32.mrb[0].mxu0
      %1687 = vmatprep.mubr.bf16.mxu0 0
      %1688 = vmatmul.mubr.bf16.gmra.mrb[0].mxu0 %v1619
      %v1689 = vpop.f32.mrb[0].mxu0
      %v1690 = vadd.f32 0.0, %v1689
      %v1691 = vpop.f32.mrb[0].mxu0
      %v1692 = vpop.f32.mrb[0].mxu0
      %v1693 = vadd.f32 0.0, %v1692
      %v1694 = vpop.f32.mrb[0].mxu0
      %1695 = vmatprep.mubr.bf16.mxu0 0
      %1696 = vmatmul.mubr.bf16.gmra.mrb[0].mxu0 %v1622
      %v1697 = vpop.f32.mrb[0].mxu0
      %v1698 = vadd.f32 0.0, %v1697
      %v1699 = vpop.f32.mrb[0].mxu0
      %v1700 = vpop.f32.mrb[0].mxu0
      %v1701 = vadd.f32 0.0, %v1700
      %v1702 = vpop.f32.mrb[0].mxu0
      %1703 = vmatprep.mubr.bf16.mxu0 0
      %1704 = vmatmul.mubr.bf16.gmra.mrb[0].mxu0 %v1625
      %v1705 = vpop.f32.mrb[0].mxu0
      %v1706 = vadd.f32 0.0, %v1705
      %v1707 = vpop.f32.mrb[0].mxu0
      %v1708 = vpop.f32.mrb[0].mxu0
      %v1709 = vadd.f32 0.0, %v1708
      %v1710 = vpop.f32.mrb[0].mxu0
      %1711 = vmatprep.mubr.bf16.mxu0 0
      %1712 = vmatmul.mubr.bf16.gmra.mrb[0].mxu0 %v1628
      %v1713 = vpop.f32.mrb[0].mxu0
      %v1714 = vadd.f32 0.0, %v1713
      %v1715 = vpop.f32.mrb[0].mxu0
      %v1716 = vpop.f32.mrb[0].mxu0
      %v1717 = vadd.f32 0.0, %v1716
      %v1718 = vpop.f32.mrb[0].mxu0
      %1719 = vmatprep.mubr.bf16.mxu0 0
      %1720 = vmatmul.mubr.bf16.gmra.mrb[0].mxu0 %v1631
      %v1721 = vpop.f32.mrb[0].mxu0
      %v1722 = vadd.f32 0.0, %v1721
      %v1723 = vpop.f32.mrb[0].mxu0
      %v1724 = vpop.f32.mrb[0].mxu0
      %v1725 = vadd.f32 0.0, %v1724
      %v1726 = vpop.f32.mrb[0].mxu0
      %1727 = vmatprep.mubr.bf16.mxu0 0
      %1728 = vmatmul.mubr.bf16.gmra.mrb[0].mxu0 %v1634
      %v1729 = vpop.f32.mrb[0].mxu0
      %v1730 = vadd.f32 0.0, %v1729
      %v1731 = vpop.f32.mrb[0].mxu0
      %v1732 = vpop.f32.mrb[0].mxu0
      %v1733 = vadd.f32 0.0, %v1732
      %v1734 = vpop.f32.mrb[0].mxu0
      %1735 = vdwg.mxu0
      %v1736 = vadd.f32 %v1570, %v1674
      %v1737 = vadd.f32 %v1571, %v1677
      %v1738 = vadd.f32 %v1572, %v1682
      %v1739 = vadd.f32 %v1573, %v1685
      %v1740 = vadd.f32 %v1574, %v1690
      %v1741 = vadd.f32 %v1575, %v1693
      %v1742 = vadd.f32 %v1576, %v1698
      %v1743 = vadd.f32 %v1577, %v1701
      %v1744 = vadd.f32 %v1578, %v1706
      %v1745 = vadd.f32 %v1579, %v1709
      %v1746 = vadd.f32 %v1580, %v1714
      %v1747 = vadd.f32 %v1581, %v1717
      %v1748 = vadd.f32 %v1582, %v1722
      %v1749 = vadd.f32 %v1583, %v1725
      %v1750 = vadd.f32 %v1584, %v1730
      %v1751 = vadd.f32 %v1585, %v1733
      %v1752 = vld [vmem:[%s1419 + $0x2] sm:$0xff]
      %v1753 = vld [vmem:[%s1419 + $0xa] sm:$0xff]
      %v1754 = vld [vmem:[%s1419 + $0x1a] sm:$0xff]
      %v1755 = vld [vmem:[%s1419 + $0x22] sm:$0xff]
      %v1756 = vld [vmem:[%s1419 + $0x32] sm:$0xff]
      %v1757 = vld [vmem:[%s1419 + $0x3a] sm:$0xff]
      %v1758 = vld [vmem:[%s1419 + $0x4a] sm:$0xff]
      %v1759 = vld [vmem:[%s1419 + $0x52] sm:$0xff]
      %v1760 = vld [vmem:[%s1419 + $0x62] sm:$0xff]
      %v1761 = vld [vmem:[%s1419 + $0x6a] sm:$0xff]
      %v1762 = vld [vmem:[%s1419 + $0x7a] sm:$0xff]
      %v1763 = vld [vmem:[%s1419 + $0x82] sm:$0xff]
      %v1764 = vld [vmem:[%s1419 + $0x92] sm:$0xff]
      %v1765 = vld [vmem:[%s1419 + $0x9a] sm:$0xff]
      %v1766 = vld [vmem:[%s1419 + $0xaa] sm:$0xff]
      %v1767 = vld [vmem:[%s1419 + $0xb2] sm:$0xff]
      %v1768 = vpack.c.bf16 %v1753, %v1752
      %v1769 = vpack.c.bf16 %v1755, %v1754
      %v1770 = vpack.c.bf16 %v1757, %v1756
      %v1771 = vpack.c.bf16 %v1759, %v1758
      %v1772 = vpack.c.bf16 %v1761, %v1760
      %v1773 = vpack.c.bf16 %v1763, %v1762
      %v1774 = vpack.c.bf16 %v1765, %v1764
      %v1775 = vpack.c.bf16 %v1767, %v1766
      %s1776 = scalar_lea.vmem %s1, 16
      %v1777 = vld [vmem:[%s1776] sm:$0x3]
      %v1779 = vsel %vm280, %v1768, 0
      %v1782 = vsel %vm280, %v1769, 0
      %v1785 = vsel %vm280, %v1770, 0
      %v1788 = vsel %vm280, %v1771, 0
      %v1791 = vsel %vm280, %v1772, 0
      %v1794 = vsel %vm280, %v1773, 0
      %v1797 = vsel %vm280, %v1774, 0
      %v1800 = vsel %vm280, %v1775, 0
      %v1803 = vsel %vm530, %v1777, 0
      %1805 = vmatprep.subr.bf16.mxu0 0
      %1806 = vmatpush1.bf16.msra.mxu0 %v1803
      %1807 = vmatprep.subr.bf16.mxu0 0
      %1808 = vmatpush1.bf16.msra.mxu0 0
      %1809 = vmatprep.subr.bf16.mxu0 0
      %1810 = vmatpush1.bf16.msra.mxu0 0
      %1811 = vmatprep.subr.bf16.mxu0 0
      %1812 = vmatpush1.bf16.msra.mxu0 0
      %1813 = vmatprep.subr.bf16.mxu0 0
      %1814 = vmatpush1.bf16.msra.mxu0 0
      %1815 = vmatprep.subr.bf16.mxu0 0
      %1816 = vmatpush1.bf16.msra.mxu0 0
      %1817 = vmatprep.subr.bf16.mxu0 0
      %1818 = vmatpush1.bf16.msra.mxu0 0
      %1819 = vmatprep.subr.bf16.mxu0 0
      %1820 = vmatpush1.bf16.msra.mxu0 0
      %1821 = vmatprep.subr.bf16.mxu0 0
      %1822 = vmatpush1.bf16.msra.mxu0 0
      %1823 = vmatprep.subr.bf16.mxu0 0
      %1824 = vmatpush1.bf16.msra.mxu0 0
      %1825 = vmatprep.subr.bf16.mxu0 0
      %1826 = vmatpush1.bf16.msra.mxu0 0
      %1827 = vmatprep.subr.bf16.mxu0 0
      %1828 = vmatpush1.bf16.msra.mxu0 0
      %1829 = vmatprep.subr.bf16.mxu0 0
      %1830 = vmatpush1.bf16.msra.mxu0 0
      %1831 = vmatprep.subr.bf16.mxu0 0
      %1832 = vmatpush1.bf16.msra.mxu0 0
      %1833 = vmatprep.subr.bf16.mxu0 0
      %1834 = vmatpush1.bf16.msra.mxu0 0
      %1835 = vmatprep.subr.bf16.mxu0 0
      %1836 = vmatpush1.bf16.msra.mxu0 0
      %1837 = vmatprep.mubr.bf16.mxu0 0
      %1838 = vmatmul.mubr.bf16.gmra.mrb[0].mxu0 %v1779
      %v1839 = vpop.f32.mrb[0].mxu0
      %v1840 = vadd.f32 0.0, %v1839
      %v1841 = vpop.f32.mrb[0].mxu0
      %v1842 = vpop.f32.mrb[0].mxu0
      %v1843 = vadd.f32 0.0, %v1842
      %v1844 = vpop.f32.mrb[0].mxu0
      %1845 = vmatprep.mubr.bf16.mxu0 0
      %1846 = vmatmul.mubr.bf16.gmra.mrb[0].mxu0 %v1782
      %v1847 = vpop.f32.mrb[0].mxu0
      %v1848 = vadd.f32 0.0, %v1847
      %v1849 = vpop.f32.mrb[0].mxu0
      %v1850 = vpop.f32.mrb[0].mxu0
      %v1851 = vadd.f32 0.0, %v1850
      %v1852 = vpop.f32.mrb[0].mxu0
      %1853 = vmatprep.mubr.bf16.mxu0 0
      %1854 = vmatmul.mubr.bf16.gmra.mrb[0].mxu0 %v1785
      %v1855 = vpop.f32.mrb[0].mxu0
      %v1856 = vadd.f32 0.0, %v1855
      %v1857 = vpop.f32.mrb[0].mxu0
      %v1858 = vpop.f32.mrb[0].mxu0
      %v1859 = vadd.f32 0.0, %v1858
      %v1860 = vpop.f32.mrb[0].mxu0
      %1861 = vmatprep.mubr.bf16.mxu0 0
      %1862 = vmatmul.mubr.bf16.gmra.mrb[0].mxu0 %v1788
      %v1863 = vpop.f32.mrb[0].mxu0
      %v1864 = vadd.f32 0.0, %v1863
      %v1865 = vpop.f32.mrb[0].mxu0
      %v1866 = vpop.f32.mrb[0].mxu0
      %v1867 = vadd.f32 0.0, %v1866
      %v1868 = vpop.f32.mrb[0].mxu0
      %1869 = vmatprep.mubr.bf16.mxu0 0
      %1870 = vmatmul.mubr.bf16.gmra.mrb[0].mxu0 %v1791
      %v1871 = vpop.f32.mrb[0].mxu0
      %v1872 = vadd.f32 0.0, %v1871
      %v1873 = vpop.f32.mrb[0].mxu0
      %v1874 = vpop.f32.mrb[0].mxu0
      %v1875 = vadd.f32 0.0, %v1874
      %v1876 = vpop.f32.mrb[0].mxu0
      %1877 = vmatprep.mubr.bf16.mxu0 0
      %1878 = vmatmul.mubr.bf16.gmra.mrb[0].mxu0 %v1794
      %v1879 = vpop.f32.mrb[0].mxu0
      %v1880 = vadd.f32 0.0, %v1879
      %v1881 = vpop.f32.mrb[0].mxu0
      %v1882 = vpop.f32.mrb[0].mxu0
      %v1883 = vadd.f32 0.0, %v1882
      %v1884 = vpop.f32.mrb[0].mxu0
      %1885 = vmatprep.mubr.bf16.mxu0 0
      %1886 = vmatmul.mubr.bf16.gmra.mrb[0].mxu0 %v1797
      %v1887 = vpop.f32.mrb[0].mxu0
      %v1888 = vadd.f32 0.0, %v1887
      %v1889 = vpop.f32.mrb[0].mxu0
      %v1890 = vpop.f32.mrb[0].mxu0
      %v1891 = vadd.f32 0.0, %v1890
      %v1892 = vpop.f32.mrb[0].mxu0
      %1893 = vmatprep.mubr.bf16.mxu0 0
      %1894 = vmatmul.mubr.bf16.gmra.mrb[0].mxu0 %v1800
      %v1895 = vpop.f32.mrb[0].mxu0
      %v1896 = vadd.f32 0.0, %v1895
      %v1897 = vpop.f32.mrb[0].mxu0
      %v1898 = vpop.f32.mrb[0].mxu0
      %v1899 = vadd.f32 0.0, %v1898
      %v1900 = vpop.f32.mrb[0].mxu0
      %1901 = vdwg.mxu0
      %v1902 = vadd.f32 %v1736, %v1840
      %v1903 = vadd.f32 %v1737, %v1843
      %v1904 = vadd.f32 %v1738, %v1848
      %v1905 = vadd.f32 %v1739, %v1851
      %v1906 = vadd.f32 %v1740, %v1856
      %v1907 = vadd.f32 %v1741, %v1859
      %v1908 = vadd.f32 %v1742, %v1864
      %v1909 = vadd.f32 %v1743, %v1867
      %v1910 = vadd.f32 %v1744, %v1872
      %v1911 = vadd.f32 %v1745, %v1875
      %v1912 = vadd.f32 %v1746, %v1880
      %v1913 = vadd.f32 %v1747, %v1883
      %v1914 = vadd.f32 %v1748, %v1888
      %v1915 = vadd.f32 %v1749, %v1891
      %v1916 = vadd.f32 %v1750, %v1896
      %v1917 = vadd.f32 %v1751, %v1899
      %v1918 = vld [vmem:[%s3] sm:$0x1]
      %v1920 = vlaneseq
      %v1921 = vshrl.u32 %v1920, 7
      %v1922 = vsub.s32 0, %v1921
      %v1923 = vrot.slane %v1918, %v1922
      %v1925 = vmul.f32 %v1902, %v1923
      %v1926 = vmul.f32 %v1903, %v1923
      %v1927 = vmul.f32 %v1904, %v1923
      %v1928 = vmul.f32 %v1905, %v1923
      %v1929 = vmul.f32 %v1906, %v1923
      %v1930 = vmul.f32 %v1907, %v1923
      %v1931 = vmul.f32 %v1908, %v1923
      %v1932 = vmul.f32 %v1909, %v1923
      %v1933 = vmul.f32 %v1910, %v1923
      %v1934 = vmul.f32 %v1911, %v1923
      %v1935 = vmul.f32 %v1912, %v1923
      %v1936 = vmul.f32 %v1913, %v1923
      %v1937 = vmul.f32 %v1914, %v1923
      %v1938 = vmul.f32 %v1915, %v1923
      %v1939 = vmul.f32 %v1916, %v1923
      %v1940 = vmul.f32 %v1917, %v1923
      %v1941 = vld [vmem:[%s4] sm:$0x1]
      %v1943 = vlaneseq
      %v1944 = vshrl.u32 %v1943, 7
      %v1945 = vsub.s32 0, %v1944
      %v1946 = vrot.slane %v1941, %v1945
      %v1948 = vadd.f32 %v1925, %v1946
      %v1949 = vadd.f32 %v1926, %v1946
      %v1950 = vadd.f32 %v1927, %v1946
      %v1951 = vadd.f32 %v1928, %v1946
      %v1952 = vadd.f32 %v1929, %v1946
      %v1953 = vadd.f32 %v1930, %v1946
      %v1954 = vadd.f32 %v1931, %v1946
      %v1955 = vadd.f32 %v1932, %v1946
      %v1956 = vadd.f32 %v1933, %v1946
      %v1957 = vadd.f32 %v1934, %v1946
      %v1958 = vadd.f32 %v1935, %v1946
      %v1959 = vadd.f32 %v1936, %v1946
      %v1960 = vadd.f32 %v1937, %v1946
      %v1961 = vadd.f32 %v1938, %v1946
      %v1962 = vadd.f32 %v1939, %v1946
      %v1963 = vadd.f32 %v1940, %v1946
      %v1964 = vmax.f32 %v1948, 0.0
      %v1965 = vmax.f32 %v1949, 0.0
      %v1966 = vmax.f32 %v1950, 0.0
      %v1967 = vmax.f32 %v1951, 0.0
      %v1968 = vmax.f32 %v1952, 0.0
      %v1969 = vmax.f32 %v1953, 0.0
      %v1970 = vmax.f32 %v1954, 0.0
      %v1971 = vmax.f32 %v1955, 0.0
      %v1972 = vmax.f32 %v1956, 0.0
      %v1973 = vmax.f32 %v1957, 0.0
      %v1974 = vmax.f32 %v1958, 0.0
      %v1975 = vmax.f32 %v1959, 0.0
      %v1976 = vmax.f32 %v1960, 0.0
      %v1977 = vmax.f32 %v1961, 0.0
      %v1978 = vmax.f32 %v1962, 0.0
      %v1979 = vmax.f32 %v1963, 0.0
      %s1980 = scalar_lea.vmem [#allocation3], 24
      %1981 = vst.msk [vmem:[%s1980 + $0x1] sm:$0xff] %vm280, %v1964
      %1982 = vst.msk [vmem:[%s1980 + $0x9] sm:$0xff] %vm280, %v1965
      %1983 = vst.msk [vmem:[%s1980 + $0x19] sm:$0xff] %vm280, %v1966
      %1984 = vst.msk [vmem:[%s1980 + $0x21] sm:$0xff] %vm280, %v1967
      %1985 = vst.msk [vmem:[%s1980 + $0x31] sm:$0xff] %vm280, %v1968
      %1986 = vst.msk [vmem:[%s1980 + $0x39] sm:$0xff] %vm280, %v1969
      %1987 = vst.msk [vmem:[%s1980 + $0x49] sm:$0xff] %vm280, %v1970
      %1988 = vst.msk [vmem:[%s1980 + $0x51] sm:$0xff] %vm280, %v1971
      %1989 = vst.msk [vmem:[%s1980 + $0x61] sm:$0xff] %vm280, %v1972
      %1990 = vst.msk [vmem:[%s1980 + $0x69] sm:$0xff] %vm280, %v1973
      %1991 = vst.msk [vmem:[%s1980 + $0x79] sm:$0xff] %vm280, %v1974
      %1992 = vst.msk [vmem:[%s1980 + $0x81] sm:$0xff] %vm280, %v1975
      %1993 = vst.msk [vmem:[%s1980 + $0x91] sm:$0xff] %vm280, %v1976
      %1994 = vst.msk [vmem:[%s1980 + $0x99] sm:$0xff] %vm280, %v1977
      %1995 = vst.msk [vmem:[%s1980 + $0xa9] sm:$0xff] %vm280, %v1978
      %1996 = vst.msk [vmem:[%s1980 + $0xb1] sm:$0xff] %vm280, %v1979
      %s1997 = scalar_lea.vmem [#allocation2], 192
      %v1998 = vld [vmem:[%s1997] sm:$0xff]
      %v1999 = vld [vmem:[%s1997 + $0x8] sm:$0xff]
      %v2000 = vld [vmem:[%s1997 + $0x18] sm:$0xff]
      %v2001 = vld [vmem:[%s1997 + $0x20] sm:$0xff]
      %v2002 = vld [vmem:[%s1997 + $0x30] sm:$0xff]
      %v2003 = vld [vmem:[%s1997 + $0x38] sm:$0xff]
      %v2004 = vld [vmem:[%s1997 + $0x48] sm:$0xff]
      %v2005 = vld [vmem:[%s1997 + $0x50] sm:$0xff]
      %v2006 = vld [vmem:[%s1997 + $0x60] sm:$0xff]
      %v2007 = vld [vmem:[%s1997 + $0x68] sm:$0xff]
      %v2008 = vld [vmem:[%s1997 + $0x78] sm:$0xff]
      %v2009 = vld [vmem:[%s1997 + $0x80] sm:$0xff]
      %v2010 = vld [vmem:[%s1997 + $0x90] sm:$0xff]
      %v2011 = vld [vmem:[%s1997 + $0x98] sm:$0xff]
      %v2012 = vld [vmem:[%s1997 + $0xa8] sm:$0xff]
      %v2013 = vld [vmem:[%s1997 + $0xb0] sm:$0xff]
      %v2014 = vpack.c.bf16 %v1999, %v1998
      %v2015 = vpack.c.bf16 %v2001, %v2000
      %v2016 = vpack.c.bf16 %v2003, %v2002
      %v2017 = vpack.c.bf16 %v2005, %v2004
      %v2018 = vpack.c.bf16 %v2007, %v2006
      %v2019 = vpack.c.bf16 %v2009, %v2008
      %v2020 = vpack.c.bf16 %v2011, %v2010
      %v2021 = vpack.c.bf16 %v2013, %v2012
      %v2022 = vld [vmem:[%s1] sm:$0x3]
      %v2023 = vld [vmem:[%s1997 + $0x1] sm:$0xff]
      %v2024 = vld [vmem:[%s1997 + $0x9] sm:$0xff]
      %v2025 = vld [vmem:[%s1997 + $0x19] sm:$0xff]
      %v2026 = vld [vmem:[%s1997 + $0x21] sm:$0xff]
      %v2027 = vld [vmem:[%s1997 + $0x31] sm:$0xff]
      %v2028 = vld [vmem:[%s1997 + $0x39] sm:$0xff]
      %v2029 = vld [vmem:[%s1997 + $0x49] sm:$0xff]
      %v2030 = vld [vmem:[%s1997 + $0x51] sm:$0xff]
      %v2031 = vld [vmem:[%s1997 + $0x61] sm:$0xff]
      %v2032 = vld [vmem:[%s1997 + $0x69] sm:$0xff]
      %v2033 = vld [vmem:[%s1997 + $0x79] sm:$0xff]
      %v2034 = vld [vmem:[%s1997 + $0x81] sm:$0xff]
      %v2035 = vld [vmem:[%s1997 + $0x91] sm:$0xff]
      %v2036 = vld [vmem:[%s1997 + $0x99] sm:$0xff]
      %v2037 = vld [vmem:[%s1997 + $0xa9] sm:$0xff]
      %v2038 = vld [vmem:[%s1997 + $0xb1] sm:$0xff]
      %v2039 = vpack.c.bf16 %v2024, %v2023
      %v2040 = vpack.c.bf16 %v2026, %v2025
      %v2041 = vpack.c.bf16 %v2028, %v2027
      %v2042 = vpack.c.bf16 %v2030, %v2029
      %v2043 = vpack.c.bf16 %v2032, %v2031
      %v2044 = vpack.c.bf16 %v2034, %v2033
      %v2045 = vpack.c.bf16 %v2036, %v2035
      %v2046 = vpack.c.bf16 %v2038, %v2037
      %v2047 = vld [vmem:[%s504] sm:$0x3]
      %v2049 = vsel %vm280, %v2039, 0
      %v2052 = vsel %vm280, %v2040, 0
      %v2055 = vsel %vm280, %v2041, 0
      %v2058 = vsel %vm280, %v2042, 0
      %v2061 = vsel %vm280, %v2043, 0
      %v2064 = vsel %vm280, %v2044, 0
      %v2067 = vsel %vm280, %v2045, 0
      %v2070 = vsel %vm280, %v2046, 0
      %v2073 = vsel %vm530, %v2047, 0
      %2075 = vmatprep.subr.bf16.mxu0 0
      %2076 = vmatpush1.bf16.msra.mxu0 %v2073
      %2077 = vmatprep.subr.bf16.mxu0 0
      %2078 = vmatpush1.bf16.msra.mxu0 0
      %2079 = vmatprep.subr.bf16.mxu0 0
      %2080 = vmatpush1.bf16.msra.mxu0 0
      %2081 = vmatprep.subr.bf16.mxu0 0
      %2082 = vmatpush1.bf16.msra.mxu0 0
      %2083 = vmatprep.subr.bf16.mxu0 0
      %2084 = vmatpush1.bf16.msra.mxu0 0
      %2085 = vmatprep.subr.bf16.mxu0 0
      %2086 = vmatpush1.bf16.msra.mxu0 0
      %2087 = vmatprep.subr.bf16.mxu0 0
      %2088 = vmatpush1.bf16.msra.mxu0 0
      %2089 = vmatprep.subr.bf16.mxu0 0
      %2090 = vmatpush1.bf16.msra.mxu0 0
      %2091 = vmatprep.subr.bf16.mxu0 0
      %2092 = vmatpush1.bf16.msra.mxu0 0
      %2093 = vmatprep.subr.bf16.mxu0 0
      %2094 = vmatpush1.bf16.msra.mxu0 0
      %2095 = vmatprep.subr.bf16.mxu0 0
      %2096 = vmatpush1.bf16.msra.mxu0 0
      %2097 = vmatprep.subr.bf16.mxu0 0
      %2098 = vmatpush1.bf16.msra.mxu0 0
      %2099 = vmatprep.subr.bf16.mxu0 0
      %2100 = vmatpush1.bf16.msra.mxu0 0
      %2101 = vmatprep.subr.bf16.mxu0 0
      %2102 = vmatpush1.bf16.msra.mxu0 0
      %2103 = vmatprep.subr.bf16.mxu0 0
      %2104 = vmatpush1.bf16.msra.mxu0 0
      %2105 = vmatprep.subr.bf16.mxu0 0
      %2106 = vmatpush1.bf16.msra.mxu0 0
      %2107 = vmatprep.mubr.bf16.mxu0 0
      %2108 = vmatmul.mubr.bf16.gmra.mrb[0].mxu0 %v2049
      %v2109 = vpop.f32.mrb[0].mxu0
      %v2110 = vadd.f32 0.0, %v2109
      %v2111 = vpop.f32.mrb[0].mxu0
      %v2112 = vpop.f32.mrb[0].mxu0
      %v2113 = vadd.f32 0.0, %v2112
      %v2114 = vpop.f32.mrb[0].mxu0
      %2115 = vmatprep.mubr.bf16.mxu0 0
      %2116 = vmatmul.mubr.bf16.gmra.mrb[0].mxu0 %v2052
      %v2117 = vpop.f32.mrb[0].mxu0
      %v2118 = vadd.f32 0.0, %v2117
      %v2119 = vpop.f32.mrb[0].mxu0
      %v2120 = vpop.f32.mrb[0].mxu0
      %v2121 = vadd.f32 0.0, %v2120
      %v2122 = vpop.f32.mrb[0].mxu0
      %2123 = vmatprep.mubr.bf16.mxu0 0
      %2124 = vmatmul.mubr.bf16.gmra.mrb[0].mxu0 %v2055
      %v2125 = vpop.f32.mrb[0].mxu0
      %v2126 = vadd.f32 0.0, %v2125
      %v2127 = vpop.f32.mrb[0].mxu0
      %v2128 = vpop.f32.mrb[0].mxu0
      %v2129 = vadd.f32 0.0, %v2128
      %v2130 = vpop.f32.mrb[0].mxu0
      %2131 = vmatprep.mubr.bf16.mxu0 0
      %2132 = vmatmul.mubr.bf16.gmra.mrb[0].mxu0 %v2058
      %v2133 = vpop.f32.mrb[0].mxu0
      %v2134 = vadd.f32 0.0, %v2133
      %v2135 = vpop.f32.mrb[0].mxu0
      %v2136 = vpop.f32.mrb[0].mxu0
      %v2137 = vadd.f32 0.0, %v2136
      %v2138 = vpop.f32.mrb[0].mxu0
      %2139 = vmatprep.mubr.bf16.mxu0 0
      %2140 = vmatmul.mubr.bf16.gmra.mrb[0].mxu0 %v2061
      %v2141 = vpop.f32.mrb[0].mxu0
      %v2142 = vadd.f32 0.0, %v2141
      %v2143 = vpop.f32.mrb[0].mxu0
      %v2144 = vpop.f32.mrb[0].mxu0
      %v2145 = vadd.f32 0.0, %v2144
      %v2146 = vpop.f32.mrb[0].mxu0
      %2147 = vmatprep.mubr.bf16.mxu0 0
      %2148 = vmatmul.mubr.bf16.gmra.mrb[0].mxu0 %v2064
      %v2149 = vpop.f32.mrb[0].mxu0
      %v2150 = vadd.f32 0.0, %v2149
      %v2151 = vpop.f32.mrb[0].mxu0
      %v2152 = vpop.f32.mrb[0].mxu0
      %v2153 = vadd.f32 0.0, %v2152
      %v2154 = vpop.f32.mrb[0].mxu0
      %2155 = vmatprep.mubr.bf16.mxu0 0
      %2156 = vmatmul.mubr.bf16.gmra.mrb[0].mxu0 %v2067
      %v2157 = vpop.f32.mrb[0].mxu0
      %v2158 = vadd.f32 0.0, %v2157
      %v2159 = vpop.f32.mrb[0].mxu0
      %v2160 = vpop.f32.mrb[0].mxu0
      %v2161 = vadd.f32 0.0, %v2160
      %v2162 = vpop.f32.mrb[0].mxu0
      %2163 = vmatprep.mubr.bf16.mxu0 0
      %2164 = vmatmul.mubr.bf16.gmra.mrb[0].mxu0 %v2070
      %v2165 = vpop.f32.mrb[0].mxu0
      %v2166 = vadd.f32 0.0, %v2165
      %v2167 = vpop.f32.mrb[0].mxu0
      %v2168 = vpop.f32.mrb[0].mxu0
      %v2169 = vadd.f32 0.0, %v2168
      %v2170 = vpop.f32.mrb[0].mxu0
      %2171 = vdwg.mxu0
      %v2173 = vsel %vm280, %v2014, 0
      %v2176 = vsel %vm280, %v2015, 0
      %v2179 = vsel %vm280, %v2016, 0
      %v2182 = vsel %vm280, %v2017, 0
      %v2185 = vsel %vm280, %v2018, 0
      %v2188 = vsel %vm280, %v2019, 0
      %v2191 = vsel %vm280, %v2020, 0
      %v2194 = vsel %vm280, %v2021, 0
      %v2197 = vsel %vm530, %v2022, 0
      %2199 = vmatprep.subr.bf16.mxu0 0
      %2200 = vmatpush1.bf16.msra.mxu0 %v2197
      %2201 = vmatprep.subr.bf16.mxu0 0
      %2202 = vmatpush1.bf16.msra.mxu0 0
      %2203 = vmatprep.subr.bf16.mxu0 0
      %2204 = vmatpush1.bf16.msra.mxu0 0
      %2205 = vmatprep.subr.bf16.mxu0 0
      %2206 = vmatpush1.bf16.msra.mxu0 0
      %2207 = vmatprep.subr.bf16.mxu0 0
      %2208 = vmatpush1.bf16.msra.mxu0 0
      %2209 = vmatprep.subr.bf16.mxu0 0
      %2210 = vmatpush1.bf16.msra.mxu0 0
      %2211 = vmatprep.subr.bf16.mxu0 0
      %2212 = vmatpush1.bf16.msra.mxu0 0
      %2213 = vmatprep.subr.bf16.mxu0 0
      %2214 = vmatpush1.bf16.msra.mxu0 0
      %2215 = vmatprep.subr.bf16.mxu0 0
      %2216 = vmatpush1.bf16.msra.mxu0 0
      %2217 = vmatprep.subr.bf16.mxu0 0
      %2218 = vmatpush1.bf16.msra.mxu0 0
      %2219 = vmatprep.subr.bf16.mxu0 0
      %2220 = vmatpush1.bf16.msra.mxu0 0
      %2221 = vmatprep.subr.bf16.mxu0 0
      %2222 = vmatpush1.bf16.msra.mxu0 0
      %2223 = vmatprep.subr.bf16.mxu0 0
      %2224 = vmatpush1.bf16.msra.mxu0 0
      %2225 = vmatprep.subr.bf16.mxu0 0
      %2226 = vmatpush1.bf16.msra.mxu0 0
      %2227 = vmatprep.subr.bf16.mxu0 0
      %2228 = vmatpush1.bf16.msra.mxu0 0
      %2229 = vmatprep.subr.bf16.mxu0 0
      %2230 = vmatpush1.bf16.msra.mxu0 0
      %2231 = vmatprep.mubr.bf16.mxu0 0
      %2232 = vmatmul.mubr.bf16.gmra.mrb[0].mxu0 %v2173
      %v2233 = vpop.f32.mrb[0].mxu0
      %v2234 = vadd.f32 %v2110, %v2233
      %v2235 = vpop.f32.mrb[0].mxu0
      %v2236 = vpop.f32.mrb[0].mxu0
      %v2237 = vadd.f32 %v2113, %v2236
      %v2238 = vpop.f32.mrb[0].mxu0
      %2239 = vmatprep.mubr.bf16.mxu0 0
      %2240 = vmatmul.mubr.bf16.gmra.mrb[0].mxu0 %v2176
      %v2241 = vpop.f32.mrb[0].mxu0
      %v2242 = vadd.f32 %v2118, %v2241
      %v2243 = vpop.f32.mrb[0].mxu0
      %v2244 = vpop.f32.mrb[0].mxu0
      %v2245 = vadd.f32 %v2121, %v2244
      %v2246 = vpop.f32.mrb[0].mxu0
      %2247 = vmatprep.mubr.bf16.mxu0 0
      %2248 = vmatmul.mubr.bf16.gmra.mrb[0].mxu0 %v2179
      %v2249 = vpop.f32.mrb[0].mxu0
      %v2250 = vadd.f32 %v2126, %v2249
      %v2251 = vpop.f32.mrb[0].mxu0
      %v2252 = vpop.f32.mrb[0].mxu0
      %v2253 = vadd.f32 %v2129, %v2252
      %v2254 = vpop.f32.mrb[0].mxu0
      %2255 = vmatprep.mubr.bf16.mxu0 0
      %2256 = vmatmul.mubr.bf16.gmra.mrb[0].mxu0 %v2182
      %v2257 = vpop.f32.mrb[0].mxu0
      %v2258 = vadd.f32 %v2134, %v2257
      %v2259 = vpop.f32.mrb[0].mxu0
      %v2260 = vpop.f32.mrb[0].mxu0
      %v2261 = vadd.f32 %v2137, %v2260
      %v2262 = vpop.f32.mrb[0].mxu0
      %2263 = vmatprep.mubr.bf16.mxu0 0
      %2264 = vmatmul.mubr.bf16.gmra.mrb[0].mxu0 %v2185
      %v2265 = vpop.f32.mrb[0].mxu0
      %v2266 = vadd.f32 %v2142, %v2265
      %v2267 = vpop.f32.mrb[0].mxu0
      %v2268 = vpop.f32.mrb[0].mxu0
      %v2269 = vadd.f32 %v2145, %v2268
      %v2270 = vpop.f32.mrb[0].mxu0
      %2271 = vmatprep.mubr.bf16.mxu0 0
      %2272 = vmatmul.mubr.bf16.gmra.mrb[0].mxu0 %v2188
      %v2273 = vpop.f32.mrb[0].mxu0
      %v2274 = vadd.f32 %v2150, %v2273
      %v2275 = vpop.f32.mrb[0].mxu0
      %v2276 = vpop.f32.mrb[0].mxu0
      %v2277 = vadd.f32 %v2153, %v2276
      %v2278 = vpop.f32.mrb[0].mxu0
      %2279 = vmatprep.mubr.bf16.mxu0 0
      %2280 = vmatmul.mubr.bf16.gmra.mrb[0].mxu0 %v2191
      %v2281 = vpop.f32.mrb[0].mxu0
      %v2282 = vadd.f32 %v2158, %v2281
      %v2283 = vpop.f32.mrb[0].mxu0
      %v2284 = vpop.f32.mrb[0].mxu0
      %v2285 = vadd.f32 %v2161, %v2284
      %v2286 = vpop.f32.mrb[0].mxu0
      %2287 = vmatprep.mubr.bf16.mxu0 0
      %2288 = vmatmul.mubr.bf16.gmra.mrb[0].mxu0 %v2194
      %v2289 = vpop.f32.mrb[0].mxu0
      %v2290 = vadd.f32 %v2166, %v2289
      %v2291 = vpop.f32.mrb[0].mxu0
      %v2292 = vpop.f32.mrb[0].mxu0
      %v2293 = vadd.f32 %v2169, %v2292
      %v2294 = vpop.f32.mrb[0].mxu0
      %2295 = vdwg.mxu0
      %v2296 = vld [vmem:[%s1997 + $0x2] sm:$0xff]
      %v2297 = vld [vmem:[%s1997 + $0xa] sm:$0xff]
      %v2298 = vld [vmem:[%s1997 + $0x1a] sm:$0xff]
      %v2299 = vld [vmem:[%s1997 + $0x22] sm:$0xff]
      %v2300 = vld [vmem:[%s1997 + $0x32] sm:$0xff]
      %v2301 = vld [vmem:[%s1997 + $0x3a] sm:$0xff]
      %v2302 = vld [vmem:[%s1997 + $0x4a] sm:$0xff]
      %v2303 = vld [vmem:[%s1997 + $0x52] sm:$0xff]
      %v2304 = vld [vmem:[%s1997 + $0x62] sm:$0xff]
      %v2305 = vld [vmem:[%s1997 + $0x6a] sm:$0xff]
      %v2306 = vld [vmem:[%s1997 + $0x7a] sm:$0xff]
      %v2307 = vld [vmem:[%s1997 + $0x82] sm:$0xff]
      %v2308 = vld [vmem:[%s1997 + $0x92] sm:$0xff]
      %v2309 = vld [vmem:[%s1997 + $0x9a] sm:$0xff]
      %v2310 = vld [vmem:[%s1997 + $0xaa] sm:$0xff]
      %v2311 = vld [vmem:[%s1997 + $0xb2] sm:$0xff]
      %v2312 = vpack.c.bf16 %v2297, %v2296
      %v2313 = vpack.c.bf16 %v2299, %v2298
      %v2314 = vpack.c.bf16 %v2301, %v2300
      %v2315 = vpack.c.bf16 %v2303, %v2302
      %v2316 = vpack.c.bf16 %v2305, %v2304
      %v2317 = vpack.c.bf16 %v2307, %v2306
      %v2318 = vpack.c.bf16 %v2309, %v2308
      %v2319 = vpack.c.bf16 %v2311, %v2310
      %v2320 = vld [vmem:[%s779] sm:$0x3]
      %v2322 = vsel %vm280, %v2312, 0
      %v2325 = vsel %vm280, %v2313, 0
      %v2328 = vsel %vm280, %v2314, 0
      %v2331 = vsel %vm280, %v2315, 0
      %v2334 = vsel %vm280, %v2316, 0
      %v2337 = vsel %vm280, %v2317, 0
      %v2340 = vsel %vm280, %v2318, 0
      %v2343 = vsel %vm280, %v2319, 0
      %v2346 = vsel %vm530, %v2320, 0
      %2348 = vmatprep.subr.bf16.mxu0 0
      %2349 = vmatpush1.bf16.msra.mxu0 %v2346
      %2350 = vmatprep.subr.bf16.mxu0 0
      %2351 = vmatpush1.bf16.msra.mxu0 0
      %2352 = vmatprep.subr.bf16.mxu0 0
      %2353 = vmatpush1.bf16.msra.mxu0 0
      %2354 = vmatprep.subr.bf16.mxu0 0
      %2355 = vmatpush1.bf16.msra.mxu0 0
      %2356 = vmatprep.subr.bf16.mxu0 0
      %2357 = vmatpush1.bf16.msra.mxu0 0
      %2358 = vmatprep.subr.bf16.mxu0 0
      %2359 = vmatpush1.bf16.msra.mxu0 0
      %2360 = vmatprep.subr.bf16.mxu0 0
      %2361 = vmatpush1.bf16.msra.mxu0 0
      %2362 = vmatprep.subr.bf16.mxu0 0
      %2363 = vmatpush1.bf16.msra.mxu0 0
      %2364 = vmatprep.subr.bf16.mxu0 0
      %2365 = vmatpush1.bf16.msra.mxu0 0
      %2366 = vmatprep.subr.bf16.mxu0 0
      %2367 = vmatpush1.bf16.msra.mxu0 0
      %2368 = vmatprep.subr.bf16.mxu0 0
      %2369 = vmatpush1.bf16.msra.mxu0 0
      %2370 = vmatprep.subr.bf16.mxu0 0
      %2371 = vmatpush1.bf16.msra.mxu0 0
      %2372 = vmatprep.subr.bf16.mxu0 0
      %2373 = vmatpush1.bf16.msra.mxu0 0
      %2374 = vmatprep.subr.bf16.mxu0 0
      %2375 = vmatpush1.bf16.msra.mxu0 0
      %2376 = vmatprep.subr.bf16.mxu0 0
      %2377 = vmatpush1.bf16.msra.mxu0 0
      %2378 = vmatprep.subr.bf16.mxu0 0
      %2379 = vmatpush1.bf16.msra.mxu0 0
      %2380 = vmatprep.mubr.bf16.mxu0 0
      %2381 = vmatmul.mubr.bf16.gmra.mrb[0].mxu0 %v2322
      %v2382 = vpop.f32.mrb[0].mxu0
      %v2383 = vadd.f32 0.0, %v2382
      %v2384 = vpop.f32.mrb[0].mxu0
      %v2385 = vpop.f32.mrb[0].mxu0
      %v2386 = vadd.f32 0.0, %v2385
      %v2387 = vpop.f32.mrb[0].mxu0
      %2388 = vmatprep.mubr.bf16.mxu0 0
      %2389 = vmatmul.mubr.bf16.gmra.mrb[0].mxu0 %v2325
      %v2390 = vpop.f32.mrb[0].mxu0
      %v2391 = vadd.f32 0.0, %v2390
      %v2392 = vpop.f32.mrb[0].mxu0
      %v2393 = vpop.f32.mrb[0].mxu0
      %v2394 = vadd.f32 0.0, %v2393
      %v2395 = vpop.f32.mrb[0].mxu0
      %2396 = vmatprep.mubr.bf16.mxu0 0
      %2397 = vmatmul.mubr.bf16.gmra.mrb[0].mxu0 %v2328
      %v2398 = vpop.f32.mrb[0].mxu0
      %v2399 = vadd.f32 0.0, %v2398
      %v2400 = vpop.f32.mrb[0].mxu0
      %v2401 = vpop.f32.mrb[0].mxu0
      %v2402 = vadd.f32 0.0, %v2401
      %v2403 = vpop.f32.mrb[0].mxu0
      %2404 = vmatprep.mubr.bf16.mxu0 0
      %2405 = vmatmul.mubr.bf16.gmra.mrb[0].mxu0 %v2331
      %v2406 = vpop.f32.mrb[0].mxu0
      %v2407 = vadd.f32 0.0, %v2406
      %v2408 = vpop.f32.mrb[0].mxu0
      %v2409 = vpop.f32.mrb[0].mxu0
      %v2410 = vadd.f32 0.0, %v2409
      %v2411 = vpop.f32.mrb[0].mxu0
      %2412 = vmatprep.mubr.bf16.mxu0 0
      %2413 = vmatmul.mubr.bf16.gmra.mrb[0].mxu0 %v2334
      %v2414 = vpop.f32.mrb[0].mxu0
      %v2415 = vadd.f32 0.0, %v2414
      %v2416 = vpop.f32.mrb[0].mxu0
      %v2417 = vpop.f32.mrb[0].mxu0
      %v2418 = vadd.f32 0.0, %v2417
      %v2419 = vpop.f32.mrb[0].mxu0
      %2420 = vmatprep.mubr.bf16.mxu0 0
      %2421 = vmatmul.mubr.bf16.gmra.mrb[0].mxu0 %v2337
      %v2422 = vpop.f32.mrb[0].mxu0
      %v2423 = vadd.f32 0.0, %v2422
      %v2424 = vpop.f32.mrb[0].mxu0
      %v2425 = vpop.f32.mrb[0].mxu0
      %v2426 = vadd.f32 0.0, %v2425
      %v2427 = vpop.f32.mrb[0].mxu0
      %2428 = vmatprep.mubr.bf16.mxu0 0
      %2429 = vmatmul.mubr.bf16.gmra.mrb[0].mxu0 %v2340
      %v2430 = vpop.f32.mrb[0].mxu0
      %v2431 = vadd.f32 0.0, %v2430
      %v2432 = vpop.f32.mrb[0].mxu0
      %v2433 = vpop.f32.mrb[0].mxu0
      %v2434 = vadd.f32 0.0, %v2433
      %v2435 = vpop.f32.mrb[0].mxu0
      %2436 = vmatprep.mubr.bf16.mxu0 0
      %2437 = vmatmul.mubr.bf16.gmra.mrb[0].mxu0 %v2343
      %v2438 = vpop.f32.mrb[0].mxu0
      %v2439 = vadd.f32 0.0, %v2438
      %v2440 = vpop.f32.mrb[0].mxu0
      %v2441 = vpop.f32.mrb[0].mxu0
      %v2442 = vadd.f32 0.0, %v2441
      %v2443 = vpop.f32.mrb[0].mxu0
      %2444 = vdwg.mxu0
      %v2445 = vadd.f32 %v2234, %v2383
      %v2446 = vadd.f32 %v2237, %v2386
      %v2447 = vadd.f32 %v2242, %v2391
      %v2448 = vadd.f32 %v2245, %v2394
      %v2449 = vadd.f32 %v2250, %v2399
      %v2450 = vadd.f32 %v2253, %v2402
      %v2451 = vadd.f32 %v2258, %v2407
      %v2452 = vadd.f32 %v2261, %v2410
      %v2453 = vadd.f32 %v2266, %v2415
      %v2454 = vadd.f32 %v2269, %v2418
      %v2455 = vadd.f32 %v2274, %v2423
      %v2456 = vadd.f32 %v2277, %v2426
      %v2457 = vadd.f32 %v2282, %v2431
      %v2458 = vadd.f32 %v2285, %v2434
      %v2459 = vadd.f32 %v2290, %v2439
      %v2460 = vadd.f32 %v2293, %v2442
      %s2461 = scalar_lea.vmem [#allocation2], 216
      %v2462 = vld [vmem:[%s2461] sm:$0xff]
      %v2463 = vld [vmem:[%s2461 + $0x8] sm:$0xff]
      %v2464 = vld [vmem:[%s2461 + $0x18] sm:$0xff]
      %v2465 = vld [vmem:[%s2461 + $0x20] sm:$0xff]
      %v2466 = vld [vmem:[%s2461 + $0x30] sm:$0xff]
      %v2467 = vld [vmem:[%s2461 + $0x38] sm:$0xff]
      %v2468 = vld [vmem:[%s2461 + $0x48] sm:$0xff]
      %v2469 = vld [vmem:[%s2461 + $0x50] sm:$0xff]
      %v2470 = vld [vmem:[%s2461 + $0x60] sm:$0xff]
      %v2471 = vld [vmem:[%s2461 + $0x68] sm:$0xff]
      %v2472 = vld [vmem:[%s2461 + $0x78] sm:$0xff]
      %v2473 = vld [vmem:[%s2461 + $0x80] sm:$0xff]
      %v2474 = vld [vmem:[%s2461 + $0x90] sm:$0xff]
      %v2475 = vld [vmem:[%s2461 + $0x98] sm:$0xff]
      %v2476 = vld [vmem:[%s2461 + $0xa8] sm:$0xff]
      %v2477 = vld [vmem:[%s2461 + $0xb0] sm:$0xff]
      %v2478 = vpack.c.bf16 %v2463, %v2462
      %v2479 = vpack.c.bf16 %v2465, %v2464
      %v2480 = vpack.c.bf16 %v2467, %v2466
      %v2481 = vpack.c.bf16 %v2469, %v2468
      %v2482 = vpack.c.bf16 %v2471, %v2470
      %v2483 = vpack.c.bf16 %v2473, %v2472
      %v2484 = vpack.c.bf16 %v2475, %v2474
      %v2485 = vpack.c.bf16 %v2477, %v2476
      %v2486 = vld [vmem:[%s945] sm:$0x3]
      %v2488 = vsel %vm280, %v2478, 0
      %v2491 = vsel %vm280, %v2479, 0
      %v2494 = vsel %vm280, %v2480, 0
      %v2497 = vsel %vm280, %v2481, 0
      %v2500 = vsel %vm280, %v2482, 0
      %v2503 = vsel %vm280, %v2483, 0
      %v2506 = vsel %vm280, %v2484, 0
      %v2509 = vsel %vm280, %v2485, 0
      %v2512 = vsel %vm530, %v2486, 0
      %2514 = vmatprep.subr.bf16.mxu0 0
      %2515 = vmatpush1.bf16.msra.mxu0 %v2512
      %2516 = vmatprep.subr.bf16.mxu0 0
      %2517 = vmatpush1.bf16.msra.mxu0 0
      %2518 = vmatprep.subr.bf16.mxu0 0
      %2519 = vmatpush1.bf16.msra.mxu0 0
      %2520 = vmatprep.subr.bf16.mxu0 0
      %2521 = vmatpush1.bf16.msra.mxu0 0
      %2522 = vmatprep.subr.bf16.mxu0 0
      %2523 = vmatpush1.bf16.msra.mxu0 0
      %2524 = vmatprep.subr.bf16.mxu0 0
      %2525 = vmatpush1.bf16.msra.mxu0 0
      %2526 = vmatprep.subr.bf16.mxu0 0
      %2527 = vmatpush1.bf16.msra.mxu0 0
      %2528 = vmatprep.subr.bf16.mxu0 0
      %2529 = vmatpush1.bf16.msra.mxu0 0
      %2530 = vmatprep.subr.bf16.mxu0 0
      %2531 = vmatpush1.bf16.msra.mxu0 0
      %2532 = vmatprep.subr.bf16.mxu0 0
      %2533 = vmatpush1.bf16.msra.mxu0 0
      %2534 = vmatprep.subr.bf16.mxu0 0
      %2535 = vmatpush1.bf16.msra.mxu0 0
      %2536 = vmatprep.subr.bf16.mxu0 0
      %2537 = vmatpush1.bf16.msra.mxu0 0
      %2538 = vmatprep.subr.bf16.mxu0 0
      %2539 = vmatpush1.bf16.msra.mxu0 0
      %2540 = vmatprep.subr.bf16.mxu0 0
      %2541 = vmatpush1.bf16.msra.mxu0 0
      %2542 = vmatprep.subr.bf16.mxu0 0
      %2543 = vmatpush1.bf16.msra.mxu0 0
      %2544 = vmatprep.subr.bf16.mxu0 0
      %2545 = vmatpush1.bf16.msra.mxu0 0
      %2546 = vmatprep.mubr.bf16.mxu0 0
      %2547 = vmatmul.mubr.bf16.gmra.mrb[0].mxu0 %v2488
      %v2548 = vpop.f32.mrb[0].mxu0
      %v2549 = vadd.f32 0.0, %v2548
      %v2550 = vpop.f32.mrb[0].mxu0
      %v2551 = vpop.f32.mrb[0].mxu0
      %v2552 = vadd.f32 0.0, %v2551
      %v2553 = vpop.f32.mrb[0].mxu0
      %2554 = vmatprep.mubr.bf16.mxu0 0
      %2555 = vmatmul.mubr.bf16.gmra.mrb[0].mxu0 %v2491
      %v2556 = vpop.f32.mrb[0].mxu0
      %v2557 = vadd.f32 0.0, %v2556
      %v2558 = vpop.f32.mrb[0].mxu0
      %v2559 = vpop.f32.mrb[0].mxu0
      %v2560 = vadd.f32 0.0, %v2559
      %v2561 = vpop.f32.mrb[0].mxu0
      %2562 = vmatprep.mubr.bf16.mxu0 0
      %2563 = vmatmul.mubr.bf16.gmra.mrb[0].mxu0 %v2494
      %v2564 = vpop.f32.mrb[0].mxu0
      %v2565 = vadd.f32 0.0, %v2564
      %v2566 = vpop.f32.mrb[0].mxu0
      %v2567 = vpop.f32.mrb[0].mxu0
      %v2568 = vadd.f32 0.0, %v2567
      %v2569 = vpop.f32.mrb[0].mxu0
      %2570 = vmatprep.mubr.bf16.mxu0 0
      %2571 = vmatmul.mubr.bf16.gmra.mrb[0].mxu0 %v2497
      %v2572 = vpop.f32.mrb[0].mxu0
      %v2573 = vadd.f32 0.0, %v2572
      %v2574 = vpop.f32.mrb[0].mxu0
      %v2575 = vpop.f32.mrb[0].mxu0
      %v2576 = vadd.f32 0.0, %v2575
      %v2577 = vpop.f32.mrb[0].mxu0
      %2578 = vmatprep.mubr.bf16.mxu0 0
      %2579 = vmatmul.mubr.bf16.gmra.mrb[0].mxu0 %v2500
      %v2580 = vpop.f32.mrb[0].mxu0
      %v2581 = vadd.f32 0.0, %v2580
      %v2582 = vpop.f32.mrb[0].mxu0
      %v2583 = vpop.f32.mrb[0].mxu0
      %v2584 = vadd.f32 0.0, %v2583
      %v2585 = vpop.f32.mrb[0].mxu0
      %2586 = vmatprep.mubr.bf16.mxu0 0
      %2587 = vmatmul.mubr.bf16.gmra.mrb[0].mxu0 %v2503
      %v2588 = vpop.f32.mrb[0].mxu0
      %v2589 = vadd.f32 0.0, %v2588
      %v2590 = vpop.f32.mrb[0].mxu0
      %v2591 = vpop.f32.mrb[0].mxu0
      %v2592 = vadd.f32 0.0, %v2591
      %v2593 = vpop.f32.mrb[0].mxu0
      %2594 = vmatprep.mubr.bf16.mxu0 0
      %2595 = vmatmul.mubr.bf16.gmra.mrb[0].mxu0 %v2506
      %v2596 = vpop.f32.mrb[0].mxu0
      %v2597 = vadd.f32 0.0, %v2596
      %v2598 = vpop.f32.mrb[0].mxu0
      %v2599 = vpop.f32.mrb[0].mxu0
      %v2600 = vadd.f32 0.0, %v2599
      %v2601 = vpop.f32.mrb[0].mxu0
      %2602 = vmatprep.mubr.bf16.mxu0 0
      %2603 = vmatmul.mubr.bf16.gmra.mrb[0].mxu0 %v2509
      %v2604 = vpop.f32.mrb[0].mxu0
      %v2605 = vadd.f32 0.0, %v2604
      %v2606 = vpop.f32.mrb[0].mxu0
      %v2607 = vpop.f32.mrb[0].mxu0
      %v2608 = vadd.f32 0.0, %v2607
      %v2609 = vpop.f32.mrb[0].mxu0
      %2610 = vdwg.mxu0
      %v2611 = vadd.f32 %v2445, %v2549
      %v2612 = vadd.f32 %v2446, %v2552
      %v2613 = vadd.f32 %v2447, %v2557
      %v2614 = vadd.f32 %v2448, %v2560
      %v2615 = vadd.f32 %v2449, %v2565
      %v2616 = vadd.f32 %v2450, %v2568
      %v2617 = vadd.f32 %v2451, %v2573
      %v2618 = vadd.f32 %v2452, %v2576
      %v2619 = vadd.f32 %v2453, %v2581
      %v2620 = vadd.f32 %v2454, %v2584
      %v2621 = vadd.f32 %v2455, %v2589
      %v2622 = vadd.f32 %v2456, %v2592
      %v2623 = vadd.f32 %v2457, %v2597
      %v2624 = vadd.f32 %v2458, %v2600
      %v2625 = vadd.f32 %v2459, %v2605
      %v2626 = vadd.f32 %v2460, %v2608
      %v2627 = vld [vmem:[%s2461 + $0x1] sm:$0xff]
      %v2628 = vld [vmem:[%s2461 + $0x9] sm:$0xff]
      %v2629 = vld [vmem:[%s2461 + $0x19] sm:$0xff]
      %v2630 = vld [vmem:[%s2461 + $0x21] sm:$0xff]
      %v2631 = vld [vmem:[%s2461 + $0x31] sm:$0xff]
      %v2632 = vld [vmem:[%s2461 + $0x39] sm:$0xff]
      %v2633 = vld [vmem:[%s2461 + $0x49] sm:$0xff]
      %v2634 = vld [vmem:[%s2461 + $0x51] sm:$0xff]
      %v2635 = vld [vmem:[%s2461 + $0x61] sm:$0xff]
      %v2636 = vld [vmem:[%s2461 + $0x69] sm:$0xff]
      %v2637 = vld [vmem:[%s2461 + $0x79] sm:$0xff]
      %v2638 = vld [vmem:[%s2461 + $0x81] sm:$0xff]
      %v2639 = vld [vmem:[%s2461 + $0x91] sm:$0xff]
      %v2640 = vld [vmem:[%s2461 + $0x99] sm:$0xff]
      %v2641 = vld [vmem:[%s2461 + $0xa9] sm:$0xff]
      %v2642 = vld [vmem:[%s2461 + $0xb1] sm:$0xff]
      %v2643 = vpack.c.bf16 %v2628, %v2627
      %v2644 = vpack.c.bf16 %v2630, %v2629
      %v2645 = vpack.c.bf16 %v2632, %v2631
      %v2646 = vpack.c.bf16 %v2634, %v2633
      %v2647 = vpack.c.bf16 %v2636, %v2635
      %v2648 = vpack.c.bf16 %v2638, %v2637
      %v2649 = vpack.c.bf16 %v2640, %v2639
      %v2650 = vpack.c.bf16 %v2642, %v2641
      %v2651 = vld [vmem:[%s1111] sm:$0x3]
      %v2653 = vsel %vm280, %v2643, 0
      %v2656 = vsel %vm280, %v2644, 0
      %v2659 = vsel %vm280, %v2645, 0
      %v2662 = vsel %vm280, %v2646, 0
      %v2665 = vsel %vm280, %v2647, 0
      %v2668 = vsel %vm280, %v2648, 0
      %v2671 = vsel %vm280, %v2649, 0
      %v2674 = vsel %vm280, %v2650, 0
      %v2677 = vsel %vm530, %v2651, 0
      %2679 = vmatprep.subr.bf16.mxu0 0
      %2680 = vmatpush1.bf16.msra.mxu0 %v2677
      %2681 = vmatprep.subr.bf16.mxu0 0
      %2682 = vmatpush1.bf16.msra.mxu0 0
      %2683 = vmatprep.subr.bf16.mxu0 0
      %2684 = vmatpush1.bf16.msra.mxu0 0
      %2685 = vmatprep.subr.bf16.mxu0 0
      %2686 = vmatpush1.bf16.msra.mxu0 0
      %2687 = vmatprep.subr.bf16.mxu0 0
      %2688 = vmatpush1.bf16.msra.mxu0 0
      %2689 = vmatprep.subr.bf16.mxu0 0
      %2690 = vmatpush1.bf16.msra.mxu0 0
      %2691 = vmatprep.subr.bf16.mxu0 0
      %2692 = vmatpush1.bf16.msra.mxu0 0
      %2693 = vmatprep.subr.bf16.mxu0 0
      %2694 = vmatpush1.bf16.msra.mxu0 0
      %2695 = vmatprep.subr.bf16.mxu0 0
      %2696 = vmatpush1.bf16.msra.mxu0 0
      %2697 = vmatprep.subr.bf16.mxu0 0
      %2698 = vmatpush1.bf16.msra.mxu0 0
      %2699 = vmatprep.subr.bf16.mxu0 0
      %2700 = vmatpush1.bf16.msra.mxu0 0
      %2701 = vmatprep.subr.bf16.mxu0 0
      %2702 = vmatpush1.bf16.msra.mxu0 0
      %2703 = vmatprep.subr.bf16.mxu0 0
      %2704 = vmatpush1.bf16.msra.mxu0 0
      %2705 = vmatprep.subr.bf16.mxu0 0
      %2706 = vmatpush1.bf16.msra.mxu0 0
      %2707 = vmatprep.subr.bf16.mxu0 0
      %2708 = vmatpush1.bf16.msra.mxu0 0
      %2709 = vmatprep.subr.bf16.mxu0 0
      %2710 = vmatpush1.bf16.msra.mxu0 0
      %2711 = vmatprep.mubr.bf16.mxu0 0
      %2712 = vmatmul.mubr.bf16.gmra.mrb[0].mxu0 %v2653
      %v2713 = vpop.f32.mrb[0].mxu0
      %v2714 = vadd.f32 0.0, %v2713
      %v2715 = vpop.f32.mrb[0].mxu0
      %v2716 = vpop.f32.mrb[0].mxu0
      %v2717 = vadd.f32 0.0, %v2716
      %v2718 = vpop.f32.mrb[0].mxu0
      %2719 = vmatprep.mubr.bf16.mxu0 0
      %2720 = vmatmul.mubr.bf16.gmra.mrb[0].mxu0 %v2656
      %v2721 = vpop.f32.mrb[0].mxu0
      %v2722 = vadd.f32 0.0, %v2721
      %v2723 = vpop.f32.mrb[0].mxu0
      %v2724 = vpop.f32.mrb[0].mxu0
      %v2725 = vadd.f32 0.0, %v2724
      %v2726 = vpop.f32.mrb[0].mxu0
      %2727 = vmatprep.mubr.bf16.mxu0 0
      %2728 = vmatmul.mubr.bf16.gmra.mrb[0].mxu0 %v2659
      %v2729 = vpop.f32.mrb[0].mxu0
      %v2730 = vadd.f32 0.0, %v2729
      %v2731 = vpop.f32.mrb[0].mxu0
      %v2732 = vpop.f32.mrb[0].mxu0
      %v2733 = vadd.f32 0.0, %v2732
      %v2734 = vpop.f32.mrb[0].mxu0
      %2735 = vmatprep.mubr.bf16.mxu0 0
      %2736 = vmatmul.mubr.bf16.gmra.mrb[0].mxu0 %v2662
      %v2737 = vpop.f32.mrb[0].mxu0
      %v2738 = vadd.f32 0.0, %v2737
      %v2739 = vpop.f32.mrb[0].mxu0
      %v2740 = vpop.f32.mrb[0].mxu0
      %v2741 = vadd.f32 0.0, %v2740
      %v2742 = vpop.f32.mrb[0].mxu0
      %2743 = vmatprep.mubr.bf16.mxu0 0
      %2744 = vmatmul.mubr.bf16.gmra.mrb[0].mxu0 %v2665
      %v2745 = vpop.f32.mrb[0].mxu0
      %v2746 = vadd.f32 0.0, %v2745
      %v2747 = vpop.f32.mrb[0].mxu0
      %v2748 = vpop.f32.mrb[0].mxu0
      %v2749 = vadd.f32 0.0, %v2748
      %v2750 = vpop.f32.mrb[0].mxu0
      %2751 = vmatprep.mubr.bf16.mxu0 0
      %2752 = vmatmul.mubr.bf16.gmra.mrb[0].mxu0 %v2668
      %v2753 = vpop.f32.mrb[0].mxu0
      %v2754 = vadd.f32 0.0, %v2753
      %v2755 = vpop.f32.mrb[0].mxu0
      %v2756 = vpop.f32.mrb[0].mxu0
      %v2757 = vadd.f32 0.0, %v2756
      %v2758 = vpop.f32.mrb[0].mxu0
      %2759 = vmatprep.mubr.bf16.mxu0 0
      %2760 = vmatmul.mubr.bf16.gmra.mrb[0].mxu0 %v2671
      %v2761 = vpop.f32.mrb[0].mxu0
      %v2762 = vadd.f32 0.0, %v2761
      %v2763 = vpop.f32.mrb[0].mxu0
      %v2764 = vpop.f32.mrb[0].mxu0
      %v2765 = vadd.f32 0.0, %v2764
      %v2766 = vpop.f32.mrb[0].mxu0
      %2767 = vmatprep.mubr.bf16.mxu0 0
      %2768 = vmatmul.mubr.bf16.gmra.mrb[0].mxu0 %v2674
      %v2769 = vpop.f32.mrb[0].mxu0
      %v2770 = vadd.f32 0.0, %v2769
      %v2771 = vpop.f32.mrb[0].mxu0
      %v2772 = vpop.f32.mrb[0].mxu0
      %v2773 = vadd.f32 0.0, %v2772
      %v2774 = vpop.f32.mrb[0].mxu0
      %2775 = vdwg.mxu0
      %v2776 = vadd.f32 %v2611, %v2714
      %v2777 = vadd.f32 %v2612, %v2717
      %v2778 = vadd.f32 %v2613, %v2722
      %v2779 = vadd.f32 %v2614, %v2725
      %v2780 = vadd.f32 %v2615, %v2730
      %v2781 = vadd.f32 %v2616, %v2733
      %v2782 = vadd.f32 %v2617, %v2738
      %v2783 = vadd.f32 %v2618, %v2741
      %v2784 = vadd.f32 %v2619, %v2746
      %v2785 = vadd.f32 %v2620, %v2749
      %v2786 = vadd.f32 %v2621, %v2754
      %v2787 = vadd.f32 %v2622, %v2757
      %v2788 = vadd.f32 %v2623, %v2762
      %v2789 = vadd.f32 %v2624, %v2765
      %v2790 = vadd.f32 %v2625, %v2770
      %v2791 = vadd.f32 %v2626, %v2773
      %v2792 = vld [vmem:[%s2461 + $0x2] sm:$0xff]
      %v2793 = vld [vmem:[%s2461 + $0xa] sm:$0xff]
      %v2794 = vld [vmem:[%s2461 + $0x1a] sm:$0xff]
      %v2795 = vld [vmem:[%s2461 + $0x22] sm:$0xff]
      %v2796 = vld [vmem:[%s2461 + $0x32] sm:$0xff]
      %v2797 = vld [vmem:[%s2461 + $0x3a] sm:$0xff]
      %v2798 = vld [vmem:[%s2461 + $0x4a] sm:$0xff]
      %v2799 = vld [vmem:[%s2461 + $0x52] sm:$0xff]
      %v2800 = vld [vmem:[%s2461 + $0x62] sm:$0xff]
      %v2801 = vld [vmem:[%s2461 + $0x6a] sm:$0xff]
      %v2802 = vld [vmem:[%s2461 + $0x7a] sm:$0xff]
      %v2803 = vld [vmem:[%s2461 + $0x82] sm:$0xff]
      %v2804 = vld [vmem:[%s2461 + $0x92] sm:$0xff]
      %v2805 = vld [vmem:[%s2461 + $0x9a] sm:$0xff]
      %v2806 = vld [vmem:[%s2461 + $0xaa] sm:$0xff]
      %v2807 = vld [vmem:[%s2461 + $0xb2] sm:$0xff]
      %v2808 = vpack.c.bf16 %v2793, %v2792
      %v2809 = vpack.c.bf16 %v2795, %v2794
      %v2810 = vpack.c.bf16 %v2797, %v2796
      %v2811 = vpack.c.bf16 %v2799, %v2798
      %v2812 = vpack.c.bf16 %v2801, %v2800
      %v2813 = vpack.c.bf16 %v2803, %v2802
      %v2814 = vpack.c.bf16 %v2805, %v2804
      %v2815 = vpack.c.bf16 %v2807, %v2806
      %v2816 = vld [vmem:[%s1277] sm:$0x3]
      %v2818 = vsel %vm280, %v2808, 0
      %v2821 = vsel %vm280, %v2809, 0
      %v2824 = vsel %vm280, %v2810, 0
      %v2827 = vsel %vm280, %v2811, 0
      %v2830 = vsel %vm280, %v2812, 0
      %v2833 = vsel %vm280, %v2813, 0
      %v2836 = vsel %vm280, %v2814, 0
      %v2839 = vsel %vm280, %v2815, 0
      %v2842 = vsel %vm530, %v2816, 0
      %2844 = vmatprep.subr.bf16.mxu0 0
      %2845 = vmatpush1.bf16.msra.mxu0 %v2842
      %2846 = vmatprep.subr.bf16.mxu0 0
      %2847 = vmatpush1.bf16.msra.mxu0 0
      %2848 = vmatprep.subr.bf16.mxu0 0
      %2849 = vmatpush1.bf16.msra.mxu0 0
      %2850 = vmatprep.subr.bf16.mxu0 0
      %2851 = vmatpush1.bf16.msra.mxu0 0
      %2852 = vmatprep.subr.bf16.mxu0 0
      %2853 = vmatpush1.bf16.msra.mxu0 0
      %2854 = vmatprep.subr.bf16.mxu0 0
      %2855 = vmatpush1.bf16.msra.mxu0 0
      %2856 = vmatprep.subr.bf16.mxu0 0
      %2857 = vmatpush1.bf16.msra.mxu0 0
      %2858 = vmatprep.subr.bf16.mxu0 0
      %2859 = vmatpush1.bf16.msra.mxu0 0
      %2860 = vmatprep.subr.bf16.mxu0 0
      %2861 = vmatpush1.bf16.msra.mxu0 0
      %2862 = vmatprep.subr.bf16.mxu0 0
      %2863 = vmatpush1.bf16.msra.mxu0 0
      %2864 = vmatprep.subr.bf16.mxu0 0
      %2865 = vmatpush1.bf16.msra.mxu0 0
      %2866 = vmatprep.subr.bf16.mxu0 0
      %2867 = vmatpush1.bf16.msra.mxu0 0
      %2868 = vmatprep.subr.bf16.mxu0 0
      %2869 = vmatpush1.bf16.msra.mxu0 0
      %2870 = vmatprep.subr.bf16.mxu0 0
      %2871 = vmatpush1.bf16.msra.mxu0 0
      %2872 = vmatprep.subr.bf16.mxu0 0
      %2873 = vmatpush1.bf16.msra.mxu0 0
      %2874 = vmatprep.subr.bf16.mxu0 0
      %2875 = vmatpush1.bf16.msra.mxu0 0
      %2876 = vmatprep.mubr.bf16.mxu0 0
      %2877 = vmatmul.mubr.bf16.gmra.mrb[0].mxu0 %v2818
      %v2878 = vpop.f32.mrb[0].mxu0
      %v2879 = vadd.f32 0.0, %v2878
      %v2880 = vpop.f32.mrb[0].mxu0
      %v2881 = vpop.f32.mrb[0].mxu0
      %v2882 = vadd.f32 0.0, %v2881
      %v2883 = vpop.f32.mrb[0].mxu0
      %2884 = vmatprep.mubr.bf16.mxu0 0
      %2885 = vmatmul.mubr.bf16.gmra.mrb[0].mxu0 %v2821
      %v2886 = vpop.f32.mrb[0].mxu0
      %v2887 = vadd.f32 0.0, %v2886
      %v2888 = vpop.f32.mrb[0].mxu0
      %v2889 = vpop.f32.mrb[0].mxu0
      %v2890 = vadd.f32 0.0, %v2889
      %v2891 = vpop.f32.mrb[0].mxu0
      %2892 = vmatprep.mubr.bf16.mxu0 0
      %2893 = vmatmul.mubr.bf16.gmra.mrb[0].mxu0 %v2824
      %v2894 = vpop.f32.mrb[0].mxu0
      %v2895 = vadd.f32 0.0, %v2894
      %v2896 = vpop.f32.mrb[0].mxu0
      %v2897 = vpop.f32.mrb[0].mxu0
      %v2898 = vadd.f32 0.0, %v2897
      %v2899 = vpop.f32.mrb[0].mxu0
      %2900 = vmatprep.mubr.bf16.mxu0 0
      %2901 = vmatmul.mubr.bf16.gmra.mrb[0].mxu0 %v2827
      %v2902 = vpop.f32.mrb[0].mxu0
      %v2903 = vadd.f32 0.0, %v2902
      %v2904 = vpop.f32.mrb[0].mxu0
      %v2905 = vpop.f32.mrb[0].mxu0
      %v2906 = vadd.f32 0.0, %v2905
      %v2907 = vpop.f32.mrb[0].mxu0
      %2908 = vmatprep.mubr.bf16.mxu0 0
      %2909 = vmatmul.mubr.bf16.gmra.mrb[0].mxu0 %v2830
      %v2910 = vpop.f32.mrb[0].mxu0
      %v2911 = vadd.f32 0.0, %v2910
      %v2912 = vpop.f32.mrb[0].mxu0
      %v2913 = vpop.f32.mrb[0].mxu0
      %v2914 = vadd.f32 0.0, %v2913
      %v2915 = vpop.f32.mrb[0].mxu0
      %2916 = vmatprep.mubr.bf16.mxu0 0
      %2917 = vmatmul.mubr.bf16.gmra.mrb[0].mxu0 %v2833
      %v2918 = vpop.f32.mrb[0].mxu0
      %v2919 = vadd.f32 0.0, %v2918
      %v2920 = vpop.f32.mrb[0].mxu0
      %v2921 = vpop.f32.mrb[0].mxu0
      %v2922 = vadd.f32 0.0, %v2921
      %v2923 = vpop.f32.mrb[0].mxu0
      %2924 = vmatprep.mubr.bf16.mxu0 0
      %2925 = vmatmul.mubr.bf16.gmra.mrb[0].mxu0 %v2836
      %v2926 = vpop.f32.mrb[0].mxu0
      %v2927 = vadd.f32 0.0, %v2926
      %v2928 = vpop.f32.mrb[0].mxu0
      %v2929 = vpop.f32.mrb[0].mxu0
      %v2930 = vadd.f32 0.0, %v2929
      %v2931 = vpop.f32.mrb[0].mxu0
      %2932 = vmatprep.mubr.bf16.mxu0 0
      %2933 = vmatmul.mubr.bf16.gmra.mrb[0].mxu0 %v2839
      %v2934 = vpop.f32.mrb[0].mxu0
      %v2935 = vadd.f32 0.0, %v2934
      %v2936 = vpop.f32.mrb[0].mxu0
      %v2937 = vpop.f32.mrb[0].mxu0
      %v2938 = vadd.f32 0.0, %v2937
      %v2939 = vpop.f32.mrb[0].mxu0
      %2940 = vdwg.mxu0
      %v2941 = vadd.f32 %v2776, %v2879
      %v2942 = vadd.f32 %v2777, %v2882
      %v2943 = vadd.f32 %v2778, %v2887
      %v2944 = vadd.f32 %v2779, %v2890
      %v2945 = vadd.f32 %v2780, %v2895
      %v2946 = vadd.f32 %v2781, %v2898
      %v2947 = vadd.f32 %v2782, %v2903
      %v2948 = vadd.f32 %v2783, %v2906
      %v2949 = vadd.f32 %v2784, %v2911
      %v2950 = vadd.f32 %v2785, %v2914
      %v2951 = vadd.f32 %v2786, %v2919
      %v2952 = vadd.f32 %v2787, %v2922
      %v2953 = vadd.f32 %v2788, %v2927
      %v2954 = vadd.f32 %v2789, %v2930
      %v2955 = vadd.f32 %v2790, %v2935
      %v2956 = vadd.f32 %v2791, %v2938
      %s2957 = scalar_lea.vmem [#allocation2], 240
      %v2958 = vld [vmem:[%s2957] sm:$0xff]
      %v2959 = vld [vmem:[%s2957 + $0x8] sm:$0xff]
      %v2960 = vld [vmem:[%s2957 + $0x18] sm:$0xff]
      %v2961 = vld [vmem:[%s2957 + $0x20] sm:$0xff]
      %v2962 = vld [vmem:[%s2957 + $0x30] sm:$0xff]
      %v2963 = vld [vmem:[%s2957 + $0x38] sm:$0xff]
      %v2964 = vld [vmem:[%s2957 + $0x48] sm:$0xff]
      %v2965 = vld [vmem:[%s2957 + $0x50] sm:$0xff]
      %v2966 = vld [vmem:[%s2957 + $0x60] sm:$0xff]
      %v2967 = vld [vmem:[%s2957 + $0x68] sm:$0xff]
      %v2968 = vld [vmem:[%s2957 + $0x78] sm:$0xff]
      %v2969 = vld [vmem:[%s2957 + $0x80] sm:$0xff]
      %v2970 = vld [vmem:[%s2957 + $0x90] sm:$0xff]
      %v2971 = vld [vmem:[%s2957 + $0x98] sm:$0xff]
      %v2972 = vld [vmem:[%s2957 + $0xa8] sm:$0xff]
      %v2973 = vld [vmem:[%s2957 + $0xb0] sm:$0xff]
      %v2974 = vpack.c.bf16 %v2959, %v2958
      %v2975 = vpack.c.bf16 %v2961, %v2960
      %v2976 = vpack.c.bf16 %v2963, %v2962
      %v2977 = vpack.c.bf16 %v2965, %v2964
      %v2978 = vpack.c.bf16 %v2967, %v2966
      %v2979 = vpack.c.bf16 %v2969, %v2968
      %v2980 = vpack.c.bf16 %v2971, %v2970
      %v2981 = vpack.c.bf16 %v2973, %v2972
      %v2982 = vld [vmem:[%s1444] sm:$0x3]
      %v2984 = vsel %vm280, %v2974, 0
      %v2987 = vsel %vm280, %v2975, 0
      %v2990 = vsel %vm280, %v2976, 0
      %v2993 = vsel %vm280, %v2977, 0
      %v2996 = vsel %vm280, %v2978, 0
      %v2999 = vsel %vm280, %v2979, 0
      %v3002 = vsel %vm280, %v2980, 0
      %v3005 = vsel %vm280, %v2981, 0
      %v3008 = vsel %vm530, %v2982, 0
      %3010 = vmatprep.subr.bf16.mxu0 0
      %3011 = vmatpush1.bf16.msra.mxu0 %v3008
      %3012 = vmatprep.subr.bf16.mxu0 0
      %3013 = vmatpush1.bf16.msra.mxu0 0
      %3014 = vmatprep.subr.bf16.mxu0 0
      %3015 = vmatpush1.bf16.msra.mxu0 0
      %3016 = vmatprep.subr.bf16.mxu0 0
      %3017 = vmatpush1.bf16.msra.mxu0 0
      %3018 = vmatprep.subr.bf16.mxu0 0
      %3019 = vmatpush1.bf16.msra.mxu0 0
      %3020 = vmatprep.subr.bf16.mxu0 0
      %3021 = vmatpush1.bf16.msra.mxu0 0
      %3022 = vmatprep.subr.bf16.mxu0 0
      %3023 = vmatpush1.bf16.msra.mxu0 0
      %3024 = vmatprep.subr.bf16.mxu0 0
      %3025 = vmatpush1.bf16.msra.mxu0 0
      %3026 = vmatprep.subr.bf16.mxu0 0
      %3027 = vmatpush1.bf16.msra.mxu0 0
      %3028 = vmatprep.subr.bf16.mxu0 0
      %3029 = vmatpush1.bf16.msra.mxu0 0
      %3030 = vmatprep.subr.bf16.mxu0 0
      %3031 = vmatpush1.bf16.msra.mxu0 0
      %3032 = vmatprep.subr.bf16.mxu0 0
      %3033 = vmatpush1.bf16.msra.mxu0 0
      %3034 = vmatprep.subr.bf16.mxu0 0
      %3035 = vmatpush1.bf16.msra.mxu0 0
      %3036 = vmatprep.subr.bf16.mxu0 0
      %3037 = vmatpush1.bf16.msra.mxu0 0
      %3038 = vmatprep.subr.bf16.mxu0 0
      %3039 = vmatpush1.bf16.msra.mxu0 0
      %3040 = vmatprep.subr.bf16.mxu0 0
      %3041 = vmatpush1.bf16.msra.mxu0 0
      %3042 = vmatprep.mubr.bf16.mxu0 0
      %3043 = vmatmul.mubr.bf16.gmra.mrb[0].mxu0 %v2984
      %v3044 = vpop.f32.mrb[0].mxu0
      %v3045 = vadd.f32 0.0, %v3044
      %v3046 = vpop.f32.mrb[0].mxu0
      %v3047 = vpop.f32.mrb[0].mxu0
      %v3048 = vadd.f32 0.0, %v3047
      %v3049 = vpop.f32.mrb[0].mxu0
      %3050 = vmatprep.mubr.bf16.mxu0 0
      %3051 = vmatmul.mubr.bf16.gmra.mrb[0].mxu0 %v2987
      %v3052 = vpop.f32.mrb[0].mxu0
      %v3053 = vadd.f32 0.0, %v3052
      %v3054 = vpop.f32.mrb[0].mxu0
      %v3055 = vpop.f32.mrb[0].mxu0
      %v3056 = vadd.f32 0.0, %v3055
      %v3057 = vpop.f32.mrb[0].mxu0
      %3058 = vmatprep.mubr.bf16.mxu0 0
      %3059 = vmatmul.mubr.bf16.gmra.mrb[0].mxu0 %v2990
      %v3060 = vpop.f32.mrb[0].mxu0
      %v3061 = vadd.f32 0.0, %v3060
      %v3062 = vpop.f32.mrb[0].mxu0
      %v3063 = vpop.f32.mrb[0].mxu0
      %v3064 = vadd.f32 0.0, %v3063
      %v3065 = vpop.f32.mrb[0].mxu0
      %3066 = vmatprep.mubr.bf16.mxu0 0
      %3067 = vmatmul.mubr.bf16.gmra.mrb[0].mxu0 %v2993
      %v3068 = vpop.f32.mrb[0].mxu0
      %v3069 = vadd.f32 0.0, %v3068
      %v3070 = vpop.f32.mrb[0].mxu0
      %v3071 = vpop.f32.mrb[0].mxu0
      %v3072 = vadd.f32 0.0, %v3071
      %v3073 = vpop.f32.mrb[0].mxu0
      %3074 = vmatprep.mubr.bf16.mxu0 0
      %3075 = vmatmul.mubr.bf16.gmra.mrb[0].mxu0 %v2996
      %v3076 = vpop.f32.mrb[0].mxu0
      %v3077 = vadd.f32 0.0, %v3076
      %v3078 = vpop.f32.mrb[0].mxu0
      %v3079 = vpop.f32.mrb[0].mxu0
      %v3080 = vadd.f32 0.0, %v3079
      %v3081 = vpop.f32.mrb[0].mxu0
      %3082 = vmatprep.mubr.bf16.mxu0 0
      %3083 = vmatmul.mubr.bf16.gmra.mrb[0].mxu0 %v2999
      %v3084 = vpop.f32.mrb[0].mxu0
      %v3085 = vadd.f32 0.0, %v3084
      %v3086 = vpop.f32.mrb[0].mxu0
      %v3087 = vpop.f32.mrb[0].mxu0
      %v3088 = vadd.f32 0.0, %v3087
      %v3089 = vpop.f32.mrb[0].mxu0
      %3090 = vmatprep.mubr.bf16.mxu0 0
      %3091 = vmatmul.mubr.bf16.gmra.mrb[0].mxu0 %v3002
      %v3092 = vpop.f32.mrb[0].mxu0
      %v3093 = vadd.f32 0.0, %v3092
      %v3094 = vpop.f32.mrb[0].mxu0
      %v3095 = vpop.f32.mrb[0].mxu0
      %v3096 = vadd.f32 0.0, %v3095
      %v3097 = vpop.f32.mrb[0].mxu0
      %3098 = vmatprep.mubr.bf16.mxu0 0
      %3099 = vmatmul.mubr.bf16.gmra.mrb[0].mxu0 %v3005
      %v3100 = vpop.f32.mrb[0].mxu0
      %v3101 = vadd.f32 0.0, %v3100
      %v3102 = vpop.f32.mrb[0].mxu0
      %v3103 = vpop.f32.mrb[0].mxu0
      %v3104 = vadd.f32 0.0, %v3103
      %v3105 = vpop.f32.mrb[0].mxu0
      %3106 = vdwg.mxu0
      %v3107 = vadd.f32 %v2941, %v3045
      %v3108 = vadd.f32 %v2942, %v3048
      %v3109 = vadd.f32 %v2943, %v3053
      %v3110 = vadd.f32 %v2944, %v3056
      %v3111 = vadd.f32 %v2945, %v3061
      %v3112 = vadd.f32 %v2946, %v3064
      %v3113 = vadd.f32 %v2947, %v3069
      %v3114 = vadd.f32 %v2948, %v3072
      %v3115 = vadd.f32 %v2949, %v3077
      %v3116 = vadd.f32 %v2950, %v3080
      %v3117 = vadd.f32 %v2951, %v3085
      %v3118 = vadd.f32 %v2952, %v3088
      %v3119 = vadd.f32 %v2953, %v3093
      %v3120 = vadd.f32 %v2954, %v3096
      %v3121 = vadd.f32 %v2955, %v3101
      %v3122 = vadd.f32 %v2956, %v3104
      %v3123 = vld [vmem:[%s2957 + $0x1] sm:$0xff]
      %v3124 = vld [vmem:[%s2957 + $0x9] sm:$0xff]
      %v3125 = vld [vmem:[%s2957 + $0x19] sm:$0xff]
      %v3126 = vld [vmem:[%s2957 + $0x21] sm:$0xff]
      %v3127 = vld [vmem:[%s2957 + $0x31] sm:$0xff]
      %v3128 = vld [vmem:[%s2957 + $0x39] sm:$0xff]
      %v3129 = vld [vmem:[%s2957 + $0x49] sm:$0xff]
      %v3130 = vld [vmem:[%s2957 + $0x51] sm:$0xff]
      %v3131 = vld [vmem:[%s2957 + $0x61] sm:$0xff]
      %v3132 = vld [vmem:[%s2957 + $0x69] sm:$0xff]
      %v3133 = vld [vmem:[%s2957 + $0x79] sm:$0xff]
      %v3134 = vld [vmem:[%s2957 + $0x81] sm:$0xff]
      %v3135 = vld [vmem:[%s2957 + $0x91] sm:$0xff]
      %v3136 = vld [vmem:[%s2957 + $0x99] sm:$0xff]
      %v3137 = vld [vmem:[%s2957 + $0xa9] sm:$0xff]
      %v3138 = vld [vmem:[%s2957 + $0xb1] sm:$0xff]
      %v3139 = vpack.c.bf16 %v3124, %v3123
      %v3140 = vpack.c.bf16 %v3126, %v3125
      %v3141 = vpack.c.bf16 %v3128, %v3127
      %v3142 = vpack.c.bf16 %v3130, %v3129
      %v3143 = vpack.c.bf16 %v3132, %v3131
      %v3144 = vpack.c.bf16 %v3134, %v3133
      %v3145 = vpack.c.bf16 %v3136, %v3135
      %v3146 = vpack.c.bf16 %v3138, %v3137
      %v3147 = vld [vmem:[%s1610] sm:$0x3]
      %v3149 = vsel %vm280, %v3139, 0
      %v3152 = vsel %vm280, %v3140, 0
      %v3155 = vsel %vm280, %v3141, 0
      %v3158 = vsel %vm280, %v3142, 0
      %v3161 = vsel %vm280, %v3143, 0
      %v3164 = vsel %vm280, %v3144, 0
      %v3167 = vsel %vm280, %v3145, 0
      %v3170 = vsel %vm280, %v3146, 0
      %v3173 = vsel %vm530, %v3147, 0
      %3175 = vmatprep.subr.bf16.mxu0 0
      %3176 = vmatpush1.bf16.msra.mxu0 %v3173
      %3177 = vmatprep.subr.bf16.mxu0 0
      %3178 = vmatpush1.bf16.msra.mxu0 0
      %3179 = vmatprep.subr.bf16.mxu0 0
      %3180 = vmatpush1.bf16.msra.mxu0 0
      %3181 = vmatprep.subr.bf16.mxu0 0
      %3182 = vmatpush1.bf16.msra.mxu0 0
      %3183 = vmatprep.subr.bf16.mxu0 0
      %3184 = vmatpush1.bf16.msra.mxu0 0
      %3185 = vmatprep.subr.bf16.mxu0 0
      %3186 = vmatpush1.bf16.msra.mxu0 0
      %3187 = vmatprep.subr.bf16.mxu0 0
      %3188 = vmatpush1.bf16.msra.mxu0 0
      %3189 = vmatprep.subr.bf16.mxu0 0
      %3190 = vmatpush1.bf16.msra.mxu0 0
      %3191 = vmatprep.subr.bf16.mxu0 0
      %3192 = vmatpush1.bf16.msra.mxu0 0
      %3193 = vmatprep.subr.bf16.mxu0 0
      %3194 = vmatpush1.bf16.msra.mxu0 0
      %3195 = vmatprep.subr.bf16.mxu0 0
      %3196 = vmatpush1.bf16.msra.mxu0 0
      %3197 = vmatprep.subr.bf16.mxu0 0
      %3198 = vmatpush1.bf16.msra.mxu0 0
      %3199 = vmatprep.subr.bf16.mxu0 0
      %3200 = vmatpush1.bf16.msra.mxu0 0
      %3201 = vmatprep.subr.bf16.mxu0 0
      %3202 = vmatpush1.bf16.msra.mxu0 0
      %3203 = vmatprep.subr.bf16.mxu0 0
      %3204 = vmatpush1.bf16.msra.mxu0 0
      %3205 = vmatprep.subr.bf16.mxu0 0
      %3206 = vmatpush1.bf16.msra.mxu0 0
      %3207 = vmatprep.mubr.bf16.mxu0 0
      %3208 = vmatmul.mubr.bf16.gmra.mrb[0].mxu0 %v3149
      %v3209 = vpop.f32.mrb[0].mxu0
      %v3210 = vadd.f32 0.0, %v3209
      %v3211 = vpop.f32.mrb[0].mxu0
      %v3212 = vpop.f32.mrb[0].mxu0
      %v3213 = vadd.f32 0.0, %v3212
      %v3214 = vpop.f32.mrb[0].mxu0
      %3215 = vmatprep.mubr.bf16.mxu0 0
      %3216 = vmatmul.mubr.bf16.gmra.mrb[0].mxu0 %v3152
      %v3217 = vpop.f32.mrb[0].mxu0
      %v3218 = vadd.f32 0.0, %v3217
      %v3219 = vpop.f32.mrb[0].mxu0
      %v3220 = vpop.f32.mrb[0].mxu0
      %v3221 = vadd.f32 0.0, %v3220
      %v3222 = vpop.f32.mrb[0].mxu0
      %3223 = vmatprep.mubr.bf16.mxu0 0
      %3224 = vmatmul.mubr.bf16.gmra.mrb[0].mxu0 %v3155
      %v3225 = vpop.f32.mrb[0].mxu0
      %v3226 = vadd.f32 0.0, %v3225
      %v3227 = vpop.f32.mrb[0].mxu0
      %v3228 = vpop.f32.mrb[0].mxu0
      %v3229 = vadd.f32 0.0, %v3228
      %v3230 = vpop.f32.mrb[0].mxu0
      %3231 = vmatprep.mubr.bf16.mxu0 0
      %3232 = vmatmul.mubr.bf16.gmra.mrb[0].mxu0 %v3158
      %v3233 = vpop.f32.mrb[0].mxu0
      %v3234 = vadd.f32 0.0, %v3233
      %v3235 = vpop.f32.mrb[0].mxu0
      %v3236 = vpop.f32.mrb[0].mxu0
      %v3237 = vadd.f32 0.0, %v3236
      %v3238 = vpop.f32.mrb[0].mxu0
      %3239 = vmatprep.mubr.bf16.mxu0 0
      %3240 = vmatmul.mubr.bf16.gmra.mrb[0].mxu0 %v3161
      %v3241 = vpop.f32.mrb[0].mxu0
      %v3242 = vadd.f32 0.0, %v3241
      %v3243 = vpop.f32.mrb[0].mxu0
      %v3244 = vpop.f32.mrb[0].mxu0
      %v3245 = vadd.f32 0.0, %v3244
      %v3246 = vpop.f32.mrb[0].mxu0
      %3247 = vmatprep.mubr.bf16.mxu0 0
      %3248 = vmatmul.mubr.bf16.gmra.mrb[0].mxu0 %v3164
      %v3249 = vpop.f32.mrb[0].mxu0
      %v3250 = vadd.f32 0.0, %v3249
      %v3251 = vpop.f32.mrb[0].mxu0
      %v3252 = vpop.f32.mrb[0].mxu0
      %v3253 = vadd.f32 0.0, %v3252
      %v3254 = vpop.f32.mrb[0].mxu0
      %3255 = vmatprep.mubr.bf16.mxu0 0
      %3256 = vmatmul.mubr.bf16.gmra.mrb[0].mxu0 %v3167
      %v3257 = vpop.f32.mrb[0].mxu0
      %v3258 = vadd.f32 0.0, %v3257
      %v3259 = vpop.f32.mrb[0].mxu0
      %v3260 = vpop.f32.mrb[0].mxu0
      %v3261 = vadd.f32 0.0, %v3260
      %v3262 = vpop.f32.mrb[0].mxu0
      %3263 = vmatprep.mubr.bf16.mxu0 0
      %3264 = vmatmul.mubr.bf16.gmra.mrb[0].mxu0 %v3170
      %v3265 = vpop.f32.mrb[0].mxu0
      %v3266 = vadd.f32 0.0, %v3265
      %v3267 = vpop.f32.mrb[0].mxu0
      %v3268 = vpop.f32.mrb[0].mxu0
      %v3269 = vadd.f32 0.0, %v3268
      %v3270 = vpop.f32.mrb[0].mxu0
      %3271 = vdwg.mxu0
      %v3272 = vadd.f32 %v3107, %v3210
      %v3273 = vadd.f32 %v3108, %v3213
      %v3274 = vadd.f32 %v3109, %v3218
      %v3275 = vadd.f32 %v3110, %v3221
      %v3276 = vadd.f32 %v3111, %v3226
      %v3277 = vadd.f32 %v3112, %v3229
      %v3278 = vadd.f32 %v3113, %v3234
      %v3279 = vadd.f32 %v3114, %v3237
      %v3280 = vadd.f32 %v3115, %v3242
      %v3281 = vadd.f32 %v3116, %v3245
      %v3282 = vadd.f32 %v3117, %v3250
      %v3283 = vadd.f32 %v3118, %v3253
      %v3284 = vadd.f32 %v3119, %v3258
      %v3285 = vadd.f32 %v3120, %v3261
      %v3286 = vadd.f32 %v3121, %v3266
      %v3287 = vadd.f32 %v3122, %v3269
      %v3288 = vld [vmem:[%s2957 + $0x2] sm:$0xff]
      %v3289 = vld [vmem:[%s2957 + $0xa] sm:$0xff]
      %v3290 = vld [vmem:[%s2957 + $0x1a] sm:$0xff]
      %v3291 = vld [vmem:[%s2957 + $0x22] sm:$0xff]
      %v3292 = vld [vmem:[%s2957 + $0x32] sm:$0xff]
      %v3293 = vld [vmem:[%s2957 + $0x3a] sm:$0xff]
      %v3294 = vld [vmem:[%s2957 + $0x4a] sm:$0xff]
      %v3295 = vld [vmem:[%s2957 + $0x52] sm:$0xff]
      %v3296 = vld [vmem:[%s2957 + $0x62] sm:$0xff]
      %v3297 = vld [vmem:[%s2957 + $0x6a] sm:$0xff]
      %v3298 = vld [vmem:[%s2957 + $0x7a] sm:$0xff]
      %v3299 = vld [vmem:[%s2957 + $0x82] sm:$0xff]
      %v3300 = vld [vmem:[%s2957 + $0x92] sm:$0xff]
      %v3301 = vld [vmem:[%s2957 + $0x9a] sm:$0xff]
      %v3302 = vld [vmem:[%s2957 + $0xaa] sm:$0xff]
      %v3303 = vld [vmem:[%s2957 + $0xb2] sm:$0xff]
      %v3304 = vpack.c.bf16 %v3289, %v3288
      %v3305 = vpack.c.bf16 %v3291, %v3290
      %v3306 = vpack.c.bf16 %v3293, %v3292
      %v3307 = vpack.c.bf16 %v3295, %v3294
      %v3308 = vpack.c.bf16 %v3297, %v3296
      %v3309 = vpack.c.bf16 %v3299, %v3298
      %v3310 = vpack.c.bf16 %v3301, %v3300
      %v3311 = vpack.c.bf16 %v3303, %v3302
      %v3312 = vld [vmem:[%s1776] sm:$0x3]
      %v3314 = vsel %vm280, %v3304, 0
      %v3317 = vsel %vm280, %v3305, 0
      %v3320 = vsel %vm280, %v3306, 0
      %v3323 = vsel %vm280, %v3307, 0
      %v3326 = vsel %vm280, %v3308, 0
      %v3329 = vsel %vm280, %v3309, 0
      %v3332 = vsel %vm280, %v3310, 0
      %v3335 = vsel %vm280, %v3311, 0
      %v3338 = vsel %vm530, %v3312, 0
      %3340 = vmatprep.subr.bf16.mxu0 0
      %3341 = vmatpush1.bf16.msra.mxu0 %v3338
      %3342 = vmatprep.subr.bf16.mxu0 0
      %3343 = vmatpush1.bf16.msra.mxu0 0
      %3344 = vmatprep.subr.bf16.mxu0 0
      %3345 = vmatpush1.bf16.msra.mxu0 0
      %3346 = vmatprep.subr.bf16.mxu0 0
      %3347 = vmatpush1.bf16.msra.mxu0 0
      %3348 = vmatprep.subr.bf16.mxu0 0
      %3349 = vmatpush1.bf16.msra.mxu0 0
      %3350 = vmatprep.subr.bf16.mxu0 0
      %3351 = vmatpush1.bf16.msra.mxu0 0
      %3352 = vmatprep.subr.bf16.mxu0 0
      %3353 = vmatpush1.bf16.msra.mxu0 0
      %3354 = vmatprep.subr.bf16.mxu0 0
      %3355 = vmatpush1.bf16.msra.mxu0 0
      %3356 = vmatprep.subr.bf16.mxu0 0
      %3357 = vmatpush1.bf16.msra.mxu0 0
      %3358 = vmatprep.subr.bf16.mxu0 0
      %3359 = vmatpush1.bf16.msra.mxu0 0
      %3360 = vmatprep.subr.bf16.mxu0 0
      %3361 = vmatpush1.bf16.msra.mxu0 0
      %3362 = vmatprep.subr.bf16.mxu0 0
      %3363 = vmatpush1.bf16.msra.mxu0 0
      %3364 = vmatprep.subr.bf16.mxu0 0
      %3365 = vmatpush1.bf16.msra.mxu0 0
      %3366 = vmatprep.subr.bf16.mxu0 0
      %3367 = vmatpush1.bf16.msra.mxu0 0
      %3368 = vmatprep.subr.bf16.mxu0 0
      %3369 = vmatpush1.bf16.msra.mxu0 0
      %3370 = vmatprep.subr.bf16.mxu0 0
      %3371 = vmatpush1.bf16.msra.mxu0 0
      %3372 = vmatprep.mubr.bf16.mxu0 0
      %3373 = vmatmul.mubr.bf16.gmra.mrb[0].mxu0 %v3314
      %v3374 = vpop.f32.mrb[0].mxu0
      %v3375 = vadd.f32 0.0, %v3374
      %v3376 = vpop.f32.mrb[0].mxu0
      %v3377 = vpop.f32.mrb[0].mxu0
      %v3378 = vadd.f32 0.0, %v3377
      %v3379 = vpop.f32.mrb[0].mxu0
      %3380 = vmatprep.mubr.bf16.mxu0 0
      %3381 = vmatmul.mubr.bf16.gmra.mrb[0].mxu0 %v3317
      %v3382 = vpop.f32.mrb[0].mxu0
      %v3383 = vadd.f32 0.0, %v3382
      %v3384 = vpop.f32.mrb[0].mxu0
      %v3385 = vpop.f32.mrb[0].mxu0
      %v3386 = vadd.f32 0.0, %v3385
      %v3387 = vpop.f32.mrb[0].mxu0
      %3388 = vmatprep.mubr.bf16.mxu0 0
      %3389 = vmatmul.mubr.bf16.gmra.mrb[0].mxu0 %v3320
      %v3390 = vpop.f32.mrb[0].mxu0
      %v3391 = vadd.f32 0.0, %v3390
      %v3392 = vpop.f32.mrb[0].mxu0
      %v3393 = vpop.f32.mrb[0].mxu0
      %v3394 = vadd.f32 0.0, %v3393
      %v3395 = vpop.f32.mrb[0].mxu0
      %3396 = vmatprep.mubr.bf16.mxu0 0
      %3397 = vmatmul.mubr.bf16.gmra.mrb[0].mxu0 %v3323
      %v3398 = vpop.f32.mrb[0].mxu0
      %v3399 = vadd.f32 0.0, %v3398
      %v3400 = vpop.f32.mrb[0].mxu0
      %v3401 = vpop.f32.mrb[0].mxu0
      %v3402 = vadd.f32 0.0, %v3401
      %v3403 = vpop.f32.mrb[0].mxu0
      %3404 = vmatprep.mubr.bf16.mxu0 0
      %3405 = vmatmul.mubr.bf16.gmra.mrb[0].mxu0 %v3326
      %v3406 = vpop.f32.mrb[0].mxu0
      %v3407 = vadd.f32 0.0, %v3406
      %v3408 = vpop.f32.mrb[0].mxu0
      %v3409 = vpop.f32.mrb[0].mxu0
      %v3410 = vadd.f32 0.0, %v3409
      %v3411 = vpop.f32.mrb[0].mxu0
      %3412 = vmatprep.mubr.bf16.mxu0 0
      %3413 = vmatmul.mubr.bf16.gmra.mrb[0].mxu0 %v3329
      %v3414 = vpop.f32.mrb[0].mxu0
      %v3415 = vadd.f32 0.0, %v3414
      %v3416 = vpop.f32.mrb[0].mxu0
      %v3417 = vpop.f32.mrb[0].mxu0
      %v3418 = vadd.f32 0.0, %v3417
      %v3419 = vpop.f32.mrb[0].mxu0
      %3420 = vmatprep.mubr.bf16.mxu0 0
      %3421 = vmatmul.mubr.bf16.gmra.mrb[0].mxu0 %v3332
      %v3422 = vpop.f32.mrb[0].mxu0
      %v3423 = vadd.f32 0.0, %v3422
      %v3424 = vpop.f32.mrb[0].mxu0
      %v3425 = vpop.f32.mrb[0].mxu0
      %v3426 = vadd.f32 0.0, %v3425
      %v3427 = vpop.f32.mrb[0].mxu0
      %3428 = vmatprep.mubr.bf16.mxu0 0
      %3429 = vmatmul.mubr.bf16.gmra.mrb[0].mxu0 %v3335
      %v3430 = vpop.f32.mrb[0].mxu0
      %v3431 = vadd.f32 0.0, %v3430
      %v3432 = vpop.f32.mrb[0].mxu0
      %v3433 = vpop.f32.mrb[0].mxu0
      %v3434 = vadd.f32 0.0, %v3433
      %v3435 = vpop.f32.mrb[0].mxu0
      %3436 = vdwg.mxu0
      %v3437 = vadd.f32 %v3272, %v3375
      %v3438 = vadd.f32 %v3273, %v3378
      %v3439 = vadd.f32 %v3274, %v3383
      %v3440 = vadd.f32 %v3275, %v3386
      %v3441 = vadd.f32 %v3276, %v3391
      %v3442 = vadd.f32 %v3277, %v3394
      %v3443 = vadd.f32 %v3278, %v3399
      %v3444 = vadd.f32 %v3279, %v3402
      %v3445 = vadd.f32 %v3280, %v3407
      %v3446 = vadd.f32 %v3281, %v3410
      %v3447 = vadd.f32 %v3282, %v3415
      %v3448 = vadd.f32 %v3283, %v3418
      %v3449 = vadd.f32 %v3284, %v3423
      %v3450 = vadd.f32 %v3285, %v3426
      %v3451 = vadd.f32 %v3286, %v3431
      %v3452 = vadd.f32 %v3287, %v3434
      %v3453 = vld [vmem:[%s3] sm:$0x1]
      %v3455 = vlaneseq
      %v3456 = vshrl.u32 %v3455, 7
      %v3457 = vsub.s32 0, %v3456
      %v3458 = vrot.slane %v3453, %v3457
      %v3460 = vmul.f32 %v3437, %v3458
      %v3461 = vmul.f32 %v3438, %v3458
      %v3462 = vmul.f32 %v3439, %v3458
      %v3463 = vmul.f32 %v3440, %v3458
      %v3464 = vmul.f32 %v3441, %v3458
      %v3465 = vmul.f32 %v3442, %v3458
      %v3466 = vmul.f32 %v3443, %v3458
      %v3467 = vmul.f32 %v3444, %v3458
      %v3468 = vmul.f32 %v3445, %v3458
      %v3469 = vmul.f32 %v3446, %v3458
      %v3470 = vmul.f32 %v3447, %v3458
      %v3471 = vmul.f32 %v3448, %v3458
      %v3472 = vmul.f32 %v3449, %v3458
      %v3473 = vmul.f32 %v3450, %v3458
      %v3474 = vmul.f32 %v3451, %v3458
      %v3475 = vmul.f32 %v3452, %v3458
      %v3476 = vld [vmem:[%s4] sm:$0x1]
      %v3478 = vlaneseq
      %v3479 = vshrl.u32 %v3478, 7
      %v3480 = vsub.s32 0, %v3479
      %v3481 = vrot.slane %v3476, %v3480
      %v3483 = vadd.f32 %v3460, %v3481
      %v3484 = vadd.f32 %v3461, %v3481
      %v3485 = vadd.f32 %v3462, %v3481
      %v3486 = vadd.f32 %v3463, %v3481
      %v3487 = vadd.f32 %v3464, %v3481
      %v3488 = vadd.f32 %v3465, %v3481
      %v3489 = vadd.f32 %v3466, %v3481
      %v3490 = vadd.f32 %v3467, %v3481
      %v3491 = vadd.f32 %v3468, %v3481
      %v3492 = vadd.f32 %v3469, %v3481
      %v3493 = vadd.f32 %v3470, %v3481
      %v3494 = vadd.f32 %v3471, %v3481
      %v3495 = vadd.f32 %v3472, %v3481
      %v3496 = vadd.f32 %v3473, %v3481
      %v3497 = vadd.f32 %v3474, %v3481
      %v3498 = vadd.f32 %v3475, %v3481
      %v3499 = vmax.f32 %v3483, 0.0
      %v3500 = vmax.f32 %v3484, 0.0
      %v3501 = vmax.f32 %v3485, 0.0
      %v3502 = vmax.f32 %v3486, 0.0
      %v3503 = vmax.f32 %v3487, 0.0
      %v3504 = vmax.f32 %v3488, 0.0
      %v3505 = vmax.f32 %v3489, 0.0
      %v3506 = vmax.f32 %v3490, 0.0
      %v3507 = vmax.f32 %v3491, 0.0
      %v3508 = vmax.f32 %v3492, 0.0
      %v3509 = vmax.f32 %v3493, 0.0
      %v3510 = vmax.f32 %v3494, 0.0
      %v3511 = vmax.f32 %v3495, 0.0
      %v3512 = vmax.f32 %v3496, 0.0
      %v3513 = vmax.f32 %v3497, 0.0
      %v3514 = vmax.f32 %v3498, 0.0
      %s3515 = scalar_lea.vmem [#allocation3], 216
      %3516 = vst.msk [vmem:[%s3515 + $0x1] sm:$0xff] %vm280, %v3499
      %3517 = vst.msk [vmem:[%s3515 + $0x9] sm:$0xff] %vm280, %v3500
      %3518 = vst.msk [vmem:[%s3515 + $0x19] sm:$0xff] %vm280, %v3501
      %3519 = vst.msk [vmem:[%s3515 + $0x21] sm:$0xff] %vm280, %v3502
      %3520 = vst.msk [vmem:[%s3515 + $0x31] sm:$0xff] %vm280, %v3503
      %3521 = vst.msk [vmem:[%s3515 + $0x39] sm:$0xff] %vm280, %v3504
      %3522 = vst.msk [vmem:[%s3515 + $0x49] sm:$0xff] %vm280, %v3505
      %3523 = vst.msk [vmem:[%s3515 + $0x51] sm:$0xff] %vm280, %v3506
      %3524 = vst.msk [vmem:[%s3515 + $0x61] sm:$0xff] %vm280, %v3507
      %3525 = vst.msk [vmem:[%s3515 + $0x69] sm:$0xff] %vm280, %v3508
      %3526 = vst.msk [vmem:[%s3515 + $0x79] sm:$0xff] %vm280, %v3509
      %3527 = vst.msk [vmem:[%s3515 + $0x81] sm:$0xff] %vm280, %v3510
      %3528 = vst.msk [vmem:[%s3515 + $0x91] sm:$0xff] %vm280, %v3511
      %3529 = vst.msk [vmem:[%s3515 + $0x99] sm:$0xff] %vm280, %v3512
      %3530 = vst.msk [vmem:[%s3515 + $0xa9] sm:$0xff] %vm280, %v3513
      %3531 = vst.msk [vmem:[%s3515 + $0xb1] sm:$0xff] %vm280, %v3514
      %v3532 = vld [vmem:[#allocation3] sm:$0xff]
      %v3533 = vld [vmem:[#allocation3 + $0x8] sm:$0xff]
      %v3534 = vld [vmem:[#allocation3 + $0x18] sm:$0xff]
      %v3535 = vld [vmem:[#allocation3 + $0x20] sm:$0xff]
      %v3536 = vld [vmem:[#allocation3 + $0x30] sm:$0xff]
      %v3537 = vld [vmem:[#allocation3 + $0x38] sm:$0xff]
      %v3538 = vld [vmem:[#allocation3 + $0x48] sm:$0xff]
      %v3539 = vld [vmem:[#allocation3 + $0x50] sm:$0xff]
      %v3540 = vld [vmem:[#allocation3 + $0x60] sm:$0xff]
      %v3541 = vld [vmem:[#allocation3 + $0x68] sm:$0xff]
      %v3542 = vld [vmem:[#allocation3 + $0x78] sm:$0xff]
      %v3543 = vld [vmem:[#allocation3 + $0x80] sm:$0xff]
      %v3544 = vld [vmem:[#allocation3 + $0x90] sm:$0xff]
      %v3545 = vld [vmem:[#allocation3 + $0x98] sm:$0xff]
      %v3546 = vld [vmem:[#allocation3 + $0xa8] sm:$0xff]
      %v3547 = vld [vmem:[#allocation3 + $0xb0] sm:$0xff]
      %v3548 = vpack.c.bf16 %v3533, %v3532
      %v3549 = vpack.c.bf16 %v3535, %v3534
      %v3550 = vpack.c.bf16 %v3537, %v3536
      %v3551 = vpack.c.bf16 %v3539, %v3538
      %v3552 = vpack.c.bf16 %v3541, %v3540
      %v3553 = vpack.c.bf16 %v3543, %v3542
      %v3554 = vpack.c.bf16 %v3545, %v3544
      %v3555 = vpack.c.bf16 %v3547, %v3546
      %v3556 = vld [vmem:[%s2] sm:$0x3]
      %v3557 = vld [vmem:[#allocation3 + $0x1] sm:$0xff]
      %v3558 = vld [vmem:[#allocation3 + $0x9] sm:$0xff]
      %v3559 = vld [vmem:[#allocation3 + $0x19] sm:$0xff]
      %v3560 = vld [vmem:[#allocation3 + $0x21] sm:$0xff]
      %v3561 = vld [vmem:[#allocation3 + $0x31] sm:$0xff]
      %v3562 = vld [vmem:[#allocation3 + $0x39] sm:$0xff]
      %v3563 = vld [vmem:[#allocation3 + $0x49] sm:$0xff]
      %v3564 = vld [vmem:[#allocation3 + $0x51] sm:$0xff]
      %v3565 = vld [vmem:[#allocation3 + $0x61] sm:$0xff]
      %v3566 = vld [vmem:[#allocation3 + $0x69] sm:$0xff]
      %v3567 = vld [vmem:[#allocation3 + $0x79] sm:$0xff]
      %v3568 = vld [vmem:[#allocation3 + $0x81] sm:$0xff]
      %v3569 = vld [vmem:[#allocation3 + $0x91] sm:$0xff]
      %v3570 = vld [vmem:[#allocation3 + $0x99] sm:$0xff]
      %v3571 = vld [vmem:[#allocation3 + $0xa9] sm:$0xff]
      %v3572 = vld [vmem:[#allocation3 + $0xb1] sm:$0xff]
      %v3573 = vpack.c.bf16 %v3558, %v3557
      %v3574 = vpack.c.bf16 %v3560, %v3559
      %v3575 = vpack.c.bf16 %v3562, %v3561
      %v3576 = vpack.c.bf16 %v3564, %v3563
      %v3577 = vpack.c.bf16 %v3566, %v3565
      %v3578 = vpack.c.bf16 %v3568, %v3567
      %v3579 = vpack.c.bf16 %v3570, %v3569
      %v3580 = vpack.c.bf16 %v3572, %v3571
      %s3581 = scalar_lea.vmem %s2, 2
      %v3582 = vld [vmem:[%s3581] sm:$0x3]
      %v3584 = vsel %vm280, %v3573, 0
      %v3587 = vsel %vm280, %v3574, 0
      %v3590 = vsel %vm280, %v3575, 0
      %v3593 = vsel %vm280, %v3576, 0
      %v3596 = vsel %vm280, %v3577, 0
      %v3599 = vsel %vm280, %v3578, 0
      %v3602 = vsel %vm280, %v3579, 0
      %v3605 = vsel %vm280, %v3580, 0
      %v3608 = vsel %vm530, %v3582, 0
      %3610 = vmatprep.subr.bf16.mxu0 0
      %3611 = vmatpush1.bf16.msra.mxu0 %v3608
      %3612 = vmatprep.subr.bf16.mxu0 0
      %3613 = vmatpush1.bf16.msra.mxu0 0
      %3614 = vmatprep.subr.bf16.mxu0 0
      %3615 = vmatpush1.bf16.msra.mxu0 0
      %3616 = vmatprep.subr.bf16.mxu0 0
      %3617 = vmatpush1.bf16.msra.mxu0 0
      %3618 = vmatprep.subr.bf16.mxu0 0
      %3619 = vmatpush1.bf16.msra.mxu0 0
      %3620 = vmatprep.subr.bf16.mxu0 0
      %3621 = vmatpush1.bf16.msra.mxu0 0
      %3622 = vmatprep.subr.bf16.mxu0 0
      %3623 = vmatpush1.bf16.msra.mxu0 0
      %3624 = vmatprep.subr.bf16.mxu0 0
      %3625 = vmatpush1.bf16.msra.mxu0 0
      %3626 = vmatprep.subr.bf16.mxu0 0
      %3627 = vmatpush1.bf16.msra.mxu0 0
      %3628 = vmatprep.subr.bf16.mxu0 0
      %3629 = vmatpush1.bf16.msra.mxu0 0
      %3630 = vmatprep.subr.bf16.mxu0 0
      %3631 = vmatpush1.bf16.msra.mxu0 0
      %3632 = vmatprep.subr.bf16.mxu0 0
      %3633 = vmatpush1.bf16.msra.mxu0 0
      %3634 = vmatprep.subr.bf16.mxu0 0
      %3635 = vmatpush1.bf16.msra.mxu0 0
      %3636 = vmatprep.subr.bf16.mxu0 0
      %3637 = vmatpush1.bf16.msra.mxu0 0
      %3638 = vmatprep.subr.bf16.mxu0 0
      %3639 = vmatpush1.bf16.msra.mxu0 0
      %3640 = vmatprep.subr.bf16.mxu0 0
      %3641 = vmatpush1.bf16.msra.mxu0 0
      %3642 = vmatprep.mubr.bf16.mxu0 0
      %3643 = vmatmul.mubr.bf16.gmra.mrb[0].mxu0 %v3584
      %v3644 = vpop.f32.mrb[0].mxu0
      %v3645 = vadd.f32 0.0, %v3644
      %v3646 = vpop.f32.mrb[0].mxu0
      %v3647 = vpop.f32.mrb[0].mxu0
      %v3648 = vadd.f32 0.0, %v3647
      %v3649 = vpop.f32.mrb[0].mxu0
      %3650 = vmatprep.mubr.bf16.mxu0 0
      %3651 = vmatmul.mubr.bf16.gmra.mrb[0].mxu0 %v3587
      %v3652 = vpop.f32.mrb[0].mxu0
      %v3653 = vadd.f32 0.0, %v3652
      %v3654 = vpop.f32.mrb[0].mxu0
      %v3655 = vpop.f32.mrb[0].mxu0
      %v3656 = vadd.f32 0.0, %v3655
      %v3657 = vpop.f32.mrb[0].mxu0
      %3658 = vmatprep.mubr.bf16.mxu0 0
      %3659 = vmatmul.mubr.bf16.gmra.mrb[0].mxu0 %v3590
      %v3660 = vpop.f32.mrb[0].mxu0
      %v3661 = vadd.f32 0.0, %v3660
      %v3662 = vpop.f32.mrb[0].mxu0
      %v3663 = vpop.f32.mrb[0].mxu0
      %v3664 = vadd.f32 0.0, %v3663
      %v3665 = vpop.f32.mrb[0].mxu0
      %3666 = vmatprep.mubr.bf16.mxu0 0
      %3667 = vmatmul.mubr.bf16.gmra.mrb[0].mxu0 %v3593
      %v3668 = vpop.f32.mrb[0].mxu0
      %v3669 = vadd.f32 0.0, %v3668
      %v3670 = vpop.f32.mrb[0].mxu0
      %v3671 = vpop.f32.mrb[0].mxu0
      %v3672 = vadd.f32 0.0, %v3671
      %v3673 = vpop.f32.mrb[0].mxu0
      %3674 = vmatprep.mubr.bf16.mxu0 0
      %3675 = vmatmul.mubr.bf16.gmra.mrb[0].mxu0 %v3596
      %v3676 = vpop.f32.mrb[0].mxu0
      %v3677 = vadd.f32 0.0, %v3676
      %v3678 = vpop.f32.mrb[0].mxu0
      %v3679 = vpop.f32.mrb[0].mxu0
      %v3680 = vadd.f32 0.0, %v3679
      %v3681 = vpop.f32.mrb[0].mxu0
      %3682 = vmatprep.mubr.bf16.mxu0 0
      %3683 = vmatmul.mubr.bf16.gmra.mrb[0].mxu0 %v3599
      %v3684 = vpop.f32.mrb[0].mxu0
      %v3685 = vadd.f32 0.0, %v3684
      %v3686 = vpop.f32.mrb[0].mxu0
      %v3687 = vpop.f32.mrb[0].mxu0
      %v3688 = vadd.f32 0.0, %v3687
      %v3689 = vpop.f32.mrb[0].mxu0
      %3690 = vmatprep.mubr.bf16.mxu0 0
      %3691 = vmatmul.mubr.bf16.gmra.mrb[0].mxu0 %v3602
      %v3692 = vpop.f32.mrb[0].mxu0
      %v3693 = vadd.f32 0.0, %v3692
      %v3694 = vpop.f32.mrb[0].mxu0
      %v3695 = vpop.f32.mrb[0].mxu0
      %v3696 = vadd.f32 0.0, %v3695
      %v3697 = vpop.f32.mrb[0].mxu0
      %3698 = vmatprep.mubr.bf16.mxu0 0
      %3699 = vmatmul.mubr.bf16.gmra.mrb[0].mxu0 %v3605
      %v3700 = vpop.f32.mrb[0].mxu0
      %v3701 = vadd.f32 0.0, %v3700
      %v3702 = vpop.f32.mrb[0].mxu0
      %v3703 = vpop.f32.mrb[0].mxu0
      %v3704 = vadd.f32 0.0, %v3703
      %v3705 = vpop.f32.mrb[0].mxu0
      %3706 = vdwg.mxu0
      %v3708 = vsel %vm280, %v3548, 0
      %v3711 = vsel %vm280, %v3549, 0
      %v3714 = vsel %vm280, %v3550, 0
      %v3717 = vsel %vm280, %v3551, 0
      %v3720 = vsel %vm280, %v3552, 0
      %v3723 = vsel %vm280, %v3553, 0
      %v3726 = vsel %vm280, %v3554, 0
      %v3729 = vsel %vm280, %v3555, 0
      %v3732 = vsel %vm530, %v3556, 0
      %3734 = vmatprep.subr.bf16.mxu0 0
      %3735 = vmatpush1.bf16.msra.mxu0 %v3732
      %3736 = vmatprep.subr.bf16.mxu0 0
      %3737 = vmatpush1.bf16.msra.mxu0 0
      %3738 = vmatprep.subr.bf16.mxu0 0
      %3739 = vmatpush1.bf16.msra.mxu0 0
      %3740 = vmatprep.subr.bf16.mxu0 0
      %3741 = vmatpush1.bf16.msra.mxu0 0
      %3742 = vmatprep.subr.bf16.mxu0 0
      %3743 = vmatpush1.bf16.msra.mxu0 0
      %3744 = vmatprep.subr.bf16.mxu0 0
      %3745 = vmatpush1.bf16.msra.mxu0 0
      %3746 = vmatprep.subr.bf16.mxu0 0
      %3747 = vmatpush1.bf16.msra.mxu0 0
      %3748 = vmatprep.subr.bf16.mxu0 0
      %3749 = vmatpush1.bf16.msra.mxu0 0
      %3750 = vmatprep.subr.bf16.mxu0 0
      %3751 = vmatpush1.bf16.msra.mxu0 0
      %3752 = vmatprep.subr.bf16.mxu0 0
      %3753 = vmatpush1.bf16.msra.mxu0 0
      %3754 = vmatprep.subr.bf16.mxu0 0
      %3755 = vmatpush1.bf16.msra.mxu0 0
      %3756 = vmatprep.subr.bf16.mxu0 0
      %3757 = vmatpush1.bf16.msra.mxu0 0
      %3758 = vmatprep.subr.bf16.mxu0 0
      %3759 = vmatpush1.bf16.msra.mxu0 0
      %3760 = vmatprep.subr.bf16.mxu0 0
      %3761 = vmatpush1.bf16.msra.mxu0 0
      %3762 = vmatprep.subr.bf16.mxu0 0
      %3763 = vmatpush1.bf16.msra.mxu0 0
      %3764 = vmatprep.subr.bf16.mxu0 0
      %3765 = vmatpush1.bf16.msra.mxu0 0
      %3766 = vmatprep.mubr.bf16.mxu0 0
      %3767 = vmatmul.mubr.bf16.gmra.mrb[0].mxu0 %v3708
      %v3768 = vpop.f32.mrb[0].mxu0
      %v3769 = vadd.f32 %v3645, %v3768
      %v3770 = vpop.f32.mrb[0].mxu0
      %v3771 = vpop.f32.mrb[0].mxu0
      %v3772 = vadd.f32 %v3648, %v3771
      %v3773 = vpop.f32.mrb[0].mxu0
      %3774 = vmatprep.mubr.bf16.mxu0 0
      %3775 = vmatmul.mubr.bf16.gmra.mrb[0].mxu0 %v3711
      %v3776 = vpop.f32.mrb[0].mxu0
      %v3777 = vadd.f32 %v3653, %v3776
      %v3778 = vpop.f32.mrb[0].mxu0
      %v3779 = vpop.f32.mrb[0].mxu0
      %v3780 = vadd.f32 %v3656, %v3779
      %v3781 = vpop.f32.mrb[0].mxu0
      %3782 = vmatprep.mubr.bf16.mxu0 0
      %3783 = vmatmul.mubr.bf16.gmra.mrb[0].mxu0 %v3714
      %v3784 = vpop.f32.mrb[0].mxu0
      %v3785 = vadd.f32 %v3661, %v3784
      %v3786 = vpop.f32.mrb[0].mxu0
      %v3787 = vpop.f32.mrb[0].mxu0
      %v3788 = vadd.f32 %v3664, %v3787
      %v3789 = vpop.f32.mrb[0].mxu0
      %3790 = vmatprep.mubr.bf16.mxu0 0
      %3791 = vmatmul.mubr.bf16.gmra.mrb[0].mxu0 %v3717
      %v3792 = vpop.f32.mrb[0].mxu0
      %v3793 = vadd.f32 %v3669, %v3792
      %v3794 = vpop.f32.mrb[0].mxu0
      %v3795 = vpop.f32.mrb[0].mxu0
      %v3796 = vadd.f32 %v3672, %v3795
      %v3797 = vpop.f32.mrb[0].mxu0
      %3798 = vmatprep.mubr.bf16.mxu0 0
      %3799 = vmatmul.mubr.bf16.gmra.mrb[0].mxu0 %v3720
      %v3800 = vpop.f32.mrb[0].mxu0
      %v3801 = vadd.f32 %v3677, %v3800
      %v3802 = vpop.f32.mrb[0].mxu0
      %v3803 = vpop.f32.mrb[0].mxu0
      %v3804 = vadd.f32 %v3680, %v3803
      %v3805 = vpop.f32.mrb[0].mxu0
      %3806 = vmatprep.mubr.bf16.mxu0 0
      %3807 = vmatmul.mubr.bf16.gmra.mrb[0].mxu0 %v3723
      %v3808 = vpop.f32.mrb[0].mxu0
      %v3809 = vadd.f32 %v3685, %v3808
      %v3810 = vpop.f32.mrb[0].mxu0
      %v3811 = vpop.f32.mrb[0].mxu0
      %v3812 = vadd.f32 %v3688, %v3811
      %v3813 = vpop.f32.mrb[0].mxu0
      %3814 = vmatprep.mubr.bf16.mxu0 0
      %3815 = vmatmul.mubr.bf16.gmra.mrb[0].mxu0 %v3726
      %v3816 = vpop.f32.mrb[0].mxu0
      %v3817 = vadd.f32 %v3693, %v3816
      %v3818 = vpop.f32.mrb[0].mxu0
      %v3819 = vpop.f32.mrb[0].mxu0
      %v3820 = vadd.f32 %v3696, %v3819
      %v3821 = vpop.f32.mrb[0].mxu0
      %3822 = vmatprep.mubr.bf16.mxu0 0
      %3823 = vmatmul.mubr.bf16.gmra.mrb[0].mxu0 %v3729
      %v3824 = vpop.f32.mrb[0].mxu0
      %v3825 = vadd.f32 %v3701, %v3824
      %v3826 = vpop.f32.mrb[0].mxu0
      %v3827 = vpop.f32.mrb[0].mxu0
      %v3828 = vadd.f32 %v3704, %v3827
      %v3829 = vpop.f32.mrb[0].mxu0
      %3830 = vdwg.mxu0
      %v3831 = vld [vmem:[#allocation3 + $0x2] sm:$0xff]
      %v3832 = vld [vmem:[#allocation3 + $0xa] sm:$0xff]
      %v3833 = vld [vmem:[#allocation3 + $0x1a] sm:$0xff]
      %v3834 = vld [vmem:[#allocation3 + $0x22] sm:$0xff]
      %v3835 = vld [vmem:[#allocation3 + $0x32] sm:$0xff]
      %v3836 = vld [vmem:[#allocation3 + $0x3a] sm:$0xff]
      %v3837 = vld [vmem:[#allocation3 + $0x4a] sm:$0xff]
      %v3838 = vld [vmem:[#allocation3 + $0x52] sm:$0xff]
      %v3839 = vld [vmem:[#allocation3 + $0x62] sm:$0xff]
      %v3840 = vld [vmem:[#allocation3 + $0x6a] sm:$0xff]
      %v3841 = vld [vmem:[#allocation3 + $0x7a] sm:$0xff]
      %v3842 = vld [vmem:[#allocation3 + $0x82] sm:$0xff]
      %v3843 = vld [vmem:[#allocation3 + $0x92] sm:$0xff]
      %v3844 = vld [vmem:[#allocation3 + $0x9a] sm:$0xff]
      %v3845 = vld [vmem:[#allocation3 + $0xaa] sm:$0xff]
      %v3846 = vld [vmem:[#allocation3 + $0xb2] sm:$0xff]
      %v3847 = vpack.c.bf16 %v3832, %v3831
      %v3848 = vpack.c.bf16 %v3834, %v3833
      %v3849 = vpack.c.bf16 %v3836, %v3835
      %v3850 = vpack.c.bf16 %v3838, %v3837
      %v3851 = vpack.c.bf16 %v3840, %v3839
      %v3852 = vpack.c.bf16 %v3842, %v3841
      %v3853 = vpack.c.bf16 %v3844, %v3843
      %v3854 = vpack.c.bf16 %v3846, %v3845
      %s3855 = scalar_lea.vmem %s2, 4
      %v3856 = vld [vmem:[%s3855] sm:$0x3]
      %v3858 = vsel %vm280, %v3847, 0
      %v3861 = vsel %vm280, %v3848, 0
      %v3864 = vsel %vm280, %v3849, 0
      %v3867 = vsel %vm280, %v3850, 0
      %v3870 = vsel %vm280, %v3851, 0
      %v3873 = vsel %vm280, %v3852, 0
      %v3876 = vsel %vm280, %v3853, 0
      %v3879 = vsel %vm280, %v3854, 0
      %v3882 = vsel %vm530, %v3856, 0
      %3884 = vmatprep.subr.bf16.mxu0 0
      %3885 = vmatpush1.bf16.msra.mxu0 %v3882
      %3886 = vmatprep.subr.bf16.mxu0 0
      %3887 = vmatpush1.bf16.msra.mxu0 0
      %3888 = vmatprep.subr.bf16.mxu0 0
      %3889 = vmatpush1.bf16.msra.mxu0 0
      %3890 = vmatprep.subr.bf16.mxu0 0
      %3891 = vmatpush1.bf16.msra.mxu0 0
      %3892 = vmatprep.subr.bf16.mxu0 0
      %3893 = vmatpush1.bf16.msra.mxu0 0
      %3894 = vmatprep.subr.bf16.mxu0 0
      %3895 = vmatpush1.bf16.msra.mxu0 0
      %3896 = vmatprep.subr.bf16.mxu0 0
      %3897 = vmatpush1.bf16.msra.mxu0 0
      %3898 = vmatprep.subr.bf16.mxu0 0
      %3899 = vmatpush1.bf16.msra.mxu0 0
      %3900 = vmatprep.subr.bf16.mxu0 0
      %3901 = vmatpush1.bf16.msra.mxu0 0
      %3902 = vmatprep.subr.bf16.mxu0 0
      %3903 = vmatpush1.bf16.msra.mxu0 0
      %3904 = vmatprep.subr.bf16.mxu0 0
      %3905 = vmatpush1.bf16.msra.mxu0 0
      %3906 = vmatprep.subr.bf16.mxu0 0
      %3907 = vmatpush1.bf16.msra.mxu0 0
      %3908 = vmatprep.subr.bf16.mxu0 0
      %3909 = vmatpush1.bf16.msra.mxu0 0
      %3910 = vmatprep.subr.bf16.mxu0 0
      %3911 = vmatpush1.bf16.msra.mxu0 0
      %3912 = vmatprep.subr.bf16.mxu0 0
      %3913 = vmatpush1.bf16.msra.mxu0 0
      %3914 = vmatprep.subr.bf16.mxu0 0
      %3915 = vmatpush1.bf16.msra.mxu0 0
      %3916 = vmatprep.mubr.bf16.mxu0 0
      %3917 = vmatmul.mubr.bf16.gmra.mrb[0].mxu0 %v3858
      %v3918 = vpop.f32.mrb[0].mxu0
      %v3919 = vadd.f32 0.0, %v3918
      %v3920 = vpop.f32.mrb[0].mxu0
      %v3921 = vpop.f32.mrb[0].mxu0
      %v3922 = vadd.f32 0.0, %v3921
      %v3923 = vpop.f32.mrb[0].mxu0
      %3924 = vmatprep.mubr.bf16.mxu0 0
      %3925 = vmatmul.mubr.bf16.gmra.mrb[0].mxu0 %v3861
      %v3926 = vpop.f32.mrb[0].mxu0
      %v3927 = vadd.f32 0.0, %v3926
      %v3928 = vpop.f32.mrb[0].mxu0
      %v3929 = vpop.f32.mrb[0].mxu0
      %v3930 = vadd.f32 0.0, %v3929
      %v3931 = vpop.f32.mrb[0].mxu0
      %3932 = vmatprep.mubr.bf16.mxu0 0
      %3933 = vmatmul.mubr.bf16.gmra.mrb[0].mxu0 %v3864
      %v3934 = vpop.f32.mrb[0].mxu0
      %v3935 = vadd.f32 0.0, %v3934
      %v3936 = vpop.f32.mrb[0].mxu0
      %v3937 = vpop.f32.mrb[0].mxu0
      %v3938 = vadd.f32 0.0, %v3937
      %v3939 = vpop.f32.mrb[0].mxu0
      %3940 = vmatprep.mubr.bf16.mxu0 0
      %3941 = vmatmul.mubr.bf16.gmra.mrb[0].mxu0 %v3867
      %v3942 = vpop.f32.mrb[0].mxu0
      %v3943 = vadd.f32 0.0, %v3942
      %v3944 = vpop.f32.mrb[0].mxu0
      %v3945 = vpop.f32.mrb[0].mxu0
      %v3946 = vadd.f32 0.0, %v3945
      %v3947 = vpop.f32.mrb[0].mxu0
      %3948 = vmatprep.mubr.bf16.mxu0 0
      %3949 = vmatmul.mubr.bf16.gmra.mrb[0].mxu0 %v3870
      %v3950 = vpop.f32.mrb[0].mxu0
      %v3951 = vadd.f32 0.0, %v3950
      %v3952 = vpop.f32.mrb[0].mxu0
      %v3953 = vpop.f32.mrb[0].mxu0
      %v3954 = vadd.f32 0.0, %v3953
      %v3955 = vpop.f32.mrb[0].mxu0
      %3956 = vmatprep.mubr.bf16.mxu0 0
      %3957 = vmatmul.mubr.bf16.gmra.mrb[0].mxu0 %v3873
      %v3958 = vpop.f32.mrb[0].mxu0
      %v3959 = vadd.f32 0.0, %v3958
      %v3960 = vpop.f32.mrb[0].mxu0
      %v3961 = vpop.f32.mrb[0].mxu0
      %v3962 = vadd.f32 0.0, %v3961
      %v3963 = vpop.f32.mrb[0].mxu0
      %3964 = vmatprep.mubr.bf16.mxu0 0
      %3965 = vmatmul.mubr.bf16.gmra.mrb[0].mxu0 %v3876
      %v3966 = vpop.f32.mrb[0].mxu0
      %v3967 = vadd.f32 0.0, %v3966
      %v3968 = vpop.f32.mrb[0].mxu0
      %v3969 = vpop.f32.mrb[0].mxu0
      %v3970 = vadd.f32 0.0, %v3969
      %v3971 = vpop.f32.mrb[0].mxu0
      %3972 = vmatprep.mubr.bf16.mxu0 0
      %3973 = vmatmul.mubr.bf16.gmra.mrb[0].mxu0 %v3879
      %v3974 = vpop.f32.mrb[0].mxu0
      %v3975 = vadd.f32 0.0, %v3974
      %v3976 = vpop.f32.mrb[0].mxu0
      %v3977 = vpop.f32.mrb[0].mxu0
      %v3978 = vadd.f32 0.0, %v3977
      %v3979 = vpop.f32.mrb[0].mxu0
      %3980 = vdwg.mxu0
      %v3981 = vadd.f32 %v3769, %v3919
      %v3982 = vadd.f32 %v3772, %v3922
      %v3983 = vadd.f32 %v3777, %v3927
      %v3984 = vadd.f32 %v3780, %v3930
      %v3985 = vadd.f32 %v3785, %v3935
      %v3986 = vadd.f32 %v3788, %v3938
      %v3987 = vadd.f32 %v3793, %v3943
      %v3988 = vadd.f32 %v3796, %v3946
      %v3989 = vadd.f32 %v3801, %v3951
      %v3990 = vadd.f32 %v3804, %v3954
      %v3991 = vadd.f32 %v3809, %v3959
      %v3992 = vadd.f32 %v3812, %v3962
      %v3993 = vadd.f32 %v3817, %v3967
      %v3994 = vadd.f32 %v3820, %v3970
      %v3995 = vadd.f32 %v3825, %v3975
      %v3996 = vadd.f32 %v3828, %v3978
      %v3997 = vld [vmem:[%s1980] sm:$0xff]
      %v3998 = vld [vmem:[%s1980 + $0x8] sm:$0xff]
      %v3999 = vld [vmem:[%s1980 + $0x18] sm:$0xff]
      %v4000 = vld [vmem:[%s1980 + $0x20] sm:$0xff]
      %v4001 = vld [vmem:[%s1980 + $0x30] sm:$0xff]
      %v4002 = vld [vmem:[%s1980 + $0x38] sm:$0xff]
      %v4003 = vld [vmem:[%s1980 + $0x48] sm:$0xff]
      %v4004 = vld [vmem:[%s1980 + $0x50] sm:$0xff]
      %v4005 = vld [vmem:[%s1980 + $0x60] sm:$0xff]
      %v4006 = vld [vmem:[%s1980 + $0x68] sm:$0xff]
      %v4007 = vld [vmem:[%s1980 + $0x78] sm:$0xff]
      %v4008 = vld [vmem:[%s1980 + $0x80] sm:$0xff]
      %v4009 = vld [vmem:[%s1980 + $0x90] sm:$0xff]
      %v4010 = vld [vmem:[%s1980 + $0x98] sm:$0xff]
      %v4011 = vld [vmem:[%s1980 + $0xa8] sm:$0xff]
      %v4012 = vld [vmem:[%s1980 + $0xb0] sm:$0xff]
      %v4013 = vpack.c.bf16 %v3998, %v3997
      %v4014 = vpack.c.bf16 %v4000, %v3999
      %v4015 = vpack.c.bf16 %v4002, %v4001
      %v4016 = vpack.c.bf16 %v4004, %v4003
      %v4017 = vpack.c.bf16 %v4006, %v4005
      %v4018 = vpack.c.bf16 %v4008, %v4007
      %v4019 = vpack.c.bf16 %v4010, %v4009
      %v4020 = vpack.c.bf16 %v4012, %v4011
      %s4021 = scalar_lea.vmem %s2, 6
      %v4022 = vld [vmem:[%s4021] sm:$0x3]
      %v4024 = vsel %vm280, %v4013, 0
      %v4027 = vsel %vm280, %v4014, 0
      %v4030 = vsel %vm280, %v4015, 0
      %v4033 = vsel %vm280, %v4016, 0
      %v4036 = vsel %vm280, %v4017, 0
      %v4039 = vsel %vm280, %v4018, 0
      %v4042 = vsel %vm280, %v4019, 0
      %v4045 = vsel %vm280, %v4020, 0
      %v4048 = vsel %vm530, %v4022, 0
      %4050 = vmatprep.subr.bf16.mxu0 0
      %4051 = vmatpush1.bf16.msra.mxu0 %v4048
      %4052 = vmatprep.subr.bf16.mxu0 0
      %4053 = vmatpush1.bf16.msra.mxu0 0
      %4054 = vmatprep.subr.bf16.mxu0 0
      %4055 = vmatpush1.bf16.msra.mxu0 0
      %4056 = vmatprep.subr.bf16.mxu0 0
      %4057 = vmatpush1.bf16.msra.mxu0 0
      %4058 = vmatprep.subr.bf16.mxu0 0
      %4059 = vmatpush1.bf16.msra.mxu0 0
      %4060 = vmatprep.subr.bf16.mxu0 0
      %4061 = vmatpush1.bf16.msra.mxu0 0
      %4062 = vmatprep.subr.bf16.mxu0 0
      %4063 = vmatpush1.bf16.msra.mxu0 0
      %4064 = vmatprep.subr.bf16.mxu0 0
      %4065 = vmatpush1.bf16.msra.mxu0 0
      %4066 = vmatprep.subr.bf16.mxu0 0
      %4067 = vmatpush1.bf16.msra.mxu0 0
      %4068 = vmatprep.subr.bf16.mxu0 0
      %4069 = vmatpush1.bf16.msra.mxu0 0
      %4070 = vmatprep.subr.bf16.mxu0 0
      %4071 = vmatpush1.bf16.msra.mxu0 0
      %4072 = vmatprep.subr.bf16.mxu0 0
      %4073 = vmatpush1.bf16.msra.mxu0 0
      %4074 = vmatprep.subr.bf16.mxu0 0
      %4075 = vmatpush1.bf16.msra.mxu0 0
      %4076 = vmatprep.subr.bf16.mxu0 0
      %4077 = vmatpush1.bf16.msra.mxu0 0
      %4078 = vmatprep.subr.bf16.mxu0 0
      %4079 = vmatpush1.bf16.msra.mxu0 0
      %4080 = vmatprep.subr.bf16.mxu0 0
      %4081 = vmatpush1.bf16.msra.mxu0 0
      %4082 = vmatprep.mubr.bf16.mxu0 0
      %4083 = vmatmul.mubr.bf16.gmra.mrb[0].mxu0 %v4024
      %v4084 = vpop.f32.mrb[0].mxu0
      %v4085 = vadd.f32 0.0, %v4084
      %v4086 = vpop.f32.mrb[0].mxu0
      %v4087 = vpop.f32.mrb[0].mxu0
      %v4088 = vadd.f32 0.0, %v4087
      %v4089 = vpop.f32.mrb[0].mxu0
      %4090 = vmatprep.mubr.bf16.mxu0 0
      %4091 = vmatmul.mubr.bf16.gmra.mrb[0].mxu0 %v4027
      %v4092 = vpop.f32.mrb[0].mxu0
      %v4093 = vadd.f32 0.0, %v4092
      %v4094 = vpop.f32.mrb[0].mxu0
      %v4095 = vpop.f32.mrb[0].mxu0
      %v4096 = vadd.f32 0.0, %v4095
      %v4097 = vpop.f32.mrb[0].mxu0
      %4098 = vmatprep.mubr.bf16.mxu0 0
      %4099 = vmatmul.mubr.bf16.gmra.mrb[0].mxu0 %v4030
      %v4100 = vpop.f32.mrb[0].mxu0
      %v4101 = vadd.f32 0.0, %v4100
      %v4102 = vpop.f32.mrb[0].mxu0
      %v4103 = vpop.f32.mrb[0].mxu0
      %v4104 = vadd.f32 0.0, %v4103
      %v4105 = vpop.f32.mrb[0].mxu0
      %4106 = vmatprep.mubr.bf16.mxu0 0
      %4107 = vmatmul.mubr.bf16.gmra.mrb[0].mxu0 %v4033
      %v4108 = vpop.f32.mrb[0].mxu0
      %v4109 = vadd.f32 0.0, %v4108
      %v4110 = vpop.f32.mrb[0].mxu0
      %v4111 = vpop.f32.mrb[0].mxu0
      %v4112 = vadd.f32 0.0, %v4111
      %v4113 = vpop.f32.mrb[0].mxu0
      %4114 = vmatprep.mubr.bf16.mxu0 0
      %4115 = vmatmul.mubr.bf16.gmra.mrb[0].mxu0 %v4036
      %v4116 = vpop.f32.mrb[0].mxu0
      %v4117 = vadd.f32 0.0, %v4116
      %v4118 = vpop.f32.mrb[0].mxu0
      %v4119 = vpop.f32.mrb[0].mxu0
      %v4120 = vadd.f32 0.0, %v4119
      %v4121 = vpop.f32.mrb[0].mxu0
      %4122 = vmatprep.mubr.bf16.mxu0 0
      %4123 = vmatmul.mubr.bf16.gmra.mrb[0].mxu0 %v4039
      %v4124 = vpop.f32.mrb[0].mxu0
      %v4125 = vadd.f32 0.0, %v4124
      %v4126 = vpop.f32.mrb[0].mxu0
      %v4127 = vpop.f32.mrb[0].mxu0
      %v4128 = vadd.f32 0.0, %v4127
      %v4129 = vpop.f32.mrb[0].mxu0
      %4130 = vmatprep.mubr.bf16.mxu0 0
      %4131 = vmatmul.mubr.bf16.gmra.mrb[0].mxu0 %v4042
      %v4132 = vpop.f32.mrb[0].mxu0
      %v4133 = vadd.f32 0.0, %v4132
      %v4134 = vpop.f32.mrb[0].mxu0
      %v4135 = vpop.f32.mrb[0].mxu0
      %v4136 = vadd.f32 0.0, %v4135
      %v4137 = vpop.f32.mrb[0].mxu0
      %4138 = vmatprep.mubr.bf16.mxu0 0
      %4139 = vmatmul.mubr.bf16.gmra.mrb[0].mxu0 %v4045
      %v4140 = vpop.f32.mrb[0].mxu0
      %v4141 = vadd.f32 0.0, %v4140
      %v4142 = vpop.f32.mrb[0].mxu0
      %v4143 = vpop.f32.mrb[0].mxu0
      %v4144 = vadd.f32 0.0, %v4143
      %v4145 = vpop.f32.mrb[0].mxu0
      %4146 = vdwg.mxu0
      %v4147 = vadd.f32 %v3981, %v4085
      %v4148 = vadd.f32 %v3982, %v4088
      %v4149 = vadd.f32 %v3983, %v4093
      %v4150 = vadd.f32 %v3984, %v4096
      %v4151 = vadd.f32 %v3985, %v4101
      %v4152 = vadd.f32 %v3986, %v4104
      %v4153 = vadd.f32 %v3987, %v4109
      %v4154 = vadd.f32 %v3988, %v4112
      %v4155 = vadd.f32 %v3989, %v4117
      %v4156 = vadd.f32 %v3990, %v4120
      %v4157 = vadd.f32 %v3991, %v4125
      %v4158 = vadd.f32 %v3992, %v4128
      %v4159 = vadd.f32 %v3993, %v4133
      %v4160 = vadd.f32 %v3994, %v4136
      %v4161 = vadd.f32 %v3995, %v4141
      %v4162 = vadd.f32 %v3996, %v4144
      %v4163 = vld [vmem:[%s1980 + $0x1] sm:$0xff]
      %v4164 = vld [vmem:[%s1980 + $0x9] sm:$0xff]
      %v4165 = vld [vmem:[%s1980 + $0x19] sm:$0xff]
      %v4166 = vld [vmem:[%s1980 + $0x21] sm:$0xff]
      %v4167 = vld [vmem:[%s1980 + $0x31] sm:$0xff]
      %v4168 = vld [vmem:[%s1980 + $0x39] sm:$0xff]
      %v4169 = vld [vmem:[%s1980 + $0x49] sm:$0xff]
      %v4170 = vld [vmem:[%s1980 + $0x51] sm:$0xff]
      %v4171 = vld [vmem:[%s1980 + $0x61] sm:$0xff]
      %v4172 = vld [vmem:[%s1980 + $0x69] sm:$0xff]
      %v4173 = vld [vmem:[%s1980 + $0x79] sm:$0xff]
      %v4174 = vld [vmem:[%s1980 + $0x81] sm:$0xff]
      %v4175 = vld [vmem:[%s1980 + $0x91] sm:$0xff]
      %v4176 = vld [vmem:[%s1980 + $0x99] sm:$0xff]
      %v4177 = vld [vmem:[%s1980 + $0xa9] sm:$0xff]
      %v4178 = vld [vmem:[%s1980 + $0xb1] sm:$0xff]
      %v4179 = vpack.c.bf16 %v4164, %v4163
      %v4180 = vpack.c.bf16 %v4166, %v4165
      %v4181 = vpack.c.bf16 %v4168, %v4167
      %v4182 = vpack.c.bf16 %v4170, %v4169
      %v4183 = vpack.c.bf16 %v4172, %v4171
      %v4184 = vpack.c.bf16 %v4174, %v4173
      %v4185 = vpack.c.bf16 %v4176, %v4175
      %v4186 = vpack.c.bf16 %v4178, %v4177
      %s4187 = scalar_lea.vmem %s2, 8
      %v4188 = vld [vmem:[%s4187] sm:$0x3]
      %v4190 = vsel %vm280, %v4179, 0
      %v4193 = vsel %vm280, %v4180, 0
      %v4196 = vsel %vm280, %v4181, 0
      %v4199 = vsel %vm280, %v4182, 0
      %v4202 = vsel %vm280, %v4183, 0
      %v4205 = vsel %vm280, %v4184, 0
      %v4208 = vsel %vm280, %v4185, 0
      %v4211 = vsel %vm280, %v4186, 0
      %v4214 = vsel %vm530, %v4188, 0
      %4216 = vmatprep.subr.bf16.mxu0 0
      %4217 = vmatpush1.bf16.msra.mxu0 %v4214
      %4218 = vmatprep.subr.bf16.mxu0 0
      %4219 = vmatpush1.bf16.msra.mxu0 0
      %4220 = vmatprep.subr.bf16.mxu0 0
      %4221 = vmatpush1.bf16.msra.mxu0 0
      %4222 = vmatprep.subr.bf16.mxu0 0
      %4223 = vmatpush1.bf16.msra.mxu0 0
      %4224 = vmatprep.subr.bf16.mxu0 0
      %4225 = vmatpush1.bf16.msra.mxu0 0
      %4226 = vmatprep.subr.bf16.mxu0 0
      %4227 = vmatpush1.bf16.msra.mxu0 0
      %4228 = vmatprep.subr.bf16.mxu0 0
      %4229 = vmatpush1.bf16.msra.mxu0 0
      %4230 = vmatprep.subr.bf16.mxu0 0
      %4231 = vmatpush1.bf16.msra.mxu0 0
      %4232 = vmatprep.subr.bf16.mxu0 0
      %4233 = vmatpush1.bf16.msra.mxu0 0
      %4234 = vmatprep.subr.bf16.mxu0 0
      %4235 = vmatpush1.bf16.msra.mxu0 0
      %4236 = vmatprep.subr.bf16.mxu0 0
      %4237 = vmatpush1.bf16.msra.mxu0 0
      %4238 = vmatprep.subr.bf16.mxu0 0
      %4239 = vmatpush1.bf16.msra.mxu0 0
      %4240 = vmatprep.subr.bf16.mxu0 0
      %4241 = vmatpush1.bf16.msra.mxu0 0
      %4242 = vmatprep.subr.bf16.mxu0 0
      %4243 = vmatpush1.bf16.msra.mxu0 0
      %4244 = vmatprep.subr.bf16.mxu0 0
      %4245 = vmatpush1.bf16.msra.mxu0 0
      %4246 = vmatprep.subr.bf16.mxu0 0
      %4247 = vmatpush1.bf16.msra.mxu0 0
      %4248 = vmatprep.mubr.bf16.mxu0 0
      %4249 = vmatmul.mubr.bf16.gmra.mrb[0].mxu0 %v4190
      %v4250 = vpop.f32.mrb[0].mxu0
      %v4251 = vadd.f32 0.0, %v4250
      %v4252 = vpop.f32.mrb[0].mxu0
      %v4253 = vpop.f32.mrb[0].mxu0
      %v4254 = vadd.f32 0.0, %v4253
      %v4255 = vpop.f32.mrb[0].mxu0
      %4256 = vmatprep.mubr.bf16.mxu0 0
      %4257 = vmatmul.mubr.bf16.gmra.mrb[0].mxu0 %v4193
      %v4258 = vpop.f32.mrb[0].mxu0
      %v4259 = vadd.f32 0.0, %v4258
      %v4260 = vpop.f32.mrb[0].mxu0
      %v4261 = vpop.f32.mrb[0].mxu0
      %v4262 = vadd.f32 0.0, %v4261
      %v4263 = vpop.f32.mrb[0].mxu0
      %4264 = vmatprep.mubr.bf16.mxu0 0
      %4265 = vmatmul.mubr.bf16.gmra.mrb[0].mxu0 %v4196
      %v4266 = vpop.f32.mrb[0].mxu0
      %v4267 = vadd.f32 0.0, %v4266
      %v4268 = vpop.f32.mrb[0].mxu0
      %v4269 = vpop.f32.mrb[0].mxu0
      %v4270 = vadd.f32 0.0, %v4269
      %v4271 = vpop.f32.mrb[0].mxu0
      %4272 = vmatprep.mubr.bf16.mxu0 0
      %4273 = vmatmul.mubr.bf16.gmra.mrb[0].mxu0 %v4199
      %v4274 = vpop.f32.mrb[0].mxu0
      %v4275 = vadd.f32 0.0, %v4274
      %v4276 = vpop.f32.mrb[0].mxu0
      %v4277 = vpop.f32.mrb[0].mxu0
      %v4278 = vadd.f32 0.0, %v4277
      %v4279 = vpop.f32.mrb[0].mxu0
      %4280 = vmatprep.mubr.bf16.mxu0 0
      %4281 = vmatmul.mubr.bf16.gmra.mrb[0].mxu0 %v4202
      %v4282 = vpop.f32.mrb[0].mxu0
      %v4283 = vadd.f32 0.0, %v4282
      %v4284 = vpop.f32.mrb[0].mxu0
      %v4285 = vpop.f32.mrb[0].mxu0
      %v4286 = vadd.f32 0.0, %v4285
      %v4287 = vpop.f32.mrb[0].mxu0
      %4288 = vmatprep.mubr.bf16.mxu0 0
      %4289 = vmatmul.mubr.bf16.gmra.mrb[0].mxu0 %v4205
      %v4290 = vpop.f32.mrb[0].mxu0
      %v4291 = vadd.f32 0.0, %v4290
      %v4292 = vpop.f32.mrb[0].mxu0
      %v4293 = vpop.f32.mrb[0].mxu0
      %v4294 = vadd.f32 0.0, %v4293
      %v4295 = vpop.f32.mrb[0].mxu0
      %4296 = vmatprep.mubr.bf16.mxu0 0
      %4297 = vmatmul.mubr.bf16.gmra.mrb[0].mxu0 %v4208
      %v4298 = vpop.f32.mrb[0].mxu0
      %v4299 = vadd.f32 0.0, %v4298
      %v4300 = vpop.f32.mrb[0].mxu0
      %v4301 = vpop.f32.mrb[0].mxu0
      %v4302 = vadd.f32 0.0, %v4301
      %v4303 = vpop.f32.mrb[0].mxu0
      %4304 = vmatprep.mubr.bf16.mxu0 0
      %4305 = vmatmul.mubr.bf16.gmra.mrb[0].mxu0 %v4211
      %v4306 = vpop.f32.mrb[0].mxu0
      %v4307 = vadd.f32 0.0, %v4306
      %v4308 = vpop.f32.mrb[0].mxu0
      %v4309 = vpop.f32.mrb[0].mxu0
      %v4310 = vadd.f32 0.0, %v4309
      %v4311 = vpop.f32.mrb[0].mxu0
      %4312 = vdwg.mxu0
      %v4313 = vadd.f32 %v4147, %v4251
      %v4314 = vadd.f32 %v4148, %v4254
      %v4315 = vadd.f32 %v4149, %v4259
      %v4316 = vadd.f32 %v4150, %v4262
      %v4317 = vadd.f32 %v4151, %v4267
      %v4318 = vadd.f32 %v4152, %v4270
      %v4319 = vadd.f32 %v4153, %v4275
      %v4320 = vadd.f32 %v4154, %v4278
      %v4321 = vadd.f32 %v4155, %v4283
      %v4322 = vadd.f32 %v4156, %v4286
      %v4323 = vadd.f32 %v4157, %v4291
      %v4324 = vadd.f32 %v4158, %v4294
      %v4325 = vadd.f32 %v4159, %v4299
      %v4326 = vadd.f32 %v4160, %v4302
      %v4327 = vadd.f32 %v4161, %v4307
      %v4328 = vadd.f32 %v4162, %v4310
      %v4329 = vld [vmem:[%s1980 + $0x2] sm:$0xff]
      %v4330 = vld [vmem:[%s1980 + $0xa] sm:$0xff]
      %v4331 = vld [vmem:[%s1980 + $0x1a] sm:$0xff]
      %v4332 = vld [vmem:[%s1980 + $0x22] sm:$0xff]
      %v4333 = vld [vmem:[%s1980 + $0x32] sm:$0xff]
      %v4334 = vld [vmem:[%s1980 + $0x3a] sm:$0xff]
      %v4335 = vld [vmem:[%s1980 + $0x4a] sm:$0xff]
      %v4336 = vld [vmem:[%s1980 + $0x52] sm:$0xff]
      %v4337 = vld [vmem:[%s1980 + $0x62] sm:$0xff]
      %v4338 = vld [vmem:[%s1980 + $0x6a] sm:$0xff]
      %v4339 = vld [vmem:[%s1980 + $0x7a] sm:$0xff]
      %v4340 = vld [vmem:[%s1980 + $0x82] sm:$0xff]
      %v4341 = vld [vmem:[%s1980 + $0x92] sm:$0xff]
      %v4342 = vld [vmem:[%s1980 + $0x9a] sm:$0xff]
      %v4343 = vld [vmem:[%s1980 + $0xaa] sm:$0xff]
      %v4344 = vld [vmem:[%s1980 + $0xb2] sm:$0xff]
      %v4345 = vpack.c.bf16 %v4330, %v4329
      %v4346 = vpack.c.bf16 %v4332, %v4331
      %v4347 = vpack.c.bf16 %v4334, %v4333
      %v4348 = vpack.c.bf16 %v4336, %v4335
      %v4349 = vpack.c.bf16 %v4338, %v4337
      %v4350 = vpack.c.bf16 %v4340, %v4339
      %v4351 = vpack.c.bf16 %v4342, %v4341
      %v4352 = vpack.c.bf16 %v4344, %v4343
      %s4353 = scalar_lea.vmem %s2, 10
      %v4354 = vld [vmem:[%s4353] sm:$0x3]
      %v4356 = vsel %vm280, %v4345, 0
      %v4359 = vsel %vm280, %v4346, 0
      %v4362 = vsel %vm280, %v4347, 0
      %v4365 = vsel %vm280, %v4348, 0
      %v4368 = vsel %vm280, %v4349, 0
      %v4371 = vsel %vm280, %v4350, 0
      %v4374 = vsel %vm280, %v4351, 0
      %v4377 = vsel %vm280, %v4352, 0
      %v4380 = vsel %vm530, %v4354, 0
      %4382 = vmatprep.subr.bf16.mxu0 0
      %4383 = vmatpush1.bf16.msra.mxu0 %v4380
      %4384 = vmatprep.subr.bf16.mxu0 0
      %4385 = vmatpush1.bf16.msra.mxu0 0
      %4386 = vmatprep.subr.bf16.mxu0 0
      %4387 = vmatpush1.bf16.msra.mxu0 0
      %4388 = vmatprep.subr.bf16.mxu0 0
      %4389 = vmatpush1.bf16.msra.mxu0 0
      %4390 = vmatprep.subr.bf16.mxu0 0
      %4391 = vmatpush1.bf16.msra.mxu0 0
      %4392 = vmatprep.subr.bf16.mxu0 0
      %4393 = vmatpush1.bf16.msra.mxu0 0
      %4394 = vmatprep.subr.bf16.mxu0 0
      %4395 = vmatpush1.bf16.msra.mxu0 0
      %4396 = vmatprep.subr.bf16.mxu0 0
      %4397 = vmatpush1.bf16.msra.mxu0 0
      %4398 = vmatprep.subr.bf16.mxu0 0
      %4399 = vmatpush1.bf16.msra.mxu0 0
      %4400 = vmatprep.subr.bf16.mxu0 0
      %4401 = vmatpush1.bf16.msra.mxu0 0
      %4402 = vmatprep.subr.bf16.mxu0 0
      %4403 = vmatpush1.bf16.msra.mxu0 0
      %4404 = vmatprep.subr.bf16.mxu0 0
      %4405 = vmatpush1.bf16.msra.mxu0 0
      %4406 = vmatprep.subr.bf16.mxu0 0
      %4407 = vmatpush1.bf16.msra.mxu0 0
      %4408 = vmatprep.subr.bf16.mxu0 0
      %4409 = vmatpush1.bf16.msra.mxu0 0
      %4410 = vmatprep.subr.bf16.mxu0 0
      %4411 = vmatpush1.bf16.msra.mxu0 0
      %4412 = vmatprep.subr.bf16.mxu0 0
      %4413 = vmatpush1.bf16.msra.mxu0 0
      %4414 = vmatprep.mubr.bf16.mxu0 0
      %4415 = vmatmul.mubr.bf16.gmra.mrb[0].mxu0 %v4356
      %v4416 = vpop.f32.mrb[0].mxu0
      %v4417 = vadd.f32 0.0, %v4416
      %v4418 = vpop.f32.mrb[0].mxu0
      %v4419 = vpop.f32.mrb[0].mxu0
      %v4420 = vadd.f32 0.0, %v4419
      %v4421 = vpop.f32.mrb[0].mxu0
      %4422 = vmatprep.mubr.bf16.mxu0 0
      %4423 = vmatmul.mubr.bf16.gmra.mrb[0].mxu0 %v4359
      %v4424 = vpop.f32.mrb[0].mxu0
      %v4425 = vadd.f32 0.0, %v4424
      %v4426 = vpop.f32.mrb[0].mxu0
      %v4427 = vpop.f32.mrb[0].mxu0
      %v4428 = vadd.f32 0.0, %v4427
      %v4429 = vpop.f32.mrb[0].mxu0
      %4430 = vmatprep.mubr.bf16.mxu0 0
      %4431 = vmatmul.mubr.bf16.gmra.mrb[0].mxu0 %v4362
      %v4432 = vpop.f32.mrb[0].mxu0
      %v4433 = vadd.f32 0.0, %v4432
      %v4434 = vpop.f32.mrb[0].mxu0
      %v4435 = vpop.f32.mrb[0].mxu0
      %v4436 = vadd.f32 0.0, %v4435
      %v4437 = vpop.f32.mrb[0].mxu0
      %4438 = vmatprep.mubr.bf16.mxu0 0
      %4439 = vmatmul.mubr.bf16.gmra.mrb[0].mxu0 %v4365
      %v4440 = vpop.f32.mrb[0].mxu0
      %v4441 = vadd.f32 0.0, %v4440
      %v4442 = vpop.f32.mrb[0].mxu0
      %v4443 = vpop.f32.mrb[0].mxu0
      %v4444 = vadd.f32 0.0, %v4443
      %v4445 = vpop.f32.mrb[0].mxu0
      %4446 = vmatprep.mubr.bf16.mxu0 0
      %4447 = vmatmul.mubr.bf16.gmra.mrb[0].mxu0 %v4368
      %v4448 = vpop.f32.mrb[0].mxu0
      %v4449 = vadd.f32 0.0, %v4448
      %v4450 = vpop.f32.mrb[0].mxu0
      %v4451 = vpop.f32.mrb[0].mxu0
      %v4452 = vadd.f32 0.0, %v4451
      %v4453 = vpop.f32.mrb[0].mxu0
      %4454 = vmatprep.mubr.bf16.mxu0 0
      %4455 = vmatmul.mubr.bf16.gmra.mrb[0].mxu0 %v4371
      %v4456 = vpop.f32.mrb[0].mxu0
      %v4457 = vadd.f32 0.0, %v4456
      %v4458 = vpop.f32.mrb[0].mxu0
      %v4459 = vpop.f32.mrb[0].mxu0
      %v4460 = vadd.f32 0.0, %v4459
      %v4461 = vpop.f32.mrb[0].mxu0
      %4462 = vmatprep.mubr.bf16.mxu0 0
      %4463 = vmatmul.mubr.bf16.gmra.mrb[0].mxu0 %v4374
      %v4464 = vpop.f32.mrb[0].mxu0
      %v4465 = vadd.f32 0.0, %v4464
      %v4466 = vpop.f32.mrb[0].mxu0
      %v4467 = vpop.f32.mrb[0].mxu0
      %v4468 = vadd.f32 0.0, %v4467
      %v4469 = vpop.f32.mrb[0].mxu0
      %4470 = vmatprep.mubr.bf16.mxu0 0
      %4471 = vmatmul.mubr.bf16.gmra.mrb[0].mxu0 %v4377
      %v4472 = vpop.f32.mrb[0].mxu0
      %v4473 = vadd.f32 0.0, %v4472
      %v4474 = vpop.f32.mrb[0].mxu0
      %v4475 = vpop.f32.mrb[0].mxu0
      %v4476 = vadd.f32 0.0, %v4475
      %v4477 = vpop.f32.mrb[0].mxu0
      %4478 = vdwg.mxu0
      %v4479 = vadd.f32 %v4313, %v4417
      %v4480 = vadd.f32 %v4314, %v4420
      %v4481 = vadd.f32 %v4315, %v4425
      %v4482 = vadd.f32 %v4316, %v4428
      %v4483 = vadd.f32 %v4317, %v4433
      %v4484 = vadd.f32 %v4318, %v4436
      %v4485 = vadd.f32 %v4319, %v4441
      %v4486 = vadd.f32 %v4320, %v4444
      %v4487 = vadd.f32 %v4321, %v4449
      %v4488 = vadd.f32 %v4322, %v4452
      %v4489 = vadd.f32 %v4323, %v4457
      %v4490 = vadd.f32 %v4324, %v4460
      %v4491 = vadd.f32 %v4325, %v4465
      %v4492 = vadd.f32 %v4326, %v4468
      %v4493 = vadd.f32 %v4327, %v4473
      %v4494 = vadd.f32 %v4328, %v4476
      %s4495 = scalar_lea.vmem [#allocation3], 48
      %v4496 = vld [vmem:[%s4495] sm:$0xff]
      %v4497 = vld [vmem:[%s4495 + $0x8] sm:$0xff]
      %v4498 = vld [vmem:[%s4495 + $0x18] sm:$0xff]
      %v4499 = vld [vmem:[%s4495 + $0x20] sm:$0xff]
      %v4500 = vld [vmem:[%s4495 + $0x30] sm:$0xff]
      %v4501 = vld [vmem:[%s4495 + $0x38] sm:$0xff]
      %v4502 = vld [vmem:[%s4495 + $0x48] sm:$0xff]
      %v4503 = vld [vmem:[%s4495 + $0x50] sm:$0xff]
      %v4504 = vld [vmem:[%s4495 + $0x60] sm:$0xff]
      %v4505 = vld [vmem:[%s4495 + $0x68] sm:$0xff]
      %v4506 = vld [vmem:[%s4495 + $0x78] sm:$0xff]
      %v4507 = vld [vmem:[%s4495 + $0x80] sm:$0xff]
      %v4508 = vld [vmem:[%s4495 + $0x90] sm:$0xff]
      %v4509 = vld [vmem:[%s4495 + $0x98] sm:$0xff]
      %v4510 = vld [vmem:[%s4495 + $0xa8] sm:$0xff]
      %v4511 = vld [vmem:[%s4495 + $0xb0] sm:$0xff]
      %v4512 = vpack.c.bf16 %v4497, %v4496
      %v4513 = vpack.c.bf16 %v4499, %v4498
      %v4514 = vpack.c.bf16 %v4501, %v4500
      %v4515 = vpack.c.bf16 %v4503, %v4502
      %v4516 = vpack.c.bf16 %v4505, %v4504
      %v4517 = vpack.c.bf16 %v4507, %v4506
      %v4518 = vpack.c.bf16 %v4509, %v4508
      %v4519 = vpack.c.bf16 %v4511, %v4510
      %s4520 = scalar_lea.vmem %s2, 12
      %v4521 = vld [vmem:[%s4520] sm:$0x3]
      %v4523 = vsel %vm280, %v4512, 0
      %v4526 = vsel %vm280, %v4513, 0
      %v4529 = vsel %vm280, %v4514, 0
      %v4532 = vsel %vm280, %v4515, 0
      %v4535 = vsel %vm280, %v4516, 0
      %v4538 = vsel %vm280, %v4517, 0
      %v4541 = vsel %vm280, %v4518, 0
      %v4544 = vsel %vm280, %v4519, 0
      %v4547 = vsel %vm530, %v4521, 0
      %4549 = vmatprep.subr.bf16.mxu0 0
      %4550 = vmatpush1.bf16.msra.mxu0 %v4547
      %4551 = vmatprep.subr.bf16.mxu0 0
      %4552 = vmatpush1.bf16.msra.mxu0 0
      %4553 = vmatprep.subr.bf16.mxu0 0
      %4554 = vmatpush1.bf16.msra.mxu0 0
      %4555 = vmatprep.subr.bf16.mxu0 0
      %4556 = vmatpush1.bf16.msra.mxu0 0
      %4557 = vmatprep.subr.bf16.mxu0 0
      %4558 = vmatpush1.bf16.msra.mxu0 0
      %4559 = vmatprep.subr.bf16.mxu0 0
      %4560 = vmatpush1.bf16.msra.mxu0 0
      %4561 = vmatprep.subr.bf16.mxu0 0
      %4562 = vmatpush1.bf16.msra.mxu0 0
      %4563 = vmatprep.subr.bf16.mxu0 0
      %4564 = vmatpush1.bf16.msra.mxu0 0
      %4565 = vmatprep.subr.bf16.mxu0 0
      %4566 = vmatpush1.bf16.msra.mxu0 0
      %4567 = vmatprep.subr.bf16.mxu0 0
      %4568 = vmatpush1.bf16.msra.mxu0 0
      %4569 = vmatprep.subr.bf16.mxu0 0
      %4570 = vmatpush1.bf16.msra.mxu0 0
      %4571 = vmatprep.subr.bf16.mxu0 0
      %4572 = vmatpush1.bf16.msra.mxu0 0
      %4573 = vmatprep.subr.bf16.mxu0 0
      %4574 = vmatpush1.bf16.msra.mxu0 0
      %4575 = vmatprep.subr.bf16.mxu0 0
      %4576 = vmatpush1.bf16.msra.mxu0 0
      %4577 = vmatprep.subr.bf16.mxu0 0
      %4578 = vmatpush1.bf16.msra.mxu0 0
      %4579 = vmatprep.subr.bf16.mxu0 0
      %4580 = vmatpush1.bf16.msra.mxu0 0
      %4581 = vmatprep.mubr.bf16.mxu0 0
      %4582 = vmatmul.mubr.bf16.gmra.mrb[0].mxu0 %v4523
      %v4583 = vpop.f32.mrb[0].mxu0
      %v4584 = vadd.f32 0.0, %v4583
      %v4585 = vpop.f32.mrb[0].mxu0
      %v4586 = vpop.f32.mrb[0].mxu0
      %v4587 = vadd.f32 0.0, %v4586
      %v4588 = vpop.f32.mrb[0].mxu0
      %4589 = vmatprep.mubr.bf16.mxu0 0
      %4590 = vmatmul.mubr.bf16.gmra.mrb[0].mxu0 %v4526
      %v4591 = vpop.f32.mrb[0].mxu0
      %v4592 = vadd.f32 0.0, %v4591
      %v4593 = vpop.f32.mrb[0].mxu0
      %v4594 = vpop.f32.mrb[0].mxu0
      %v4595 = vadd.f32 0.0, %v4594
      %v4596 = vpop.f32.mrb[0].mxu0
      %4597 = vmatprep.mubr.bf16.mxu0 0
      %4598 = vmatmul.mubr.bf16.gmra.mrb[0].mxu0 %v4529
      %v4599 = vpop.f32.mrb[0].mxu0
      %v4600 = vadd.f32 0.0, %v4599
      %v4601 = vpop.f32.mrb[0].mxu0
      %v4602 = vpop.f32.mrb[0].mxu0
      %v4603 = vadd.f32 0.0, %v4602
      %v4604 = vpop.f32.mrb[0].mxu0
      %4605 = vmatprep.mubr.bf16.mxu0 0
      %4606 = vmatmul.mubr.bf16.gmra.mrb[0].mxu0 %v4532
      %v4607 = vpop.f32.mrb[0].mxu0
      %v4608 = vadd.f32 0.0, %v4607
      %v4609 = vpop.f32.mrb[0].mxu0
      %v4610 = vpop.f32.mrb[0].mxu0
      %v4611 = vadd.f32 0.0, %v4610
      %v4612 = vpop.f32.mrb[0].mxu0
      %4613 = vmatprep.mubr.bf16.mxu0 0
      %4614 = vmatmul.mubr.bf16.gmra.mrb[0].mxu0 %v4535
      %v4615 = vpop.f32.mrb[0].mxu0
      %v4616 = vadd.f32 0.0, %v4615
      %v4617 = vpop.f32.mrb[0].mxu0
      %v4618 = vpop.f32.mrb[0].mxu0
      %v4619 = vadd.f32 0.0, %v4618
      %v4620 = vpop.f32.mrb[0].mxu0
      %4621 = vmatprep.mubr.bf16.mxu0 0
      %4622 = vmatmul.mubr.bf16.gmra.mrb[0].mxu0 %v4538
      %v4623 = vpop.f32.mrb[0].mxu0
      %v4624 = vadd.f32 0.0, %v4623
      %v4625 = vpop.f32.mrb[0].mxu0
      %v4626 = vpop.f32.mrb[0].mxu0
      %v4627 = vadd.f32 0.0, %v4626
      %v4628 = vpop.f32.mrb[0].mxu0
      %4629 = vmatprep.mubr.bf16.mxu0 0
      %4630 = vmatmul.mubr.bf16.gmra.mrb[0].mxu0 %v4541
      %v4631 = vpop.f32.mrb[0].mxu0
      %v4632 = vadd.f32 0.0, %v4631
      %v4633 = vpop.f32.mrb[0].mxu0
      %v4634 = vpop.f32.mrb[0].mxu0
      %v4635 = vadd.f32 0.0, %v4634
      %v4636 = vpop.f32.mrb[0].mxu0
      %4637 = vmatprep.mubr.bf16.mxu0 0
      %4638 = vmatmul.mubr.bf16.gmra.mrb[0].mxu0 %v4544
      %v4639 = vpop.f32.mrb[0].mxu0
      %v4640 = vadd.f32 0.0, %v4639
      %v4641 = vpop.f32.mrb[0].mxu0
      %v4642 = vpop.f32.mrb[0].mxu0
      %v4643 = vadd.f32 0.0, %v4642
      %v4644 = vpop.f32.mrb[0].mxu0
      %4645 = vdwg.mxu0
      %v4646 = vadd.f32 %v4479, %v4584
      %v4647 = vadd.f32 %v4480, %v4587
      %v4648 = vadd.f32 %v4481, %v4592
      %v4649 = vadd.f32 %v4482, %v4595
      %v4650 = vadd.f32 %v4483, %v4600
      %v4651 = vadd.f32 %v4484, %v4603
      %v4652 = vadd.f32 %v4485, %v4608
      %v4653 = vadd.f32 %v4486, %v4611
      %v4654 = vadd.f32 %v4487, %v4616
      %v4655 = vadd.f32 %v4488, %v4619
      %v4656 = vadd.f32 %v4489, %v4624
      %v4657 = vadd.f32 %v4490, %v4627
      %v4658 = vadd.f32 %v4491, %v4632
      %v4659 = vadd.f32 %v4492, %v4635
      %v4660 = vadd.f32 %v4493, %v4640
      %v4661 = vadd.f32 %v4494, %v4643
      %v4662 = vld [vmem:[%s4495 + $0x1] sm:$0xff]
      %v4663 = vld [vmem:[%s4495 + $0x9] sm:$0xff]
      %v4664 = vld [vmem:[%s4495 + $0x19] sm:$0xff]
      %v4665 = vld [vmem:[%s4495 + $0x21] sm:$0xff]
      %v4666 = vld [vmem:[%s4495 + $0x31] sm:$0xff]
      %v4667 = vld [vmem:[%s4495 + $0x39] sm:$0xff]
      %v4668 = vld [vmem:[%s4495 + $0x49] sm:$0xff]
      %v4669 = vld [vmem:[%s4495 + $0x51] sm:$0xff]
      %v4670 = vld [vmem:[%s4495 + $0x61] sm:$0xff]
      %v4671 = vld [vmem:[%s4495 + $0x69] sm:$0xff]
      %v4672 = vld [vmem:[%s4495 + $0x79] sm:$0xff]
      %v4673 = vld [vmem:[%s4495 + $0x81] sm:$0xff]
      %v4674 = vld [vmem:[%s4495 + $0x91] sm:$0xff]
      %v4675 = vld [vmem:[%s4495 + $0x99] sm:$0xff]
      %v4676 = vld [vmem:[%s4495 + $0xa9] sm:$0xff]
      %v4677 = vld [vmem:[%s4495 + $0xb1] sm:$0xff]
      %v4678 = vpack.c.bf16 %v4663, %v4662
      %v4679 = vpack.c.bf16 %v4665, %v4664
      %v4680 = vpack.c.bf16 %v4667, %v4666
      %v4681 = vpack.c.bf16 %v4669, %v4668
      %v4682 = vpack.c.bf16 %v4671, %v4670
      %v4683 = vpack.c.bf16 %v4673, %v4672
      %v4684 = vpack.c.bf16 %v4675, %v4674
      %v4685 = vpack.c.bf16 %v4677, %v4676
      %s4686 = scalar_lea.vmem %s2, 14
      %v4687 = vld [vmem:[%s4686] sm:$0x3]
      %v4689 = vsel %vm280, %v4678, 0
      %v4692 = vsel %vm280, %v4679, 0
      %v4695 = vsel %vm280, %v4680, 0
      %v4698 = vsel %vm280, %v4681, 0
      %v4701 = vsel %vm280, %v4682, 0
      %v4704 = vsel %vm280, %v4683, 0
      %v4707 = vsel %vm280, %v4684, 0
      %v4710 = vsel %vm280, %v4685, 0
      %v4713 = vsel %vm530, %v4687, 0
      %4715 = vmatprep.subr.bf16.mxu0 0
      %4716 = vmatpush1.bf16.msra.mxu0 %v4713
      %4717 = vmatprep.subr.bf16.mxu0 0
      %4718 = vmatpush1.bf16.msra.mxu0 0
      %4719 = vmatprep.subr.bf16.mxu0 0
      %4720 = vmatpush1.bf16.msra.mxu0 0
      %4721 = vmatprep.subr.bf16.mxu0 0
      %4722 = vmatpush1.bf16.msra.mxu0 0
      %4723 = vmatprep.subr.bf16.mxu0 0
      %4724 = vmatpush1.bf16.msra.mxu0 0
      %4725 = vmatprep.subr.bf16.mxu0 0
      %4726 = vmatpush1.bf16.msra.mxu0 0
      %4727 = vmatprep.subr.bf16.mxu0 0
      %4728 = vmatpush1.bf16.msra.mxu0 0
      %4729 = vmatprep.subr.bf16.mxu0 0
      %4730 = vmatpush1.bf16.msra.mxu0 0
      %4731 = vmatprep.subr.bf16.mxu0 0
      %4732 = vmatpush1.bf16.msra.mxu0 0
      %4733 = vmatprep.subr.bf16.mxu0 0
      %4734 = vmatpush1.bf16.msra.mxu0 0
      %4735 = vmatprep.subr.bf16.mxu0 0
      %4736 = vmatpush1.bf16.msra.mxu0 0
      %4737 = vmatprep.subr.bf16.mxu0 0
      %4738 = vmatpush1.bf16.msra.mxu0 0
      %4739 = vmatprep.subr.bf16.mxu0 0
      %4740 = vmatpush1.bf16.msra.mxu0 0
      %4741 = vmatprep.subr.bf16.mxu0 0
      %4742 = vmatpush1.bf16.msra.mxu0 0
      %4743 = vmatprep.subr.bf16.mxu0 0
      %4744 = vmatpush1.bf16.msra.mxu0 0
      %4745 = vmatprep.subr.bf16.mxu0 0
      %4746 = vmatpush1.bf16.msra.mxu0 0
      %4747 = vmatprep.mubr.bf16.mxu0 0
      %4748 = vmatmul.mubr.bf16.gmra.mrb[0].mxu0 %v4689
      %v4749 = vpop.f32.mrb[0].mxu0
      %v4750 = vadd.f32 0.0, %v4749
      %v4751 = vpop.f32.mrb[0].mxu0
      %v4752 = vpop.f32.mrb[0].mxu0
      %v4753 = vadd.f32 0.0, %v4752
      %v4754 = vpop.f32.mrb[0].mxu0
      %4755 = vmatprep.mubr.bf16.mxu0 0
      %4756 = vmatmul.mubr.bf16.gmra.mrb[0].mxu0 %v4692
      %v4757 = vpop.f32.mrb[0].mxu0
      %v4758 = vadd.f32 0.0, %v4757
      %v4759 = vpop.f32.mrb[0].mxu0
      %v4760 = vpop.f32.mrb[0].mxu0
      %v4761 = vadd.f32 0.0, %v4760
      %v4762 = vpop.f32.mrb[0].mxu0
      %4763 = vmatprep.mubr.bf16.mxu0 0
      %4764 = vmatmul.mubr.bf16.gmra.mrb[0].mxu0 %v4695
      %v4765 = vpop.f32.mrb[0].mxu0
      %v4766 = vadd.f32 0.0, %v4765
      %v4767 = vpop.f32.mrb[0].mxu0
      %v4768 = vpop.f32.mrb[0].mxu0
      %v4769 = vadd.f32 0.0, %v4768
      %v4770 = vpop.f32.mrb[0].mxu0
      %4771 = vmatprep.mubr.bf16.mxu0 0
      %4772 = vmatmul.mubr.bf16.gmra.mrb[0].mxu0 %v4698
      %v4773 = vpop.f32.mrb[0].mxu0
      %v4774 = vadd.f32 0.0, %v4773
      %v4775 = vpop.f32.mrb[0].mxu0
      %v4776 = vpop.f32.mrb[0].mxu0
      %v4777 = vadd.f32 0.0, %v4776
      %v4778 = vpop.f32.mrb[0].mxu0
      %4779 = vmatprep.mubr.bf16.mxu0 0
      %4780 = vmatmul.mubr.bf16.gmra.mrb[0].mxu0 %v4701
      %v4781 = vpop.f32.mrb[0].mxu0
      %v4782 = vadd.f32 0.0, %v4781
      %v4783 = vpop.f32.mrb[0].mxu0
      %v4784 = vpop.f32.mrb[0].mxu0
      %v4785 = vadd.f32 0.0, %v4784
      %v4786 = vpop.f32.mrb[0].mxu0
      %4787 = vmatprep.mubr.bf16.mxu0 0
      %4788 = vmatmul.mubr.bf16.gmra.mrb[0].mxu0 %v4704
      %v4789 = vpop.f32.mrb[0].mxu0
      %v4790 = vadd.f32 0.0, %v4789
      %v4791 = vpop.f32.mrb[0].mxu0
      %v4792 = vpop.f32.mrb[0].mxu0
      %v4793 = vadd.f32 0.0, %v4792
      %v4794 = vpop.f32.mrb[0].mxu0
      %4795 = vmatprep.mubr.bf16.mxu0 0
      %4796 = vmatmul.mubr.bf16.gmra.mrb[0].mxu0 %v4707
      %v4797 = vpop.f32.mrb[0].mxu0
      %v4798 = vadd.f32 0.0, %v4797
      %v4799 = vpop.f32.mrb[0].mxu0
      %v4800 = vpop.f32.mrb[0].mxu0
      %v4801 = vadd.f32 0.0, %v4800
      %v4802 = vpop.f32.mrb[0].mxu0
      %4803 = vmatprep.mubr.bf16.mxu0 0
      %4804 = vmatmul.mubr.bf16.gmra.mrb[0].mxu0 %v4710
      %v4805 = vpop.f32.mrb[0].mxu0
      %v4806 = vadd.f32 0.0, %v4805
      %v4807 = vpop.f32.mrb[0].mxu0
      %v4808 = vpop.f32.mrb[0].mxu0
      %v4809 = vadd.f32 0.0, %v4808
      %v4810 = vpop.f32.mrb[0].mxu0
      %4811 = vdwg.mxu0
      %v4812 = vadd.f32 %v4646, %v4750
      %v4813 = vadd.f32 %v4647, %v4753
      %v4814 = vadd.f32 %v4648, %v4758
      %v4815 = vadd.f32 %v4649, %v4761
      %v4816 = vadd.f32 %v4650, %v4766
      %v4817 = vadd.f32 %v4651, %v4769
      %v4818 = vadd.f32 %v4652, %v4774
      %v4819 = vadd.f32 %v4653, %v4777
      %v4820 = vadd.f32 %v4654, %v4782
      %v4821 = vadd.f32 %v4655, %v4785
      %v4822 = vadd.f32 %v4656, %v4790
      %v4823 = vadd.f32 %v4657, %v4793
      %v4824 = vadd.f32 %v4658, %v4798
      %v4825 = vadd.f32 %v4659, %v4801
      %v4826 = vadd.f32 %v4660, %v4806
      %v4827 = vadd.f32 %v4661, %v4809
      %v4828 = vld [vmem:[%s4495 + $0x2] sm:$0xff]
      %v4829 = vld [vmem:[%s4495 + $0xa] sm:$0xff]
      %v4830 = vld [vmem:[%s4495 + $0x1a] sm:$0xff]
      %v4831 = vld [vmem:[%s4495 + $0x22] sm:$0xff]
      %v4832 = vld [vmem:[%s4495 + $0x32] sm:$0xff]
      %v4833 = vld [vmem:[%s4495 + $0x3a] sm:$0xff]
      %v4834 = vld [vmem:[%s4495 + $0x4a] sm:$0xff]
      %v4835 = vld [vmem:[%s4495 + $0x52] sm:$0xff]
      %v4836 = vld [vmem:[%s4495 + $0x62] sm:$0xff]
      %v4837 = vld [vmem:[%s4495 + $0x6a] sm:$0xff]
      %v4838 = vld [vmem:[%s4495 + $0x7a] sm:$0xff]
      %v4839 = vld [vmem:[%s4495 + $0x82] sm:$0xff]
      %v4840 = vld [vmem:[%s4495 + $0x92] sm:$0xff]
      %v4841 = vld [vmem:[%s4495 + $0x9a] sm:$0xff]
      %v4842 = vld [vmem:[%s4495 + $0xaa] sm:$0xff]
      %v4843 = vld [vmem:[%s4495 + $0xb2] sm:$0xff]
      %v4844 = vpack.c.bf16 %v4829, %v4828
      %v4845 = vpack.c.bf16 %v4831, %v4830
      %v4846 = vpack.c.bf16 %v4833, %v4832
      %v4847 = vpack.c.bf16 %v4835, %v4834
      %v4848 = vpack.c.bf16 %v4837, %v4836
      %v4849 = vpack.c.bf16 %v4839, %v4838
      %v4850 = vpack.c.bf16 %v4841, %v4840
      %v4851 = vpack.c.bf16 %v4843, %v4842
      %s4852 = scalar_lea.vmem %s2, 16
      %v4853 = vld [vmem:[%s4852] sm:$0x3]
      %v4855 = vsel %vm280, %v4844, 0
      %v4858 = vsel %vm280, %v4845, 0
      %v4861 = vsel %vm280, %v4846, 0
      %v4864 = vsel %vm280, %v4847, 0
      %v4867 = vsel %vm280, %v4848, 0
      %v4870 = vsel %vm280, %v4849, 0
      %v4873 = vsel %vm280, %v4850, 0
      %v4876 = vsel %vm280, %v4851, 0
      %v4879 = vsel %vm530, %v4853, 0
      %4881 = vmatprep.subr.bf16.mxu0 0
      %4882 = vmatpush1.bf16.msra.mxu0 %v4879
      %4883 = vmatprep.subr.bf16.mxu0 0
      %4884 = vmatpush1.bf16.msra.mxu0 0
      %4885 = vmatprep.subr.bf16.mxu0 0
      %4886 = vmatpush1.bf16.msra.mxu0 0
      %4887 = vmatprep.subr.bf16.mxu0 0
      %4888 = vmatpush1.bf16.msra.mxu0 0
      %4889 = vmatprep.subr.bf16.mxu0 0
      %4890 = vmatpush1.bf16.msra.mxu0 0
      %4891 = vmatprep.subr.bf16.mxu0 0
      %4892 = vmatpush1.bf16.msra.mxu0 0
      %4893 = vmatprep.subr.bf16.mxu0 0
      %4894 = vmatpush1.bf16.msra.mxu0 0
      %4895 = vmatprep.subr.bf16.mxu0 0
      %4896 = vmatpush1.bf16.msra.mxu0 0
      %4897 = vmatprep.subr.bf16.mxu0 0
      %4898 = vmatpush1.bf16.msra.mxu0 0
      %4899 = vmatprep.subr.bf16.mxu0 0
      %4900 = vmatpush1.bf16.msra.mxu0 0
      %4901 = vmatprep.subr.bf16.mxu0 0
      %4902 = vmatpush1.bf16.msra.mxu0 0
      %4903 = vmatprep.subr.bf16.mxu0 0
      %4904 = vmatpush1.bf16.msra.mxu0 0
      %4905 = vmatprep.subr.bf16.mxu0 0
      %4906 = vmatpush1.bf16.msra.mxu0 0
      %4907 = vmatprep.subr.bf16.mxu0 0
      %4908 = vmatpush1.bf16.msra.mxu0 0
      %4909 = vmatprep.subr.bf16.mxu0 0
      %4910 = vmatpush1.bf16.msra.mxu0 0
      %4911 = vmatprep.subr.bf16.mxu0 0
      %4912 = vmatpush1.bf16.msra.mxu0 0
      %4913 = vmatprep.mubr.bf16.mxu0 0
      %4914 = vmatmul.mubr.bf16.gmra.mrb[0].mxu0 %v4855
      %v4915 = vpop.f32.mrb[0].mxu0
      %v4916 = vadd.f32 0.0, %v4915
      %v4917 = vpop.f32.mrb[0].mxu0
      %v4918 = vpop.f32.mrb[0].mxu0
      %v4919 = vadd.f32 0.0, %v4918
      %v4920 = vpop.f32.mrb[0].mxu0
      %4921 = vmatprep.mubr.bf16.mxu0 0
      %4922 = vmatmul.mubr.bf16.gmra.mrb[0].mxu0 %v4858
      %v4923 = vpop.f32.mrb[0].mxu0
      %v4924 = vadd.f32 0.0, %v4923
      %v4925 = vpop.f32.mrb[0].mxu0
      %v4926 = vpop.f32.mrb[0].mxu0
      %v4927 = vadd.f32 0.0, %v4926
      %v4928 = vpop.f32.mrb[0].mxu0
      %4929 = vmatprep.mubr.bf16.mxu0 0
      %4930 = vmatmul.mubr.bf16.gmra.mrb[0].mxu0 %v4861
      %v4931 = vpop.f32.mrb[0].mxu0
      %v4932 = vadd.f32 0.0, %v4931
      %v4933 = vpop.f32.mrb[0].mxu0
      %v4934 = vpop.f32.mrb[0].mxu0
      %v4935 = vadd.f32 0.0, %v4934
      %v4936 = vpop.f32.mrb[0].mxu0
      %4937 = vmatprep.mubr.bf16.mxu0 0
      %4938 = vmatmul.mubr.bf16.gmra.mrb[0].mxu0 %v4864
      %v4939 = vpop.f32.mrb[0].mxu0
      %v4940 = vadd.f32 0.0, %v4939
      %v4941 = vpop.f32.mrb[0].mxu0
      %v4942 = vpop.f32.mrb[0].mxu0
      %v4943 = vadd.f32 0.0, %v4942
      %v4944 = vpop.f32.mrb[0].mxu0
      %4945 = vmatprep.mubr.bf16.mxu0 0
      %4946 = vmatmul.mubr.bf16.gmra.mrb[0].mxu0 %v4867
      %v4947 = vpop.f32.mrb[0].mxu0
      %v4948 = vadd.f32 0.0, %v4947
      %v4949 = vpop.f32.mrb[0].mxu0
      %v4950 = vpop.f32.mrb[0].mxu0
      %v4951 = vadd.f32 0.0, %v4950
      %v4952 = vpop.f32.mrb[0].mxu0
      %4953 = vmatprep.mubr.bf16.mxu0 0
      %4954 = vmatmul.mubr.bf16.gmra.mrb[0].mxu0 %v4870
      %v4955 = vpop.f32.mrb[0].mxu0
      %v4956 = vadd.f32 0.0, %v4955
      %v4957 = vpop.f32.mrb[0].mxu0
      %v4958 = vpop.f32.mrb[0].mxu0
      %v4959 = vadd.f32 0.0, %v4958
      %v4960 = vpop.f32.mrb[0].mxu0
      %4961 = vmatprep.mubr.bf16.mxu0 0
      %4962 = vmatmul.mubr.bf16.gmra.mrb[0].mxu0 %v4873
      %v4963 = vpop.f32.mrb[0].mxu0
      %v4964 = vadd.f32 0.0, %v4963
      %v4965 = vpop.f32.mrb[0].mxu0
      %v4966 = vpop.f32.mrb[0].mxu0
      %v4967 = vadd.f32 0.0, %v4966
      %v4968 = vpop.f32.mrb[0].mxu0
      %4969 = vmatprep.mubr.bf16.mxu0 0
      %4970 = vmatmul.mubr.bf16.gmra.mrb[0].mxu0 %v4876
      %v4971 = vpop.f32.mrb[0].mxu0
      %v4972 = vadd.f32 0.0, %v4971
      %v4973 = vpop.f32.mrb[0].mxu0
      %v4974 = vpop.f32.mrb[0].mxu0
      %v4975 = vadd.f32 0.0, %v4974
      %v4976 = vpop.f32.mrb[0].mxu0
      %4977 = vdwg.mxu0
      %v4978 = vadd.f32 %v4812, %v4916
      %v4979 = vadd.f32 %v4813, %v4919
      %v4980 = vadd.f32 %v4814, %v4924
      %v4981 = vadd.f32 %v4815, %v4927
      %v4982 = vadd.f32 %v4816, %v4932
      %v4983 = vadd.f32 %v4817, %v4935
      %v4984 = vadd.f32 %v4818, %v4940
      %v4985 = vadd.f32 %v4819, %v4943
      %v4986 = vadd.f32 %v4820, %v4948
      %v4987 = vadd.f32 %v4821, %v4951
      %v4988 = vadd.f32 %v4822, %v4956
      %v4989 = vadd.f32 %v4823, %v4959
      %v4990 = vadd.f32 %v4824, %v4964
      %v4991 = vadd.f32 %v4825, %v4967
      %v4992 = vadd.f32 %v4826, %v4972
      %v4993 = vadd.f32 %v4827, %v4975
      %v4994 = vld [vmem:[%s5] sm:$0x1]
      %v4996 = vlaneseq
      %v4997 = vshrl.u32 %v4996, 7
      %v4998 = vsub.s32 0, %v4997
      %v4999 = vrot.slane %v4994, %v4998
      %v5001 = vmul.f32 %v4978, %v4999
      %v5002 = vmul.f32 %v4979, %v4999
      %v5003 = vmul.f32 %v4980, %v4999
      %v5004 = vmul.f32 %v4981, %v4999
      %v5005 = vmul.f32 %v4982, %v4999
      %v5006 = vmul.f32 %v4983, %v4999
      %v5007 = vmul.f32 %v4984, %v4999
      %v5008 = vmul.f32 %v4985, %v4999
      %v5009 = vmul.f32 %v4986, %v4999
      %v5010 = vmul.f32 %v4987, %v4999
      %v5011 = vmul.f32 %v4988, %v4999
      %v5012 = vmul.f32 %v4989, %v4999
      %v5013 = vmul.f32 %v4990, %v4999
      %v5014 = vmul.f32 %v4991, %v4999
      %v5015 = vmul.f32 %v4992, %v4999
      %v5016 = vmul.f32 %v4993, %v4999
      %v5017 = vld [vmem:[%s6] sm:$0x1]
      %v5019 = vlaneseq
      %v5020 = vshrl.u32 %v5019, 7
      %v5021 = vsub.s32 0, %v5020
      %v5022 = vrot.slane %v5017, %v5021
      %v5024 = vadd.f32 %v5001, %v5022
      %v5025 = vadd.f32 %v5002, %v5022
      %v5026 = vadd.f32 %v5003, %v5022
      %v5027 = vadd.f32 %v5004, %v5022
      %v5028 = vadd.f32 %v5005, %v5022
      %v5029 = vadd.f32 %v5006, %v5022
      %v5030 = vadd.f32 %v5007, %v5022
      %v5031 = vadd.f32 %v5008, %v5022
      %v5032 = vadd.f32 %v5009, %v5022
      %v5033 = vadd.f32 %v5010, %v5022
      %v5034 = vadd.f32 %v5011, %v5022
      %v5035 = vadd.f32 %v5012, %v5022
      %v5036 = vadd.f32 %v5013, %v5022
      %v5037 = vadd.f32 %v5014, %v5022
      %v5038 = vadd.f32 %v5015, %v5022
      %v5039 = vadd.f32 %v5016, %v5022
      %v5040 = vld [vmem:[%s273] sm:$0xff]
      %v5041 = vld [vmem:[%s273 + $0x8] sm:$0xff]
      %v5042 = vld [vmem:[%s273 + $0x10] sm:$0xff]
      %v5043 = vld [vmem:[%s273 + $0x18] sm:$0xff]
      %v5044 = vld [vmem:[%s273 + $0x20] sm:$0xff]
      %v5045 = vld [vmem:[%s273 + $0x28] sm:$0xff]
      %v5046 = vld [vmem:[%s273 + $0x30] sm:$0xff]
      %v5047 = vld [vmem:[%s273 + $0x38] sm:$0xff]
      %v5048 = vld [vmem:[%s273 + $0x40] sm:$0xff]
      %v5049 = vld [vmem:[%s273 + $0x48] sm:$0xff]
      %v5050 = vld [vmem:[%s273 + $0x50] sm:$0xff]
      %v5051 = vld [vmem:[%s273 + $0x58] sm:$0xff]
      %v5052 = vld [vmem:[%s273 + $0x60] sm:$0xff]
      %v5053 = vld [vmem:[%s273 + $0x68] sm:$0xff]
      %v5054 = vld [vmem:[%s273 + $0x70] sm:$0xff]
      %v5055 = vld [vmem:[%s273 + $0x78] sm:$0xff]
      %v5056 = vadd.f32 %v5024, %v5040
      %v5057 = vadd.f32 %v5025, %v5041
      %v5058 = vadd.f32 %v5026, %v5042
      %v5059 = vadd.f32 %v5027, %v5043
      %v5060 = vadd.f32 %v5028, %v5044
      %v5061 = vadd.f32 %v5029, %v5045
      %v5062 = vadd.f32 %v5030, %v5046
      %v5063 = vadd.f32 %v5031, %v5047
      %v5064 = vadd.f32 %v5032, %v5048
      %v5065 = vadd.f32 %v5033, %v5049
      %v5066 = vadd.f32 %v5034, %v5050
      %v5067 = vadd.f32 %v5035, %v5051
      %v5068 = vadd.f32 %v5036, %v5052
      %v5069 = vadd.f32 %v5037, %v5053
      %v5070 = vadd.f32 %v5038, %v5054
      %v5071 = vadd.f32 %v5039, %v5055
      %v5072 = vmax.f32 %v5056, 0.0
      %v5073 = vmax.f32 %v5057, 0.0
      %v5074 = vmax.f32 %v5058, 0.0
      %v5075 = vmax.f32 %v5059, 0.0
      %v5076 = vmax.f32 %v5060, 0.0
      %v5077 = vmax.f32 %v5061, 0.0
      %v5078 = vmax.f32 %v5062, 0.0
      %v5079 = vmax.f32 %v5063, 0.0
      %v5080 = vmax.f32 %v5064, 0.0
      %v5081 = vmax.f32 %v5065, 0.0
      %v5082 = vmax.f32 %v5066, 0.0
      %v5083 = vmax.f32 %v5067, 0.0
      %v5084 = vmax.f32 %v5068, 0.0
      %v5085 = vmax.f32 %v5069, 0.0
      %v5086 = vmax.f32 %v5070, 0.0
      %v5087 = vmax.f32 %v5071, 0.0
      %5088 = vst.msk [vmem:[%s278] sm:$0xff] %vm280, %v5072
      %5089 = vst.msk [vmem:[%s278 + $0x8] sm:$0xff] %vm280, %v5073
      %5090 = vst.msk [vmem:[%s278 + $0x10] sm:$0xff] %vm280, %v5074
      %5091 = vst.msk [vmem:[%s278 + $0x18] sm:$0xff] %vm280, %v5075
      %5092 = vst.msk [vmem:[%s278 + $0x20] sm:$0xff] %vm280, %v5076
      %5093 = vst.msk [vmem:[%s278 + $0x28] sm:$0xff] %vm280, %v5077
      %5094 = vst.msk [vmem:[%s278 + $0x30] sm:$0xff] %vm280, %v5078
      %5095 = vst.msk [vmem:[%s278 + $0x38] sm:$0xff] %vm280, %v5079
      %5096 = vst.msk [vmem:[%s278 + $0x40] sm:$0xff] %vm280, %v5080
      %5097 = vst.msk [vmem:[%s278 + $0x48] sm:$0xff] %vm280, %v5081
      %5098 = vst.msk [vmem:[%s278 + $0x50] sm:$0xff] %vm280, %v5082
      %5099 = vst.msk [vmem:[%s278 + $0x58] sm:$0xff] %vm280, %v5083
      %5100 = vst.msk [vmem:[%s278 + $0x60] sm:$0xff] %vm280, %v5084
      %5101 = vst.msk [vmem:[%s278 + $0x68] sm:$0xff] %vm280, %v5085
      %5102 = vst.msk [vmem:[%s278 + $0x70] sm:$0xff] %vm280, %v5086
      %5103 = vst.msk [vmem:[%s278 + $0x78] sm:$0xff] %vm280, %v5087
      %s5104 = scalar_lea.vmem [#allocation3], 192
      %v5105 = vld [vmem:[%s5104] sm:$0xff]
      %v5106 = vld [vmem:[%s5104 + $0x8] sm:$0xff]
      %v5107 = vld [vmem:[%s5104 + $0x18] sm:$0xff]
      %v5108 = vld [vmem:[%s5104 + $0x20] sm:$0xff]
      %v5109 = vld [vmem:[%s5104 + $0x30] sm:$0xff]
      %v5110 = vld [vmem:[%s5104 + $0x38] sm:$0xff]
      %v5111 = vld [vmem:[%s5104 + $0x48] sm:$0xff]
      %v5112 = vld [vmem:[%s5104 + $0x50] sm:$0xff]
      %v5113 = vld [vmem:[%s5104 + $0x60] sm:$0xff]
      %v5114 = vld [vmem:[%s5104 + $0x68] sm:$0xff]
      %v5115 = vld [vmem:[%s5104 + $0x78] sm:$0xff]
      %v5116 = vld [vmem:[%s5104 + $0x80] sm:$0xff]
      %v5117 = vld [vmem:[%s5104 + $0x90] sm:$0xff]
      %v5118 = vld [vmem:[%s5104 + $0x98] sm:$0xff]
      %v5119 = vld [vmem:[%s5104 + $0xa8] sm:$0xff]
      %v5120 = vld [vmem:[%s5104 + $0xb0] sm:$0xff]
      %v5121 = vpack.c.bf16 %v5106, %v5105
      %v5122 = vpack.c.bf16 %v5108, %v5107
      %v5123 = vpack.c.bf16 %v5110, %v5109
      %v5124 = vpack.c.bf16 %v5112, %v5111
      %v5125 = vpack.c.bf16 %v5114, %v5113
      %v5126 = vpack.c.bf16 %v5116, %v5115
      %v5127 = vpack.c.bf16 %v5118, %v5117
      %v5128 = vpack.c.bf16 %v5120, %v5119
      %v5129 = vld [vmem:[%s2] sm:$0x3]
      %v5130 = vld [vmem:[%s5104 + $0x1] sm:$0xff]
      %v5131 = vld [vmem:[%s5104 + $0x9] sm:$0xff]
      %v5132 = vld [vmem:[%s5104 + $0x19] sm:$0xff]
      %v5133 = vld [vmem:[%s5104 + $0x21] sm:$0xff]
      %v5134 = vld [vmem:[%s5104 + $0x31] sm:$0xff]
      %v5135 = vld [vmem:[%s5104 + $0x39] sm:$0xff]
      %v5136 = vld [vmem:[%s5104 + $0x49] sm:$0xff]
      %v5137 = vld [vmem:[%s5104 + $0x51] sm:$0xff]
      %v5138 = vld [vmem:[%s5104 + $0x61] sm:$0xff]
      %v5139 = vld [vmem:[%s5104 + $0x69] sm:$0xff]
      %v5140 = vld [vmem:[%s5104 + $0x79] sm:$0xff]
      %v5141 = vld [vmem:[%s5104 + $0x81] sm:$0xff]
      %v5142 = vld [vmem:[%s5104 + $0x91] sm:$0xff]
      %v5143 = vld [vmem:[%s5104 + $0x99] sm:$0xff]
      %v5144 = vld [vmem:[%s5104 + $0xa9] sm:$0xff]
      %v5145 = vld [vmem:[%s5104 + $0xb1] sm:$0xff]
      %v5146 = vpack.c.bf16 %v5131, %v5130
      %v5147 = vpack.c.bf16 %v5133, %v5132
      %v5148 = vpack.c.bf16 %v5135, %v5134
      %v5149 = vpack.c.bf16 %v5137, %v5136
      %v5150 = vpack.c.bf16 %v5139, %v5138
      %v5151 = vpack.c.bf16 %v5141, %v5140
      %v5152 = vpack.c.bf16 %v5143, %v5142
      %v5153 = vpack.c.bf16 %v5145, %v5144
      %v5154 = vld [vmem:[%s3581] sm:$0x3]
      %v5156 = vsel %vm280, %v5146, 0
      %v5159 = vsel %vm280, %v5147, 0
      %v5162 = vsel %vm280, %v5148, 0
      %v5165 = vsel %vm280, %v5149, 0
      %v5168 = vsel %vm280, %v5150, 0
      %v5171 = vsel %vm280, %v5151, 0
      %v5174 = vsel %vm280, %v5152, 0
      %v5177 = vsel %vm280, %v5153, 0
      %v5180 = vsel %vm530, %v5154, 0
      %5182 = vmatprep.subr.bf16.mxu0 0
      %5183 = vmatpush1.bf16.msra.mxu0 %v5180
      %5184 = vmatprep.subr.bf16.mxu0 0
      %5185 = vmatpush1.bf16.msra.mxu0 0
      %5186 = vmatprep.subr.bf16.mxu0 0
      %5187 = vmatpush1.bf16.msra.mxu0 0
      %5188 = vmatprep.subr.bf16.mxu0 0
      %5189 = vmatpush1.bf16.msra.mxu0 0
      %5190 = vmatprep.subr.bf16.mxu0 0
      %5191 = vmatpush1.bf16.msra.mxu0 0
      %5192 = vmatprep.subr.bf16.mxu0 0
      %5193 = vmatpush1.bf16.msra.mxu0 0
      %5194 = vmatprep.subr.bf16.mxu0 0
      %5195 = vmatpush1.bf16.msra.mxu0 0
      %5196 = vmatprep.subr.bf16.mxu0 0
      %5197 = vmatpush1.bf16.msra.mxu0 0
      %5198 = vmatprep.subr.bf16.mxu0 0
      %5199 = vmatpush1.bf16.msra.mxu0 0
      %5200 = vmatprep.subr.bf16.mxu0 0
      %5201 = vmatpush1.bf16.msra.mxu0 0
      %5202 = vmatprep.subr.bf16.mxu0 0
      %5203 = vmatpush1.bf16.msra.mxu0 0
      %5204 = vmatprep.subr.bf16.mxu0 0
      %5205 = vmatpush1.bf16.msra.mxu0 0
      %5206 = vmatprep.subr.bf16.mxu0 0
      %5207 = vmatpush1.bf16.msra.mxu0 0
      %5208 = vmatprep.subr.bf16.mxu0 0
      %5209 = vmatpush1.bf16.msra.mxu0 0
      %5210 = vmatprep.subr.bf16.mxu0 0
      %5211 = vmatpush1.bf16.msra.mxu0 0
      %5212 = vmatprep.subr.bf16.mxu0 0
      %5213 = vmatpush1.bf16.msra.mxu0 0
      %5214 = vmatprep.mubr.bf16.mxu0 0
      %5215 = vmatmul.mubr.bf16.gmra.mrb[0].mxu0 %v5156
      %v5216 = vpop.f32.mrb[0].mxu0
      %v5217 = vadd.f32 0.0, %v5216
      %v5218 = vpop.f32.mrb[0].mxu0
      %v5219 = vpop.f32.mrb[0].mxu0
      %v5220 = vadd.f32 0.0, %v5219
      %v5221 = vpop.f32.mrb[0].mxu0
      %5222 = vmatprep.mubr.bf16.mxu0 0
      %5223 = vmatmul.mubr.bf16.gmra.mrb[0].mxu0 %v5159
      %v5224 = vpop.f32.mrb[0].mxu0
      %v5225 = vadd.f32 0.0, %v5224
      %v5226 = vpop.f32.mrb[0].mxu0
      %v5227 = vpop.f32.mrb[0].mxu0
      %v5228 = vadd.f32 0.0, %v5227
      %v5229 = vpop.f32.mrb[0].mxu0
      %5230 = vmatprep.mubr.bf16.mxu0 0
      %5231 = vmatmul.mubr.bf16.gmra.mrb[0].mxu0 %v5162
      %v5232 = vpop.f32.mrb[0].mxu0
      %v5233 = vadd.f32 0.0, %v5232
      %v5234 = vpop.f32.mrb[0].mxu0
      %v5235 = vpop.f32.mrb[0].mxu0
      %v5236 = vadd.f32 0.0, %v5235
      %v5237 = vpop.f32.mrb[0].mxu0
      %5238 = vmatprep.mubr.bf16.mxu0 0
      %5239 = vmatmul.mubr.bf16.gmra.mrb[0].mxu0 %v5165
      %v5240 = vpop.f32.mrb[0].mxu0
      %v5241 = vadd.f32 0.0, %v5240
      %v5242 = vpop.f32.mrb[0].mxu0
      %v5243 = vpop.f32.mrb[0].mxu0
      %v5244 = vadd.f32 0.0, %v5243
      %v5245 = vpop.f32.mrb[0].mxu0
      %5246 = vmatprep.mubr.bf16.mxu0 0
      %5247 = vmatmul.mubr.bf16.gmra.mrb[0].mxu0 %v5168
      %v5248 = vpop.f32.mrb[0].mxu0
      %v5249 = vadd.f32 0.0, %v5248
      %v5250 = vpop.f32.mrb[0].mxu0
      %v5251 = vpop.f32.mrb[0].mxu0
      %v5252 = vadd.f32 0.0, %v5251
      %v5253 = vpop.f32.mrb[0].mxu0
      %5254 = vmatprep.mubr.bf16.mxu0 0
      %5255 = vmatmul.mubr.bf16.gmra.mrb[0].mxu0 %v5171
      %v5256 = vpop.f32.mrb[0].mxu0
      %v5257 = vadd.f32 0.0, %v5256
      %v5258 = vpop.f32.mrb[0].mxu0
      %v5259 = vpop.f32.mrb[0].mxu0
      %v5260 = vadd.f32 0.0, %v5259
      %v5261 = vpop.f32.mrb[0].mxu0
      %5262 = vmatprep.mubr.bf16.mxu0 0
      %5263 = vmatmul.mubr.bf16.gmra.mrb[0].mxu0 %v5174
      %v5264 = vpop.f32.mrb[0].mxu0
      %v5265 = vadd.f32 0.0, %v5264
      %v5266 = vpop.f32.mrb[0].mxu0
      %v5267 = vpop.f32.mrb[0].mxu0
      %v5268 = vadd.f32 0.0, %v5267
      %v5269 = vpop.f32.mrb[0].mxu0
      %5270 = vmatprep.mubr.bf16.mxu0 0
      %5271 = vmatmul.mubr.bf16.gmra.mrb[0].mxu0 %v5177
      %v5272 = vpop.f32.mrb[0].mxu0
      %v5273 = vadd.f32 0.0, %v5272
      %v5274 = vpop.f32.mrb[0].mxu0
      %v5275 = vpop.f32.mrb[0].mxu0
      %v5276 = vadd.f32 0.0, %v5275
      %v5277 = vpop.f32.mrb[0].mxu0
      %5278 = vdwg.mxu0
      %v5280 = vsel %vm280, %v5121, 0
      %v5283 = vsel %vm280, %v5122, 0
      %v5286 = vsel %vm280, %v5123, 0
      %v5289 = vsel %vm280, %v5124, 0
      %v5292 = vsel %vm280, %v5125, 0
      %v5295 = vsel %vm280, %v5126, 0
      %v5298 = vsel %vm280, %v5127, 0
      %v5301 = vsel %vm280, %v5128, 0
      %v5304 = vsel %vm530, %v5129, 0
      %5306 = vmatprep.subr.bf16.mxu0 0
      %5307 = vmatpush1.bf16.msra.mxu0 %v5304
      %5308 = vmatprep.subr.bf16.mxu0 0
      %5309 = vmatpush1.bf16.msra.mxu0 0
      %5310 = vmatprep.subr.bf16.mxu0 0
      %5311 = vmatpush1.bf16.msra.mxu0 0
      %5312 = vmatprep.subr.bf16.mxu0 0
      %5313 = vmatpush1.bf16.msra.mxu0 0
      %5314 = vmatprep.subr.bf16.mxu0 0
      %5315 = vmatpush1.bf16.msra.mxu0 0
      %5316 = vmatprep.subr.bf16.mxu0 0
      %5317 = vmatpush1.bf16.msra.mxu0 0
      %5318 = vmatprep.subr.bf16.mxu0 0
      %5319 = vmatpush1.bf16.msra.mxu0 0
      %5320 = vmatprep.subr.bf16.mxu0 0
      %5321 = vmatpush1.bf16.msra.mxu0 0
      %5322 = vmatprep.subr.bf16.mxu0 0
      %5323 = vmatpush1.bf16.msra.mxu0 0
      %5324 = vmatprep.subr.bf16.mxu0 0
      %5325 = vmatpush1.bf16.msra.mxu0 0
      %5326 = vmatprep.subr.bf16.mxu0 0
      %5327 = vmatpush1.bf16.msra.mxu0 0
      %5328 = vmatprep.subr.bf16.mxu0 0
      %5329 = vmatpush1.bf16.msra.mxu0 0
      %5330 = vmatprep.subr.bf16.mxu0 0
      %5331 = vmatpush1.bf16.msra.mxu0 0
      %5332 = vmatprep.subr.bf16.mxu0 0
      %5333 = vmatpush1.bf16.msra.mxu0 0
      %5334 = vmatprep.subr.bf16.mxu0 0
      %5335 = vmatpush1.bf16.msra.mxu0 0
      %5336 = vmatprep.subr.bf16.mxu0 0
      %5337 = vmatpush1.bf16.msra.mxu0 0
      %5338 = vmatprep.mubr.bf16.mxu0 0
      %5339 = vmatmul.mubr.bf16.gmra.mrb[0].mxu0 %v5280
      %v5340 = vpop.f32.mrb[0].mxu0
      %v5341 = vadd.f32 %v5217, %v5340
      %v5342 = vpop.f32.mrb[0].mxu0
      %v5343 = vpop.f32.mrb[0].mxu0
      %v5344 = vadd.f32 %v5220, %v5343
      %v5345 = vpop.f32.mrb[0].mxu0
      %5346 = vmatprep.mubr.bf16.mxu0 0
      %5347 = vmatmul.mubr.bf16.gmra.mrb[0].mxu0 %v5283
      %v5348 = vpop.f32.mrb[0].mxu0
      %v5349 = vadd.f32 %v5225, %v5348
      %v5350 = vpop.f32.mrb[0].mxu0
      %v5351 = vpop.f32.mrb[0].mxu0
      %v5352 = vadd.f32 %v5228, %v5351
      %v5353 = vpop.f32.mrb[0].mxu0
      %5354 = vmatprep.mubr.bf16.mxu0 0
      %5355 = vmatmul.mubr.bf16.gmra.mrb[0].mxu0 %v5286
      %v5356 = vpop.f32.mrb[0].mxu0
      %v5357 = vadd.f32 %v5233, %v5356
      %v5358 = vpop.f32.mrb[0].mxu0
      %v5359 = vpop.f32.mrb[0].mxu0
      %v5360 = vadd.f32 %v5236, %v5359
      %v5361 = vpop.f32.mrb[0].mxu0
      %5362 = vmatprep.mubr.bf16.mxu0 0
      %5363 = vmatmul.mubr.bf16.gmra.mrb[0].mxu0 %v5289
      %v5364 = vpop.f32.mrb[0].mxu0
      %v5365 = vadd.f32 %v5241, %v5364
      %v5366 = vpop.f32.mrb[0].mxu0
      %v5367 = vpop.f32.mrb[0].mxu0
      %v5368 = vadd.f32 %v5244, %v5367
      %v5369 = vpop.f32.mrb[0].mxu0
      %5370 = vmatprep.mubr.bf16.mxu0 0
      %5371 = vmatmul.mubr.bf16.gmra.mrb[0].mxu0 %v5292
      %v5372 = vpop.f32.mrb[0].mxu0
      %v5373 = vadd.f32 %v5249, %v5372
      %v5374 = vpop.f32.mrb[0].mxu0
      %v5375 = vpop.f32.mrb[0].mxu0
      %v5376 = vadd.f32 %v5252, %v5375
      %v5377 = vpop.f32.mrb[0].mxu0
      %5378 = vmatprep.mubr.bf16.mxu0 0
      %5379 = vmatmul.mubr.bf16.gmra.mrb[0].mxu0 %v5295
      %v5380 = vpop.f32.mrb[0].mxu0
      %v5381 = vadd.f32 %v5257, %v5380
      %v5382 = vpop.f32.mrb[0].mxu0
      %v5383 = vpop.f32.mrb[0].mxu0
      %v5384 = vadd.f32 %v5260, %v5383
      %v5385 = vpop.f32.mrb[0].mxu0
      %5386 = vmatprep.mubr.bf16.mxu0 0
      %5387 = vmatmul.mubr.bf16.gmra.mrb[0].mxu0 %v5298
      %v5388 = vpop.f32.mrb[0].mxu0
      %v5389 = vadd.f32 %v5265, %v5388
      %v5390 = vpop.f32.mrb[0].mxu0
      %v5391 = vpop.f32.mrb[0].mxu0
      %v5392 = vadd.f32 %v5268, %v5391
      %v5393 = vpop.f32.mrb[0].mxu0
      %5394 = vmatprep.mubr.bf16.mxu0 0
      %5395 = vmatmul.mubr.bf16.gmra.mrb[0].mxu0 %v5301
      %v5396 = vpop.f32.mrb[0].mxu0
      %v5397 = vadd.f32 %v5273, %v5396
      %v5398 = vpop.f32.mrb[0].mxu0
      %v5399 = vpop.f32.mrb[0].mxu0
      %v5400 = vadd.f32 %v5276, %v5399
      %v5401 = vpop.f32.mrb[0].mxu0
      %5402 = vdwg.mxu0
      %v5403 = vld [vmem:[%s5104 + $0x2] sm:$0xff]
      %v5404 = vld [vmem:[%s5104 + $0xa] sm:$0xff]
      %v5405 = vld [vmem:[%s5104 + $0x1a] sm:$0xff]
      %v5406 = vld [vmem:[%s5104 + $0x22] sm:$0xff]
      %v5407 = vld [vmem:[%s5104 + $0x32] sm:$0xff]
      %v5408 = vld [vmem:[%s5104 + $0x3a] sm:$0xff]
      %v5409 = vld [vmem:[%s5104 + $0x4a] sm:$0xff]
      %v5410 = vld [vmem:[%s5104 + $0x52] sm:$0xff]
      %v5411 = vld [vmem:[%s5104 + $0x62] sm:$0xff]
      %v5412 = vld [vmem:[%s5104 + $0x6a] sm:$0xff]
      %v5413 = vld [vmem:[%s5104 + $0x7a] sm:$0xff]
      %v5414 = vld [vmem:[%s5104 + $0x82] sm:$0xff]
      %v5415 = vld [vmem:[%s5104 + $0x92] sm:$0xff]
      %v5416 = vld [vmem:[%s5104 + $0x9a] sm:$0xff]
      %v5417 = vld [vmem:[%s5104 + $0xaa] sm:$0xff]
      %v5418 = vld [vmem:[%s5104 + $0xb2] sm:$0xff]
      %v5419 = vpack.c.bf16 %v5404, %v5403
      %v5420 = vpack.c.bf16 %v5406, %v5405
      %v5421 = vpack.c.bf16 %v5408, %v5407
      %v5422 = vpack.c.bf16 %v5410, %v5409
      %v5423 = vpack.c.bf16 %v5412, %v5411
      %v5424 = vpack.c.bf16 %v5414, %v5413
      %v5425 = vpack.c.bf16 %v5416, %v5415
      %v5426 = vpack.c.bf16 %v5418, %v5417
      %v5427 = vld [vmem:[%s3855] sm:$0x3]
      %v5429 = vsel %vm280, %v5419, 0
      %v5432 = vsel %vm280, %v5420, 0
      %v5435 = vsel %vm280, %v5421, 0
      %v5438 = vsel %vm280, %v5422, 0
      %v5441 = vsel %vm280, %v5423, 0
      %v5444 = vsel %vm280, %v5424, 0
      %v5447 = vsel %vm280, %v5425, 0
      %v5450 = vsel %vm280, %v5426, 0
      %v5453 = vsel %vm530, %v5427, 0
      %5455 = vmatprep.subr.bf16.mxu0 0
      %5456 = vmatpush1.bf16.msra.mxu0 %v5453
      %5457 = vmatprep.subr.bf16.mxu0 0
      %5458 = vmatpush1.bf16.msra.mxu0 0
      %5459 = vmatprep.subr.bf16.mxu0 0
      %5460 = vmatpush1.bf16.msra.mxu0 0
      %5461 = vmatprep.subr.bf16.mxu0 0
      %5462 = vmatpush1.bf16.msra.mxu0 0
      %5463 = vmatprep.subr.bf16.mxu0 0
      %5464 = vmatpush1.bf16.msra.mxu0 0
      %5465 = vmatprep.subr.bf16.mxu0 0
      %5466 = vmatpush1.bf16.msra.mxu0 0
      %5467 = vmatprep.subr.bf16.mxu0 0
      %5468 = vmatpush1.bf16.msra.mxu0 0
      %5469 = vmatprep.subr.bf16.mxu0 0
      %5470 = vmatpush1.bf16.msra.mxu0 0
      %5471 = vmatprep.subr.bf16.mxu0 0
      %5472 = vmatpush1.bf16.msra.mxu0 0
      %5473 = vmatprep.subr.bf16.mxu0 0
      %5474 = vmatpush1.bf16.msra.mxu0 0
      %5475 = vmatprep.subr.bf16.mxu0 0
      %5476 = vmatpush1.bf16.msra.mxu0 0
      %5477 = vmatprep.subr.bf16.mxu0 0
      %5478 = vmatpush1.bf16.msra.mxu0 0
      %5479 = vmatprep.subr.bf16.mxu0 0
      %5480 = vmatpush1.bf16.msra.mxu0 0
      %5481 = vmatprep.subr.bf16.mxu0 0
      %5482 = vmatpush1.bf16.msra.mxu0 0
      %5483 = vmatprep.subr.bf16.mxu0 0
      %5484 = vmatpush1.bf16.msra.mxu0 0
      %5485 = vmatprep.subr.bf16.mxu0 0
      %5486 = vmatpush1.bf16.msra.mxu0 0
      %5487 = vmatprep.mubr.bf16.mxu0 0
      %5488 = vmatmul.mubr.bf16.gmra.mrb[0].mxu0 %v5429
      %v5489 = vpop.f32.mrb[0].mxu0
      %v5490 = vadd.f32 0.0, %v5489
      %v5491 = vpop.f32.mrb[0].mxu0
      %v5492 = vpop.f32.mrb[0].mxu0
      %v5493 = vadd.f32 0.0, %v5492
      %v5494 = vpop.f32.mrb[0].mxu0
      %5495 = vmatprep.mubr.bf16.mxu0 0
      %5496 = vmatmul.mubr.bf16.gmra.mrb[0].mxu0 %v5432
      %v5497 = vpop.f32.mrb[0].mxu0
      %v5498 = vadd.f32 0.0, %v5497
      %v5499 = vpop.f32.mrb[0].mxu0
      %v5500 = vpop.f32.mrb[0].mxu0
      %v5501 = vadd.f32 0.0, %v5500
      %v5502 = vpop.f32.mrb[0].mxu0
      %5503 = vmatprep.mubr.bf16.mxu0 0
      %5504 = vmatmul.mubr.bf16.gmra.mrb[0].mxu0 %v5435
      %v5505 = vpop.f32.mrb[0].mxu0
      %v5506 = vadd.f32 0.0, %v5505
      %v5507 = vpop.f32.mrb[0].mxu0
      %v5508 = vpop.f32.mrb[0].mxu0
      %v5509 = vadd.f32 0.0, %v5508
      %v5510 = vpop.f32.mrb[0].mxu0
      %5511 = vmatprep.mubr.bf16.mxu0 0
      %5512 = vmatmul.mubr.bf16.gmra.mrb[0].mxu0 %v5438
      %v5513 = vpop.f32.mrb[0].mxu0
      %v5514 = vadd.f32 0.0, %v5513
      %v5515 = vpop.f32.mrb[0].mxu0
      %v5516 = vpop.f32.mrb[0].mxu0
      %v5517 = vadd.f32 0.0, %v5516
      %v5518 = vpop.f32.mrb[0].mxu0
      %5519 = vmatprep.mubr.bf16.mxu0 0
      %5520 = vmatmul.mubr.bf16.gmra.mrb[0].mxu0 %v5441
      %v5521 = vpop.f32.mrb[0].mxu0
      %v5522 = vadd.f32 0.0, %v5521
      %v5523 = vpop.f32.mrb[0].mxu0
      %v5524 = vpop.f32.mrb[0].mxu0
      %v5525 = vadd.f32 0.0, %v5524
      %v5526 = vpop.f32.mrb[0].mxu0
      %5527 = vmatprep.mubr.bf16.mxu0 0
      %5528 = vmatmul.mubr.bf16.gmra.mrb[0].mxu0 %v5444
      %v5529 = vpop.f32.mrb[0].mxu0
      %v5530 = vadd.f32 0.0, %v5529
      %v5531 = vpop.f32.mrb[0].mxu0
      %v5532 = vpop.f32.mrb[0].mxu0
      %v5533 = vadd.f32 0.0, %v5532
      %v5534 = vpop.f32.mrb[0].mxu0
      %5535 = vmatprep.mubr.bf16.mxu0 0
      %5536 = vmatmul.mubr.bf16.gmra.mrb[0].mxu0 %v5447
      %v5537 = vpop.f32.mrb[0].mxu0
      %v5538 = vadd.f32 0.0, %v5537
      %v5539 = vpop.f32.mrb[0].mxu0
      %v5540 = vpop.f32.mrb[0].mxu0
      %v5541 = vadd.f32 0.0, %v5540
      %v5542 = vpop.f32.mrb[0].mxu0
      %5543 = vmatprep.mubr.bf16.mxu0 0
      %5544 = vmatmul.mubr.bf16.gmra.mrb[0].mxu0 %v5450
      %v5545 = vpop.f32.mrb[0].mxu0
      %v5546 = vadd.f32 0.0, %v5545
      %v5547 = vpop.f32.mrb[0].mxu0
      %v5548 = vpop.f32.mrb[0].mxu0
      %v5549 = vadd.f32 0.0, %v5548
      %v5550 = vpop.f32.mrb[0].mxu0
      %5551 = vdwg.mxu0
      %v5552 = vadd.f32 %v5341, %v5490
      %v5553 = vadd.f32 %v5344, %v5493
      %v5554 = vadd.f32 %v5349, %v5498
      %v5555 = vadd.f32 %v5352, %v5501
      %v5556 = vadd.f32 %v5357, %v5506
      %v5557 = vadd.f32 %v5360, %v5509
      %v5558 = vadd.f32 %v5365, %v5514
      %v5559 = vadd.f32 %v5368, %v5517
      %v5560 = vadd.f32 %v5373, %v5522
      %v5561 = vadd.f32 %v5376, %v5525
      %v5562 = vadd.f32 %v5381, %v5530
      %v5563 = vadd.f32 %v5384, %v5533
      %v5564 = vadd.f32 %v5389, %v5538
      %v5565 = vadd.f32 %v5392, %v5541
      %v5566 = vadd.f32 %v5397, %v5546
      %v5567 = vadd.f32 %v5400, %v5549
      %v5568 = vld [vmem:[%s3515] sm:$0xff]
      %v5569 = vld [vmem:[%s3515 + $0x8] sm:$0xff]
      %v5570 = vld [vmem:[%s3515 + $0x18] sm:$0xff]
      %v5571 = vld [vmem:[%s3515 + $0x20] sm:$0xff]
      %v5572 = vld [vmem:[%s3515 + $0x30] sm:$0xff]
      %v5573 = vld [vmem:[%s3515 + $0x38] sm:$0xff]
      %v5574 = vld [vmem:[%s3515 + $0x48] sm:$0xff]
      %v5575 = vld [vmem:[%s3515 + $0x50] sm:$0xff]
      %v5576 = vld [vmem:[%s3515 + $0x60] sm:$0xff]
      %v5577 = vld [vmem:[%s3515 + $0x68] sm:$0xff]
      %v5578 = vld [vmem:[%s3515 + $0x78] sm:$0xff]
      %v5579 = vld [vmem:[%s3515 + $0x80] sm:$0xff]
      %v5580 = vld [vmem:[%s3515 + $0x90] sm:$0xff]
      %v5581 = vld [vmem:[%s3515 + $0x98] sm:$0xff]
      %v5582 = vld [vmem:[%s3515 + $0xa8] sm:$0xff]
      %v5583 = vld [vmem:[%s3515 + $0xb0] sm:$0xff]
      %v5584 = vpack.c.bf16 %v5569, %v5568
      %v5585 = vpack.c.bf16 %v5571, %v5570
      %v5586 = vpack.c.bf16 %v5573, %v5572
      %v5587 = vpack.c.bf16 %v5575, %v5574
      %v5588 = vpack.c.bf16 %v5577, %v5576
      %v5589 = vpack.c.bf16 %v5579, %v5578
      %v5590 = vpack.c.bf16 %v5581, %v5580
      %v5591 = vpack.c.bf16 %v5583, %v5582
      %v5592 = vld [vmem:[%s4021] sm:$0x3]
      %v5594 = vsel %vm280, %v5584, 0
      %v5597 = vsel %vm280, %v5585, 0
      %v5600 = vsel %vm280, %v5586, 0
      %v5603 = vsel %vm280, %v5587, 0
      %v5606 = vsel %vm280, %v5588, 0
      %v5609 = vsel %vm280, %v5589, 0
      %v5612 = vsel %vm280, %v5590, 0
      %v5615 = vsel %vm280, %v5591, 0
      %v5618 = vsel %vm530, %v5592, 0
      %5620 = vmatprep.subr.bf16.mxu0 0
      %5621 = vmatpush1.bf16.msra.mxu0 %v5618
      %5622 = vmatprep.subr.bf16.mxu0 0
      %5623 = vmatpush1.bf16.msra.mxu0 0
      %5624 = vmatprep.subr.bf16.mxu0 0
      %5625 = vmatpush1.bf16.msra.mxu0 0
      %5626 = vmatprep.subr.bf16.mxu0 0
      %5627 = vmatpush1.bf16.msra.mxu0 0
      %5628 = vmatprep.subr.bf16.mxu0 0
      %5629 = vmatpush1.bf16.msra.mxu0 0
      %5630 = vmatprep.subr.bf16.mxu0 0
      %5631 = vmatpush1.bf16.msra.mxu0 0
      %5632 = vmatprep.subr.bf16.mxu0 0
      %5633 = vmatpush1.bf16.msra.mxu0 0
      %5634 = vmatprep.subr.bf16.mxu0 0
      %5635 = vmatpush1.bf16.msra.mxu0 0
      %5636 = vmatprep.subr.bf16.mxu0 0
      %5637 = vmatpush1.bf16.msra.mxu0 0
      %5638 = vmatprep.subr.bf16.mxu0 0
      %5639 = vmatpush1.bf16.msra.mxu0 0
      %5640 = vmatprep.subr.bf16.mxu0 0
      %5641 = vmatpush1.bf16.msra.mxu0 0
      %5642 = vmatprep.subr.bf16.mxu0 0
      %5643 = vmatpush1.bf16.msra.mxu0 0
      %5644 = vmatprep.subr.bf16.mxu0 0
      %5645 = vmatpush1.bf16.msra.mxu0 0
      %5646 = vmatprep.subr.bf16.mxu0 0
      %5647 = vmatpush1.bf16.msra.mxu0 0
      %5648 = vmatprep.subr.bf16.mxu0 0
      %5649 = vmatpush1.bf16.msra.mxu0 0
      %5650 = vmatprep.subr.bf16.mxu0 0
      %5651 = vmatpush1.bf16.msra.mxu0 0
      %5652 = vmatprep.mubr.bf16.mxu0 0
      %5653 = vmatmul.mubr.bf16.gmra.mrb[0].mxu0 %v5594
      %v5654 = vpop.f32.mrb[0].mxu0
      %v5655 = vadd.f32 0.0, %v5654
      %v5656 = vpop.f32.mrb[0].mxu0
      %v5657 = vpop.f32.mrb[0].mxu0
      %v5658 = vadd.f32 0.0, %v5657
      %v5659 = vpop.f32.mrb[0].mxu0
      %5660 = vmatprep.mubr.bf16.mxu0 0
      %5661 = vmatmul.mubr.bf16.gmra.mrb[0].mxu0 %v5597
      %v5662 = vpop.f32.mrb[0].mxu0
      %v5663 = vadd.f32 0.0, %v5662
      %v5664 = vpop.f32.mrb[0].mxu0
      %v5665 = vpop.f32.mrb[0].mxu0
      %v5666 = vadd.f32 0.0, %v5665
      %v5667 = vpop.f32.mrb[0].mxu0
      %5668 = vmatprep.mubr.bf16.mxu0 0
      %5669 = vmatmul.mubr.bf16.gmra.mrb[0].mxu0 %v5600
      %v5670 = vpop.f32.mrb[0].mxu0
      %v5671 = vadd.f32 0.0, %v5670
      %v5672 = vpop.f32.mrb[0].mxu0
      %v5673 = vpop.f32.mrb[0].mxu0
      %v5674 = vadd.f32 0.0, %v5673
      %v5675 = vpop.f32.mrb[0].mxu0
      %5676 = vmatprep.mubr.bf16.mxu0 0
      %5677 = vmatmul.mubr.bf16.gmra.mrb[0].mxu0 %v5603
      %v5678 = vpop.f32.mrb[0].mxu0
      %v5679 = vadd.f32 0.0, %v5678
      %v5680 = vpop.f32.mrb[0].mxu0
      %v5681 = vpop.f32.mrb[0].mxu0
      %v5682 = vadd.f32 0.0, %v5681
      %v5683 = vpop.f32.mrb[0].mxu0
      %5684 = vmatprep.mubr.bf16.mxu0 0
      %5685 = vmatmul.mubr.bf16.gmra.mrb[0].mxu0 %v5606
      %v5686 = vpop.f32.mrb[0].mxu0
      %v5687 = vadd.f32 0.0, %v5686
      %v5688 = vpop.f32.mrb[0].mxu0
      %v5689 = vpop.f32.mrb[0].mxu0
      %v5690 = vadd.f32 0.0, %v5689
      %v5691 = vpop.f32.mrb[0].mxu0
      %5692 = vmatprep.mubr.bf16.mxu0 0
      %5693 = vmatmul.mubr.bf16.gmra.mrb[0].mxu0 %v5609
      %v5694 = vpop.f32.mrb[0].mxu0
      %v5695 = vadd.f32 0.0, %v5694
      %v5696 = vpop.f32.mrb[0].mxu0
      %v5697 = vpop.f32.mrb[0].mxu0
      %v5698 = vadd.f32 0.0, %v5697
      %v5699 = vpop.f32.mrb[0].mxu0
      %5700 = vmatprep.mubr.bf16.mxu0 0
      %5701 = vmatmul.mubr.bf16.gmra.mrb[0].mxu0 %v5612
      %v5702 = vpop.f32.mrb[0].mxu0
      %v5703 = vadd.f32 0.0, %v5702
      %v5704 = vpop.f32.mrb[0].mxu0
      %v5705 = vpop.f32.mrb[0].mxu0
      %v5706 = vadd.f32 0.0, %v5705
      %v5707 = vpop.f32.mrb[0].mxu0
      %5708 = vmatprep.mubr.bf16.mxu0 0
      %5709 = vmatmul.mubr.bf16.gmra.mrb[0].mxu0 %v5615
      %v5710 = vpop.f32.mrb[0].mxu0
      %v5711 = vadd.f32 0.0, %v5710
      %v5712 = vpop.f32.mrb[0].mxu0
      %v5713 = vpop.f32.mrb[0].mxu0
      %v5714 = vadd.f32 0.0, %v5713
      %v5715 = vpop.f32.mrb[0].mxu0
      %5716 = vdwg.mxu0
      %v5717 = vadd.f32 %v5552, %v5655
      %v5718 = vadd.f32 %v5553, %v5658
      %v5719 = vadd.f32 %v5554, %v5663
      %v5720 = vadd.f32 %v5555, %v5666
      %v5721 = vadd.f32 %v5556, %v5671
      %v5722 = vadd.f32 %v5557, %v5674
      %v5723 = vadd.f32 %v5558, %v5679
      %v5724 = vadd.f32 %v5559, %v5682
      %v5725 = vadd.f32 %v5560, %v5687
      %v5726 = vadd.f32 %v5561, %v5690
      %v5727 = vadd.f32 %v5562, %v5695
      %v5728 = vadd.f32 %v5563, %v5698
      %v5729 = vadd.f32 %v5564, %v5703
      %v5730 = vadd.f32 %v5565, %v5706
      %v5731 = vadd.f32 %v5566, %v5711
      %v5732 = vadd.f32 %v5567, %v5714
      %v5733 = vld [vmem:[%s3515 + $0x1] sm:$0xff]
      %v5734 = vld [vmem:[%s3515 + $0x9] sm:$0xff]
      %v5735 = vld [vmem:[%s3515 + $0x19] sm:$0xff]
      %v5736 = vld [vmem:[%s3515 + $0x21] sm:$0xff]
      %v5737 = vld [vmem:[%s3515 + $0x31] sm:$0xff]
      %v5738 = vld [vmem:[%s3515 + $0x39] sm:$0xff]
      %v5739 = vld [vmem:[%s3515 + $0x49] sm:$0xff]
      %v5740 = vld [vmem:[%s3515 + $0x51] sm:$0xff]
      %v5741 = vld [vmem:[%s3515 + $0x61] sm:$0xff]
      %v5742 = vld [vmem:[%s3515 + $0x69] sm:$0xff]
      %v5743 = vld [vmem:[%s3515 + $0x79] sm:$0xff]
      %v5744 = vld [vmem:[%s3515 + $0x81] sm:$0xff]
      %v5745 = vld [vmem:[%s3515 + $0x91] sm:$0xff]
      %v5746 = vld [vmem:[%s3515 + $0x99] sm:$0xff]
      %v5747 = vld [vmem:[%s3515 + $0xa9] sm:$0xff]
      %v5748 = vld [vmem:[%s3515 + $0xb1] sm:$0xff]
      %v5749 = vpack.c.bf16 %v5734, %v5733
      %v5750 = vpack.c.bf16 %v5736, %v5735
      %v5751 = vpack.c.bf16 %v5738, %v5737
      %v5752 = vpack.c.bf16 %v5740, %v5739
      %v5753 = vpack.c.bf16 %v5742, %v5741
      %v5754 = vpack.c.bf16 %v5744, %v5743
      %v5755 = vpack.c.bf16 %v5746, %v5745
      %v5756 = vpack.c.bf16 %v5748, %v5747
      %v5757 = vld [vmem:[%s4187] sm:$0x3]
      %v5759 = vsel %vm280, %v5749, 0
      %v5762 = vsel %vm280, %v5750, 0
      %v5765 = vsel %vm280, %v5751, 0
      %v5768 = vsel %vm280, %v5752, 0
      %v5771 = vsel %vm280, %v5753, 0
      %v5774 = vsel %vm280, %v5754, 0
      %v5777 = vsel %vm280, %v5755, 0
      %v5780 = vsel %vm280, %v5756, 0
      %v5783 = vsel %vm530, %v5757, 0
      %5785 = vmatprep.subr.bf16.mxu0 0
      %5786 = vmatpush1.bf16.msra.mxu0 %v5783
      %5787 = vmatprep.subr.bf16.mxu0 0
      %5788 = vmatpush1.bf16.msra.mxu0 0
      %5789 = vmatprep.subr.bf16.mxu0 0
      %5790 = vmatpush1.bf16.msra.mxu0 0
      %5791 = vmatprep.subr.bf16.mxu0 0
      %5792 = vmatpush1.bf16.msra.mxu0 0
      %5793 = vmatprep.subr.bf16.mxu0 0
      %5794 = vmatpush1.bf16.msra.mxu0 0
      %5795 = vmatprep.subr.bf16.mxu0 0
      %5796 = vmatpush1.bf16.msra.mxu0 0
      %5797 = vmatprep.subr.bf16.mxu0 0
      %5798 = vmatpush1.bf16.msra.mxu0 0
      %5799 = vmatprep.subr.bf16.mxu0 0
      %5800 = vmatpush1.bf16.msra.mxu0 0
      %5801 = vmatprep.subr.bf16.mxu0 0
      %5802 = vmatpush1.bf16.msra.mxu0 0
      %5803 = vmatprep.subr.bf16.mxu0 0
      %5804 = vmatpush1.bf16.msra.mxu0 0
      %5805 = vmatprep.subr.bf16.mxu0 0
      %5806 = vmatpush1.bf16.msra.mxu0 0
      %5807 = vmatprep.subr.bf16.mxu0 0
      %5808 = vmatpush1.bf16.msra.mxu0 0
      %5809 = vmatprep.subr.bf16.mxu0 0
      %5810 = vmatpush1.bf16.msra.mxu0 0
      %5811 = vmatprep.subr.bf16.mxu0 0
      %5812 = vmatpush1.bf16.msra.mxu0 0
      %5813 = vmatprep.subr.bf16.mxu0 0
      %5814 = vmatpush1.bf16.msra.mxu0 0
      %5815 = vmatprep.subr.bf16.mxu0 0
      %5816 = vmatpush1.bf16.msra.mxu0 0
      %5817 = vmatprep.mubr.bf16.mxu0 0
      %5818 = vmatmul.mubr.bf16.gmra.mrb[0].mxu0 %v5759
      %v5819 = vpop.f32.mrb[0].mxu0
      %v5820 = vadd.f32 0.0, %v5819
      %v5821 = vpop.f32.mrb[0].mxu0
      %v5822 = vpop.f32.mrb[0].mxu0
      %v5823 = vadd.f32 0.0, %v5822
      %v5824 = vpop.f32.mrb[0].mxu0
      %5825 = vmatprep.mubr.bf16.mxu0 0
      %5826 = vmatmul.mubr.bf16.gmra.mrb[0].mxu0 %v5762
      %v5827 = vpop.f32.mrb[0].mxu0
      %v5828 = vadd.f32 0.0, %v5827
      %v5829 = vpop.f32.mrb[0].mxu0
      %v5830 = vpop.f32.mrb[0].mxu0
      %v5831 = vadd.f32 0.0, %v5830
      %v5832 = vpop.f32.mrb[0].mxu0
      %5833 = vmatprep.mubr.bf16.mxu0 0
      %5834 = vmatmul.mubr.bf16.gmra.mrb[0].mxu0 %v5765
      %v5835 = vpop.f32.mrb[0].mxu0
      %v5836 = vadd.f32 0.0, %v5835
      %v5837 = vpop.f32.mrb[0].mxu0
      %v5838 = vpop.f32.mrb[0].mxu0
      %v5839 = vadd.f32 0.0, %v5838
      %v5840 = vpop.f32.mrb[0].mxu0
      %5841 = vmatprep.mubr.bf16.mxu0 0
      %5842 = vmatmul.mubr.bf16.gmra.mrb[0].mxu0 %v5768
      %v5843 = vpop.f32.mrb[0].mxu0
      %v5844 = vadd.f32 0.0, %v5843
      %v5845 = vpop.f32.mrb[0].mxu0
      %v5846 = vpop.f32.mrb[0].mxu0
      %v5847 = vadd.f32 0.0, %v5846
      %v5848 = vpop.f32.mrb[0].mxu0
      %5849 = vmatprep.mubr.bf16.mxu0 0
      %5850 = vmatmul.mubr.bf16.gmra.mrb[0].mxu0 %v5771
      %v5851 = vpop.f32.mrb[0].mxu0
      %v5852 = vadd.f32 0.0, %v5851
      %v5853 = vpop.f32.mrb[0].mxu0
      %v5854 = vpop.f32.mrb[0].mxu0
      %v5855 = vadd.f32 0.0, %v5854
      %v5856 = vpop.f32.mrb[0].mxu0
      %5857 = vmatprep.mubr.bf16.mxu0 0
      %5858 = vmatmul.mubr.bf16.gmra.mrb[0].mxu0 %v5774
      %v5859 = vpop.f32.mrb[0].mxu0
      %v5860 = vadd.f32 0.0, %v5859
      %v5861 = vpop.f32.mrb[0].mxu0
      %v5862 = vpop.f32.mrb[0].mxu0
      %v5863 = vadd.f32 0.0, %v5862
      %v5864 = vpop.f32.mrb[0].mxu0
      %5865 = vmatprep.mubr.bf16.mxu0 0
      %5866 = vmatmul.mubr.bf16.gmra.mrb[0].mxu0 %v5777
      %v5867 = vpop.f32.mrb[0].mxu0
      %v5868 = vadd.f32 0.0, %v5867
      %v5869 = vpop.f32.mrb[0].mxu0
      %v5870 = vpop.f32.mrb[0].mxu0
      %v5871 = vadd.f32 0.0, %v5870
      %v5872 = vpop.f32.mrb[0].mxu0
      %5873 = vmatprep.mubr.bf16.mxu0 0
      %5874 = vmatmul.mubr.bf16.gmra.mrb[0].mxu0 %v5780
      %v5875 = vpop.f32.mrb[0].mxu0
      %v5876 = vadd.f32 0.0, %v5875
      %v5877 = vpop.f32.mrb[0].mxu0
      %v5878 = vpop.f32.mrb[0].mxu0
      %v5879 = vadd.f32 0.0, %v5878
      %v5880 = vpop.f32.mrb[0].mxu0
      %5881 = vdwg.mxu0
      %v5882 = vadd.f32 %v5717, %v5820
      %v5883 = vadd.f32 %v5718, %v5823
      %v5884 = vadd.f32 %v5719, %v5828
      %v5885 = vadd.f32 %v5720, %v5831
      %v5886 = vadd.f32 %v5721, %v5836
      %v5887 = vadd.f32 %v5722, %v5839
      %v5888 = vadd.f32 %v5723, %v5844
      %v5889 = vadd.f32 %v5724, %v5847
      %v5890 = vadd.f32 %v5725, %v5852
      %v5891 = vadd.f32 %v5726, %v5855
      %v5892 = vadd.f32 %v5727, %v5860
      %v5893 = vadd.f32 %v5728, %v5863
      %v5894 = vadd.f32 %v5729, %v5868
      %v5895 = vadd.f32 %v5730, %v5871
      %v5896 = vadd.f32 %v5731, %v5876
      %v5897 = vadd.f32 %v5732, %v5879
      %v5898 = vld [vmem:[%s3515 + $0x2] sm:$0xff]
      %v5899 = vld [vmem:[%s3515 + $0xa] sm:$0xff]
      %v5900 = vld [vmem:[%s3515 + $0x1a] sm:$0xff]
      %v5901 = vld [vmem:[%s3515 + $0x22] sm:$0xff]
      %v5902 = vld [vmem:[%s3515 + $0x32] sm:$0xff]
      %v5903 = vld [vmem:[%s3515 + $0x3a] sm:$0xff]
      %v5904 = vld [vmem:[%s3515 + $0x4a] sm:$0xff]
      %v5905 = vld [vmem:[%s3515 + $0x52] sm:$0xff]
      %v5906 = vld [vmem:[%s3515 + $0x62] sm:$0xff]
      %v5907 = vld [vmem:[%s3515 + $0x6a] sm:$0xff]
      %v5908 = vld [vmem:[%s3515 + $0x7a] sm:$0xff]
      %v5909 = vld [vmem:[%s3515 + $0x82] sm:$0xff]
      %v5910 = vld [vmem:[%s3515 + $0x92] sm:$0xff]
      %v5911 = vld [vmem:[%s3515 + $0x9a] sm:$0xff]
      %v5912 = vld [vmem:[%s3515 + $0xaa] sm:$0xff]
      %v5913 = vld [vmem:[%s3515 + $0xb2] sm:$0xff]
      %v5914 = vpack.c.bf16 %v5899, %v5898
      %v5915 = vpack.c.bf16 %v5901, %v5900
      %v5916 = vpack.c.bf16 %v5903, %v5902
      %v5917 = vpack.c.bf16 %v5905, %v5904
      %v5918 = vpack.c.bf16 %v5907, %v5906
      %v5919 = vpack.c.bf16 %v5909, %v5908
      %v5920 = vpack.c.bf16 %v5911, %v5910
      %v5921 = vpack.c.bf16 %v5913, %v5912
      %v5922 = vld [vmem:[%s4353] sm:$0x3]
      %v5924 = vsel %vm280, %v5914, 0
      %v5927 = vsel %vm280, %v5915, 0
      %v5930 = vsel %vm280, %v5916, 0
      %v5933 = vsel %vm280, %v5917, 0
      %v5936 = vsel %vm280, %v5918, 0
      %v5939 = vsel %vm280, %v5919, 0
      %v5942 = vsel %vm280, %v5920, 0
      %v5945 = vsel %vm280, %v5921, 0
      %v5948 = vsel %vm530, %v5922, 0
      %5950 = vmatprep.subr.bf16.mxu0 0
      %5951 = vmatpush1.bf16.msra.mxu0 %v5948
      %5952 = vmatprep.subr.bf16.mxu0 0
      %5953 = vmatpush1.bf16.msra.mxu0 0
      %5954 = vmatprep.subr.bf16.mxu0 0
      %5955 = vmatpush1.bf16.msra.mxu0 0
      %5956 = vmatprep.subr.bf16.mxu0 0
      %5957 = vmatpush1.bf16.msra.mxu0 0
      %5958 = vmatprep.subr.bf16.mxu0 0
      %5959 = vmatpush1.bf16.msra.mxu0 0
      %5960 = vmatprep.subr.bf16.mxu0 0
      %5961 = vmatpush1.bf16.msra.mxu0 0
      %5962 = vmatprep.subr.bf16.mxu0 0
      %5963 = vmatpush1.bf16.msra.mxu0 0
      %5964 = vmatprep.subr.bf16.mxu0 0
      %5965 = vmatpush1.bf16.msra.mxu0 0
      %5966 = vmatprep.subr.bf16.mxu0 0
      %5967 = vmatpush1.bf16.msra.mxu0 0
      %5968 = vmatprep.subr.bf16.mxu0 0
      %5969 = vmatpush1.bf16.msra.mxu0 0
      %5970 = vmatprep.subr.bf16.mxu0 0
      %5971 = vmatpush1.bf16.msra.mxu0 0
      %5972 = vmatprep.subr.bf16.mxu0 0
      %5973 = vmatpush1.bf16.msra.mxu0 0
      %5974 = vmatprep.subr.bf16.mxu0 0
      %5975 = vmatpush1.bf16.msra.mxu0 0
      %5976 = vmatprep.subr.bf16.mxu0 0
      %5977 = vmatpush1.bf16.msra.mxu0 0
      %5978 = vmatprep.subr.bf16.mxu0 0
      %5979 = vmatpush1.bf16.msra.mxu0 0
      %5980 = vmatprep.subr.bf16.mxu0 0
      %5981 = vmatpush1.bf16.msra.mxu0 0
      %5982 = vmatprep.mubr.bf16.mxu0 0
      %5983 = vmatmul.mubr.bf16.gmra.mrb[0].mxu0 %v5924
      %v5984 = vpop.f32.mrb[0].mxu0
      %v5985 = vadd.f32 0.0, %v5984
      %v5986 = vpop.f32.mrb[0].mxu0
      %v5987 = vpop.f32.mrb[0].mxu0
      %v5988 = vadd.f32 0.0, %v5987
      %v5989 = vpop.f32.mrb[0].mxu0
      %5990 = vmatprep.mubr.bf16.mxu0 0
      %5991 = vmatmul.mubr.bf16.gmra.mrb[0].mxu0 %v5927
      %v5992 = vpop.f32.mrb[0].mxu0
      %v5993 = vadd.f32 0.0, %v5992
      %v5994 = vpop.f32.mrb[0].mxu0
      %v5995 = vpop.f32.mrb[0].mxu0
      %v5996 = vadd.f32 0.0, %v5995
      %v5997 = vpop.f32.mrb[0].mxu0
      %5998 = vmatprep.mubr.bf16.mxu0 0
      %5999 = vmatmul.mubr.bf16.gmra.mrb[0].mxu0 %v5930
      %v6000 = vpop.f32.mrb[0].mxu0
      %v6001 = vadd.f32 0.0, %v6000
      %v6002 = vpop.f32.mrb[0].mxu0
      %v6003 = vpop.f32.mrb[0].mxu0
      %v6004 = vadd.f32 0.0, %v6003
      %v6005 = vpop.f32.mrb[0].mxu0
      %6006 = vmatprep.mubr.bf16.mxu0 0
      %6007 = vmatmul.mubr.bf16.gmra.mrb[0].mxu0 %v5933
      %v6008 = vpop.f32.mrb[0].mxu0
      %v6009 = vadd.f32 0.0, %v6008
      %v6010 = vpop.f32.mrb[0].mxu0
      %v6011 = vpop.f32.mrb[0].mxu0
      %v6012 = vadd.f32 0.0, %v6011
      %v6013 = vpop.f32.mrb[0].mxu0
      %6014 = vmatprep.mubr.bf16.mxu0 0
      %6015 = vmatmul.mubr.bf16.gmra.mrb[0].mxu0 %v5936
      %v6016 = vpop.f32.mrb[0].mxu0
      %v6017 = vadd.f32 0.0, %v6016
      %v6018 = vpop.f32.mrb[0].mxu0
      %v6019 = vpop.f32.mrb[0].mxu0
      %v6020 = vadd.f32 0.0, %v6019
      %v6021 = vpop.f32.mrb[0].mxu0
      %6022 = vmatprep.mubr.bf16.mxu0 0
      %6023 = vmatmul.mubr.bf16.gmra.mrb[0].mxu0 %v5939
      %v6024 = vpop.f32.mrb[0].mxu0
      %v6025 = vadd.f32 0.0, %v6024
      %v6026 = vpop.f32.mrb[0].mxu0
      %v6027 = vpop.f32.mrb[0].mxu0
      %v6028 = vadd.f32 0.0, %v6027
      %v6029 = vpop.f32.mrb[0].mxu0
      %6030 = vmatprep.mubr.bf16.mxu0 0
      %6031 = vmatmul.mubr.bf16.gmra.mrb[0].mxu0 %v5942
      %v6032 = vpop.f32.mrb[0].mxu0
      %v6033 = vadd.f32 0.0, %v6032
      %v6034 = vpop.f32.mrb[0].mxu0
      %v6035 = vpop.f32.mrb[0].mxu0
      %v6036 = vadd.f32 0.0, %v6035
      %v6037 = vpop.f32.mrb[0].mxu0
      %6038 = vmatprep.mubr.bf16.mxu0 0
      %6039 = vmatmul.mubr.bf16.gmra.mrb[0].mxu0 %v5945
      %v6040 = vpop.f32.mrb[0].mxu0
      %v6041 = vadd.f32 0.0, %v6040
      %v6042 = vpop.f32.mrb[0].mxu0
      %v6043 = vpop.f32.mrb[0].mxu0
      %v6044 = vadd.f32 0.0, %v6043
      %v6045 = vpop.f32.mrb[0].mxu0
      %6046 = vdwg.mxu0
      %v6047 = vadd.f32 %v5882, %v5985
      %v6048 = vadd.f32 %v5883, %v5988
      %v6049 = vadd.f32 %v5884, %v5993
      %v6050 = vadd.f32 %v5885, %v5996
      %v6051 = vadd.f32 %v5886, %v6001
      %v6052 = vadd.f32 %v5887, %v6004
      %v6053 = vadd.f32 %v5888, %v6009
      %v6054 = vadd.f32 %v5889, %v6012
      %v6055 = vadd.f32 %v5890, %v6017
      %v6056 = vadd.f32 %v5891, %v6020
      %v6057 = vadd.f32 %v5892, %v6025
      %v6058 = vadd.f32 %v5893, %v6028
      %v6059 = vadd.f32 %v5894, %v6033
      %v6060 = vadd.f32 %v5895, %v6036
      %v6061 = vadd.f32 %v5896, %v6041
      %v6062 = vadd.f32 %v5897, %v6044
      %s6063 = scalar_lea.vmem [#allocation3], 240
      %v6064 = vld [vmem:[%s6063] sm:$0xff]
      %v6065 = vld [vmem:[%s6063 + $0x8] sm:$0xff]
      %v6066 = vld [vmem:[%s6063 + $0x18] sm:$0xff]
      %v6067 = vld [vmem:[%s6063 + $0x20] sm:$0xff]
      %v6068 = vld [vmem:[%s6063 + $0x30] sm:$0xff]
      %v6069 = vld [vmem:[%s6063 + $0x38] sm:$0xff]
      %v6070 = vld [vmem:[%s6063 + $0x48] sm:$0xff]
      %v6071 = vld [vmem:[%s6063 + $0x50] sm:$0xff]
      %v6072 = vld [vmem:[%s6063 + $0x60] sm:$0xff]
      %v6073 = vld [vmem:[%s6063 + $0x68] sm:$0xff]
      %v6074 = vld [vmem:[%s6063 + $0x78] sm:$0xff]
      %v6075 = vld [vmem:[%s6063 + $0x80] sm:$0xff]
      %v6076 = vld [vmem:[%s6063 + $0x90] sm:$0xff]
      %v6077 = vld [vmem:[%s6063 + $0x98] sm:$0xff]
      %v6078 = vld [vmem:[%s6063 + $0xa8] sm:$0xff]
      %v6079 = vld [vmem:[%s6063 + $0xb0] sm:$0xff]
      %v6080 = vpack.c.bf16 %v6065, %v6064
      %v6081 = vpack.c.bf16 %v6067, %v6066
      %v6082 = vpack.c.bf16 %v6069, %v6068
      %v6083 = vpack.c.bf16 %v6071, %v6070
      %v6084 = vpack.c.bf16 %v6073, %v6072
      %v6085 = vpack.c.bf16 %v6075, %v6074
      %v6086 = vpack.c.bf16 %v6077, %v6076
      %v6087 = vpack.c.bf16 %v6079, %v6078
      %v6088 = vld [vmem:[%s4520] sm:$0x3]
      %v6090 = vsel %vm280, %v6080, 0
      %v6093 = vsel %vm280, %v6081, 0
      %v6096 = vsel %vm280, %v6082, 0
      %v6099 = vsel %vm280, %v6083, 0
      %v6102 = vsel %vm280, %v6084, 0
      %v6105 = vsel %vm280, %v6085, 0
      %v6108 = vsel %vm280, %v6086, 0
      %v6111 = vsel %vm280, %v6087, 0
      %v6114 = vsel %vm530, %v6088, 0
      %6116 = vmatprep.subr.bf16.mxu0 0
      %6117 = vmatpush1.bf16.msra.mxu0 %v6114
      %6118 = vmatprep.subr.bf16.mxu0 0
      %6119 = vmatpush1.bf16.msra.mxu0 0
      %6120 = vmatprep.subr.bf16.mxu0 0
      %6121 = vmatpush1.bf16.msra.mxu0 0
      %6122 = vmatprep.subr.bf16.mxu0 0
      %6123 = vmatpush1.bf16.msra.mxu0 0
      %6124 = vmatprep.subr.bf16.mxu0 0
      %6125 = vmatpush1.bf16.msra.mxu0 0
      %6126 = vmatprep.subr.bf16.mxu0 0
      %6127 = vmatpush1.bf16.msra.mxu0 0
      %6128 = vmatprep.subr.bf16.mxu0 0
      %6129 = vmatpush1.bf16.msra.mxu0 0
      %6130 = vmatprep.subr.bf16.mxu0 0
      %6131 = vmatpush1.bf16.msra.mxu0 0
      %6132 = vmatprep.subr.bf16.mxu0 0
      %6133 = vmatpush1.bf16.msra.mxu0 0
      %6134 = vmatprep.subr.bf16.mxu0 0
      %6135 = vmatpush1.bf16.msra.mxu0 0
      %6136 = vmatprep.subr.bf16.mxu0 0
      %6137 = vmatpush1.bf16.msra.mxu0 0
      %6138 = vmatprep.subr.bf16.mxu0 0
      %6139 = vmatpush1.bf16.msra.mxu0 0
      %6140 = vmatprep.subr.bf16.mxu0 0
      %6141 = vmatpush1.bf16.msra.mxu0 0
      %6142 = vmatprep.subr.bf16.mxu0 0
      %6143 = vmatpush1.bf16.msra.mxu0 0
      %6144 = vmatprep.subr.bf16.mxu0 0
      %6145 = vmatpush1.bf16.msra.mxu0 0
      %6146 = vmatprep.subr.bf16.mxu0 0
      %6147 = vmatpush1.bf16.msra.mxu0 0
      %6148 = vmatprep.mubr.bf16.mxu0 0
      %6149 = vmatmul.mubr.bf16.gmra.mrb[0].mxu0 %v6090
      %v6150 = vpop.f32.mrb[0].mxu0
      %v6151 = vadd.f32 0.0, %v6150
      %v6152 = vpop.f32.mrb[0].mxu0
      %v6153 = vpop.f32.mrb[0].mxu0
      %v6154 = vadd.f32 0.0, %v6153
      %v6155 = vpop.f32.mrb[0].mxu0
      %6156 = vmatprep.mubr.bf16.mxu0 0
      %6157 = vmatmul.mubr.bf16.gmra.mrb[0].mxu0 %v6093
      %v6158 = vpop.f32.mrb[0].mxu0
      %v6159 = vadd.f32 0.0, %v6158
      %v6160 = vpop.f32.mrb[0].mxu0
      %v6161 = vpop.f32.mrb[0].mxu0
      %v6162 = vadd.f32 0.0, %v6161
      %v6163 = vpop.f32.mrb[0].mxu0
      %6164 = vmatprep.mubr.bf16.mxu0 0
      %6165 = vmatmul.mubr.bf16.gmra.mrb[0].mxu0 %v6096
      %v6166 = vpop.f32.mrb[0].mxu0
      %v6167 = vadd.f32 0.0, %v6166
      %v6168 = vpop.f32.mrb[0].mxu0
      %v6169 = vpop.f32.mrb[0].mxu0
      %v6170 = vadd.f32 0.0, %v6169
      %v6171 = vpop.f32.mrb[0].mxu0
      %6172 = vmatprep.mubr.bf16.mxu0 0
      %6173 = vmatmul.mubr.bf16.gmra.mrb[0].mxu0 %v6099
      %v6174 = vpop.f32.mrb[0].mxu0
      %v6175 = vadd.f32 0.0, %v6174
      %v6176 = vpop.f32.mrb[0].mxu0
      %v6177 = vpop.f32.mrb[0].mxu0
      %v6178 = vadd.f32 0.0, %v6177
      %v6179 = vpop.f32.mrb[0].mxu0
      %6180 = vmatprep.mubr.bf16.mxu0 0
      %6181 = vmatmul.mubr.bf16.gmra.mrb[0].mxu0 %v6102
      %v6182 = vpop.f32.mrb[0].mxu0
      %v6183 = vadd.f32 0.0, %v6182
      %v6184 = vpop.f32.mrb[0].mxu0
      %v6185 = vpop.f32.mrb[0].mxu0
      %v6186 = vadd.f32 0.0, %v6185
      %v6187 = vpop.f32.mrb[0].mxu0
      %6188 = vmatprep.mubr.bf16.mxu0 0
      %6189 = vmatmul.mubr.bf16.gmra.mrb[0].mxu0 %v6105
      %v6190 = vpop.f32.mrb[0].mxu0
      %v6191 = vadd.f32 0.0, %v6190
      %v6192 = vpop.f32.mrb[0].mxu0
      %v6193 = vpop.f32.mrb[0].mxu0
      %v6194 = vadd.f32 0.0, %v6193
      %v6195 = vpop.f32.mrb[0].mxu0
      %6196 = vmatprep.mubr.bf16.mxu0 0
      %6197 = vmatmul.mubr.bf16.gmra.mrb[0].mxu0 %v6108
      %v6198 = vpop.f32.mrb[0].mxu0
      %v6199 = vadd.f32 0.0, %v6198
      %v6200 = vpop.f32.mrb[0].mxu0
      %v6201 = vpop.f32.mrb[0].mxu0
      %v6202 = vadd.f32 0.0, %v6201
      %v6203 = vpop.f32.mrb[0].mxu0
      %6204 = vmatprep.mubr.bf16.mxu0 0
      %6205 = vmatmul.mubr.bf16.gmra.mrb[0].mxu0 %v6111
      %v6206 = vpop.f32.mrb[0].mxu0
      %v6207 = vadd.f32 0.0, %v6206
      %v6208 = vpop.f32.mrb[0].mxu0
      %v6209 = vpop.f32.mrb[0].mxu0
      %v6210 = vadd.f32 0.0, %v6209
      %v6211 = vpop.f32.mrb[0].mxu0
      %6212 = vdwg.mxu0
      %v6213 = vadd.f32 %v6047, %v6151
      %v6214 = vadd.f32 %v6048, %v6154
      %v6215 = vadd.f32 %v6049, %v6159
      %v6216 = vadd.f32 %v6050, %v6162
      %v6217 = vadd.f32 %v6051, %v6167
      %v6218 = vadd.f32 %v6052, %v6170
      %v6219 = vadd.f32 %v6053, %v6175
      %v6220 = vadd.f32 %v6054, %v6178
      %v6221 = vadd.f32 %v6055, %v6183
      %v6222 = vadd.f32 %v6056, %v6186
      %v6223 = vadd.f32 %v6057, %v6191
      %v6224 = vadd.f32 %v6058, %v6194
      %v6225 = vadd.f32 %v6059, %v6199
      %v6226 = vadd.f32 %v6060, %v6202
      %v6227 = vadd.f32 %v6061, %v6207
      %v6228 = vadd.f32 %v6062, %v6210
      %v6229 = vld [vmem:[%s6063 + $0x1] sm:$0xff]
      %v6230 = vld [vmem:[%s6063 + $0x9] sm:$0xff]
      %v6231 = vld [vmem:[%s6063 + $0x19] sm:$0xff]
      %v6232 = vld [vmem:[%s6063 + $0x21] sm:$0xff]
      %v6233 = vld [vmem:[%s6063 + $0x31] sm:$0xff]
      %v6234 = vld [vmem:[%s6063 + $0x39] sm:$0xff]
      %v6235 = vld [vmem:[%s6063 + $0x49] sm:$0xff]
      %v6236 = vld [vmem:[%s6063 + $0x51] sm:$0xff]
      %v6237 = vld [vmem:[%s6063 + $0x61] sm:$0xff]
      %v6238 = vld [vmem:[%s6063 + $0x69] sm:$0xff]
      %v6239 = vld [vmem:[%s6063 + $0x79] sm:$0xff]
      %v6240 = vld [vmem:[%s6063 + $0x81] sm:$0xff]
      %v6241 = vld [vmem:[%s6063 + $0x91] sm:$0xff]
      %v6242 = vld [vmem:[%s6063 + $0x99] sm:$0xff]
      %v6243 = vld [vmem:[%s6063 + $0xa9] sm:$0xff]
      %v6244 = vld [vmem:[%s6063 + $0xb1] sm:$0xff]
      %v6245 = vpack.c.bf16 %v6230, %v6229
      %v6246 = vpack.c.bf16 %v6232, %v6231
      %v6247 = vpack.c.bf16 %v6234, %v6233
      %v6248 = vpack.c.bf16 %v6236, %v6235
      %v6249 = vpack.c.bf16 %v6238, %v6237
      %v6250 = vpack.c.bf16 %v6240, %v6239
      %v6251 = vpack.c.bf16 %v6242, %v6241
      %v6252 = vpack.c.bf16 %v6244, %v6243
      %v6253 = vld [vmem:[%s4686] sm:$0x3]
      %v6255 = vsel %vm280, %v6245, 0
      %v6258 = vsel %vm280, %v6246, 0
      %v6261 = vsel %vm280, %v6247, 0
      %v6264 = vsel %vm280, %v6248, 0
      %v6267 = vsel %vm280, %v6249, 0
      %v6270 = vsel %vm280, %v6250, 0
      %v6273 = vsel %vm280, %v6251, 0
      %v6276 = vsel %vm280, %v6252, 0
      %v6279 = vsel %vm530, %v6253, 0
      %6281 = vmatprep.subr.bf16.mxu0 0
      %6282 = vmatpush1.bf16.msra.mxu0 %v6279
      %6283 = vmatprep.subr.bf16.mxu0 0
      %6284 = vmatpush1.bf16.msra.mxu0 0
      %6285 = vmatprep.subr.bf16.mxu0 0
      %6286 = vmatpush1.bf16.msra.mxu0 0
      %6287 = vmatprep.subr.bf16.mxu0 0
      %6288 = vmatpush1.bf16.msra.mxu0 0
      %6289 = vmatprep.subr.bf16.mxu0 0
      %6290 = vmatpush1.bf16.msra.mxu0 0
      %6291 = vmatprep.subr.bf16.mxu0 0
      %6292 = vmatpush1.bf16.msra.mxu0 0
      %6293 = vmatprep.subr.bf16.mxu0 0
      %6294 = vmatpush1.bf16.msra.mxu0 0
      %6295 = vmatprep.subr.bf16.mxu0 0
      %6296 = vmatpush1.bf16.msra.mxu0 0
      %6297 = vmatprep.subr.bf16.mxu0 0
      %6298 = vmatpush1.bf16.msra.mxu0 0
      %6299 = vmatprep.subr.bf16.mxu0 0
      %6300 = vmatpush1.bf16.msra.mxu0 0
      %6301 = vmatprep.subr.bf16.mxu0 0
      %6302 = vmatpush1.bf16.msra.mxu0 0
      %6303 = vmatprep.subr.bf16.mxu0 0
      %6304 = vmatpush1.bf16.msra.mxu0 0
      %6305 = vmatprep.subr.bf16.mxu0 0
      %6306 = vmatpush1.bf16.msra.mxu0 0
      %6307 = vmatprep.subr.bf16.mxu0 0
      %6308 = vmatpush1.bf16.msra.mxu0 0
      %6309 = vmatprep.subr.bf16.mxu0 0
      %6310 = vmatpush1.bf16.msra.mxu0 0
      %6311 = vmatprep.subr.bf16.mxu0 0
      %6312 = vmatpush1.bf16.msra.mxu0 0
      %6313 = vmatprep.mubr.bf16.mxu0 0
      %6314 = vmatmul.mubr.bf16.gmra.mrb[0].mxu0 %v6255
      %v6315 = vpop.f32.mrb[0].mxu0
      %v6316 = vadd.f32 0.0, %v6315
      %v6317 = vpop.f32.mrb[0].mxu0
      %v6318 = vpop.f32.mrb[0].mxu0
      %v6319 = vadd.f32 0.0, %v6318
      %v6320 = vpop.f32.mrb[0].mxu0
      %6321 = vmatprep.mubr.bf16.mxu0 0
      %6322 = vmatmul.mubr.bf16.gmra.mrb[0].mxu0 %v6258
      %v6323 = vpop.f32.mrb[0].mxu0
      %v6324 = vadd.f32 0.0, %v6323
      %v6325 = vpop.f32.mrb[0].mxu0
      %v6326 = vpop.f32.mrb[0].mxu0
      %v6327 = vadd.f32 0.0, %v6326
      %v6328 = vpop.f32.mrb[0].mxu0
      %6329 = vmatprep.mubr.bf16.mxu0 0
      %6330 = vmatmul.mubr.bf16.gmra.mrb[0].mxu0 %v6261
      %v6331 = vpop.f32.mrb[0].mxu0
      %v6332 = vadd.f32 0.0, %v6331
      %v6333 = vpop.f32.mrb[0].mxu0
      %v6334 = vpop.f32.mrb[0].mxu0
      %v6335 = vadd.f32 0.0, %v6334
      %v6336 = vpop.f32.mrb[0].mxu0
      %6337 = vmatprep.mubr.bf16.mxu0 0
      %6338 = vmatmul.mubr.bf16.gmra.mrb[0].mxu0 %v6264
      %v6339 = vpop.f32.mrb[0].mxu0
      %v6340 = vadd.f32 0.0, %v6339
      %v6341 = vpop.f32.mrb[0].mxu0
      %v6342 = vpop.f32.mrb[0].mxu0
      %v6343 = vadd.f32 0.0, %v6342
      %v6344 = vpop.f32.mrb[0].mxu0
      %6345 = vmatprep.mubr.bf16.mxu0 0
      %6346 = vmatmul.mubr.bf16.gmra.mrb[0].mxu0 %v6267
      %v6347 = vpop.f32.mrb[0].mxu0
      %v6348 = vadd.f32 0.0, %v6347
      %v6349 = vpop.f32.mrb[0].mxu0
      %v6350 = vpop.f32.mrb[0].mxu0
      %v6351 = vadd.f32 0.0, %v6350
      %v6352 = vpop.f32.mrb[0].mxu0
      %6353 = vmatprep.mubr.bf16.mxu0 0
      %6354 = vmatmul.mubr.bf16.gmra.mrb[0].mxu0 %v6270
      %v6355 = vpop.f32.mrb[0].mxu0
      %v6356 = vadd.f32 0.0, %v6355
      %v6357 = vpop.f32.mrb[0].mxu0
      %v6358 = vpop.f32.mrb[0].mxu0
      %v6359 = vadd.f32 0.0, %v6358
      %v6360 = vpop.f32.mrb[0].mxu0
      %6361 = vmatprep.mubr.bf16.mxu0 0
      %6362 = vmatmul.mubr.bf16.gmra.mrb[0].mxu0 %v6273
      %v6363 = vpop.f32.mrb[0].mxu0
      %v6364 = vadd.f32 0.0, %v6363
      %v6365 = vpop.f32.mrb[0].mxu0
      %v6366 = vpop.f32.mrb[0].mxu0
      %v6367 = vadd.f32 0.0, %v6366
      %v6368 = vpop.f32.mrb[0].mxu0
      %6369 = vmatprep.mubr.bf16.mxu0 0
      %6370 = vmatmul.mubr.bf16.gmra.mrb[0].mxu0 %v6276
      %v6371 = vpop.f32.mrb[0].mxu0
      %v6372 = vadd.f32 0.0, %v6371
      %v6373 = vpop.f32.mrb[0].mxu0
      %v6374 = vpop.f32.mrb[0].mxu0
      %v6375 = vadd.f32 0.0, %v6374
      %v6376 = vpop.f32.mrb[0].mxu0
      %6377 = vdwg.mxu0
      %v6378 = vadd.f32 %v6213, %v6316
      %v6379 = vadd.f32 %v6214, %v6319
      %v6380 = vadd.f32 %v6215, %v6324
      %v6381 = vadd.f32 %v6216, %v6327
      %v6382 = vadd.f32 %v6217, %v6332
      %v6383 = vadd.f32 %v6218, %v6335
      %v6384 = vadd.f32 %v6219, %v6340
      %v6385 = vadd.f32 %v6220, %v6343
      %v6386 = vadd.f32 %v6221, %v6348
      %v6387 = vadd.f32 %v6222, %v6351
      %v6388 = vadd.f32 %v6223, %v6356
      %v6389 = vadd.f32 %v6224, %v6359
      %v6390 = vadd.f32 %v6225, %v6364
      %v6391 = vadd.f32 %v6226, %v6367
      %v6392 = vadd.f32 %v6227, %v6372
      %v6393 = vadd.f32 %v6228, %v6375
      %v6394 = vld [vmem:[%s6063 + $0x2] sm:$0xff]
      %v6395 = vld [vmem:[%s6063 + $0xa] sm:$0xff]
      %v6396 = vld [vmem:[%s6063 + $0x1a] sm:$0xff]
      %v6397 = vld [vmem:[%s6063 + $0x22] sm:$0xff]
      %v6398 = vld [vmem:[%s6063 + $0x32] sm:$0xff]
      %v6399 = vld [vmem:[%s6063 + $0x3a] sm:$0xff]
      %v6400 = vld [vmem:[%s6063 + $0x4a] sm:$0xff]
      %v6401 = vld [vmem:[%s6063 + $0x52] sm:$0xff]
      %v6402 = vld [vmem:[%s6063 + $0x62] sm:$0xff]
      %v6403 = vld [vmem:[%s6063 + $0x6a] sm:$0xff]
      %v6404 = vld [vmem:[%s6063 + $0x7a] sm:$0xff]
      %v6405 = vld [vmem:[%s6063 + $0x82] sm:$0xff]
      %v6406 = vld [vmem:[%s6063 + $0x92] sm:$0xff]
      %v6407 = vld [vmem:[%s6063 + $0x9a] sm:$0xff]
      %v6408 = vld [vmem:[%s6063 + $0xaa] sm:$0xff]
      %v6409 = vld [vmem:[%s6063 + $0xb2] sm:$0xff]
      %v6410 = vpack.c.bf16 %v6395, %v6394
      %v6411 = vpack.c.bf16 %v6397, %v6396
      %v6412 = vpack.c.bf16 %v6399, %v6398
      %v6413 = vpack.c.bf16 %v6401, %v6400
      %v6414 = vpack.c.bf16 %v6403, %v6402
      %v6415 = vpack.c.bf16 %v6405, %v6404
      %v6416 = vpack.c.bf16 %v6407, %v6406
      %v6417 = vpack.c.bf16 %v6409, %v6408
      %v6418 = vld [vmem:[%s4852] sm:$0x3]
      %v6420 = vsel %vm280, %v6410, 0
      %v6423 = vsel %vm280, %v6411, 0
      %v6426 = vsel %vm280, %v6412, 0
      %v6429 = vsel %vm280, %v6413, 0
      %v6432 = vsel %vm280, %v6414, 0
      %v6435 = vsel %vm280, %v6415, 0
      %v6438 = vsel %vm280, %v6416, 0
      %v6441 = vsel %vm280, %v6417, 0
      %v6444 = vsel %vm530, %v6418, 0
      %6446 = vmatprep.subr.bf16.mxu0 0
      %6447 = vmatpush1.bf16.msra.mxu0 %v6444
      %6448 = vmatprep.subr.bf16.mxu0 0
      %6449 = vmatpush1.bf16.msra.mxu0 0
      %6450 = vmatprep.subr.bf16.mxu0 0
      %6451 = vmatpush1.bf16.msra.mxu0 0
      %6452 = vmatprep.subr.bf16.mxu0 0
      %6453 = vmatpush1.bf16.msra.mxu0 0
      %6454 = vmatprep.subr.bf16.mxu0 0
      %6455 = vmatpush1.bf16.msra.mxu0 0
      %6456 = vmatprep.subr.bf16.mxu0 0
      %6457 = vmatpush1.bf16.msra.mxu0 0
      %6458 = vmatprep.subr.bf16.mxu0 0
      %6459 = vmatpush1.bf16.msra.mxu0 0
      %6460 = vmatprep.subr.bf16.mxu0 0
      %6461 = vmatpush1.bf16.msra.mxu0 0
      %6462 = vmatprep.subr.bf16.mxu0 0
      %6463 = vmatpush1.bf16.msra.mxu0 0
      %6464 = vmatprep.subr.bf16.mxu0 0
      %6465 = vmatpush1.bf16.msra.mxu0 0
      %6466 = vmatprep.subr.bf16.mxu0 0
      %6467 = vmatpush1.bf16.msra.mxu0 0
      %6468 = vmatprep.subr.bf16.mxu0 0
      %6469 = vmatpush1.bf16.msra.mxu0 0
      %6470 = vmatprep.subr.bf16.mxu0 0
      %6471 = vmatpush1.bf16.msra.mxu0 0
      %6472 = vmatprep.subr.bf16.mxu0 0
      %6473 = vmatpush1.bf16.msra.mxu0 0
      %6474 = vmatprep.subr.bf16.mxu0 0
      %6475 = vmatpush1.bf16.msra.mxu0 0
      %6476 = vmatprep.subr.bf16.mxu0 0
      %6477 = vmatpush1.bf16.msra.mxu0 0
      %6478 = vmatprep.mubr.bf16.mxu0 0
      %6479 = vmatmul.mubr.bf16.gmra.mrb[0].mxu0 %v6420
      %v6480 = vpop.f32.mrb[0].mxu0
      %v6481 = vadd.f32 0.0, %v6480
      %v6482 = vpop.f32.mrb[0].mxu0
      %v6483 = vpop.f32.mrb[0].mxu0
      %v6484 = vadd.f32 0.0, %v6483
      %v6485 = vpop.f32.mrb[0].mxu0
      %6486 = vmatprep.mubr.bf16.mxu0 0
      %6487 = vmatmul.mubr.bf16.gmra.mrb[0].mxu0 %v6423
      %v6488 = vpop.f32.mrb[0].mxu0
      %v6489 = vadd.f32 0.0, %v6488
      %v6490 = vpop.f32.mrb[0].mxu0
      %v6491 = vpop.f32.mrb[0].mxu0
      %v6492 = vadd.f32 0.0, %v6491
      %v6493 = vpop.f32.mrb[0].mxu0
      %6494 = vmatprep.mubr.bf16.mxu0 0
      %6495 = vmatmul.mubr.bf16.gmra.mrb[0].mxu0 %v6426
      %v6496 = vpop.f32.mrb[0].mxu0
      %v6497 = vadd.f32 0.0, %v6496
      %v6498 = vpop.f32.mrb[0].mxu0
      %v6499 = vpop.f32.mrb[0].mxu0
      %v6500 = vadd.f32 0.0, %v6499
      %v6501 = vpop.f32.mrb[0].mxu0
      %6502 = vmatprep.mubr.bf16.mxu0 0
      %6503 = vmatmul.mubr.bf16.gmra.mrb[0].mxu0 %v6429
      %v6504 = vpop.f32.mrb[0].mxu0
      %v6505 = vadd.f32 0.0, %v6504
      %v6506 = vpop.f32.mrb[0].mxu0
      %v6507 = vpop.f32.mrb[0].mxu0
      %v6508 = vadd.f32 0.0, %v6507
      %v6509 = vpop.f32.mrb[0].mxu0
      %6510 = vmatprep.mubr.bf16.mxu0 0
      %6511 = vmatmul.mubr.bf16.gmra.mrb[0].mxu0 %v6432
      %v6512 = vpop.f32.mrb[0].mxu0
      %v6513 = vadd.f32 0.0, %v6512
      %v6514 = vpop.f32.mrb[0].mxu0
      %v6515 = vpop.f32.mrb[0].mxu0
      %v6516 = vadd.f32 0.0, %v6515
      %v6517 = vpop.f32.mrb[0].mxu0
      %6518 = vmatprep.mubr.bf16.mxu0 0
      %6519 = vmatmul.mubr.bf16.gmra.mrb[0].mxu0 %v6435
      %v6520 = vpop.f32.mrb[0].mxu0
      %v6521 = vadd.f32 0.0, %v6520
      %v6522 = vpop.f32.mrb[0].mxu0
      %v6523 = vpop.f32.mrb[0].mxu0
      %v6524 = vadd.f32 0.0, %v6523
      %v6525 = vpop.f32.mrb[0].mxu0
      %6526 = vmatprep.mubr.bf16.mxu0 0
      %6527 = vmatmul.mubr.bf16.gmra.mrb[0].mxu0 %v6438
      %v6528 = vpop.f32.mrb[0].mxu0
      %v6529 = vadd.f32 0.0, %v6528
      %v6530 = vpop.f32.mrb[0].mxu0
      %v6531 = vpop.f32.mrb[0].mxu0
      %v6532 = vadd.f32 0.0, %v6531
      %v6533 = vpop.f32.mrb[0].mxu0
      %6534 = vmatprep.mubr.bf16.mxu0 0
      %6535 = vmatmul.mubr.bf16.gmra.mrb[0].mxu0 %v6441
      %v6536 = vpop.f32.mrb[0].mxu0
      %v6537 = vadd.f32 0.0, %v6536
      %v6538 = vpop.f32.mrb[0].mxu0
      %v6539 = vpop.f32.mrb[0].mxu0
      %v6540 = vadd.f32 0.0, %v6539
      %v6541 = vpop.f32.mrb[0].mxu0
      %6542 = vdwg.mxu0
      %v6543 = vadd.f32 %v6378, %v6481
      %v6544 = vadd.f32 %v6379, %v6484
      %v6545 = vadd.f32 %v6380, %v6489
      %v6546 = vadd.f32 %v6381, %v6492
      %v6547 = vadd.f32 %v6382, %v6497
      %v6548 = vadd.f32 %v6383, %v6500
      %v6549 = vadd.f32 %v6384, %v6505
      %v6550 = vadd.f32 %v6385, %v6508
      %v6551 = vadd.f32 %v6386, %v6513
      %v6552 = vadd.f32 %v6387, %v6516
      %v6553 = vadd.f32 %v6388, %v6521
      %v6554 = vadd.f32 %v6389, %v6524
      %v6555 = vadd.f32 %v6390, %v6529
      %v6556 = vadd.f32 %v6391, %v6532
      %v6557 = vadd.f32 %v6392, %v6537
      %v6558 = vadd.f32 %v6393, %v6540
      %v6559 = vld [vmem:[%s5] sm:$0x1]
      %v6561 = vlaneseq
      %v6562 = vshrl.u32 %v6561, 7
      %v6563 = vsub.s32 0, %v6562
      %v6564 = vrot.slane %v6559, %v6563
      %v6566 = vmul.f32 %v6543, %v6564
      %v6567 = vmul.f32 %v6544, %v6564
      %v6568 = vmul.f32 %v6545, %v6564
      %v6569 = vmul.f32 %v6546, %v6564
      %v6570 = vmul.f32 %v6547, %v6564
      %v6571 = vmul.f32 %v6548, %v6564
      %v6572 = vmul.f32 %v6549, %v6564
      %v6573 = vmul.f32 %v6550, %v6564
      %v6574 = vmul.f32 %v6551, %v6564
      %v6575 = vmul.f32 %v6552, %v6564
      %v6576 = vmul.f32 %v6553, %v6564
      %v6577 = vmul.f32 %v6554, %v6564
      %v6578 = vmul.f32 %v6555, %v6564
      %v6579 = vmul.f32 %v6556, %v6564
      %v6580 = vmul.f32 %v6557, %v6564
      %v6581 = vmul.f32 %v6558, %v6564
      %v6582 = vld [vmem:[%s6] sm:$0x1]
      %v6584 = vlaneseq
      %v6585 = vshrl.u32 %v6584, 7
      %v6586 = vsub.s32 0, %v6585
      %v6587 = vrot.slane %v6582, %v6586
      %v6589 = vadd.f32 %v6566, %v6587
      %v6590 = vadd.f32 %v6567, %v6587
      %v6591 = vadd.f32 %v6568, %v6587
      %v6592 = vadd.f32 %v6569, %v6587
      %v6593 = vadd.f32 %v6570, %v6587
      %v6594 = vadd.f32 %v6571, %v6587
      %v6595 = vadd.f32 %v6572, %v6587
      %v6596 = vadd.f32 %v6573, %v6587
      %v6597 = vadd.f32 %v6574, %v6587
      %v6598 = vadd.f32 %v6575, %v6587
      %v6599 = vadd.f32 %v6576, %v6587
      %v6600 = vadd.f32 %v6577, %v6587
      %v6601 = vadd.f32 %v6578, %v6587
      %v6602 = vadd.f32 %v6579, %v6587
      %v6603 = vadd.f32 %v6580, %v6587
      %v6604 = vadd.f32 %v6581, %v6587
      %s6605 = scalar_lea.vmem %s273, 128
      %v6606 = vld [vmem:[%s6605] sm:$0xff]
      %v6607 = vld [vmem:[%s6605 + $0x8] sm:$0xff]
      %v6608 = vld [vmem:[%s6605 + $0x10] sm:$0xff]
      %v6609 = vld [vmem:[%s6605 + $0x18] sm:$0xff]
      %v6610 = vld [vmem:[%s6605 + $0x20] sm:$0xff]
      %v6611 = vld [vmem:[%s6605 + $0x28] sm:$0xff]
      %v6612 = vld [vmem:[%s6605 + $0x30] sm:$0xff]
      %v6613 = vld [vmem:[%s6605 + $0x38] sm:$0xff]
      %v6614 = vld [vmem:[%s6605 + $0x40] sm:$0xff]
      %v6615 = vld [vmem:[%s6605 + $0x48] sm:$0xff]
      %v6616 = vld [vmem:[%s6605 + $0x50] sm:$0xff]
      %v6617 = vld [vmem:[%s6605 + $0x58] sm:$0xff]
      %v6618 = vld [vmem:[%s6605 + $0x60] sm:$0xff]
      %v6619 = vld [vmem:[%s6605 + $0x68] sm:$0xff]
      %v6620 = vld [vmem:[%s6605 + $0x70] sm:$0xff]
      %v6621 = vld [vmem:[%s6605 + $0x78] sm:$0xff]
      %v6622 = vadd.f32 %v6589, %v6606
      %v6623 = vadd.f32 %v6590, %v6607
      %v6624 = vadd.f32 %v6591, %v6608
      %v6625 = vadd.f32 %v6592, %v6609
      %v6626 = vadd.f32 %v6593, %v6610
      %v6627 = vadd.f32 %v6594, %v6611
      %v6628 = vadd.f32 %v6595, %v6612
      %v6629 = vadd.f32 %v6596, %v6613
      %v6630 = vadd.f32 %v6597, %v6614
      %v6631 = vadd.f32 %v6598, %v6615
      %v6632 = vadd.f32 %v6599, %v6616
      %v6633 = vadd.f32 %v6600, %v6617
      %v6634 = vadd.f32 %v6601, %v6618
      %v6635 = vadd.f32 %v6602, %v6619
      %v6636 = vadd.f32 %v6603, %v6620
      %v6637 = vadd.f32 %v6604, %v6621
      %v6638 = vmax.f32 %v6622, 0.0
      %v6639 = vmax.f32 %v6623, 0.0
      %v6640 = vmax.f32 %v6624, 0.0
      %v6641 = vmax.f32 %v6625, 0.0
      %v6642 = vmax.f32 %v6626, 0.0
      %v6643 = vmax.f32 %v6627, 0.0
      %v6644 = vmax.f32 %v6628, 0.0
      %v6645 = vmax.f32 %v6629, 0.0
      %v6646 = vmax.f32 %v6630, 0.0
      %v6647 = vmax.f32 %v6631, 0.0
      %v6648 = vmax.f32 %v6632, 0.0
      %v6649 = vmax.f32 %v6633, 0.0
      %v6650 = vmax.f32 %v6634, 0.0
      %v6651 = vmax.f32 %v6635, 0.0
      %v6652 = vmax.f32 %v6636, 0.0
      %v6653 = vmax.f32 %v6637, 0.0
      %s6654 = scalar_lea.vmem %s278, 128
      %6655 = vst.msk [vmem:[%s6654] sm:$0xff] %vm280, %v6638
      %6656 = vst.msk [vmem:[%s6654 + $0x8] sm:$0xff] %vm280, %v6639
      %6657 = vst.msk [vmem:[%s6654 + $0x10] sm:$0xff] %vm280, %v6640
      %6658 = vst.msk [vmem:[%s6654 + $0x18] sm:$0xff] %vm280, %v6641
      %6659 = vst.msk [vmem:[%s6654 + $0x20] sm:$0xff] %vm280, %v6642
      %6660 = vst.msk [vmem:[%s6654 + $0x28] sm:$0xff] %vm280, %v6643
      %6661 = vst.msk [vmem:[%s6654 + $0x30] sm:$0xff] %vm280, %v6644
      %6662 = vst.msk [vmem:[%s6654 + $0x38] sm:$0xff] %vm280, %v6645
      %6663 = vst.msk [vmem:[%s6654 + $0x40] sm:$0xff] %vm280, %v6646
      %6664 = vst.msk [vmem:[%s6654 + $0x48] sm:$0xff] %vm280, %v6647
      %6665 = vst.msk [vmem:[%s6654 + $0x50] sm:$0xff] %vm280, %v6648
      %6666 = vst.msk [vmem:[%s6654 + $0x58] sm:$0xff] %vm280, %v6649
      %6667 = vst.msk [vmem:[%s6654 + $0x60] sm:$0xff] %vm280, %v6650
      %6668 = vst.msk [vmem:[%s6654 + $0x68] sm:$0xff] %vm280, %v6651
      %6669 = vst.msk [vmem:[%s6654 + $0x70] sm:$0xff] %vm280, %v6652
      %6670 = vst.msk [vmem:[%s6654 + $0x78] sm:$0xff] %vm280, %v6653
      %p6671 = scmp.lt.s32.totalorder %s18, 1
      %s6672 = scalar_select %p6671, %s18, 1
      %s6673 = smul.addr %s6672, 32
      %s6674 = smul.addr %s6673, 8
      %s6675 = scalar_lea.vmem %s7, %s6674
      // Predicated region
      $region49: #{tpu_custom_call.1} parent=47 // pred_check
        %p6676 = pneg %p188
      $region50: #{tpu_custom_call.1} parent=47 // pred_check_branch
        %6678 = sbr.rel (%p6676) target = $region52
      $region51: #{tpu_custom_call.1} parent=47 // pred_region
        _
      $region52: #{tpu_custom_call.1} parent=47 // pred_fallthru
        _
    $region48: #{tpu_custom_call.1} parent=5 // pred_fallthru
      _
    %p6679 = scmp.le.s32.totalorder 2, %s13
    // Predicated region
    $region53: #{tpu_custom_call.1} parent=5 // pred_check
      %p6680 = pneg %p6679
    $region54: #{tpu_custom_call.1} parent=5 // pred_check_branch
      %6682 = sbr.rel (%p6680) target = $region56
    $region55: #{tpu_custom_call.1} parent=5 // pred_region
      %s6683 = ssub.s32 %s13, 2
      // Predicated region
      $region57: #{tpu_custom_call.1} parent=55 // pred_check
        %p6684 = pneg %p194
      $region58: #{tpu_custom_call.1} parent=55 // pred_check_branch
        %6686 = sbr.rel (%p6684) target = $region60
      $region59: #{tpu_custom_call.1} parent=55 // pred_region
        %p6687 = scmp.lt.s32.totalorder %s19, 1
        %s6688 = scalar_select %p6687, %s19, 1
        %s6689 = smul.addr %s6688, 32
        %s6690 = smul.addr %s6689, 8
        %s6691 = scalar_lea.vmem %s7, %s6690
      $region60: #{tpu_custom_call.1} parent=55 // pred_fallthru
        _
    $region56: #{tpu_custom_call.1} parent=5 // pred_fallthru
      _
  $region6: #{tpu_custom_call.1} parent=0 // loop_footer
    %s17 = sadd.s32 1, %s13
  $region7: #{tpu_custom_call.1} parent=0 // loop_footer_branch
    %12 = sbr.rel target = $region3
  $region8: #{tpu_custom_call.1} parent=0 // loop_exit
    _

</llo_original>
